<compile_context>
chip_gen: v7x
topology: tpu7x:2x2x1
jax: 0.10.0
libtpu: 0.0.40
codegen_flags: <defaults>
</compile_context>

<pallas_src>
import functools
import math

import numpy as np
import jax
import jax.numpy as jnp
from jax.experimental import pallas as pl
from jax.experimental.pallas import tpu as pltpu


# ----------------------------------------------------------------------------
# Small-config version of vae_v3 (same architecture logic, reduced sizes).
# ----------------------------------------------------------------------------
CFG = dict(
    in_size=(4, 8, 8),
    in_channels=4,
    out_size=(8, 8, 8),
    out_channels=[1, 2],
    out_conv_blocks=2,
    model_channels=32,
    num_res_blocks=(2, 2),          # (up_blocks, down_blocks)
    attention_resolutions=(1, 2, 4),
    latent_channels=32,
    channel_mult=(1, 2),
    z_down=(4, 8),
    z_up=(1, 2, 4, 8),
    num_heads=4,
)

_VMEM_LIMIT = 32 * 1024 * 1024      # explicit scoped-VMEM budget (fits all gens)


def _cparams(sem):
    return pltpu.CompilerParams(dimension_semantics=sem,
                                vmem_limit_bytes=_VMEM_LIMIT)


def _avg_matrix(c, groups=32):
    """(C, C) matrix averaging per-channel stats within each GroupNorm group."""
    cg = c // groups
    return jnp.asarray(
        (np.kron(np.eye(groups), np.ones((cg, cg)) / cg)).astype(np.float32))


# ----------------------------------------------------------------------------
# Pallas kernel 1: fused [GroupNorm(+SiLU)] + zero-pad + 3x3x3 conv
#                  (+ optional nearest 2x D/H upsample, stride, residual add).
# One grid step = one batch element x one output depth slice (valid rows only).
# ----------------------------------------------------------------------------
def _conv3_kernel(*refs, D_in, H_in, W_up, Cin, rd, rh, sd, sh, sw,
                  Ho, Wo, Hp, eps, has_gn, gn_silu, has_resid):
    it = iter(refs)
    x_ref = next(it)                     # (D_in*H_in, W_up, Cin)  bf16
    w_ref = next(it)                     # (27*Cin, Cout)          bf16
    b_ref = next(it)                     # (1, Cout)               f32
    if has_gn:
        g_ref = next(it)                 # (1, Cin)
        be_ref = next(it)                # (1, Cin)
        avg_ref = next(it)               # (Cin, Cin)
    if has_resid:
        r_ref = next(it)                 # (1, Ho*Wo, Cout)
    o_ref = next(it)                     # (1, Ho*Wo, Cout)
    xpad_ref = next(it)                  # (Dp*Hp, Wp, Cin) scratch bf16

    od = pl.program_id(1)
    D_up = D_in * rd
    H_up = H_in * rh

    # ---- once per sample: zero the padded scratch and fill its interior with
    #      the (optionally GroupNorm+SiLU'd, optionally D/H-upsampled) input. ----
    @pl.when(od == 0)
    def _prepare():
        xpad_ref[...] = jnp.zeros_like(xpad_ref)
        if has_gn:
            xf = x_ref[...].astype(jnp.float32)                      # (DH, W, C)
            inv_n = 1.0 / float(D_in * H_in * W_up)
            s1 = jnp.sum(xf, axis=(0, 1), keepdims=True).reshape(1, Cin) * inv_n
            s2 = jnp.sum(xf * xf, axis=(0, 1), keepdims=True).reshape(1, Cin) * inv_n
            stats = jnp.concatenate([s1, s2], axis=0)                # (2, C)
            gs = jnp.dot(stats, avg_ref[...],
                         preferred_element_type=jnp.float32)         # group stats
            mean_g = gs[0:1, :]
            var_g = jnp.maximum(gs[1:2, :] - mean_g * mean_g, 0.0)
            scale = jax.lax.rsqrt(var_g + eps) * g_ref[...]          # (1, C)
            shift = be_ref[...] - mean_g * scale                     # (1, C)
        for d_out in range(D_up):
            d_src = d_out // rd
            for h_out in range(H_up):
                h_src = h_out // rh
                row = x_ref[d_src * H_in + h_src, :, :]              # (W_up, C)
                if has_gn:
                    rf = row.astype(jnp.float32) * scale + shift
                    if gn_silu:
                        rf = rf * jax.nn.sigmoid(rf)
                    row = rf.astype(xpad_ref.dtype)
                xpad_ref[(d_out + 1) * Hp + 1 + h_out, pl.ds(1, W_up), :] = row

    # ---- valid-rows-only conv: one fused-K GEMM per output H row. ----
    base_d = od * sd
    wf = w_ref[...]
    bias = b_ref[...]
    for oh in range(Ho):
        pieces = []
        for kd in range(3):
            for kh in range(3):
                r = (base_d + kd) * Hp + oh * sh + kh
                for kw in range(3):
                    if sw == 1:
                        pieces.append(xpad_ref[r, pl.ds(kw, Wo), :])
                    else:
                        pieces.append(xpad_ref[r, pl.ds(kw, Wo, stride=sw), :])
        patch = jnp.concatenate(pieces, axis=-1)                     # (Wo, 27*Cin)
        acc = jnp.dot(patch, wf, preferred_element_type=jnp.float32) + bias
        if has_resid:
            acc = acc + r_ref[0, pl.ds(oh * Wo, Wo), :].astype(jnp.float32)
        o_ref[0, pl.ds(oh * Wo, Wo), :] = acc.astype(o_ref.dtype)


def conv3(x, w_taps, b, *, stride=(1, 1, 1), up=(1, 1), gn=None, gn_silu=True,
          resid=None, out_dtype=jnp.bfloat16, eps=1e-5):
    """Channels-last 3x3x3 conv, padding=1.
    x: (B, D, H, W, Cin); w_taps: (27, Cin, Cout); b: (Cout,)
    up=(rd, rh): fused nearest-neighbour 2x replication along D/H before conv.
    gn: optional {'g','b'} -> GroupNorm(32)(+SiLU if gn_silu) fused on the input.
    resid: optional tensor added to the conv output (identity skip)."""
    B, D_in, H_in, W_up, Cin = x.shape
    Cout = w_taps.shape[-1]
    rd, rh = int(up[0]), int(up[1])
    sd, sh, sw = (int(s) for s in stride)
    D_up, H_up = D_in * rd, H_in * rh
    Dp, Hp, Wp = D_up + 2, H_up + 2, W_up + 2
    Do = (D_up - 1) // sd + 1
    Ho = (H_up - 1) // sh + 1
    Wo = (W_up - 1) // sw + 1

    x4 = x.reshape(B, D_in * H_in, W_up, Cin).astype(jnp.bfloat16)
    wf = w_taps.astype(jnp.bfloat16).reshape(27 * Cin, Cout)
    bf = b.reshape(1, Cout).astype(jnp.float32)

    args = [x4, wf, bf]
    in_specs = [
        pl.BlockSpec((None, D_in * H_in, W_up, Cin), lambda b_, d_: (b_, 0, 0, 0)),
        pl.BlockSpec((27 * Cin, Cout), lambda b_, d_: (0, 0)),
        pl.BlockSpec((1, Cout), lambda b_, d_: (0, 0)),
    ]
    if gn is not None:
        args += [gn['g'].reshape(1, Cin).astype(jnp.float32),
                 gn['b'].reshape(1, Cin).astype(jnp.float32),
                 _avg_matrix(Cin)]
        in_specs += [pl.BlockSpec((1, Cin), lambda b_, d_: (0, 0)),
                     pl.BlockSpec((1, Cin), lambda b_, d_: (0, 0)),
                     pl.BlockSpec((Cin, Cin), lambda b_, d_: (0, 0))]
    if resid is not None:
        args.append(resid.reshape(B, Do, Ho * Wo, Cout).astype(jnp.bfloat16))
        in_specs.append(pl.BlockSpec((None, 1, Ho * Wo, Cout),
                                     lambda b_, d_: (b_, d_, 0, 0)))

    kernel = functools.partial(
        _conv3_kernel, D_in=D_in, H_in=H_in, W_up=W_up, Cin=Cin, rd=rd, rh=rh,
        sd=sd, sh=sh, sw=sw, Ho=Ho, Wo=Wo, Hp=Hp, eps=eps,
        has_gn=gn is not None, gn_silu=gn_silu, has_resid=resid is not None)

    y = pl.pallas_call(
        kernel,
        out_shape=jax.ShapeDtypeStruct((B, Do, Ho * Wo, Cout), out_dtype),
        grid=(B, Do),
        in_specs=in_specs,
        out_specs=pl.BlockSpec((None, 1, Ho * Wo, Cout),
                               lambda b_, d_: (b_, d_, 0, 0)),
        scratch_shapes=[pltpu.VMEM((Dp * Hp, Wp, Cin), jnp.bfloat16)],
        compiler_params=_cparams(("parallel", "arbitrary")),
    )(*args)
    return y.reshape(B, Do, Ho, Wo, Cout)


# ----------------------------------------------------------------------------
# Pallas kernel 2: fused AttentionBlock (GN + qkv + attention + proj + skip).
# ----------------------------------------------------------------------------
def _attn_block_kernel(x_ref, g_ref, be_ref, avg_ref, wqkv_ref, bqkv_ref,
                       wp_ref, bp_ref, o_ref, a_ref, *, heads, ch, scale, eps):
    x = x_ref[...]                                            # (T, C) bf16
    T, C = x.shape
    xf = x.astype(jnp.float32)
    inv_n = 1.0 / float(T)
    s1 = jnp.sum(xf, axis=0, keepdims=True) * inv_n
    s2 = jnp.sum(xf * xf, axis=0, keepdims=True) * inv_n
    gs = jnp.dot(jnp.concatenate([s1, s2], axis=0), avg_ref[...],
                 preferred_element_type=jnp.float32)
    mean = gs[0:1, :]
    var = jnp.maximum(gs[1:2, :] - mean * mean, 0.0)
    xn = (xf - mean) * jax.lax.rsqrt(var + eps) * g_ref[...] + be_ref[...]
    qkv = jnp.dot(xn.astype(jnp.bfloat16), wqkv_ref[...],
                  preferred_element_type=jnp.float32) + bqkv_ref[...]
    qkv = qkv.astype(jnp.bfloat16)                            # (T, 3C)
    # TODO(synk): for large T, stream K/V in tiles (flash-style); T is tiny here.
    for h in range(heads):
        q = qkv[:, h * ch:(h + 1) * ch]
        k = qkv[:, C + h * ch:C + (h + 1) * ch]
        v = qkv[:, 2 * C + h * ch:2 * C + (h + 1) * ch]
        w = jax.lax.dot_general(q, k, (((1,), (1,)), ((), ())),
                                preferred_element_type=jnp.float32) * scale
        m = jnp.max(w, axis=-1, keepdims=True)
        e = jnp.exp(w - m)
        p = e * pl.reciprocal(jnp.sum(e, axis=-1, keepdims=True), approx=True)
        a_ref[:, h * ch:(h + 1) * ch] = jnp.dot(
            p.astype(jnp.bfloat16), v,
            preferred_element_type=jnp.float32).astype(a_ref.dtype)
    y = jnp.dot(a_ref[...], wp_ref[...],
                preferred_element_type=jnp.float32) + bp_ref[...]
    o_ref[...] = (xf + y).astype(o_ref.dtype)


def attn_block(x3, p, heads, eps=1e-5):
    B, T, C = x3.shape
    ch = C // heads
    return pl.pallas_call(
        functools.partial(_attn_block_kernel, heads=heads, ch=ch,
                          scale=1.0 / math.sqrt(ch), eps=eps),
        out_shape=jax.ShapeDtypeStruct((B, T, C), x3.dtype),
        grid=(B,),
        in_specs=[
            pl.BlockSpec((None, T, C), lambda b: (b, 0, 0)),
            pl.BlockSpec((1, C), lambda b: (0, 0)),
            pl.BlockSpec((1, C), lambda b: (0, 0)),
            pl.BlockSpec((C, C), lambda b: (0, 0)),
            pl.BlockSpec((C, 3 * C), lambda b: (0, 0)),
            pl.BlockSpec((1, 3 * C), lambda b: (0, 0)),
            pl.BlockSpec((C, C), lambda b: (0, 0)),
            pl.BlockSpec((1, C), lambda b: (0, 0)),
        ],
        out_specs=pl.BlockSpec((None, T, C), lambda b: (b, 0, 0)),
        scratch_shapes=[pltpu.VMEM((T, C), jnp.bfloat16)],
        compiler_params=_cparams(("parallel",)),
    )(x3,
      p['n']['g'].reshape(1, C).astype(jnp.float32),
      p['n']['b'].reshape(1, C).astype(jnp.float32),
      _avg_matrix(C),
      p['qkv']['w'].astype(jnp.bfloat16),
      p['qkv']['b'].reshape(1, 3 * C).astype(jnp.float32),
      p['proj']['w'].astype(jnp.bfloat16),
      p['proj']['b'].reshape(1, C).astype(jnp.float32))


# ----------------------------------------------------------------------------
# Pallas kernel 3: noise_enc -> (mu, logvar) -> reparam sample -> noise_dec.
# ----------------------------------------------------------------------------
def _latent_kernel(h_ref, eps_ref, wenc_ref, benc_ref, wdec_ref, bdec_ref,
                   mu_ref, lv_ref, o_ref, *, L):
    h = h_ref[...]                                            # (S, Cz) bf16
    henc = jnp.dot(h, wenc_ref[...],
                   preferred_element_type=jnp.float32) + benc_ref[...]
    mu = henc[:, :L]
    lv = henc[:, L:]
    mu_ref[...] = mu
    lv_ref[...] = lv
    # TODO(synk): eps could be generated in-kernel via pltpu.prng_* (Box-Muller).
    z = mu + jnp.exp(0.5 * lv) * eps_ref[...]
    o_ref[...] = (jnp.dot(z.astype(jnp.bfloat16), wdec_ref[...],
                          preferred_element_type=jnp.float32)
                  + bdec_ref[...]).astype(o_ref.dtype)


def latent_sample_decode(h3, eps3, pe, pd):
    B, S, Cz = h3.shape
    L = pe['w'].shape[-1] // 2
    return pl.pallas_call(
        functools.partial(_latent_kernel, L=L),
        out_shape=(jax.ShapeDtypeStruct((B, S, L), jnp.float32),
                   jax.ShapeDtypeStruct((B, S, L), jnp.float32),
                   jax.ShapeDtypeStruct((B, S, Cz), jnp.bfloat16)),
        grid=(B,),
        in_specs=[
            pl.BlockSpec((None, S, Cz), lambda b: (b, 0, 0)),
            pl.BlockSpec((None, S, L), lambda b: (b, 0, 0)),
            pl.BlockSpec((Cz, 2 * L), lambda b: (0, 0)),
            pl.BlockSpec((1, 2 * L), lambda b: (0, 0)),
            pl.BlockSpec((L, Cz), lambda b: (0, 0)),
            pl.BlockSpec((1, Cz), lambda b: (0, 0)),
        ],
        out_specs=(pl.BlockSpec((None, S, L), lambda b: (b, 0, 0)),
                   pl.BlockSpec((None, S, L), lambda b: (b, 0, 0)),
                   pl.BlockSpec((None, S, Cz), lambda b: (b, 0, 0))),
        compiler_params=_cparams(("parallel",)),
    )(h3, eps3,
      pe['w'].astype(jnp.bfloat16), pe['b'].reshape(1, -1).astype(jnp.float32),
      pd['w'].astype(jnp.bfloat16), pd['b'].reshape(1, -1).astype(jnp.float32))


# ----------------------------------------------------------------------------
# Pallas kernel 4: merged output heads (block-diagonal 1x1 convs + LeakyReLU).
# ----------------------------------------------------------------------------
def _head_kernel(x_ref, *refs, n_mid):
    it = iter(refs)
    w0 = next(it)
    b0 = next(it)
    t = jnp.dot(x_ref[...], w0[...], preferred_element_type=jnp.float32) + b0[...]
    t = jnp.where(t > 0, t, 0.01 * t)
    for _ in range(n_mid):
        wi = next(it)
        bi = next(it)
        t = jnp.dot(t.astype(jnp.bfloat16), wi[...],
                    preferred_element_type=jnp.float32) + bi[...]
        t = jnp.where(t > 0, t, 0.01 * t)
    wfin = next(it)
    o_ref = next(it)
    o_ref[...] = jnp.dot(t.astype(jnp.bfloat16), wfin[...],
                         preferred_element_type=jnp.float32)


def _merge_heads(heads_p, Cf, out_channels):
    n = len(heads_p)
    Ctot = n * Cf
    Csum = int(sum(out_channels))
    w0 = jnp.concatenate([h['convs'][0]['w'] for h in heads_p], axis=1)
    b0 = jnp.concatenate([h['convs'][0]['b'] for h in heads_p], axis=0)
    mids = []
    for j in range(1, len(heads_p[0]['convs'])):
        wj = jnp.zeros((Ctot, Ctot), jnp.float32)
        bj = []
        for i, h in enumerate(heads_p):
            wj = wj.at[i * Cf:(i + 1) * Cf, i * Cf:(i + 1) * Cf].set(h['convs'][j]['w'])
            bj.append(h['convs'][j]['b'])
        mids.append((wj, jnp.concatenate(bj, axis=0)))
    wfin = jnp.zeros((Ctot, Csum), jnp.float32)
    off = 0
    for i, (h, oc) in enumerate(zip(heads_p, out_channels)):
        wfin = wfin.at[i * Cf:(i + 1) * Cf, off:off + oc].set(h['final']['w'])
        off += oc
    return w0, b0, mids, wfin, Ctot, Csum


def out_heads(h3, heads_p, out_channels):
    B, S, Cf = h3.shape
    w0, b0, mids, wfin, Ctot, Csum = _merge_heads(heads_p, Cf, out_channels)
    args = [h3, w0.astype(jnp.bfloat16), b0.reshape(1, Ctot).astype(jnp.float32)]
    in_specs = [pl.BlockSpec((None, S, Cf), lambda b: (b, 0, 0)),
                pl.BlockSpec((Cf, Ctot), lambda b: (0, 0)),
                pl.BlockSpec((1, Ctot), lambda b: (0, 0))]
    for (wj, bj) in mids:
        args += [wj.astype(jnp.bfloat16), bj.reshape(1, Ctot).astype(jnp.float32)]
        in_specs += [pl.BlockSpec((Ctot, Ctot), lambda b: (0, 0)),
                     pl.BlockSpec((1, Ctot), lambda b: (0, 0))]
    args.append(wfin.astype(jnp.bfloat16))
    in_specs.append(pl.BlockSpec((Ctot, Csum), lambda b: (0, 0)))
    return pl.pallas_call(
        functools.partial(_head_kernel, n_mid=len(mids)),
        out_shape=jax.ShapeDtypeStruct((B, S, Csum), jnp.float32),
        grid=(B,),
        in_specs=in_specs,
        out_specs=pl.BlockSpec((None, S, Csum), lambda b: (b, 0, 0)),
        compiler_params=_cparams(("parallel",)),
    )(*args)


# ----------------------------------------------------------------------------
# Nearest-neighbour upsample helper: 2x D/H is fused into the next conv;
# W (and any non-2x ratio) is replicated on the (smaller) host tensor.
# TODO(synk): fuse the W-axis replication into the conv scratch fill as well.
# ----------------------------------------------------------------------------
def prepare_upsample(x, out_size):
    B, D, H, W, C = x.shape
    Do_, Ho_, Wo_ = (int(v) for v in out_size)
    if Wo_ != W:
        x = x[:, :, :, np.asarray((np.arange(Wo_) * W) // Wo_), :]
    rd = rh = 1
    if Do_ == 2 * D:
        rd = 2
    elif Do_ != D:
        x = x[:, np.asarray((np.arange(Do_) * D) // Do_)]
    if Ho_ == 2 * H:
        rh = 2
    elif Ho_ != H:
        x = x[:, :, np.asarray((np.arange(Ho_) * H) // Ho_)]
    return x, rd, rh


# ----------------------------------------------------------------------------
# Architecture bookkeeping (mirrors vae_v3.__init__ size logic)
# ----------------------------------------------------------------------------
def build_arch(cfg):
    in_size = np.array(cfg['in_size'])
    out_size = np.array(cfg['out_size'])
    channel_mult = np.array(cfg['channel_mult'])
    up_size = []
    for i in range(len(channel_mult)):
        up_size.append(out_size.copy())
        ds = 2 ** i
        if ds in cfg['z_down']:
            in_size = np.ceil(in_size / 2).astype(int)
        else:
            in_size = np.ceil(in_size / np.array([1, 2, 2])).astype(int)
        if ds in cfg['z_up']:
            out_size = np.ceil(out_size / 2).astype(int)
        else:
            out_size = np.ceil(out_size / np.array([1, 2, 2])).astype(int)
    up_size = up_size[::-1]
    down_ch = cfg['model_channels'] * channel_mult
    up_ch = np.flip(down_ch, axis=0)[:len(up_size) + 1]
    return down_ch, up_ch, up_size


# ----------------------------------------------------------------------------
# Parameter init (deterministic, in-script). 3x3x3 conv weights stored
# pre-transposed as (27, Cin, Cout); 1x1x1 as (Cin, Cout).
# ----------------------------------------------------------------------------
def _init_conv3(key, cout, cin):
    wk, bk = jax.random.split(key)
    return {'w': jax.random.normal(wk, (27, cin, cout), jnp.float32) / np.sqrt(cin * 27),
            'b': 0.01 * jax.random.normal(bk, (cout,), jnp.float32)}


def _init_pw(key, cout, cin, bias=True):
    wk, bk = jax.random.split(key)
    p = {'w': jax.random.normal(wk, (cin, cout), jnp.float32) / np.sqrt(cin)}
    if bias:
        p['b'] = 0.01 * jax.random.normal(bk, (cout,), jnp.float32)
    return p


def _init_gn(c):
    return {'g': jnp.ones((c,), jnp.float32), 'b': jnp.zeros((c,), jnp.float32)}


def _init_res(key, c):
    k1, k2 = jax.random.split(key)
    return {'n1': _init_gn(c), 'c1': _init_conv3(k1, c, c),
            'n2': _init_gn(c), 'c2': _init_conv3(k2, c, c)}


def _init_attn(key, c):
    k1, k2 = jax.random.split(key)
    return {'n': _init_gn(c), 'qkv': _init_pw(k1, 3 * c, c), 'proj': _init_pw(k2, c, c)}


def init_params(key, cfg):
    down_ch, up_ch, up_size = build_arch(cfg)
    up_blocks, down_blocks = cfg['num_res_blocks']
    attn_res = cfg['attention_resolutions']
    latent = cfg['latent_channels']
    kit = iter(jax.random.split(key, 512))

    params = {'inp': _init_conv3(next(kit), cfg['model_channels'], cfg['in_channels'])}

    enc = []
    ds = 1
    for level in range(len(down_ch) - 1):
        in_ch, out_ch = int(down_ch[level]), int(down_ch[level + 1])
        blocks = []
        for n in range(down_blocks):
            blk = {'res': _init_res(next(kit), in_ch)}
            if ds in attn_res and n < up_blocks - 1:
                blk['attn'] = _init_attn(next(kit), in_ch)
            blocks.append(blk)
        enc.append({'blocks': blocks, 'down': _init_conv3(next(kit), out_ch, in_ch)})
        ds *= 2
    params['enc'] = enc

    last_ch = int(down_ch[-1])
    params['noise_enc'] = _init_pw(next(kit), 2 * latent, last_ch)
    params['noise_dec'] = _init_pw(next(kit), last_ch, latent)

    dec = []
    n_dec = min(len(up_ch) - 1, len(up_size) - 1)
    for level in range(n_dec):
        in_ch, out_ch = int(up_ch[level]), int(up_ch[level + 1])
        lvl = {'up': _init_conv3(next(kit), out_ch, in_ch)}
        blocks = []
        for n in range(up_blocks):
            blk = {'res': _init_res(next(kit), out_ch)}
            blk['attn'] = _init_attn(next(kit), out_ch)   # used only when gated on
            blocks.append(blk)
        lvl['blocks'] = blocks
        dec.append(lvl)
    params['dec'] = dec

    final_ch = int(up_ch[n_dec])
    outs = []
    for ch in cfg['out_channels']:
        outs.append({'convs': [_init_pw(next(kit), final_ch, final_ch)
                               for _ in range(cfg['out_conv_blocks'])],
                     'final': _init_pw(next(kit), ch, final_ch, bias=False)})
    params['out'] = outs
    return params


# ----------------------------------------------------------------------------
# Forward pass (channels-last, bf16 activations)
# ----------------------------------------------------------------------------
def make_forward(cfg):
    down_ch, up_ch, up_size = build_arch(cfg)
    up_blocks, down_blocks = cfg['num_res_blocks']
    attn_res = cfg['attention_resolutions']
    heads = cfg['num_heads']
    latent = cfg['latent_channels']

    def res_apply(x5, p):
        h = conv3(x5, p['c1']['w'], p['c1']['b'], gn=p['n1'], gn_silu=True)
        return conv3(h, p['c2']['w'], p['c2']['b'], gn=p['n2'], gn_silu=True,
                     resid=x5)

    def attn_apply(x5, p):
        B, D, H, W, C = x5.shape
        return attn_block(x5.reshape(B, D * H * W, C), p, heads).reshape(x5.shape)

    def forward(params, x, key):
        # NCDHW -> channels-last bf16
        h = jnp.transpose(x, (0, 2, 3, 4, 1)).astype(jnp.bfloat16)

        # ---------------- encode ----------------
        h = conv3(h, params['inp']['w'], params['inp']['b'])
        ds = 1
        for level in range(len(down_ch) - 1):
            lp = params['enc'][level]
            for n in range(down_blocks):
                bp = lp['blocks'][n]
                h = res_apply(h, bp['res'])
                if ds in attn_res and n < up_blocks - 1:
                    h = attn_apply(h, bp['attn'])
            stride = (2, 2, 2) if ds in cfg['z_down'] else (1, 2, 2)
            h = conv3(h, lp['down']['w'], lp['down']['b'], stride=stride)
            ds *= 2

        B, Dz, Hz, Wz, Cz = h.shape
        Sz = Dz * Hz * Wz
        eps = jax.random.normal(key, (B, Sz, latent), jnp.float32)
        mu3, lv3, h3 = latent_sample_decode(h.reshape(B, Sz, Cz), eps,
                                            params['noise_enc'], params['noise_dec'])
        h = h3.reshape(B, Dz, Hz, Wz, Cz)

        # ---------------- decode ----------------
        n_dec = min(len(up_ch) - 1, len(up_size) - 1)
        for level in range(n_dec):
            ds //= 2
            lp = params['dec'][level]
            out_sz = tuple(int(v) for v in up_size[level + 1])
            hu, rd, rh = prepare_upsample(h, out_sz)
            h = conv3(hu, lp['up']['w'], lp['up']['b'], up=(rd, rh))
            for n in range(up_blocks):
                bp = lp['blocks'][n]
                h = res_apply(h, bp['res'])
                if ds in attn_res and n < up_blocks - 1:
                    h = attn_apply(h, bp['attn'])

        # ---------------- merged output heads ----------------
        Bo, Do_, Ho_, Wo_, Cf = h.shape
        So = Do_ * Ho_ * Wo_
        y3 = out_heads(h.reshape(Bo, So, Cf), params['out'], cfg['out_channels'])
        y = jnp.transpose(y3.reshape(Bo, Do_, Ho_, Wo_, -1), (0, 4, 1, 2, 3))

        mu = jnp.transpose(mu3.reshape(B, Dz, Hz, Wz, latent), (0, 4, 1, 2, 3))
        logvar = jnp.transpose(lv3.reshape(B, Dz, Hz, Wz, latent), (0, 4, 1, 2, 3))
        return y, mu, logvar

    return forward


# ----------------------------------------------------------------------------
# Reference helpers for the conv sanity checks
# ----------------------------------------------------------------------------
def _ref_conv(x, w_taps, b, stride):
    return jax.lax.conv_general_dilated(
        x, w_taps.reshape(3, 3, 3, x.shape[-1], -1), window_strides=stride,
        padding=((1, 1), (1, 1), (1, 1)),
        dimension_numbers=('NDHWC', 'DHWIO', 'NDHWC')) + b


def _ref_gn_silu(x, gamma, beta, groups=32, eps=1e-5):
    B, D, H, W, C = x.shape
    xg = x.reshape(B, D, H, W, groups, C // groups)
    mean = xg.mean(axis=(1, 2, 3, 5), keepdims=True)
    var = xg.var(axis=(1, 2, 3, 5), keepdims=True)
    xn = ((xg - mean) / jnp.sqrt(var + eps)).reshape(B, D, H, W, C) * gamma + beta
    return xn * jax.nn.sigmoid(xn)


def _ref_upsample(x, out_size):
    B, D, H, W, C = x.shape
    Do_, Ho_, Wo_ = out_size
    x = x[:, (np.arange(Do_) * D) // Do_]
    x = x[:, :, (np.arange(Ho_) * H) // Ho_]
    return x[:, :, :, (np.arange(Wo_) * W) // Wo_]


# ----------------------------------------------------------------------------
# Main
# ----------------------------------------------------------------------------
if __name__ == "__main__":
    key = jax.random.PRNGKey(0)
    xkey, skey = jax.random.split(key)

    def _check(got, ref, name):
        err = float(jnp.max(jnp.abs(got - ref)))
        tol = 0.08 * float(jnp.max(jnp.abs(ref))) + 0.08   # bf16-operand tolerance
        assert err < tol, (name, err, tol)

    # --- sanity 1: stride-1 conv with fused GroupNorm+SiLU ---
    cx = jax.random.normal(jax.random.PRNGKey(1), (2, 4, 6, 8, 32), jnp.float32)
    cw = jax.random.normal(jax.random.PRNGKey(2), (27, 32, 32), jnp.float32) / np.sqrt(27 * 32)
    cb = 0.1 * jax.random.normal(jax.random.PRNGKey(3), (32,), jnp.float32)
    gma = 1.0 + 0.1 * jax.random.normal(jax.random.PRNGKey(4), (32,), jnp.float32)
    bta = 0.1 * jax.random.normal(jax.random.PRNGKey(5), (32,), jnp.float32)
    got = conv3(cx, cw, cb, gn={'g': gma, 'b': bta}, gn_silu=True, out_dtype=jnp.float32)
    ref = _ref_conv(_ref_gn_silu(cx, gma, bta), cw, cb, (1, 1, 1))
    _check(got, ref, "gn_silu_conv")

    # --- sanity 2: strided (2,2,2) conv (odd sizes, covers z_down path) ---
    cx = jax.random.normal(jax.random.PRNGKey(6), (2, 5, 6, 7, 8), jnp.float32)
    cw = jax.random.normal(jax.random.PRNGKey(7), (27, 8, 16), jnp.float32) / np.sqrt(27 * 8)
    cb = 0.1 * jax.random.normal(jax.random.PRNGKey(8), (16,), jnp.float32)
    got = conv3(cx, cw, cb, stride=(2, 2, 2), out_dtype=jnp.float32)
    ref = _ref_conv(cx, cw, cb, (2, 2, 2))
    _check(got, ref, "strided_conv")

    # --- sanity 3: nearest-upsample fused into the conv ---
    cx = jax.random.normal(jax.random.PRNGKey(9), (2, 3, 4, 4, 16), jnp.float32)
    cw = jax.random.normal(jax.random.PRNGKey(10), (27, 16, 32), jnp.float32) / np.sqrt(27 * 16)
    cb = 0.1 * jax.random.normal(jax.random.PRNGKey(11), (32,), jnp.float32)
    hu, rd, rh = prepare_upsample(cx, (6, 8, 8))
    got = conv3(hu, cw, cb, up=(rd, rh), out_dtype=jnp.float32)
    ref = _ref_conv(_ref_upsample(cx, (6, 8, 8)), cw, cb, (1, 1, 1))
    _check(got, ref, "upsample_conv")

    # --- full forward ---
    params = init_params(jax.random.PRNGKey(42), CFG)
    x = jax.random.normal(
        xkey, (2, CFG['in_channels']) + tuple(CFG['in_size']), jnp.float32)

    forward = jax.jit(make_forward(CFG))
    y, mu, logvar = forward(params, x, skey)
    jax.block_until_ready((y, mu, logvar))

    assert y.shape == (2, sum(CFG['out_channels'])) + tuple(CFG['out_size']), y.shape
    assert mu.shape == (2, CFG['latent_channels'], 4, 4, 4), mu.shape
    assert logvar.shape == mu.shape
    assert bool(jnp.all(jnp.isfinite(y)))
    assert bool(jnp.all(jnp.isfinite(mu))) and bool(jnp.all(jnp.isfinite(logvar)))

    print("KERNEL_OK")
</pallas_src>

<mosaic_0001>
module attributes {stable_mosaic.version = 11 : i64} {
  func.func @_conv3_kernel(%arg0: i32, %arg1: i32, %arg2: memref<1x24x8x32xbf16, #tpu.memory_space<vmem>>, %arg3: memref<864x32xbf16, #tpu.memory_space<vmem>>, %arg4: memref<1x32xf32, #tpu.memory_space<vmem>>, %arg5: memref<1x32xf32, #tpu.memory_space<vmem>>, %arg6: memref<1x32xf32, #tpu.memory_space<vmem>>, %arg7: memref<32x32xf32, #tpu.memory_space<vmem>>, %arg8: memref<1x1x48x32xf32, #tpu.memory_space<vmem>>, %arg9: memref<48x10x32xbf16, #tpu.memory_space<vmem>>) attributes {dimension_semantics = [#tpu.dimension_semantics<parallel>, #tpu.dimension_semantics<arbitrary>], iteration_bounds = array<i64: 2, 4>, scalar_prefetch = 0 : i64, scratch_operands = 1 : i64, tpu.core_type = #tpu.core_type<tc>, window_params = [{transform_indices = @transform_0, window_bounds = array<i64: 1, 24, 8, 32>}, {pipeline_mode = #tpu.pipeline_mode<synchronous>, transform_indices = @transform_1, window_bounds = array<i64: 864, 32>}, {pipeline_mode = #tpu.pipeline_mode<synchronous>, transform_indices = @transform_2, window_bounds = array<i64: 1, 32>}, {pipeline_mode = #tpu.pipeline_mode<synchronous>, transform_indices = @transform_3, window_bounds = array<i64: 1, 32>}, {pipeline_mode = #tpu.pipeline_mode<synchronous>, transform_indices = @transform_4, window_bounds = array<i64: 1, 32>}, {pipeline_mode = #tpu.pipeline_mode<synchronous>, transform_indices = @transform_5, window_bounds = array<i64: 32, 32>}, {transform_indices = @transform_6, window_bounds = array<i64: 1, 1, 48, 32>}]} {
    %c0_i32 = arith.constant 0 : i32
    %0 = arith.cmpi eq, %arg1, %c0_i32 : i32
    %1 = arith.extui %0 : i1 to i32
    %c0_i32_0 = arith.constant 0 : i32
    %2 = arith.cmpi ne, %1, %c0_i32_0 : i32
    scf.if %2 {
      %cst_561 = arith.constant 0.000000e+00 : bf16
      %762 = vector.broadcast %cst_561 : bf16 to vector<48x10x32xbf16>
      %c0_562 = arith.constant 0 : index
      %c0_563 = arith.constant 0 : index
      %c0_564 = arith.constant 0 : index
      %763 = vector.load %arg9[%c0_562, %c0_563, %c0_564] : memref<48x10x32xbf16, #tpu.memory_space<vmem>>, vector<48x10x32xbf16>
      tpu.vector_store %arg9[%c0_562, %c0_563, %c0_564], %762 {strides = array<i32>} : memref<48x10x32xbf16, #tpu.memory_space<vmem>>, vector<48x10x32xbf16>,
      %c0_565 = arith.constant 0 : index
      %c0_566 = arith.constant 0 : index
      %c0_567 = arith.constant 0 : index
      %c0_568 = arith.constant 0 : index
      %764 = vector.load %arg2[%c0_565, %c0_566, %c0_567, %c0_568] : memref<1x24x8x32xbf16, #tpu.memory_space<vmem>>, vector<1x24x8x32xbf16>
      %765 = vector.shape_cast %764 : vector<1x24x8x32xbf16> to vector<24x8x32xbf16>
      %766 = arith.extf %765 : vector<24x8x32xbf16> to vector<24x8x32xf32>
      %cst_569 = arith.constant dense<0.000000e+00> : vector<32xf32>
      %767 = vector.multi_reduction <add>, %766, %cst_569 [0, 1] : vector<24x8x32xf32> to vector<32xf32>
      %768 = vector.shape_cast %767 : vector<32xf32> to vector<1x1x32xf32>
      %769 = vector.shape_cast %768 : vector<1x1x32xf32> to vector<1x32xf32>
      %cst_570 = arith.constant 0.00520833349 : f32
      %770 = vector.broadcast %cst_570 : f32 to vector<1x32xf32>
      %771 = arith.mulf %769, %770 : vector<1x32xf32>
      %772 = arith.mulf %766, %766 : vector<24x8x32xf32>
      %cst_571 = arith.constant dense<0.000000e+00> : vector<32xf32>
      %773 = vector.multi_reduction <add>, %772, %cst_571 [0, 1] : vector<24x8x32xf32> to vector<32xf32>
      %774 = vector.shape_cast %773 : vector<32xf32> to vector<1x1x32xf32>
      %775 = vector.shape_cast %774 : vector<1x1x32xf32> to vector<1x32xf32>
      %cst_572 = arith.constant 0.00520833349 : f32
      %776 = vector.broadcast %cst_572 : f32 to vector<1x32xf32>
      %777 = arith.mulf %775, %776 : vector<1x32xf32>
      %778 = tpu.concatenate %771, %777 in 0 : vector<1x32xf32>, vector<1x32xf32> -> vector<2x32xf32>
      %c0_573 = arith.constant 0 : index
      %c0_574 = arith.constant 0 : index
      %779 = vector.load %arg7[%c0_573, %c0_574] : memref<32x32xf32, #tpu.memory_space<vmem>>, vector<32x32xf32>
      %cst_575 = arith.constant dense<0.000000e+00> : vector<2x32xf32>
      %780 = tpu.matmul %778, %779, %cst_575 {dimension_numbers = #tpu.dot_dimension_numbers<[1], [0], [0], [1], [0, 0, 1, 1], [], []>} : vector<2x32xf32>, vector<32x32xf32>, vector<2x32xf32> -> vector<2x32xf32>
      %781 = vector.extract_strided_slice %780 {offsets = [0, 0], sizes = [1, 32], strides = [1, 1]} : vector<2x32xf32> to vector<1x32xf32>
      %782 = vector.extract_strided_slice %780 {offsets = [1, 0], sizes = [1, 32], strides = [1, 1]} : vector<2x32xf32> to vector<1x32xf32>
      %783 = arith.mulf %781, %781 : vector<1x32xf32>
      %784 = arith.subf %782, %783 : vector<1x32xf32>
      %cst_576 = arith.constant 0.000000e+00 : f32
      %785 = vector.broadcast %cst_576 : f32 to vector<1x32xf32>
      %786 = arith.maximumf %784, %785 : vector<1x32xf32>
      %cst_577 = arith.constant 9.99999974E-6 : f32
      %787 = vector.broadcast %cst_577 : f32 to vector<1x32xf32>
      %788 = arith.addf %786, %787 : vector<1x32xf32>
      %789 = math.rsqrt %788 : vector<1x32xf32>
      %c0_578 = arith.constant 0 : index
      %c0_579 = arith.constant 0 : index
      %790 = vector.load %arg5[%c0_578, %c0_579] : memref<1x32xf32, #tpu.memory_space<vmem>>, vector<1x32xf32>
      %791 = arith.mulf %789, %790 : vector<1x32xf32>
      %c0_580 = arith.constant 0 : index
      %c0_581 = arith.constant 0 : index
      %792 = vector.load %arg6[%c0_580, %c0_581] : memref<1x32xf32, #tpu.memory_space<vmem>>, vector<1x32xf32>
      %793 = arith.mulf %781, %791 : vector<1x32xf32>
      %794 = arith.subf %792, %793 : vector<1x32xf32>
      %c0_582 = arith.constant 0 : index
      %c0_583 = arith.constant 0 : index
      %c0_584 = arith.constant 0 : index
      %c0_585 = arith.constant 0 : index
      %795 = vector.load %arg2[%c0_582, %c0_583, %c0_584, %c0_585] : memref<1x24x8x32xbf16, #tpu.memory_space<vmem>>, vector<1x1x8x32xbf16>
      %796 = vector.shape_cast %795 : vector<1x1x8x32xbf16> to vector<8x32xbf16>
      %797 = arith.extf %796 : vector<8x32xbf16> to vector<8x32xf32>
      %798 = vector.broadcast %791 : vector<1x32xf32> to vector<8x32xf32>
      %799 = arith.mulf %797, %798 : vector<8x32xf32>
      %800 = vector.broadcast %794 : vector<1x32xf32> to vector<8x32xf32>
      %801 = arith.addf %799, %800 : vector<8x32xf32>
      %802 = arith.negf %801 : vector<8x32xf32>
      %803 = math.exp %802 : vector<8x32xf32>
      %cst_586 = arith.constant 1.000000e+00 : f32
      %804 = vector.broadcast %cst_586 : f32 to vector<8x32xf32>
      %805 = arith.addf %804, %803 : vector<8x32xf32>
      %806 = arith.divf %804, %805 : vector<8x32xf32>
      %807 = arith.mulf %801, %806 : vector<8x32xf32>
      %808 = arith.truncf %807 : vector<8x32xf32> to vector<8x32xbf16>
      %c9 = arith.constant 9 : index
      %c1_587 = arith.constant 1 : index
      %c0_588 = arith.constant 0 : index
      %809 = vector.load %arg9[%c9, %c1_587, %c0_588] : memref<48x10x32xbf16, #tpu.memory_space<vmem>>, vector<1x8x32xbf16>
      %810 = vector.shape_cast %809 : vector<1x8x32xbf16> to vector<8x32xbf16>
      %811 = vector.shape_cast %808 : vector<8x32xbf16> to vector<1x8x32xbf16>
      tpu.vector_store %arg9[%c9, %c1_587, %c0_588], %811 {strides = array<i32>} : memref<48x10x32xbf16, #tpu.memory_space<vmem>>, vector<1x8x32xbf16>,
      %c0_589 = arith.constant 0 : index
      %c1_590 = arith.constant 1 : index
      %c0_591 = arith.constant 0 : index
      %c0_592 = arith.constant 0 : index
      %812 = vector.load %arg2[%c0_589, %c1_590, %c0_591, %c0_592] : memref<1x24x8x32xbf16, #tpu.memory_space<vmem>>, vector<1x1x8x32xbf16>
      %813 = vector.shape_cast %812 : vector<1x1x8x32xbf16> to vector<8x32xbf16>
      %814 = arith.extf %813 : vector<8x32xbf16> to vector<8x32xf32>
      %815 = vector.broadcast %791 : vector<1x32xf32> to vector<8x32xf32>
      %816 = arith.mulf %814, %815 : vector<8x32xf32>
      %817 = vector.broadcast %794 : vector<1x32xf32> to vector<8x32xf32>
      %818 = arith.addf %816, %817 : vector<8x32xf32>
      %819 = arith.negf %818 : vector<8x32xf32>
      %820 = math.exp %819 : vector<8x32xf32>
      %cst_593 = arith.constant 1.000000e+00 : f32
      %821 = vector.broadcast %cst_593 : f32 to vector<8x32xf32>
      %822 = arith.addf %821, %820 : vector<8x32xf32>
      %823 = arith.divf %821, %822 : vector<8x32xf32>
      %824 = arith.mulf %818, %823 : vector<8x32xf32>
      %825 = arith.truncf %824 : vector<8x32xf32> to vector<8x32xbf16>
      %c10 = arith.constant 10 : index
      %c1_594 = arith.constant 1 : index
      %c0_595 = arith.constant 0 : index
      %826 = vector.load %arg9[%c10, %c1_594, %c0_595] : memref<48x10x32xbf16, #tpu.memory_space<vmem>>, vector<1x8x32xbf16>
      %827 = vector.shape_cast %826 : vector<1x8x32xbf16> to vector<8x32xbf16>
      %828 = vector.shape_cast %825 : vector<8x32xbf16> to vector<1x8x32xbf16>
      tpu.vector_store %arg9[%c10, %c1_594, %c0_595], %828 {strides = array<i32>} : memref<48x10x32xbf16, #tpu.memory_space<vmem>>, vector<1x8x32xbf16>,
      %c0_596 = arith.constant 0 : index
      %c2_597 = arith.constant 2 : index
      %c0_598 = arith.constant 0 : index
      %c0_599 = arith.constant 0 : index
      %829 = vector.load %arg2[%c0_596, %c2_597, %c0_598, %c0_599] : memref<1x24x8x32xbf16, #tpu.memory_space<vmem>>, vector<1x1x8x32xbf16>
      %830 = vector.shape_cast %829 : vector<1x1x8x32xbf16> to vector<8x32xbf16>
      %831 = arith.extf %830 : vector<8x32xbf16> to vector<8x32xf32>
      %832 = vector.broadcast %791 : vector<1x32xf32> to vector<8x32xf32>
      %833 = arith.mulf %831, %832 : vector<8x32xf32>
      %834 = vector.broadcast %794 : vector<1x32xf32> to vector<8x32xf32>
      %835 = arith.addf %833, %834 : vector<8x32xf32>
      %836 = arith.negf %835 : vector<8x32xf32>
      %837 = math.exp %836 : vector<8x32xf32>
      %cst_600 = arith.constant 1.000000e+00 : f32
      %838 = vector.broadcast %cst_600 : f32 to vector<8x32xf32>
      %839 = arith.addf %838, %837 : vector<8x32xf32>
      %840 = arith.divf %838, %839 : vector<8x32xf32>
      %841 = arith.mulf %835, %840 : vector<8x32xf32>
      %842 = arith.truncf %841 : vector<8x32xf32> to vector<8x32xbf16>
      %c11 = arith.constant 11 : index
      %c1_601 = arith.constant 1 : index
      %c0_602 = arith.constant 0 : index
      %843 = vector.load %arg9[%c11, %c1_601, %c0_602] : memref<48x10x32xbf16, #tpu.memory_space<vmem>>, vector<1x8x32xbf16>
      %844 = vector.shape_cast %843 : vector<1x8x32xbf16> to vector<8x32xbf16>
      %845 = vector.shape_cast %842 : vector<8x32xbf16> to vector<1x8x32xbf16>
      tpu.vector_store %arg9[%c11, %c1_601, %c0_602], %845 {strides = array<i32>} : memref<48x10x32xbf16, #tpu.memory_space<vmem>>, vector<1x8x32xbf16>,
      %c0_603 = arith.constant 0 : index
      %c3 = arith.constant 3 : index
      %c0_604 = arith.constant 0 : index
      %c0_605 = arith.constant 0 : index
      %846 = vector.load %arg2[%c0_603, %c3, %c0_604, %c0_605] : memref<1x24x8x32xbf16, #tpu.memory_space<vmem>>, vector<1x1x8x32xbf16>
      %847 = vector.shape_cast %846 : vector<1x1x8x32xbf16> to vector<8x32xbf16>
      %848 = arith.extf %847 : vector<8x32xbf16> to vector<8x32xf32>
      %849 = vector.broadcast %791 : vector<1x32xf32> to vector<8x32xf32>
      %850 = arith.mulf %848, %849 : vector<8x32xf32>
      %851 = vector.broadcast %794 : vector<1x32xf32> to vector<8x32xf32>
      %852 = arith.addf %850, %851 : vector<8x32xf32>
      %853 = arith.negf %852 : vector<8x32xf32>
      %854 = math.exp %853 : vector<8x32xf32>
      %cst_606 = arith.constant 1.000000e+00 : f32
      %855 = vector.broadcast %cst_606 : f32 to vector<8x32xf32>
      %856 = arith.addf %855, %854 : vector<8x32xf32>
      %857 = arith.divf %855, %856 : vector<8x32xf32>
      %858 = arith.mulf %852, %857 : vector<8x32xf32>
      %859 = arith.truncf %858 : vector<8x32xf32> to vector<8x32xbf16>
      %c12 = arith.constant 12 : index
      %c1_607 = arith.constant 1 : index
      %c0_608 = arith.constant 0 : index
      %860 = vector.load %arg9[%c12, %c1_607, %c0_608] : memref<48x10x32xbf16, #tpu.memory_space<vmem>>, vector<1x8x32xbf16>
      %861 = vector.shape_cast %860 : vector<1x8x32xbf16> to vector<8x32xbf16>
      %862 = vector.shape_cast %859 : vector<8x32xbf16> to vector<1x8x32xbf16>
      tpu.vector_store %arg9[%c12, %c1_607, %c0_608], %862 {strides = array<i32>} : memref<48x10x32xbf16, #tpu.memory_space<vmem>>, vector<1x8x32xbf16>,
      %c0_609 = arith.constant 0 : index
      %c4 = arith.constant 4 : index
      %c0_610 = arith.constant 0 : index
      %c0_611 = arith.constant 0 : index
      %863 = vector.load %arg2[%c0_609, %c4, %c0_610, %c0_611] : memref<1x24x8x32xbf16, #tpu.memory_space<vmem>>, vector<1x1x8x32xbf16>
      %864 = vector.shape_cast %863 : vector<1x1x8x32xbf16> to vector<8x32xbf16>
      %865 = arith.extf %864 : vector<8x32xbf16> to vector<8x32xf32>
      %866 = vector.broadcast %791 : vector<1x32xf32> to vector<8x32xf32>
      %867 = arith.mulf %865, %866 : vector<8x32xf32>
      %868 = vector.broadcast %794 : vector<1x32xf32> to vector<8x32xf32>
      %869 = arith.addf %867, %868 : vector<8x32xf32>
      %870 = arith.negf %869 : vector<8x32xf32>
      %871 = math.exp %870 : vector<8x32xf32>
      %cst_612 = arith.constant 1.000000e+00 : f32
      %872 = vector.broadcast %cst_612 : f32 to vector<8x32xf32>
      %873 = arith.addf %872, %871 : vector<8x32xf32>
      %874 = arith.divf %872, %873 : vector<8x32xf32>
      %875 = arith.mulf %869, %874 : vector<8x32xf32>
      %876 = arith.truncf %875 : vector<8x32xf32> to vector<8x32xbf16>
      %c13 = arith.constant 13 : index
      %c1_613 = arith.constant 1 : index
      %c0_614 = arith.constant 0 : index
      %877 = vector.load %arg9[%c13, %c1_613, %c0_614] : memref<48x10x32xbf16, #tpu.memory_space<vmem>>, vector<1x8x32xbf16>
      %878 = vector.shape_cast %877 : vector<1x8x32xbf16> to vector<8x32xbf16>
      %879 = vector.shape_cast %876 : vector<8x32xbf16> to vector<1x8x32xbf16>
      tpu.vector_store %arg9[%c13, %c1_613, %c0_614], %879 {strides = array<i32>} : memref<48x10x32xbf16, #tpu.memory_space<vmem>>, vector<1x8x32xbf16>,
      %c0_615 = arith.constant 0 : index
      %c5 = arith.constant 5 : index
      %c0_616 = arith.constant 0 : index
      %c0_617 = arith.constant 0 : index
      %880 = vector.load %arg2[%c0_615, %c5, %c0_616, %c0_617] : memref<1x24x8x32xbf16, #tpu.memory_space<vmem>>, vector<1x1x8x32xbf16>
      %881 = vector.shape_cast %880 : vector<1x1x8x32xbf16> to vector<8x32xbf16>
      %882 = arith.extf %881 : vector<8x32xbf16> to vector<8x32xf32>
      %883 = vector.broadcast %791 : vector<1x32xf32> to vector<8x32xf32>
      %884 = arith.mulf %882, %883 : vector<8x32xf32>
      %885 = vector.broadcast %794 : vector<1x32xf32> to vector<8x32xf32>
      %886 = arith.addf %884, %885 : vector<8x32xf32>
      %887 = arith.negf %886 : vector<8x32xf32>
      %888 = math.exp %887 : vector<8x32xf32>
      %cst_618 = arith.constant 1.000000e+00 : f32
      %889 = vector.broadcast %cst_618 : f32 to vector<8x32xf32>
      %890 = arith.addf %889, %888 : vector<8x32xf32>
      %891 = arith.divf %889, %890 : vector<8x32xf32>
      %892 = arith.mulf %886, %891 : vector<8x32xf32>
      %893 = arith.truncf %892 : vector<8x32xf32> to vector<8x32xbf16>
      %c14 = arith.constant 14 : index
      %c1_619 = arith.constant 1 : index
      %c0_620 = arith.constant 0 : index
      %894 = vector.load %arg9[%c14, %c1_619, %c0_620] : memref<48x10x32xbf16, #tpu.memory_space<vmem>>, vector<1x8x32xbf16>
      %895 = vector.shape_cast %894 : vector<1x8x32xbf16> to vector<8x32xbf16>
      %896 = vector.shape_cast %893 : vector<8x32xbf16> to vector<1x8x32xbf16>
      tpu.vector_store %arg9[%c14, %c1_619, %c0_620], %896 {strides = array<i32>} : memref<48x10x32xbf16, #tpu.memory_space<vmem>>, vector<1x8x32xbf16>,
      %c0_621 = arith.constant 0 : index
      %c6 = arith.constant 6 : index
      %c0_622 = arith.constant 0 : index
      %c0_623 = arith.constant 0 : index
      %897 = vector.load %arg2[%c0_621, %c6, %c0_622, %c0_623] : memref<1x24x8x32xbf16, #tpu.memory_space<vmem>>, vector<1x1x8x32xbf16>
      %898 = vector.shape_cast %897 : vector<1x1x8x32xbf16> to vector<8x32xbf16>
      %899 = arith.extf %898 : vector<8x32xbf16> to vector<8x32xf32>
      %900 = vector.broadcast %791 : vector<1x32xf32> to vector<8x32xf32>
      %901 = arith.mulf %899, %900 : vector<8x32xf32>
      %902 = vector.broadcast %794 : vector<1x32xf32> to vector<8x32xf32>
      %903 = arith.addf %901, %902 : vector<8x32xf32>
      %904 = arith.negf %903 : vector<8x32xf32>
      %905 = math.exp %904 : vector<8x32xf32>
      %cst_624 = arith.constant 1.000000e+00 : f32
      %906 = vector.broadcast %cst_624 : f32 to vector<8x32xf32>
      %907 = arith.addf %906, %905 : vector<8x32xf32>
      %908 = arith.divf %906, %907 : vector<8x32xf32>
      %909 = arith.mulf %903, %908 : vector<8x32xf32>
      %910 = arith.truncf %909 : vector<8x32xf32> to vector<8x32xbf16>
      %c17 = arith.constant 17 : index
      %c1_625 = arith.constant 1 : index
      %c0_626 = arith.constant 0 : index
      %911 = vector.load %arg9[%c17, %c1_625, %c0_626] : memref<48x10x32xbf16, #tpu.memory_space<vmem>>, vector<1x8x32xbf16>
      %912 = vector.shape_cast %911 : vector<1x8x32xbf16> to vector<8x32xbf16>
      %913 = vector.shape_cast %910 : vector<8x32xbf16> to vector<1x8x32xbf16>
      tpu.vector_store %arg9[%c17, %c1_625, %c0_626], %913 {strides = array<i32>} : memref<48x10x32xbf16, #tpu.memory_space<vmem>>, vector<1x8x32xbf16>,
      %c0_627 = arith.constant 0 : index
      %c7 = arith.constant 7 : index
      %c0_628 = arith.constant 0 : index
      %c0_629 = arith.constant 0 : index
      %914 = vector.load %arg2[%c0_627, %c7, %c0_628, %c0_629] : memref<1x24x8x32xbf16, #tpu.memory_space<vmem>>, vector<1x1x8x32xbf16>
      %915 = vector.shape_cast %914 : vector<1x1x8x32xbf16> to vector<8x32xbf16>
      %916 = arith.extf %915 : vector<8x32xbf16> to vector<8x32xf32>
      %917 = vector.broadcast %791 : vector<1x32xf32> to vector<8x32xf32>
      %918 = arith.mulf %916, %917 : vector<8x32xf32>
      %919 = vector.broadcast %794 : vector<1x32xf32> to vector<8x32xf32>
      %920 = arith.addf %918, %919 : vector<8x32xf32>
      %921 = arith.negf %920 : vector<8x32xf32>
      %922 = math.exp %921 : vector<8x32xf32>
      %cst_630 = arith.constant 1.000000e+00 : f32
      %923 = vector.broadcast %cst_630 : f32 to vector<8x32xf32>
      %924 = arith.addf %923, %922 : vector<8x32xf32>
      %925 = arith.divf %923, %924 : vector<8x32xf32>
      %926 = arith.mulf %920, %925 : vector<8x32xf32>
      %927 = arith.truncf %926 : vector<8x32xf32> to vector<8x32xbf16>
      %c18 = arith.constant 18 : index
      %c1_631 = arith.constant 1 : index
      %c0_632 = arith.constant 0 : index
      %928 = vector.load %arg9[%c18, %c1_631, %c0_632] : memref<48x10x32xbf16, #tpu.memory_space<vmem>>, vector<1x8x32xbf16>
      %929 = vector.shape_cast %928 : vector<1x8x32xbf16> to vector<8x32xbf16>
      %930 = vector.shape_cast %927 : vector<8x32xbf16> to vector<1x8x32xbf16>
      tpu.vector_store %arg9[%c18, %c1_631, %c0_632], %930 {strides = array<i32>} : memref<48x10x32xbf16, #tpu.memory_space<vmem>>, vector<1x8x32xbf16>,
      %c0_633 = arith.constant 0 : index
      %c8_634 = arith.constant 8 : index
      %c0_635 = arith.constant 0 : index
      %c0_636 = arith.constant 0 : index
      %931 = vector.load %arg2[%c0_633, %c8_634, %c0_635, %c0_636] : memref<1x24x8x32xbf16, #tpu.memory_space<vmem>>, vector<1x1x8x32xbf16>
      %932 = vector.shape_cast %931 : vector<1x1x8x32xbf16> to vector<8x32xbf16>
      %933 = arith.extf %932 : vector<8x32xbf16> to vector<8x32xf32>
      %934 = vector.broadcast %791 : vector<1x32xf32> to vector<8x32xf32>
      %935 = arith.mulf %933, %934 : vector<8x32xf32>
      %936 = vector.broadcast %794 : vector<1x32xf32> to vector<8x32xf32>
      %937 = arith.addf %935, %936 : vector<8x32xf32>
      %938 = arith.negf %937 : vector<8x32xf32>
      %939 = math.exp %938 : vector<8x32xf32>
      %cst_637 = arith.constant 1.000000e+00 : f32
      %940 = vector.broadcast %cst_637 : f32 to vector<8x32xf32>
      %941 = arith.addf %940, %939 : vector<8x32xf32>
      %942 = arith.divf %940, %941 : vector<8x32xf32>
      %943 = arith.mulf %937, %942 : vector<8x32xf32>
      %944 = arith.truncf %943 : vector<8x32xf32> to vector<8x32xbf16>
      %c19 = arith.constant 19 : index
      %c1_638 = arith.constant 1 : index
      %c0_639 = arith.constant 0 : index
      %945 = vector.load %arg9[%c19, %c1_638, %c0_639] : memref<48x10x32xbf16, #tpu.memory_space<vmem>>, vector<1x8x32xbf16>
      %946 = vector.shape_cast %945 : vector<1x8x32xbf16> to vector<8x32xbf16>
      %947 = vector.shape_cast %944 : vector<8x32xbf16> to vector<1x8x32xbf16>
      tpu.vector_store %arg9[%c19, %c1_638, %c0_639], %947 {strides = array<i32>} : memref<48x10x32xbf16, #tpu.memory_space<vmem>>, vector<1x8x32xbf16>,
      %c0_640 = arith.constant 0 : index
      %c9_641 = arith.constant 9 : index
      %c0_642 = arith.constant 0 : index
      %c0_643 = arith.constant 0 : index
      %948 = vector.load %arg2[%c0_640, %c9_641, %c0_642, %c0_643] : memref<1x24x8x32xbf16, #tpu.memory_space<vmem>>, vector<1x1x8x32xbf16>
      %949 = vector.shape_cast %948 : vector<1x1x8x32xbf16> to vector<8x32xbf16>
      %950 = arith.extf %949 : vector<8x32xbf16> to vector<8x32xf32>
      %951 = vector.broadcast %791 : vector<1x32xf32> to vector<8x32xf32>
      %952 = arith.mulf %950, %951 : vector<8x32xf32>
      %953 = vector.broadcast %794 : vector<1x32xf32> to vector<8x32xf32>
      %954 = arith.addf %952, %953 : vector<8x32xf32>
      %955 = arith.negf %954 : vector<8x32xf32>
      %956 = math.exp %955 : vector<8x32xf32>
      %cst_644 = arith.constant 1.000000e+00 : f32
      %957 = vector.broadcast %cst_644 : f32 to vector<8x32xf32>
      %958 = arith.addf %957, %956 : vector<8x32xf32>
      %959 = arith.divf %957, %958 : vector<8x32xf32>
      %960 = arith.mulf %954, %959 : vector<8x32xf32>
      %961 = arith.truncf %960 : vector<8x32xf32> to vector<8x32xbf16>
      %c20 = arith.constant 20 : index
      %c1_645 = arith.constant 1 : index
      %c0_646 = arith.constant 0 : index
      %962 = vector.load %arg9[%c20, %c1_645, %c0_646] : memref<48x10x32xbf16, #tpu.memory_space<vmem>>, vector<1x8x32xbf16>
      %963 = vector.shape_cast %962 : vector<1x8x32xbf16> to vector<8x32xbf16>
      %964 = vector.shape_cast %961 : vector<8x32xbf16> to vector<1x8x32xbf16>
      tpu.vector_store %arg9[%c20, %c1_645, %c0_646], %964 {strides = array<i32>} : memref<48x10x32xbf16, #tpu.memory_space<vmem>>, vector<1x8x32xbf16>,
      %c0_647 = arith.constant 0 : index
      %c10_648 = arith.constant 10 : index
      %c0_649 = arith.constant 0 : index
      %c0_650 = arith.constant 0 : index
      %965 = vector.load %arg2[%c0_647, %c10_648, %c0_649, %c0_650] : memref<1x24x8x32xbf16, #tpu.memory_space<vmem>>, vector<1x1x8x32xbf16>
      %966 = vector.shape_cast %965 : vector<1x1x8x32xbf16> to vector<8x32xbf16>
      %967 = arith.extf %966 : vector<8x32xbf16> to vector<8x32xf32>
      %968 = vector.broadcast %791 : vector<1x32xf32> to vector<8x32xf32>
      %969 = arith.mulf %967, %968 : vector<8x32xf32>
      %970 = vector.broadcast %794 : vector<1x32xf32> to vector<8x32xf32>
      %971 = arith.addf %969, %970 : vector<8x32xf32>
      %972 = arith.negf %971 : vector<8x32xf32>
      %973 = math.exp %972 : vector<8x32xf32>
      %cst_651 = arith.constant 1.000000e+00 : f32
      %974 = vector.broadcast %cst_651 : f32 to vector<8x32xf32>
      %975 = arith.addf %974, %973 : vector<8x32xf32>
      %976 = arith.divf %974, %975 : vector<8x32xf32>
      %977 = arith.mulf %971, %976 : vector<8x32xf32>
      %978 = arith.truncf %977 : vector<8x32xf32> to vector<8x32xbf16>
      %c21 = arith.constant 21 : index
      %c1_652 = arith.constant 1 : index
      %c0_653 = arith.constant 0 : index
      %979 = vector.load %arg9[%c21, %c1_652, %c0_653] : memref<48x10x32xbf16, #tpu.memory_space<vmem>>, vector<1x8x32xbf16>
      %980 = vector.shape_cast %979 : vector<1x8x32xbf16> to vector<8x32xbf16>
      %981 = vector.shape_cast %978 : vector<8x32xbf16> to vector<1x8x32xbf16>
      tpu.vector_store %arg9[%c21, %c1_652, %c0_653], %981 {strides = array<i32>} : memref<48x10x32xbf16, #tpu.memory_space<vmem>>, vector<1x8x32xbf16>,
      %c0_654 = arith.constant 0 : index
      %c11_655 = arith.constant 11 : index
      %c0_656 = arith.constant 0 : index
      %c0_657 = arith.constant 0 : index
      %982 = vector.load %arg2[%c0_654, %c11_655, %c0_656, %c0_657] : memref<1x24x8x32xbf16, #tpu.memory_space<vmem>>, vector<1x1x8x32xbf16>
      %983 = vector.shape_cast %982 : vector<1x1x8x32xbf16> to vector<8x32xbf16>
      %984 = arith.extf %983 : vector<8x32xbf16> to vector<8x32xf32>
      %985 = vector.broadcast %791 : vector<1x32xf32> to vector<8x32xf32>
      %986 = arith.mulf %984, %985 : vector<8x32xf32>
      %987 = vector.broadcast %794 : vector<1x32xf32> to vector<8x32xf32>
      %988 = arith.addf %986, %987 : vector<8x32xf32>
      %989 = arith.negf %988 : vector<8x32xf32>
      %990 = math.exp %989 : vector<8x32xf32>
      %cst_658 = arith.constant 1.000000e+00 : f32
      %991 = vector.broadcast %cst_658 : f32 to vector<8x32xf32>
      %992 = arith.addf %991, %990 : vector<8x32xf32>
      %993 = arith.divf %991, %992 : vector<8x32xf32>
      %994 = arith.mulf %988, %993 : vector<8x32xf32>
      %995 = arith.truncf %994 : vector<8x32xf32> to vector<8x32xbf16>
      %c22 = arith.constant 22 : index
      %c1_659 = arith.constant 1 : index
      %c0_660 = arith.constant 0 : index
      %996 = vector.load %arg9[%c22, %c1_659, %c0_660] : memref<48x10x32xbf16, #tpu.memory_space<vmem>>, vector<1x8x32xbf16>
      %997 = vector.shape_cast %996 : vector<1x8x32xbf16> to vector<8x32xbf16>
      %998 = vector.shape_cast %995 : vector<8x32xbf16> to vector<1x8x32xbf16>
      tpu.vector_store %arg9[%c22, %c1_659, %c0_660], %998 {strides = array<i32>} : memref<48x10x32xbf16, #tpu.memory_space<vmem>>, vector<1x8x32xbf16>,
      %c0_661 = arith.constant 0 : index
      %c12_662 = arith.constant 12 : index
      %c0_663 = arith.constant 0 : index
      %c0_664 = arith.constant 0 : index
      %999 = vector.load %arg2[%c0_661, %c12_662, %c0_663, %c0_664] : memref<1x24x8x32xbf16, #tpu.memory_space<vmem>>, vector<1x1x8x32xbf16>
      %1000 = vector.shape_cast %999 : vector<1x1x8x32xbf16> to vector<8x32xbf16>
      %1001 = arith.extf %1000 : vector<8x32xbf16> to vector<8x32xf32>
      %1002 = vector.broadcast %791 : vector<1x32xf32> to vector<8x32xf32>
      %1003 = arith.mulf %1001, %1002 : vector<8x32xf32>
      %1004 = vector.broadcast %794 : vector<1x32xf32> to vector<8x32xf32>
      %1005 = arith.addf %1003, %1004 : vector<8x32xf32>
      %1006 = arith.negf %1005 : vector<8x32xf32>
      %1007 = math.exp %1006 : vector<8x32xf32>
      %cst_665 = arith.constant 1.000000e+00 : f32
      %1008 = vector.broadcast %cst_665 : f32 to vector<8x32xf32>
      %1009 = arith.addf %1008, %1007 : vector<8x32xf32>
      %1010 = arith.divf %1008, %1009 : vector<8x32xf32>
      %1011 = arith.mulf %1005, %1010 : vector<8x32xf32>
      %1012 = arith.truncf %1011 : vector<8x32xf32> to vector<8x32xbf16>
      %c25 = arith.constant 25 : index
      %c1_666 = arith.constant 1 : index
      %c0_667 = arith.constant 0 : index
      %1013 = vector.load %arg9[%c25, %c1_666, %c0_667] : memref<48x10x32xbf16, #tpu.memory_space<vmem>>, vector<1x8x32xbf16>
      %1014 = vector.shape_cast %1013 : vector<1x8x32xbf16> to vector<8x32xbf16>
      %1015 = vector.shape_cast %1012 : vector<8x32xbf16> to vector<1x8x32xbf16>
      tpu.vector_store %arg9[%c25, %c1_666, %c0_667], %1015 {strides = array<i32>} : memref<48x10x32xbf16, #tpu.memory_space<vmem>>, vector<1x8x32xbf16>,
      %c0_668 = arith.constant 0 : index
      %c13_669 = arith.constant 13 : index
      %c0_670 = arith.constant 0 : index
      %c0_671 = arith.constant 0 : index
      %1016 = vector.load %arg2[%c0_668, %c13_669, %c0_670, %c0_671] : memref<1x24x8x32xbf16, #tpu.memory_space<vmem>>, vector<1x1x8x32xbf16>
      %1017 = vector.shape_cast %1016 : vector<1x1x8x32xbf16> to vector<8x32xbf16>
      %1018 = arith.extf %1017 : vector<8x32xbf16> to vector<8x32xf32>
      %1019 = vector.broadcast %791 : vector<1x32xf32> to vector<8x32xf32>
      %1020 = arith.mulf %1018, %1019 : vector<8x32xf32>
      %1021 = vector.broadcast %794 : vector<1x32xf32> to vector<8x32xf32>
      %1022 = arith.addf %1020, %1021 : vector<8x32xf32>
      %1023 = arith.negf %1022 : vector<8x32xf32>
      %1024 = math.exp %1023 : vector<8x32xf32>
      %cst_672 = arith.constant 1.000000e+00 : f32
      %1025 = vector.broadcast %cst_672 : f32 to vector<8x32xf32>
      %1026 = arith.addf %1025, %1024 : vector<8x32xf32>
      %1027 = arith.divf %1025, %1026 : vector<8x32xf32>
      %1028 = arith.mulf %1022, %1027 : vector<8x32xf32>
      %1029 = arith.truncf %1028 : vector<8x32xf32> to vector<8x32xbf16>
      %c26 = arith.constant 26 : index
      %c1_673 = arith.constant 1 : index
      %c0_674 = arith.constant 0 : index
      %1030 = vector.load %arg9[%c26, %c1_673, %c0_674] : memref<48x10x32xbf16, #tpu.memory_space<vmem>>, vector<1x8x32xbf16>
      %1031 = vector.shape_cast %1030 : vector<1x8x32xbf16> to vector<8x32xbf16>
      %1032 = vector.shape_cast %1029 : vector<8x32xbf16> to vector<1x8x32xbf16>
      tpu.vector_store %arg9[%c26, %c1_673, %c0_674], %1032 {strides = array<i32>} : memref<48x10x32xbf16, #tpu.memory_space<vmem>>, vector<1x8x32xbf16>,
      %c0_675 = arith.constant 0 : index
      %c14_676 = arith.constant 14 : index
      %c0_677 = arith.constant 0 : index
      %c0_678 = arith.constant 0 : index
      %1033 = vector.load %arg2[%c0_675, %c14_676, %c0_677, %c0_678] : memref<1x24x8x32xbf16, #tpu.memory_space<vmem>>, vector<1x1x8x32xbf16>
      %1034 = vector.shape_cast %1033 : vector<1x1x8x32xbf16> to vector<8x32xbf16>
      %1035 = arith.extf %1034 : vector<8x32xbf16> to vector<8x32xf32>
      %1036 = vector.broadcast %791 : vector<1x32xf32> to vector<8x32xf32>
      %1037 = arith.mulf %1035, %1036 : vector<8x32xf32>
      %1038 = vector.broadcast %794 : vector<1x32xf32> to vector<8x32xf32>
      %1039 = arith.addf %1037, %1038 : vector<8x32xf32>
      %1040 = arith.negf %1039 : vector<8x32xf32>
      %1041 = math.exp %1040 : vector<8x32xf32>
      %cst_679 = arith.constant 1.000000e+00 : f32
      %1042 = vector.broadcast %cst_679 : f32 to vector<8x32xf32>
      %1043 = arith.addf %1042, %1041 : vector<8x32xf32>
      %1044 = arith.divf %1042, %1043 : vector<8x32xf32>
      %1045 = arith.mulf %1039, %1044 : vector<8x32xf32>
      %1046 = arith.truncf %1045 : vector<8x32xf32> to vector<8x32xbf16>
      %c27 = arith.constant 27 : index
      %c1_680 = arith.constant 1 : index
      %c0_681 = arith.constant 0 : index
      %1047 = vector.load %arg9[%c27, %c1_680, %c0_681] : memref<48x10x32xbf16, #tpu.memory_space<vmem>>, vector<1x8x32xbf16>
      %1048 = vector.shape_cast %1047 : vector<1x8x32xbf16> to vector<8x32xbf16>
      %1049 = vector.shape_cast %1046 : vector<8x32xbf16> to vector<1x8x32xbf16>
      tpu.vector_store %arg9[%c27, %c1_680, %c0_681], %1049 {strides = array<i32>} : memref<48x10x32xbf16, #tpu.memory_space<vmem>>, vector<1x8x32xbf16>,
      %c0_682 = arith.constant 0 : index
      %c15 = arith.constant 15 : index
      %c0_683 = arith.constant 0 : index
      %c0_684 = arith.constant 0 : index
      %1050 = vector.load %arg2[%c0_682, %c15, %c0_683, %c0_684] : memref<1x24x8x32xbf16, #tpu.memory_space<vmem>>, vector<1x1x8x32xbf16>
      %1051 = vector.shape_cast %1050 : vector<1x1x8x32xbf16> to vector<8x32xbf16>
      %1052 = arith.extf %1051 : vector<8x32xbf16> to vector<8x32xf32>
      %1053 = vector.broadcast %791 : vector<1x32xf32> to vector<8x32xf32>
      %1054 = arith.mulf %1052, %1053 : vector<8x32xf32>
      %1055 = vector.broadcast %794 : vector<1x32xf32> to vector<8x32xf32>
      %1056 = arith.addf %1054, %1055 : vector<8x32xf32>
      %1057 = arith.negf %1056 : vector<8x32xf32>
      %1058 = math.exp %1057 : vector<8x32xf32>
      %cst_685 = arith.constant 1.000000e+00 : f32
      %1059 = vector.broadcast %cst_685 : f32 to vector<8x32xf32>
      %1060 = arith.addf %1059, %1058 : vector<8x32xf32>
      %1061 = arith.divf %1059, %1060 : vector<8x32xf32>
      %1062 = arith.mulf %1056, %1061 : vector<8x32xf32>
      %1063 = arith.truncf %1062 : vector<8x32xf32> to vector<8x32xbf16>
      %c28 = arith.constant 28 : index
      %c1_686 = arith.constant 1 : index
      %c0_687 = arith.constant 0 : index
      %1064 = vector.load %arg9[%c28, %c1_686, %c0_687] : memref<48x10x32xbf16, #tpu.memory_space<vmem>>, vector<1x8x32xbf16>
      %1065 = vector.shape_cast %1064 : vector<1x8x32xbf16> to vector<8x32xbf16>
      %1066 = vector.shape_cast %1063 : vector<8x32xbf16> to vector<1x8x32xbf16>
      tpu.vector_store %arg9[%c28, %c1_686, %c0_687], %1066 {strides = array<i32>} : memref<48x10x32xbf16, #tpu.memory_space<vmem>>, vector<1x8x32xbf16>,
      %c0_688 = arith.constant 0 : index
      %c16_689 = arith.constant 16 : index
      %c0_690 = arith.constant 0 : index
      %c0_691 = arith.constant 0 : index
      %1067 = vector.load %arg2[%c0_688, %c16_689, %c0_690, %c0_691] : memref<1x24x8x32xbf16, #tpu.memory_space<vmem>>, vector<1x1x8x32xbf16>
      %1068 = vector.shape_cast %1067 : vector<1x1x8x32xbf16> to vector<8x32xbf16>
      %1069 = arith.extf %1068 : vector<8x32xbf16> to vector<8x32xf32>
      %1070 = vector.broadcast %791 : vector<1x32xf32> to vector<8x32xf32>
      %1071 = arith.mulf %1069, %1070 : vector<8x32xf32>
      %1072 = vector.broadcast %794 : vector<1x32xf32> to vector<8x32xf32>
      %1073 = arith.addf %1071, %1072 : vector<8x32xf32>
      %1074 = arith.negf %1073 : vector<8x32xf32>
      %1075 = math.exp %1074 : vector<8x32xf32>
      %cst_692 = arith.constant 1.000000e+00 : f32
      %1076 = vector.broadcast %cst_692 : f32 to vector<8x32xf32>
      %1077 = arith.addf %1076, %1075 : vector<8x32xf32>
      %1078 = arith.divf %1076, %1077 : vector<8x32xf32>
      %1079 = arith.mulf %1073, %1078 : vector<8x32xf32>
      %1080 = arith.truncf %1079 : vector<8x32xf32> to vector<8x32xbf16>
      %c29 = arith.constant 29 : index
      %c1_693 = arith.constant 1 : index
      %c0_694 = arith.constant 0 : index
      %1081 = vector.load %arg9[%c29, %c1_693, %c0_694] : memref<48x10x32xbf16, #tpu.memory_space<vmem>>, vector<1x8x32xbf16>
      %1082 = vector.shape_cast %1081 : vector<1x8x32xbf16> to vector<8x32xbf16>
      %1083 = vector.shape_cast %1080 : vector<8x32xbf16> to vector<1x8x32xbf16>
      tpu.vector_store %arg9[%c29, %c1_693, %c0_694], %1083 {strides = array<i32>} : memref<48x10x32xbf16, #tpu.memory_space<vmem>>, vector<1x8x32xbf16>,
      %c0_695 = arith.constant 0 : index
      %c17_696 = arith.constant 17 : index
      %c0_697 = arith.constant 0 : index
      %c0_698 = arith.constant 0 : index
      %1084 = vector.load %arg2[%c0_695, %c17_696, %c0_697, %c0_698] : memref<1x24x8x32xbf16, #tpu.memory_space<vmem>>, vector<1x1x8x32xbf16>
      %1085 = vector.shape_cast %1084 : vector<1x1x8x32xbf16> to vector<8x32xbf16>
      %1086 = arith.extf %1085 : vector<8x32xbf16> to vector<8x32xf32>
      %1087 = vector.broadcast %791 : vector<1x32xf32> to vector<8x32xf32>
      %1088 = arith.mulf %1086, %1087 : vector<8x32xf32>
      %1089 = vector.broadcast %794 : vector<1x32xf32> to vector<8x32xf32>
      %1090 = arith.addf %1088, %1089 : vector<8x32xf32>
      %1091 = arith.negf %1090 : vector<8x32xf32>
      %1092 = math.exp %1091 : vector<8x32xf32>
      %cst_699 = arith.constant 1.000000e+00 : f32
      %1093 = vector.broadcast %cst_699 : f32 to vector<8x32xf32>
      %1094 = arith.addf %1093, %1092 : vector<8x32xf32>
      %1095 = arith.divf %1093, %1094 : vector<8x32xf32>
      %1096 = arith.mulf %1090, %1095 : vector<8x32xf32>
      %1097 = arith.truncf %1096 : vector<8x32xf32> to vector<8x32xbf16>
      %c30 = arith.constant 30 : index
      %c1_700 = arith.constant 1 : index
      %c0_701 = arith.constant 0 : index
      %1098 = vector.load %arg9[%c30, %c1_700, %c0_701] : memref<48x10x32xbf16, #tpu.memory_space<vmem>>, vector<1x8x32xbf16>
      %1099 = vector.shape_cast %1098 : vector<1x8x32xbf16> to vector<8x32xbf16>
      %1100 = vector.shape_cast %1097 : vector<8x32xbf16> to vector<1x8x32xbf16>
      tpu.vector_store %arg9[%c30, %c1_700, %c0_701], %1100 {strides = array<i32>} : memref<48x10x32xbf16, #tpu.memory_space<vmem>>, vector<1x8x32xbf16>,
      %c0_702 = arith.constant 0 : index
      %c18_703 = arith.constant 18 : index
      %c0_704 = arith.constant 0 : index
      %c0_705 = arith.constant 0 : index
      %1101 = vector.load %arg2[%c0_702, %c18_703, %c0_704, %c0_705] : memref<1x24x8x32xbf16, #tpu.memory_space<vmem>>, vector<1x1x8x32xbf16>
      %1102 = vector.shape_cast %1101 : vector<1x1x8x32xbf16> to vector<8x32xbf16>
      %1103 = arith.extf %1102 : vector<8x32xbf16> to vector<8x32xf32>
      %1104 = vector.broadcast %791 : vector<1x32xf32> to vector<8x32xf32>
      %1105 = arith.mulf %1103, %1104 : vector<8x32xf32>
      %1106 = vector.broadcast %794 : vector<1x32xf32> to vector<8x32xf32>
      %1107 = arith.addf %1105, %1106 : vector<8x32xf32>
      %1108 = arith.negf %1107 : vector<8x32xf32>
      %1109 = math.exp %1108 : vector<8x32xf32>
      %cst_706 = arith.constant 1.000000e+00 : f32
      %1110 = vector.broadcast %cst_706 : f32 to vector<8x32xf32>
      %1111 = arith.addf %1110, %1109 : vector<8x32xf32>
      %1112 = arith.divf %1110, %1111 : vector<8x32xf32>
      %1113 = arith.mulf %1107, %1112 : vector<8x32xf32>
      %1114 = arith.truncf %1113 : vector<8x32xf32> to vector<8x32xbf16>
      %c33 = arith.constant 33 : index
      %c1_707 = arith.constant 1 : index
      %c0_708 = arith.constant 0 : index
      %1115 = vector.load %arg9[%c33, %c1_707, %c0_708] : memref<48x10x32xbf16, #tpu.memory_space<vmem>>, vector<1x8x32xbf16>
      %1116 = vector.shape_cast %1115 : vector<1x8x32xbf16> to vector<8x32xbf16>
      %1117 = vector.shape_cast %1114 : vector<8x32xbf16> to vector<1x8x32xbf16>
      tpu.vector_store %arg9[%c33, %c1_707, %c0_708], %1117 {strides = array<i32>} : memref<48x10x32xbf16, #tpu.memory_space<vmem>>, vector<1x8x32xbf16>,
      %c0_709 = arith.constant 0 : index
      %c19_710 = arith.constant 19 : index
      %c0_711 = arith.constant 0 : index
      %c0_712 = arith.constant 0 : index
      %1118 = vector.load %arg2[%c0_709, %c19_710, %c0_711, %c0_712] : memref<1x24x8x32xbf16, #tpu.memory_space<vmem>>, vector<1x1x8x32xbf16>
      %1119 = vector.shape_cast %1118 : vector<1x1x8x32xbf16> to vector<8x32xbf16>
      %1120 = arith.extf %1119 : vector<8x32xbf16> to vector<8x32xf32>
      %1121 = vector.broadcast %791 : vector<1x32xf32> to vector<8x32xf32>
      %1122 = arith.mulf %1120, %1121 : vector<8x32xf32>
      %1123 = vector.broadcast %794 : vector<1x32xf32> to vector<8x32xf32>
      %1124 = arith.addf %1122, %1123 : vector<8x32xf32>
      %1125 = arith.negf %1124 : vector<8x32xf32>
      %1126 = math.exp %1125 : vector<8x32xf32>
      %cst_713 = arith.constant 1.000000e+00 : f32
      %1127 = vector.broadcast %cst_713 : f32 to vector<8x32xf32>
      %1128 = arith.addf %1127, %1126 : vector<8x32xf32>
      %1129 = arith.divf %1127, %1128 : vector<8x32xf32>
      %1130 = arith.mulf %1124, %1129 : vector<8x32xf32>
      %1131 = arith.truncf %1130 : vector<8x32xf32> to vector<8x32xbf16>
      %c34 = arith.constant 34 : index
      %c1_714 = arith.constant 1 : index
      %c0_715 = arith.constant 0 : index
      %1132 = vector.load %arg9[%c34, %c1_714, %c0_715] : memref<48x10x32xbf16, #tpu.memory_space<vmem>>, vector<1x8x32xbf16>
      %1133 = vector.shape_cast %1132 : vector<1x8x32xbf16> to vector<8x32xbf16>
      %1134 = vector.shape_cast %1131 : vector<8x32xbf16> to vector<1x8x32xbf16>
      tpu.vector_store %arg9[%c34, %c1_714, %c0_715], %1134 {strides = array<i32>} : memref<48x10x32xbf16, #tpu.memory_space<vmem>>, vector<1x8x32xbf16>,
      %c0_716 = arith.constant 0 : index
      %c20_717 = arith.constant 20 : index
      %c0_718 = arith.constant 0 : index
      %c0_719 = arith.constant 0 : index
      %1135 = vector.load %arg2[%c0_716, %c20_717, %c0_718, %c0_719] : memref<1x24x8x32xbf16, #tpu.memory_space<vmem>>, vector<1x1x8x32xbf16>
      %1136 = vector.shape_cast %1135 : vector<1x1x8x32xbf16> to vector<8x32xbf16>
      %1137 = arith.extf %1136 : vector<8x32xbf16> to vector<8x32xf32>
      %1138 = vector.broadcast %791 : vector<1x32xf32> to vector<8x32xf32>
      %1139 = arith.mulf %1137, %1138 : vector<8x32xf32>
      %1140 = vector.broadcast %794 : vector<1x32xf32> to vector<8x32xf32>
      %1141 = arith.addf %1139, %1140 : vector<8x32xf32>
      %1142 = arith.negf %1141 : vector<8x32xf32>
      %1143 = math.exp %1142 : vector<8x32xf32>
      %cst_720 = arith.constant 1.000000e+00 : f32
      %1144 = vector.broadcast %cst_720 : f32 to vector<8x32xf32>
      %1145 = arith.addf %1144, %1143 : vector<8x32xf32>
      %1146 = arith.divf %1144, %1145 : vector<8x32xf32>
      %1147 = arith.mulf %1141, %1146 : vector<8x32xf32>
      %1148 = arith.truncf %1147 : vector<8x32xf32> to vector<8x32xbf16>
      %c35 = arith.constant 35 : index
      %c1_721 = arith.constant 1 : index
      %c0_722 = arith.constant 0 : index
      %1149 = vector.load %arg9[%c35, %c1_721, %c0_722] : memref<48x10x32xbf16, #tpu.memory_space<vmem>>, vector<1x8x32xbf16>
      %1150 = vector.shape_cast %1149 : vector<1x8x32xbf16> to vector<8x32xbf16>
      %1151 = vector.shape_cast %1148 : vector<8x32xbf16> to vector<1x8x32xbf16>
      tpu.vector_store %arg9[%c35, %c1_721, %c0_722], %1151 {strides = array<i32>} : memref<48x10x32xbf16, #tpu.memory_space<vmem>>, vector<1x8x32xbf16>,
      %c0_723 = arith.constant 0 : index
      %c21_724 = arith.constant 21 : index
      %c0_725 = arith.constant 0 : index
      %c0_726 = arith.constant 0 : index
      %1152 = vector.load %arg2[%c0_723, %c21_724, %c0_725, %c0_726] : memref<1x24x8x32xbf16, #tpu.memory_space<vmem>>, vector<1x1x8x32xbf16>
      %1153 = vector.shape_cast %1152 : vector<1x1x8x32xbf16> to vector<8x32xbf16>
      %1154 = arith.extf %1153 : vector<8x32xbf16> to vector<8x32xf32>
      %1155 = vector.broadcast %791 : vector<1x32xf32> to vector<8x32xf32>
      %1156 = arith.mulf %1154, %1155 : vector<8x32xf32>
      %1157 = vector.broadcast %794 : vector<1x32xf32> to vector<8x32xf32>
      %1158 = arith.addf %1156, %1157 : vector<8x32xf32>
      %1159 = arith.negf %1158 : vector<8x32xf32>
      %1160 = math.exp %1159 : vector<8x32xf32>
      %cst_727 = arith.constant 1.000000e+00 : f32
      %1161 = vector.broadcast %cst_727 : f32 to vector<8x32xf32>
      %1162 = arith.addf %1161, %1160 : vector<8x32xf32>
      %1163 = arith.divf %1161, %1162 : vector<8x32xf32>
      %1164 = arith.mulf %1158, %1163 : vector<8x32xf32>
      %1165 = arith.truncf %1164 : vector<8x32xf32> to vector<8x32xbf16>
      %c36 = arith.constant 36 : index
      %c1_728 = arith.constant 1 : index
      %c0_729 = arith.constant 0 : index
      %1166 = vector.load %arg9[%c36, %c1_728, %c0_729] : memref<48x10x32xbf16, #tpu.memory_space<vmem>>, vector<1x8x32xbf16>
      %1167 = vector.shape_cast %1166 : vector<1x8x32xbf16> to vector<8x32xbf16>
      %1168 = vector.shape_cast %1165 : vector<8x32xbf16> to vector<1x8x32xbf16>
      tpu.vector_store %arg9[%c36, %c1_728, %c0_729], %1168 {strides = array<i32>} : memref<48x10x32xbf16, #tpu.memory_space<vmem>>, vector<1x8x32xbf16>,
      %c0_730 = arith.constant 0 : index
      %c22_731 = arith.constant 22 : index
      %c0_732 = arith.constant 0 : index
      %c0_733 = arith.constant 0 : index
      %1169 = vector.load %arg2[%c0_730, %c22_731, %c0_732, %c0_733] : memref<1x24x8x32xbf16, #tpu.memory_space<vmem>>, vector<1x1x8x32xbf16>
      %1170 = vector.shape_cast %1169 : vector<1x1x8x32xbf16> to vector<8x32xbf16>
      %1171 = arith.extf %1170 : vector<8x32xbf16> to vector<8x32xf32>
      %1172 = vector.broadcast %791 : vector<1x32xf32> to vector<8x32xf32>
      %1173 = arith.mulf %1171, %1172 : vector<8x32xf32>
      %1174 = vector.broadcast %794 : vector<1x32xf32> to vector<8x32xf32>
      %1175 = arith.addf %1173, %1174 : vector<8x32xf32>
      %1176 = arith.negf %1175 : vector<8x32xf32>
      %1177 = math.exp %1176 : vector<8x32xf32>
      %cst_734 = arith.constant 1.000000e+00 : f32
      %1178 = vector.broadcast %cst_734 : f32 to vector<8x32xf32>
      %1179 = arith.addf %1178, %1177 : vector<8x32xf32>
      %1180 = arith.divf %1178, %1179 : vector<8x32xf32>
      %1181 = arith.mulf %1175, %1180 : vector<8x32xf32>
      %1182 = arith.truncf %1181 : vector<8x32xf32> to vector<8x32xbf16>
      %c37 = arith.constant 37 : index
      %c1_735 = arith.constant 1 : index
      %c0_736 = arith.constant 0 : index
      %1183 = vector.load %arg9[%c37, %c1_735, %c0_736] : memref<48x10x32xbf16, #tpu.memory_space<vmem>>, vector<1x8x32xbf16>
      %1184 = vector.shape_cast %1183 : vector<1x8x32xbf16> to vector<8x32xbf16>
      %1185 = vector.shape_cast %1182 : vector<8x32xbf16> to vector<1x8x32xbf16>
      tpu.vector_store %arg9[%c37, %c1_735, %c0_736], %1185 {strides = array<i32>} : memref<48x10x32xbf16, #tpu.memory_space<vmem>>, vector<1x8x32xbf16>,
      %c0_737 = arith.constant 0 : index
      %c23 = arith.constant 23 : index
      %c0_738 = arith.constant 0 : index
      %c0_739 = arith.constant 0 : index
      %1186 = vector.load %arg2[%c0_737, %c23, %c0_738, %c0_739] : memref<1x24x8x32xbf16, #tpu.memory_space<vmem>>, vector<1x1x8x32xbf16>
      %1187 = vector.shape_cast %1186 : vector<1x1x8x32xbf16> to vector<8x32xbf16>
      %1188 = arith.extf %1187 : vector<8x32xbf16> to vector<8x32xf32>
      %1189 = vector.broadcast %791 : vector<1x32xf32> to vector<8x32xf32>
      %1190 = arith.mulf %1188, %1189 : vector<8x32xf32>
      %1191 = vector.broadcast %794 : vector<1x32xf32> to vector<8x32xf32>
      %1192 = arith.addf %1190, %1191 : vector<8x32xf32>
      %1193 = arith.negf %1192 : vector<8x32xf32>
      %1194 = math.exp %1193 : vector<8x32xf32>
      %cst_740 = arith.constant 1.000000e+00 : f32
      %1195 = vector.broadcast %cst_740 : f32 to vector<8x32xf32>
      %1196 = arith.addf %1195, %1194 : vector<8x32xf32>
      %1197 = arith.divf %1195, %1196 : vector<8x32xf32>
      %1198 = arith.mulf %1192, %1197 : vector<8x32xf32>
      %1199 = arith.truncf %1198 : vector<8x32xf32> to vector<8x32xbf16>
      %c38 = arith.constant 38 : index
      %c1_741 = arith.constant 1 : index
      %c0_742 = arith.constant 0 : index
      %1200 = vector.load %arg9[%c38, %c1_741, %c0_742] : memref<48x10x32xbf16, #tpu.memory_space<vmem>>, vector<1x8x32xbf16>
      %1201 = vector.shape_cast %1200 : vector<1x8x32xbf16> to vector<8x32xbf16>
      %1202 = vector.shape_cast %1199 : vector<8x32xbf16> to vector<1x8x32xbf16>
      tpu.vector_store %arg9[%c38, %c1_741, %c0_742], %1202 {strides = array<i32>} : memref<48x10x32xbf16, #tpu.memory_space<vmem>>, vector<1x8x32xbf16>,
    } else {
    }
    %c1_i32 = arith.constant 1 : i32
    %3 = arith.muli %arg1, %c1_i32 : i32
    %c0 = arith.constant 0 : index
    %c0_1 = arith.constant 0 : index
    %4 = vector.load %arg3[%c0, %c0_1] : memref<864x32xbf16, #tpu.memory_space<vmem>>, vector<864x32xbf16>
    %c0_2 = arith.constant 0 : index
    %c0_3 = arith.constant 0 : index
    %5 = vector.load %arg4[%c0_2, %c0_3] : memref<1x32xf32, #tpu.memory_space<vmem>>, vector<1x32xf32>
    %c0_i32_4 = arith.constant 0 : i32
    %6 = arith.addi %3, %c0_i32_4 : i32
    %c8_i32 = arith.constant 8 : i32
    %7 = arith.muli %6, %c8_i32 : i32
    %c0_i32_5 = arith.constant 0 : i32
    %8 = arith.addi %7, %c0_i32_5 : i32
    %c0_i32_6 = arith.constant 0 : i32
    %9 = arith.addi %8, %c0_i32_6 : i32
    %10 = arith.index_cast %9 : i32 to index
    %c0_7 = arith.constant 0 : index
    %c0_8 = arith.constant 0 : index
    %11 = vector.load %arg9[%10, %c0_7, %c0_8] : memref<48x10x32xbf16, #tpu.memory_space<vmem>>, vector<1x8x32xbf16>
    %12 = vector.shape_cast %11 : vector<1x8x32xbf16> to vector<8x32xbf16>
    %13 = arith.index_cast %9 : i32 to index
    %c1 = arith.constant 1 : index
    %c0_9 = arith.constant 0 : index
    %14 = vector.load %arg9[%13, %c1, %c0_9] : memref<48x10x32xbf16, #tpu.memory_space<vmem>>, vector<1x8x32xbf16>
    %15 = vector.shape_cast %14 : vector<1x8x32xbf16> to vector<8x32xbf16>
    %16 = arith.index_cast %9 : i32 to index
    %c2 = arith.constant 2 : index
    %c0_10 = arith.constant 0 : index
    %17 = vector.load %arg9[%16, %c2, %c0_10] : memref<48x10x32xbf16, #tpu.memory_space<vmem>>, vector<1x8x32xbf16>
    %18 = vector.shape_cast %17 : vector<1x8x32xbf16> to vector<8x32xbf16>
    %c0_i32_11 = arith.constant 0 : i32
    %19 = arith.addi %3, %c0_i32_11 : i32
    %c8_i32_12 = arith.constant 8 : i32
    %20 = arith.muli %19, %c8_i32_12 : i32
    %c0_i32_13 = arith.constant 0 : i32
    %21 = arith.addi %20, %c0_i32_13 : i32
    %c1_i32_14 = arith.constant 1 : i32
    %22 = arith.addi %21, %c1_i32_14 : i32
    %23 = arith.index_cast %22 : i32 to index
    %c0_15 = arith.constant 0 : index
    %c0_16 = arith.constant 0 : index
    %24 = vector.load %arg9[%23, %c0_15, %c0_16] : memref<48x10x32xbf16, #tpu.memory_space<vmem>>, vector<1x8x32xbf16>
    %25 = vector.shape_cast %24 : vector<1x8x32xbf16> to vector<8x32xbf16>
    %26 = arith.index_cast %22 : i32 to index
    %c1_17 = arith.constant 1 : index
    %c0_18 = arith.constant 0 : index
    %27 = vector.load %arg9[%26, %c1_17, %c0_18] : memref<48x10x32xbf16, #tpu.memory_space<vmem>>, vector<1x8x32xbf16>
    %28 = vector.shape_cast %27 : vector<1x8x32xbf16> to vector<8x32xbf16>
    %29 = arith.index_cast %22 : i32 to index
    %c2_19 = arith.constant 2 : index
    %c0_20 = arith.constant 0 : index
    %30 = vector.load %arg9[%29, %c2_19, %c0_20] : memref<48x10x32xbf16, #tpu.memory_space<vmem>>, vector<1x8x32xbf16>
    %31 = vector.shape_cast %30 : vector<1x8x32xbf16> to vector<8x32xbf16>
    %c0_i32_21 = arith.constant 0 : i32
    %32 = arith.addi %3, %c0_i32_21 : i32
    %c8_i32_22 = arith.constant 8 : i32
    %33 = arith.muli %32, %c8_i32_22 : i32
    %c0_i32_23 = arith.constant 0 : i32
    %34 = arith.addi %33, %c0_i32_23 : i32
    %c2_i32 = arith.constant 2 : i32
    %35 = arith.addi %34, %c2_i32 : i32
    %36 = arith.index_cast %35 : i32 to index
    %c0_24 = arith.constant 0 : index
    %c0_25 = arith.constant 0 : index
    %37 = vector.load %arg9[%36, %c0_24, %c0_25] : memref<48x10x32xbf16, #tpu.memory_space<vmem>>, vector<1x8x32xbf16>
    %38 = vector.shape_cast %37 : vector<1x8x32xbf16> to vector<8x32xbf16>
    %39 = arith.index_cast %35 : i32 to index
    %c1_26 = arith.constant 1 : index
    %c0_27 = arith.constant 0 : index
    %40 = vector.load %arg9[%39, %c1_26, %c0_27] : memref<48x10x32xbf16, #tpu.memory_space<vmem>>, vector<1x8x32xbf16>
    %41 = vector.shape_cast %40 : vector<1x8x32xbf16> to vector<8x32xbf16>
    %42 = arith.index_cast %35 : i32 to index
    %c2_28 = arith.constant 2 : index
    %c0_29 = arith.constant 0 : index
    %43 = vector.load %arg9[%42, %c2_28, %c0_29] : memref<48x10x32xbf16, #tpu.memory_space<vmem>>, vector<1x8x32xbf16>
    %44 = vector.shape_cast %43 : vector<1x8x32xbf16> to vector<8x32xbf16>
    %c1_i32_30 = arith.constant 1 : i32
    %45 = arith.addi %3, %c1_i32_30 : i32
    %c8_i32_31 = arith.constant 8 : i32
    %46 = arith.muli %45, %c8_i32_31 : i32
    %c0_i32_32 = arith.constant 0 : i32
    %47 = arith.addi %46, %c0_i32_32 : i32
    %c0_i32_33 = arith.constant 0 : i32
    %48 = arith.addi %47, %c0_i32_33 : i32
    %49 = arith.index_cast %48 : i32 to index
    %c0_34 = arith.constant 0 : index
    %c0_35 = arith.constant 0 : index
    %50 = vector.load %arg9[%49, %c0_34, %c0_35] : memref<48x10x32xbf16, #tpu.memory_space<vmem>>, vector<1x8x32xbf16>
    %51 = vector.shape_cast %50 : vector<1x8x32xbf16> to vector<8x32xbf16>
    %52 = arith.index_cast %48 : i32 to index
    %c1_36 = arith.constant 1 : index
    %c0_37 = arith.constant 0 : index
    %53 = vector.load %arg9[%52, %c1_36, %c0_37] : memref<48x10x32xbf16, #tpu.memory_space<vmem>>, vector<1x8x32xbf16>
    %54 = vector.shape_cast %53 : vector<1x8x32xbf16> to vector<8x32xbf16>
    %55 = arith.index_cast %48 : i32 to index
    %c2_38 = arith.constant 2 : index
    %c0_39 = arith.constant 0 : index
    %56 = vector.load %arg9[%55, %c2_38, %c0_39] : memref<48x10x32xbf16, #tpu.memory_space<vmem>>, vector<1x8x32xbf16>
    %57 = vector.shape_cast %56 : vector<1x8x32xbf16> to vector<8x32xbf16>
    %c1_i32_40 = arith.constant 1 : i32
    %58 = arith.addi %3, %c1_i32_40 : i32
    %c8_i32_41 = arith.constant 8 : i32
    %59 = arith.muli %58, %c8_i32_41 : i32
    %c0_i32_42 = arith.constant 0 : i32
    %60 = arith.addi %59, %c0_i32_42 : i32
    %c1_i32_43 = arith.constant 1 : i32
    %61 = arith.addi %60, %c1_i32_43 : i32
    %62 = arith.index_cast %61 : i32 to index
    %c0_44 = arith.constant 0 : index
    %c0_45 = arith.constant 0 : index
    %63 = vector.load %arg9[%62, %c0_44, %c0_45] : memref<48x10x32xbf16, #tpu.memory_space<vmem>>, vector<1x8x32xbf16>
    %64 = vector.shape_cast %63 : vector<1x8x32xbf16> to vector<8x32xbf16>
    %65 = arith.index_cast %61 : i32 to index
    %c1_46 = arith.constant 1 : index
    %c0_47 = arith.constant 0 : index
    %66 = vector.load %arg9[%65, %c1_46, %c0_47] : memref<48x10x32xbf16, #tpu.memory_space<vmem>>, vector<1x8x32xbf16>
    %67 = vector.shape_cast %66 : vector<1x8x32xbf16> to vector<8x32xbf16>
    %68 = arith.index_cast %61 : i32 to index
    %c2_48 = arith.constant 2 : index
    %c0_49 = arith.constant 0 : index
    %69 = vector.load %arg9[%68, %c2_48, %c0_49] : memref<48x10x32xbf16, #tpu.memory_space<vmem>>, vector<1x8x32xbf16>
    %70 = vector.shape_cast %69 : vector<1x8x32xbf16> to vector<8x32xbf16>
    %c1_i32_50 = arith.constant 1 : i32
    %71 = arith.addi %3, %c1_i32_50 : i32
    %c8_i32_51 = arith.constant 8 : i32
    %72 = arith.muli %71, %c8_i32_51 : i32
    %c0_i32_52 = arith.constant 0 : i32
    %73 = arith.addi %72, %c0_i32_52 : i32
    %c2_i32_53 = arith.constant 2 : i32
    %74 = arith.addi %73, %c2_i32_53 : i32
    %75 = arith.index_cast %74 : i32 to index
    %c0_54 = arith.constant 0 : index
    %c0_55 = arith.constant 0 : index
    %76 = vector.load %arg9[%75, %c0_54, %c0_55] : memref<48x10x32xbf16, #tpu.memory_space<vmem>>, vector<1x8x32xbf16>
    %77 = vector.shape_cast %76 : vector<1x8x32xbf16> to vector<8x32xbf16>
    %78 = arith.index_cast %74 : i32 to index
    %c1_56 = arith.constant 1 : index
    %c0_57 = arith.constant 0 : index
    %79 = vector.load %arg9[%78, %c1_56, %c0_57] : memref<48x10x32xbf16, #tpu.memory_space<vmem>>, vector<1x8x32xbf16>
    %80 = vector.shape_cast %79 : vector<1x8x32xbf16> to vector<8x32xbf16>
    %81 = arith.index_cast %74 : i32 to index
    %c2_58 = arith.constant 2 : index
    %c0_59 = arith.constant 0 : index
    %82 = vector.load %arg9[%81, %c2_58, %c0_59] : memref<48x10x32xbf16, #tpu.memory_space<vmem>>, vector<1x8x32xbf16>
    %83 = vector.shape_cast %82 : vector<1x8x32xbf16> to vector<8x32xbf16>
    %c2_i32_60 = arith.constant 2 : i32
    %84 = arith.addi %3, %c2_i32_60 : i32
    %c8_i32_61 = arith.constant 8 : i32
    %85 = arith.muli %84, %c8_i32_61 : i32
    %c0_i32_62 = arith.constant 0 : i32
    %86 = arith.addi %85, %c0_i32_62 : i32
    %c0_i32_63 = arith.constant 0 : i32
    %87 = arith.addi %86, %c0_i32_63 : i32
    %88 = arith.index_cast %87 : i32 to index
    %c0_64 = arith.constant 0 : index
    %c0_65 = arith.constant 0 : index
    %89 = vector.load %arg9[%88, %c0_64, %c0_65] : memref<48x10x32xbf16, #tpu.memory_space<vmem>>, vector<1x8x32xbf16>
    %90 = vector.shape_cast %89 : vector<1x8x32xbf16> to vector<8x32xbf16>
    %91 = arith.index_cast %87 : i32 to index
    %c1_66 = arith.constant 1 : index
    %c0_67 = arith.constant 0 : index
    %92 = vector.load %arg9[%91, %c1_66, %c0_67] : memref<48x10x32xbf16, #tpu.memory_space<vmem>>, vector<1x8x32xbf16>
    %93 = vector.shape_cast %92 : vector<1x8x32xbf16> to vector<8x32xbf16>
    %94 = arith.index_cast %87 : i32 to index
    %c2_68 = arith.constant 2 : index
    %c0_69 = arith.constant 0 : index
    %95 = vector.load %arg9[%94, %c2_68, %c0_69] : memref<48x10x32xbf16, #tpu.memory_space<vmem>>, vector<1x8x32xbf16>
    %96 = vector.shape_cast %95 : vector<1x8x32xbf16> to vector<8x32xbf16>
    %c2_i32_70 = arith.constant 2 : i32
    %97 = arith.addi %3, %c2_i32_70 : i32
    %c8_i32_71 = arith.constant 8 : i32
    %98 = arith.muli %97, %c8_i32_71 : i32
    %c0_i32_72 = arith.constant 0 : i32
    %99 = arith.addi %98, %c0_i32_72 : i32
    %c1_i32_73 = arith.constant 1 : i32
    %100 = arith.addi %99, %c1_i32_73 : i32
    %101 = arith.index_cast %100 : i32 to index
    %c0_74 = arith.constant 0 : index
    %c0_75 = arith.constant 0 : index
    %102 = vector.load %arg9[%101, %c0_74, %c0_75] : memref<48x10x32xbf16, #tpu.memory_space<vmem>>, vector<1x8x32xbf16>
    %103 = vector.shape_cast %102 : vector<1x8x32xbf16> to vector<8x32xbf16>
    %104 = arith.index_cast %100 : i32 to index
    %c1_76 = arith.constant 1 : index
    %c0_77 = arith.constant 0 : index
    %105 = vector.load %arg9[%104, %c1_76, %c0_77] : memref<48x10x32xbf16, #tpu.memory_space<vmem>>, vector<1x8x32xbf16>
    %106 = vector.shape_cast %105 : vector<1x8x32xbf16> to vector<8x32xbf16>
    %107 = arith.index_cast %100 : i32 to index
    %c2_78 = arith.constant 2 : index
    %c0_79 = arith.constant 0 : index
    %108 = vector.load %arg9[%107, %c2_78, %c0_79] : memref<48x10x32xbf16, #tpu.memory_space<vmem>>, vector<1x8x32xbf16>
    %109 = vector.shape_cast %108 : vector<1x8x32xbf16> to vector<8x32xbf16>
    %c2_i32_80 = arith.constant 2 : i32
    %110 = arith.addi %3, %c2_i32_80 : i32
    %c8_i32_81 = arith.constant 8 : i32
    %111 = arith.muli %110, %c8_i32_81 : i32
    %c0_i32_82 = arith.constant 0 : i32
    %112 = arith.addi %111, %c0_i32_82 : i32
    %c2_i32_83 = arith.constant 2 : i32
    %113 = arith.addi %112, %c2_i32_83 : i32
    %114 = arith.index_cast %113 : i32 to index
    %c0_84 = arith.constant 0 : index
    %c0_85 = arith.constant 0 : index
    %115 = vector.load %arg9[%114, %c0_84, %c0_85] : memref<48x10x32xbf16, #tpu.memory_space<vmem>>, vector<1x8x32xbf16>
    %116 = vector.shape_cast %115 : vector<1x8x32xbf16> to vector<8x32xbf16>
    %117 = arith.index_cast %113 : i32 to index
    %c1_86 = arith.constant 1 : index
    %c0_87 = arith.constant 0 : index
    %118 = vector.load %arg9[%117, %c1_86, %c0_87] : memref<48x10x32xbf16, #tpu.memory_space<vmem>>, vector<1x8x32xbf16>
    %119 = vector.shape_cast %118 : vector<1x8x32xbf16> to vector<8x32xbf16>
    %120 = arith.index_cast %113 : i32 to index
    %c2_88 = arith.constant 2 : index
    %c0_89 = arith.constant 0 : index
    %121 = vector.load %arg9[%120, %c2_88, %c0_89] : memref<48x10x32xbf16, #tpu.memory_space<vmem>>, vector<1x8x32xbf16>
    %122 = vector.shape_cast %121 : vector<1x8x32xbf16> to vector<8x32xbf16>
    %123 = tpu.concatenate %12, %15, %18, %25, %28, %31, %38, %41, %44, %51, %54, %57, %64, %67, %70, %77 in 1 : vector<8x32xbf16>, vector<8x32xbf16>, vector<8x32xbf16>, vector<8x32xbf16>, vector<8x32xbf16>, vector<8x32xbf16>, vector<8x32xbf16>, vector<8x32xbf16>, vector<8x32xbf16>, vector<8x32xbf16>, vector<8x32xbf16>, vector<8x32xbf16>, vector<8x32xbf16>, vector<8x32xbf16>, vector<8x32xbf16>, vector<8x32xbf16> -> vector<8x512xbf16>
    %124 = tpu.concatenate %80, %83, %90, %93, %96, %103, %106, %109, %116, %119, %122 in 1 : vector<8x32xbf16>, vector<8x32xbf16>, vector<8x32xbf16>, vector<8x32xbf16>, vector<8x32xbf16>, vector<8x32xbf16>, vector<8x32xbf16>, vector<8x32xbf16>, vector<8x32xbf16>, vector<8x32xbf16>, vector<8x32xbf16> -> vector<8x352xbf16>
    %125 = tpu.concatenate %123, %124 in 1 : vector<8x512xbf16>, vector<8x352xbf16> -> vector<8x864xbf16>
    %cst = arith.constant dense<0.000000e+00> : vector<8x32xf32>
    %126 = tpu.matmul %125, %4, %cst {dimension_numbers = #tpu.dot_dimension_numbers<[1], [0], [0], [1], [0, 0, 1, 1], [], []>} : vector<8x864xbf16>, vector<864x32xbf16>, vector<8x32xf32> -> vector<8x32xf32>
    %127 = vector.broadcast %5 : vector<1x32xf32> to vector<8x32xf32>
    %128 = arith.addf %126, %127 : vector<8x32xf32>
    %c0_90 = arith.constant 0 : index
    %c0_91 = arith.constant 0 : index
    %c0_92 = arith.constant 0 : index
    %c0_93 = arith.constant 0 : index
    %129 = vector.load %arg8[%c0_90, %c0_91, %c0_92, %c0_93] : memref<1x1x48x32xf32, #tpu.memory_space<vmem>>, vector<1x1x8x32xf32>
    %130 = vector.shape_cast %129 : vector<1x1x8x32xf32> to vector<8x32xf32>
    %131 = vector.shape_cast %128 : vector<8x32xf32> to vector<1x1x8x32xf32>
    tpu.vector_store %arg8[%c0_90, %c0_91, %c0_92, %c0_93], %131 {strides = array<i32>} : memref<1x1x48x32xf32, #tpu.memory_space<vmem>>, vector<1x1x8x32xf32>,
    %c0_i32_94 = arith.constant 0 : i32
    %132 = arith.addi %3, %c0_i32_94 : i32
    %c8_i32_95 = arith.constant 8 : i32
    %133 = arith.muli %132, %c8_i32_95 : i32
    %c1_i32_96 = arith.constant 1 : i32
    %134 = arith.addi %133, %c1_i32_96 : i32
    %c0_i32_97 = arith.constant 0 : i32
    %135 = arith.addi %134, %c0_i32_97 : i32
    %136 = arith.index_cast %135 : i32 to index
    %c0_98 = arith.constant 0 : index
    %c0_99 = arith.constant 0 : index
    %137 = vector.load %arg9[%136, %c0_98, %c0_99] : memref<48x10x32xbf16, #tpu.memory_space<vmem>>, vector<1x8x32xbf16>
    %138 = vector.shape_cast %137 : vector<1x8x32xbf16> to vector<8x32xbf16>
    %139 = arith.index_cast %135 : i32 to index
    %c1_100 = arith.constant 1 : index
    %c0_101 = arith.constant 0 : index
    %140 = vector.load %arg9[%139, %c1_100, %c0_101] : memref<48x10x32xbf16, #tpu.memory_space<vmem>>, vector<1x8x32xbf16>
    %141 = vector.shape_cast %140 : vector<1x8x32xbf16> to vector<8x32xbf16>
    %142 = arith.index_cast %135 : i32 to index
    %c2_102 = arith.constant 2 : index
    %c0_103 = arith.constant 0 : index
    %143 = vector.load %arg9[%142, %c2_102, %c0_103] : memref<48x10x32xbf16, #tpu.memory_space<vmem>>, vector<1x8x32xbf16>
    %144 = vector.shape_cast %143 : vector<1x8x32xbf16> to vector<8x32xbf16>
    %c0_i32_104 = arith.constant 0 : i32
    %145 = arith.addi %3, %c0_i32_104 : i32
    %c8_i32_105 = arith.constant 8 : i32
    %146 = arith.muli %145, %c8_i32_105 : i32
    %c1_i32_106 = arith.constant 1 : i32
    %147 = arith.addi %146, %c1_i32_106 : i32
    %c1_i32_107 = arith.constant 1 : i32
    %148 = arith.addi %147, %c1_i32_107 : i32
    %149 = arith.index_cast %148 : i32 to index
    %c0_108 = arith.constant 0 : index
    %c0_109 = arith.constant 0 : index
    %150 = vector.load %arg9[%149, %c0_108, %c0_109] : memref<48x10x32xbf16, #tpu.memory_space<vmem>>, vector<1x8x32xbf16>
    %151 = vector.shape_cast %150 : vector<1x8x32xbf16> to vector<8x32xbf16>
    %152 = arith.index_cast %148 : i32 to index
    %c1_110 = arith.constant 1 : index
    %c0_111 = arith.constant 0 : index
    %153 = vector.load %arg9[%152, %c1_110, %c0_111] : memref<48x10x32xbf16, #tpu.memory_space<vmem>>, vector<1x8x32xbf16>
    %154 = vector.shape_cast %153 : vector<1x8x32xbf16> to vector<8x32xbf16>
    %155 = arith.index_cast %148 : i32 to index
    %c2_112 = arith.constant 2 : index
    %c0_113 = arith.constant 0 : index
    %156 = vector.load %arg9[%155, %c2_112, %c0_113] : memref<48x10x32xbf16, #tpu.memory_space<vmem>>, vector<1x8x32xbf16>
    %157 = vector.shape_cast %156 : vector<1x8x32xbf16> to vector<8x32xbf16>
    %c0_i32_114 = arith.constant 0 : i32
    %158 = arith.addi %3, %c0_i32_114 : i32
    %c8_i32_115 = arith.constant 8 : i32
    %159 = arith.muli %158, %c8_i32_115 : i32
    %c1_i32_116 = arith.constant 1 : i32
    %160 = arith.addi %159, %c1_i32_116 : i32
    %c2_i32_117 = arith.constant 2 : i32
    %161 = arith.addi %160, %c2_i32_117 : i32
    %162 = arith.index_cast %161 : i32 to index
    %c0_118 = arith.constant 0 : index
    %c0_119 = arith.constant 0 : index
    %163 = vector.load %arg9[%162, %c0_118, %c0_119] : memref<48x10x32xbf16, #tpu.memory_space<vmem>>, vector<1x8x32xbf16>
    %164 = vector.shape_cast %163 : vector<1x8x32xbf16> to vector<8x32xbf16>
    %165 = arith.index_cast %161 : i32 to index
    %c1_120 = arith.constant 1 : index
    %c0_121 = arith.constant 0 : index
    %166 = vector.load %arg9[%165, %c1_120, %c0_121] : memref<48x10x32xbf16, #tpu.memory_space<vmem>>, vector<1x8x32xbf16>
    %167 = vector.shape_cast %166 : vector<1x8x32xbf16> to vector<8x32xbf16>
    %168 = arith.index_cast %161 : i32 to index
    %c2_122 = arith.constant 2 : index
    %c0_123 = arith.constant 0 : index
    %169 = vector.load %arg9[%168, %c2_122, %c0_123] : memref<48x10x32xbf16, #tpu.memory_space<vmem>>, vector<1x8x32xbf16>
    %170 = vector.shape_cast %169 : vector<1x8x32xbf16> to vector<8x32xbf16>
    %c1_i32_124 = arith.constant 1 : i32
    %171 = arith.addi %3, %c1_i32_124 : i32
    %c8_i32_125 = arith.constant 8 : i32
    %172 = arith.muli %171, %c8_i32_125 : i32
    %c1_i32_126 = arith.constant 1 : i32
    %173 = arith.addi %172, %c1_i32_126 : i32
    %c0_i32_127 = arith.constant 0 : i32
    %174 = arith.addi %173, %c0_i32_127 : i32
    %175 = arith.index_cast %174 : i32 to index
    %c0_128 = arith.constant 0 : index
    %c0_129 = arith.constant 0 : index
    %176 = vector.load %arg9[%175, %c0_128, %c0_129] : memref<48x10x32xbf16, #tpu.memory_space<vmem>>, vector<1x8x32xbf16>
    %177 = vector.shape_cast %176 : vector<1x8x32xbf16> to vector<8x32xbf16>
    %178 = arith.index_cast %174 : i32 to index
    %c1_130 = arith.constant 1 : index
    %c0_131 = arith.constant 0 : index
    %179 = vector.load %arg9[%178, %c1_130, %c0_131] : memref<48x10x32xbf16, #tpu.memory_space<vmem>>, vector<1x8x32xbf16>
    %180 = vector.shape_cast %179 : vector<1x8x32xbf16> to vector<8x32xbf16>
    %181 = arith.index_cast %174 : i32 to index
    %c2_132 = arith.constant 2 : index
    %c0_133 = arith.constant 0 : index
    %182 = vector.load %arg9[%181, %c2_132, %c0_133] : memref<48x10x32xbf16, #tpu.memory_space<vmem>>, vector<1x8x32xbf16>
    %183 = vector.shape_cast %182 : vector<1x8x32xbf16> to vector<8x32xbf16>
    %c1_i32_134 = arith.constant 1 : i32
    %184 = arith.addi %3, %c1_i32_134 : i32
    %c8_i32_135 = arith.constant 8 : i32
    %185 = arith.muli %184, %c8_i32_135 : i32
    %c1_i32_136 = arith.constant 1 : i32
    %186 = arith.addi %185, %c1_i32_136 : i32
    %c1_i32_137 = arith.constant 1 : i32
    %187 = arith.addi %186, %c1_i32_137 : i32
    %188 = arith.index_cast %187 : i32 to index
    %c0_138 = arith.constant 0 : index
    %c0_139 = arith.constant 0 : index
    %189 = vector.load %arg9[%188, %c0_138, %c0_139] : memref<48x10x32xbf16, #tpu.memory_space<vmem>>, vector<1x8x32xbf16>
    %190 = vector.shape_cast %189 : vector<1x8x32xbf16> to vector<8x32xbf16>
    %191 = arith.index_cast %187 : i32 to index
    %c1_140 = arith.constant 1 : index
    %c0_141 = arith.constant 0 : index
    %192 = vector.load %arg9[%191, %c1_140, %c0_141] : memref<48x10x32xbf16, #tpu.memory_space<vmem>>, vector<1x8x32xbf16>
    %193 = vector.shape_cast %192 : vector<1x8x32xbf16> to vector<8x32xbf16>
    %194 = arith.index_cast %187 : i32 to index
    %c2_142 = arith.constant 2 : index
    %c0_143 = arith.constant 0 : index
    %195 = vector.load %arg9[%194, %c2_142, %c0_143] : memref<48x10x32xbf16, #tpu.memory_space<vmem>>, vector<1x8x32xbf16>
    %196 = vector.shape_cast %195 : vector<1x8x32xbf16> to vector<8x32xbf16>
    %c1_i32_144 = arith.constant 1 : i32
    %197 = arith.addi %3, %c1_i32_144 : i32
    %c8_i32_145 = arith.constant 8 : i32
    %198 = arith.muli %197, %c8_i32_145 : i32
    %c1_i32_146 = arith.constant 1 : i32
    %199 = arith.addi %198, %c1_i32_146 : i32
    %c2_i32_147 = arith.constant 2 : i32
    %200 = arith.addi %199, %c2_i32_147 : i32
    %201 = arith.index_cast %200 : i32 to index
    %c0_148 = arith.constant 0 : index
    %c0_149 = arith.constant 0 : index
    %202 = vector.load %arg9[%201, %c0_148, %c0_149] : memref<48x10x32xbf16, #tpu.memory_space<vmem>>, vector<1x8x32xbf16>
    %203 = vector.shape_cast %202 : vector<1x8x32xbf16> to vector<8x32xbf16>
    %204 = arith.index_cast %200 : i32 to index
    %c1_150 = arith.constant 1 : index
    %c0_151 = arith.constant 0 : index
    %205 = vector.load %arg9[%204, %c1_150, %c0_151] : memref<48x10x32xbf16, #tpu.memory_space<vmem>>, vector<1x8x32xbf16>
    %206 = vector.shape_cast %205 : vector<1x8x32xbf16> to vector<8x32xbf16>
    %207 = arith.index_cast %200 : i32 to index
    %c2_152 = arith.constant 2 : index
    %c0_153 = arith.constant 0 : index
    %208 = vector.load %arg9[%207, %c2_152, %c0_153] : memref<48x10x32xbf16, #tpu.memory_space<vmem>>, vector<1x8x32xbf16>
    %209 = vector.shape_cast %208 : vector<1x8x32xbf16> to vector<8x32xbf16>
    %c2_i32_154 = arith.constant 2 : i32
    %210 = arith.addi %3, %c2_i32_154 : i32
    %c8_i32_155 = arith.constant 8 : i32
    %211 = arith.muli %210, %c8_i32_155 : i32
    %c1_i32_156 = arith.constant 1 : i32
    %212 = arith.addi %211, %c1_i32_156 : i32
    %c0_i32_157 = arith.constant 0 : i32
    %213 = arith.addi %212, %c0_i32_157 : i32
    %214 = arith.index_cast %213 : i32 to index
    %c0_158 = arith.constant 0 : index
    %c0_159 = arith.constant 0 : index
    %215 = vector.load %arg9[%214, %c0_158, %c0_159] : memref<48x10x32xbf16, #tpu.memory_space<vmem>>, vector<1x8x32xbf16>
    %216 = vector.shape_cast %215 : vector<1x8x32xbf16> to vector<8x32xbf16>
    %217 = arith.index_cast %213 : i32 to index
    %c1_160 = arith.constant 1 : index
    %c0_161 = arith.constant 0 : index
    %218 = vector.load %arg9[%217, %c1_160, %c0_161] : memref<48x10x32xbf16, #tpu.memory_space<vmem>>, vector<1x8x32xbf16>
    %219 = vector.shape_cast %218 : vector<1x8x32xbf16> to vector<8x32xbf16>
    %220 = arith.index_cast %213 : i32 to index
    %c2_162 = arith.constant 2 : index
    %c0_163 = arith.constant 0 : index
    %221 = vector.load %arg9[%220, %c2_162, %c0_163] : memref<48x10x32xbf16, #tpu.memory_space<vmem>>, vector<1x8x32xbf16>
    %222 = vector.shape_cast %221 : vector<1x8x32xbf16> to vector<8x32xbf16>
    %c2_i32_164 = arith.constant 2 : i32
    %223 = arith.addi %3, %c2_i32_164 : i32
    %c8_i32_165 = arith.constant 8 : i32
    %224 = arith.muli %223, %c8_i32_165 : i32
    %c1_i32_166 = arith.constant 1 : i32
    %225 = arith.addi %224, %c1_i32_166 : i32
    %c1_i32_167 = arith.constant 1 : i32
    %226 = arith.addi %225, %c1_i32_167 : i32
    %227 = arith.index_cast %226 : i32 to index
    %c0_168 = arith.constant 0 : index
    %c0_169 = arith.constant 0 : index
    %228 = vector.load %arg9[%227, %c0_168, %c0_169] : memref<48x10x32xbf16, #tpu.memory_space<vmem>>, vector<1x8x32xbf16>
    %229 = vector.shape_cast %228 : vector<1x8x32xbf16> to vector<8x32xbf16>
    %230 = arith.index_cast %226 : i32 to index
    %c1_170 = arith.constant 1 : index
    %c0_171 = arith.constant 0 : index
    %231 = vector.load %arg9[%230, %c1_170, %c0_171] : memref<48x10x32xbf16, #tpu.memory_space<vmem>>, vector<1x8x32xbf16>
    %232 = vector.shape_cast %231 : vector<1x8x32xbf16> to vector<8x32xbf16>
    %233 = arith.index_cast %226 : i32 to index
    %c2_172 = arith.constant 2 : index
    %c0_173 = arith.constant 0 : index
    %234 = vector.load %arg9[%233, %c2_172, %c0_173] : memref<48x10x32xbf16, #tpu.memory_space<vmem>>, vector<1x8x32xbf16>
    %235 = vector.shape_cast %234 : vector<1x8x32xbf16> to vector<8x32xbf16>
    %c2_i32_174 = arith.constant 2 : i32
    %236 = arith.addi %3, %c2_i32_174 : i32
    %c8_i32_175 = arith.constant 8 : i32
    %237 = arith.muli %236, %c8_i32_175 : i32
    %c1_i32_176 = arith.constant 1 : i32
    %238 = arith.addi %237, %c1_i32_176 : i32
    %c2_i32_177 = arith.constant 2 : i32
    %239 = arith.addi %238, %c2_i32_177 : i32
    %240 = arith.index_cast %239 : i32 to index
    %c0_178 = arith.constant 0 : index
    %c0_179 = arith.constant 0 : index
    %241 = vector.load %arg9[%240, %c0_178, %c0_179] : memref<48x10x32xbf16, #tpu.memory_space<vmem>>, vector<1x8x32xbf16>
    %242 = vector.shape_cast %241 : vector<1x8x32xbf16> to vector<8x32xbf16>
    %243 = arith.index_cast %239 : i32 to index
    %c1_180 = arith.constant 1 : index
    %c0_181 = arith.constant 0 : index
    %244 = vector.load %arg9[%243, %c1_180, %c0_181] : memref<48x10x32xbf16, #tpu.memory_space<vmem>>, vector<1x8x32xbf16>
    %245 = vector.shape_cast %244 : vector<1x8x32xbf16> to vector<8x32xbf16>
    %246 = arith.index_cast %239 : i32 to index
    %c2_182 = arith.constant 2 : index
    %c0_183 = arith.constant 0 : index
    %247 = vector.load %arg9[%246, %c2_182, %c0_183] : memref<48x10x32xbf16, #tpu.memory_space<vmem>>, vector<1x8x32xbf16>
    %248 = vector.shape_cast %247 : vector<1x8x32xbf16> to vector<8x32xbf16>
    %249 = tpu.concatenate %138, %141, %144, %151, %154, %157, %164, %167, %170, %177, %180, %183, %190, %193, %196, %203 in 1 : vector<8x32xbf16>, vector<8x32xbf16>, vector<8x32xbf16>, vector<8x32xbf16>, vector<8x32xbf16>, vector<8x32xbf16>, vector<8x32xbf16>, vector<8x32xbf16>, vector<8x32xbf16>, vector<8x32xbf16>, vector<8x32xbf16>, vector<8x32xbf16>, vector<8x32xbf16>, vector<8x32xbf16>, vector<8x32xbf16>, vector<8x32xbf16> -> vector<8x512xbf16>
    %250 = tpu.concatenate %206, %209, %216, %219, %222, %229, %232, %235, %242, %245, %248 in 1 : vector<8x32xbf16>, vector<8x32xbf16>, vector<8x32xbf16>, vector<8x32xbf16>, vector<8x32xbf16>, vector<8x32xbf16>, vector<8x32xbf16>, vector<8x32xbf16>, vector<8x32xbf16>, vector<8x32xbf16>, vector<8x32xbf16> -> vector<8x352xbf16>
    %251 = tpu.concatenate %249, %250 in 1 : vector<8x512xbf16>, vector<8x352xbf16> -> vector<8x864xbf16>
    %cst_184 = arith.constant dense<0.000000e+00> : vector<8x32xf32>
    %252 = tpu.matmul %251, %4, %cst_184 {dimension_numbers = #tpu.dot_dimension_numbers<[1], [0], [0], [1], [0, 0, 1, 1], [], []>} : vector<8x864xbf16>, vector<864x32xbf16>, vector<8x32xf32> -> vector<8x32xf32>
    %253 = vector.broadcast %5 : vector<1x32xf32> to vector<8x32xf32>
    %254 = arith.addf %252, %253 : vector<8x32xf32>
    %c0_185 = arith.constant 0 : index
    %c0_186 = arith.constant 0 : index
    %c8 = arith.constant 8 : index
    %c0_187 = arith.constant 0 : index
    %255 = vector.load %arg8[%c0_185, %c0_186, %c8, %c0_187] : memref<1x1x48x32xf32, #tpu.memory_space<vmem>>, vector<1x1x8x32xf32>
    %256 = vector.shape_cast %255 : vector<1x1x8x32xf32> to vector<8x32xf32>
    %257 = vector.shape_cast %254 : vector<8x32xf32> to vector<1x1x8x32xf32>
    tpu.vector_store %arg8[%c0_185, %c0_186, %c8, %c0_187], %257 {strides = array<i32>} : memref<1x1x48x32xf32, #tpu.memory_space<vmem>>, vector<1x1x8x32xf32>,
    %c0_i32_188 = arith.constant 0 : i32
    %258 = arith.addi %3, %c0_i32_188 : i32
    %c8_i32_189 = arith.constant 8 : i32
    %259 = arith.muli %258, %c8_i32_189 : i32
    %c2_i32_190 = arith.constant 2 : i32
    %260 = arith.addi %259, %c2_i32_190 : i32
    %c0_i32_191 = arith.constant 0 : i32
    %261 = arith.addi %260, %c0_i32_191 : i32
    %262 = arith.index_cast %261 : i32 to index
    %c0_192 = arith.constant 0 : index
    %c0_193 = arith.constant 0 : index
    %263 = vector.load %arg9[%262, %c0_192, %c0_193] : memref<48x10x32xbf16, #tpu.memory_space<vmem>>, vector<1x8x32xbf16>
    %264 = vector.shape_cast %263 : vector<1x8x32xbf16> to vector<8x32xbf16>
    %265 = arith.index_cast %261 : i32 to index
    %c1_194 = arith.constant 1 : index
    %c0_195 = arith.constant 0 : index
    %266 = vector.load %arg9[%265, %c1_194, %c0_195] : memref<48x10x32xbf16, #tpu.memory_space<vmem>>, vector<1x8x32xbf16>
    %267 = vector.shape_cast %266 : vector<1x8x32xbf16> to vector<8x32xbf16>
    %268 = arith.index_cast %261 : i32 to index
    %c2_196 = arith.constant 2 : index
    %c0_197 = arith.constant 0 : index
    %269 = vector.load %arg9[%268, %c2_196, %c0_197] : memref<48x10x32xbf16, #tpu.memory_space<vmem>>, vector<1x8x32xbf16>
    %270 = vector.shape_cast %269 : vector<1x8x32xbf16> to vector<8x32xbf16>
    %c0_i32_198 = arith.constant 0 : i32
    %271 = arith.addi %3, %c0_i32_198 : i32
    %c8_i32_199 = arith.constant 8 : i32
    %272 = arith.muli %271, %c8_i32_199 : i32
    %c2_i32_200 = arith.constant 2 : i32
    %273 = arith.addi %272, %c2_i32_200 : i32
    %c1_i32_201 = arith.constant 1 : i32
    %274 = arith.addi %273, %c1_i32_201 : i32
    %275 = arith.index_cast %274 : i32 to index
    %c0_202 = arith.constant 0 : index
    %c0_203 = arith.constant 0 : index
    %276 = vector.load %arg9[%275, %c0_202, %c0_203] : memref<48x10x32xbf16, #tpu.memory_space<vmem>>, vector<1x8x32xbf16>
    %277 = vector.shape_cast %276 : vector<1x8x32xbf16> to vector<8x32xbf16>
    %278 = arith.index_cast %274 : i32 to index
    %c1_204 = arith.constant 1 : index
    %c0_205 = arith.constant 0 : index
    %279 = vector.load %arg9[%278, %c1_204, %c0_205] : memref<48x10x32xbf16, #tpu.memory_space<vmem>>, vector<1x8x32xbf16>
    %280 = vector.shape_cast %279 : vector<1x8x32xbf16> to vector<8x32xbf16>
    %281 = arith.index_cast %274 : i32 to index
    %c2_206 = arith.constant 2 : index
    %c0_207 = arith.constant 0 : index
    %282 = vector.load %arg9[%281, %c2_206, %c0_207] : memref<48x10x32xbf16, #tpu.memory_space<vmem>>, vector<1x8x32xbf16>
    %283 = vector.shape_cast %282 : vector<1x8x32xbf16> to vector<8x32xbf16>
    %c0_i32_208 = arith.constant 0 : i32
    %284 = arith.addi %3, %c0_i32_208 : i32
    %c8_i32_209 = arith.constant 8 : i32
    %285 = arith.muli %284, %c8_i32_209 : i32
    %c2_i32_210 = arith.constant 2 : i32
    %286 = arith.addi %285, %c2_i32_210 : i32
    %c2_i32_211 = arith.constant 2 : i32
    %287 = arith.addi %286, %c2_i32_211 : i32
    %288 = arith.index_cast %287 : i32 to index
    %c0_212 = arith.constant 0 : index
    %c0_213 = arith.constant 0 : index
    %289 = vector.load %arg9[%288, %c0_212, %c0_213] : memref<48x10x32xbf16, #tpu.memory_space<vmem>>, vector<1x8x32xbf16>
    %290 = vector.shape_cast %289 : vector<1x8x32xbf16> to vector<8x32xbf16>
    %291 = arith.index_cast %287 : i32 to index
    %c1_214 = arith.constant 1 : index
    %c0_215 = arith.constant 0 : index
    %292 = vector.load %arg9[%291, %c1_214, %c0_215] : memref<48x10x32xbf16, #tpu.memory_space<vmem>>, vector<1x8x32xbf16>
    %293 = vector.shape_cast %292 : vector<1x8x32xbf16> to vector<8x32xbf16>
    %294 = arith.index_cast %287 : i32 to index
    %c2_216 = arith.constant 2 : index
    %c0_217 = arith.constant 0 : index
    %295 = vector.load %arg9[%294, %c2_216, %c0_217] : memref<48x10x32xbf16, #tpu.memory_space<vmem>>, vector<1x8x32xbf16>
    %296 = vector.shape_cast %295 : vector<1x8x32xbf16> to vector<8x32xbf16>
    %c1_i32_218 = arith.constant 1 : i32
    %297 = arith.addi %3, %c1_i32_218 : i32
    %c8_i32_219 = arith.constant 8 : i32
    %298 = arith.muli %297, %c8_i32_219 : i32
    %c2_i32_220 = arith.constant 2 : i32
    %299 = arith.addi %298, %c2_i32_220 : i32
    %c0_i32_221 = arith.constant 0 : i32
    %300 = arith.addi %299, %c0_i32_221 : i32
    %301 = arith.index_cast %300 : i32 to index
    %c0_222 = arith.constant 0 : index
    %c0_223 = arith.constant 0 : index
    %302 = vector.load %arg9[%301, %c0_222, %c0_223] : memref<48x10x32xbf16, #tpu.memory_space<vmem>>, vector<1x8x32xbf16>
    %303 = vector.shape_cast %302 : vector<1x8x32xbf16> to vector<8x32xbf16>
    %304 = arith.index_cast %300 : i32 to index
    %c1_224 = arith.constant 1 : index
    %c0_225 = arith.constant 0 : index
    %305 = vector.load %arg9[%304, %c1_224, %c0_225] : memref<48x10x32xbf16, #tpu.memory_space<vmem>>, vector<1x8x32xbf16>
    %306 = vector.shape_cast %305 : vector<1x8x32xbf16> to vector<8x32xbf16>
    %307 = arith.index_cast %300 : i32 to index
    %c2_226 = arith.constant 2 : index
    %c0_227 = arith.constant 0 : index
    %308 = vector.load %arg9[%307, %c2_226, %c0_227] : memref<48x10x32xbf16, #tpu.memory_space<vmem>>, vector<1x8x32xbf16>
    %309 = vector.shape_cast %308 : vector<1x8x32xbf16> to vector<8x32xbf16>
    %c1_i32_228 = arith.constant 1 : i32
    %310 = arith.addi %3, %c1_i32_228 : i32
    %c8_i32_229 = arith.constant 8 : i32
    %311 = arith.muli %310, %c8_i32_229 : i32
    %c2_i32_230 = arith.constant 2 : i32
    %312 = arith.addi %311, %c2_i32_230 : i32
    %c1_i32_231 = arith.constant 1 : i32
    %313 = arith.addi %312, %c1_i32_231 : i32
    %314 = arith.index_cast %313 : i32 to index
    %c0_232 = arith.constant 0 : index
    %c0_233 = arith.constant 0 : index
    %315 = vector.load %arg9[%314, %c0_232, %c0_233] : memref<48x10x32xbf16, #tpu.memory_space<vmem>>, vector<1x8x32xbf16>
    %316 = vector.shape_cast %315 : vector<1x8x32xbf16> to vector<8x32xbf16>
    %317 = arith.index_cast %313 : i32 to index
    %c1_234 = arith.constant 1 : index
    %c0_235 = arith.constant 0 : index
    %318 = vector.load %arg9[%317, %c1_234, %c0_235] : memref<48x10x32xbf16, #tpu.memory_space<vmem>>, vector<1x8x32xbf16>
    %319 = vector.shape_cast %318 : vector<1x8x32xbf16> to vector<8x32xbf16>
    %320 = arith.index_cast %313 : i32 to index
    %c2_236 = arith.constant 2 : index
    %c0_237 = arith.constant 0 : index
    %321 = vector.load %arg9[%320, %c2_236, %c0_237] : memref<48x10x32xbf16, #tpu.memory_space<vmem>>, vector<1x8x32xbf16>
    %322 = vector.shape_cast %321 : vector<1x8x32xbf16> to vector<8x32xbf16>
    %c1_i32_238 = arith.constant 1 : i32
    %323 = arith.addi %3, %c1_i32_238 : i32
    %c8_i32_239 = arith.constant 8 : i32
    %324 = arith.muli %323, %c8_i32_239 : i32
    %c2_i32_240 = arith.constant 2 : i32
    %325 = arith.addi %324, %c2_i32_240 : i32
    %c2_i32_241 = arith.constant 2 : i32
    %326 = arith.addi %325, %c2_i32_241 : i32
    %327 = arith.index_cast %326 : i32 to index
    %c0_242 = arith.constant 0 : index
    %c0_243 = arith.constant 0 : index
    %328 = vector.load %arg9[%327, %c0_242, %c0_243] : memref<48x10x32xbf16, #tpu.memory_space<vmem>>, vector<1x8x32xbf16>
    %329 = vector.shape_cast %328 : vector<1x8x32xbf16> to vector<8x32xbf16>
    %330 = arith.index_cast %326 : i32 to index
    %c1_244 = arith.constant 1 : index
    %c0_245 = arith.constant 0 : index
    %331 = vector.load %arg9[%330, %c1_244, %c0_245] : memref<48x10x32xbf16, #tpu.memory_space<vmem>>, vector<1x8x32xbf16>
    %332 = vector.shape_cast %331 : vector<1x8x32xbf16> to vector<8x32xbf16>
    %333 = arith.index_cast %326 : i32 to index
    %c2_246 = arith.constant 2 : index
    %c0_247 = arith.constant 0 : index
    %334 = vector.load %arg9[%333, %c2_246, %c0_247] : memref<48x10x32xbf16, #tpu.memory_space<vmem>>, vector<1x8x32xbf16>
    %335 = vector.shape_cast %334 : vector<1x8x32xbf16> to vector<8x32xbf16>
    %c2_i32_248 = arith.constant 2 : i32
    %336 = arith.addi %3, %c2_i32_248 : i32
    %c8_i32_249 = arith.constant 8 : i32
    %337 = arith.muli %336, %c8_i32_249 : i32
    %c2_i32_250 = arith.constant 2 : i32
    %338 = arith.addi %337, %c2_i32_250 : i32
    %c0_i32_251 = arith.constant 0 : i32
    %339 = arith.addi %338, %c0_i32_251 : i32
    %340 = arith.index_cast %339 : i32 to index
    %c0_252 = arith.constant 0 : index
    %c0_253 = arith.constant 0 : index
    %341 = vector.load %arg9[%340, %c0_252, %c0_253] : memref<48x10x32xbf16, #tpu.memory_space<vmem>>, vector<1x8x32xbf16>
    %342 = vector.shape_cast %341 : vector<1x8x32xbf16> to vector<8x32xbf16>
    %343 = arith.index_cast %339 : i32 to index
    %c1_254 = arith.constant 1 : index
    %c0_255 = arith.constant 0 : index
    %344 = vector.load %arg9[%343, %c1_254, %c0_255] : memref<48x10x32xbf16, #tpu.memory_space<vmem>>, vector<1x8x32xbf16>
    %345 = vector.shape_cast %344 : vector<1x8x32xbf16> to vector<8x32xbf16>
    %346 = arith.index_cast %339 : i32 to index
    %c2_256 = arith.constant 2 : index
    %c0_257 = arith.constant 0 : index
    %347 = vector.load %arg9[%346, %c2_256, %c0_257] : memref<48x10x32xbf16, #tpu.memory_space<vmem>>, vector<1x8x32xbf16>
    %348 = vector.shape_cast %347 : vector<1x8x32xbf16> to vector<8x32xbf16>
    %c2_i32_258 = arith.constant 2 : i32
    %349 = arith.addi %3, %c2_i32_258 : i32
    %c8_i32_259 = arith.constant 8 : i32
    %350 = arith.muli %349, %c8_i32_259 : i32
    %c2_i32_260 = arith.constant 2 : i32
    %351 = arith.addi %350, %c2_i32_260 : i32
    %c1_i32_261 = arith.constant 1 : i32
    %352 = arith.addi %351, %c1_i32_261 : i32
    %353 = arith.index_cast %352 : i32 to index
    %c0_262 = arith.constant 0 : index
    %c0_263 = arith.constant 0 : index
    %354 = vector.load %arg9[%353, %c0_262, %c0_263] : memref<48x10x32xbf16, #tpu.memory_space<vmem>>, vector<1x8x32xbf16>
    %355 = vector.shape_cast %354 : vector<1x8x32xbf16> to vector<8x32xbf16>
    %356 = arith.index_cast %352 : i32 to index
    %c1_264 = arith.constant 1 : index
    %c0_265 = arith.constant 0 : index
    %357 = vector.load %arg9[%356, %c1_264, %c0_265] : memref<48x10x32xbf16, #tpu.memory_space<vmem>>, vector<1x8x32xbf16>
    %358 = vector.shape_cast %357 : vector<1x8x32xbf16> to vector<8x32xbf16>
    %359 = arith.index_cast %352 : i32 to index
    %c2_266 = arith.constant 2 : index
    %c0_267 = arith.constant 0 : index
    %360 = vector.load %arg9[%359, %c2_266, %c0_267] : memref<48x10x32xbf16, #tpu.memory_space<vmem>>, vector<1x8x32xbf16>
    %361 = vector.shape_cast %360 : vector<1x8x32xbf16> to vector<8x32xbf16>
    %c2_i32_268 = arith.constant 2 : i32
    %362 = arith.addi %3, %c2_i32_268 : i32
    %c8_i32_269 = arith.constant 8 : i32
    %363 = arith.muli %362, %c8_i32_269 : i32
    %c2_i32_270 = arith.constant 2 : i32
    %364 = arith.addi %363, %c2_i32_270 : i32
    %c2_i32_271 = arith.constant 2 : i32
    %365 = arith.addi %364, %c2_i32_271 : i32
    %366 = arith.index_cast %365 : i32 to index
    %c0_272 = arith.constant 0 : index
    %c0_273 = arith.constant 0 : index
    %367 = vector.load %arg9[%366, %c0_272, %c0_273] : memref<48x10x32xbf16, #tpu.memory_space<vmem>>, vector<1x8x32xbf16>
    %368 = vector.shape_cast %367 : vector<1x8x32xbf16> to vector<8x32xbf16>
    %369 = arith.index_cast %365 : i32 to index
    %c1_274 = arith.constant 1 : index
    %c0_275 = arith.constant 0 : index
    %370 = vector.load %arg9[%369, %c1_274, %c0_275] : memref<48x10x32xbf16, #tpu.memory_space<vmem>>, vector<1x8x32xbf16>
    %371 = vector.shape_cast %370 : vector<1x8x32xbf16> to vector<8x32xbf16>
    %372 = arith.index_cast %365 : i32 to index
    %c2_276 = arith.constant 2 : index
    %c0_277 = arith.constant 0 : index
    %373 = vector.load %arg9[%372, %c2_276, %c0_277] : memref<48x10x32xbf16, #tpu.memory_space<vmem>>, vector<1x8x32xbf16>
    %374 = vector.shape_cast %373 : vector<1x8x32xbf16> to vector<8x32xbf16>
    %375 = tpu.concatenate %264, %267, %270, %277, %280, %283, %290, %293, %296, %303, %306, %309, %316, %319, %322, %329 in 1 : vector<8x32xbf16>, vector<8x32xbf16>, vector<8x32xbf16>, vector<8x32xbf16>, vector<8x32xbf16>, vector<8x32xbf16>, vector<8x32xbf16>, vector<8x32xbf16>, vector<8x32xbf16>, vector<8x32xbf16>, vector<8x32xbf16>, vector<8x32xbf16>, vector<8x32xbf16>, vector<8x32xbf16>, vector<8x32xbf16>, vector<8x32xbf16> -> vector<8x512xbf16>
    %376 = tpu.concatenate %332, %335, %342, %345, %348, %355, %358, %361, %368, %371, %374 in 1 : vector<8x32xbf16>, vector<8x32xbf16>, vector<8x32xbf16>, vector<8x32xbf16>, vector<8x32xbf16>, vector<8x32xbf16>, vector<8x32xbf16>, vector<8x32xbf16>, vector<8x32xbf16>, vector<8x32xbf16>, vector<8x32xbf16> -> vector<8x352xbf16>
    %377 = tpu.concatenate %375, %376 in 1 : vector<8x512xbf16>, vector<8x352xbf16> -> vector<8x864xbf16>
    %cst_278 = arith.constant dense<0.000000e+00> : vector<8x32xf32>
    %378 = tpu.matmul %377, %4, %cst_278 {dimension_numbers = #tpu.dot_dimension_numbers<[1], [0], [0], [1], [0, 0, 1, 1], [], []>} : vector<8x864xbf16>, vector<864x32xbf16>, vector<8x32xf32> -> vector<8x32xf32>
    %379 = vector.broadcast %5 : vector<1x32xf32> to vector<8x32xf32>
    %380 = arith.addf %378, %379 : vector<8x32xf32>
    %c0_279 = arith.constant 0 : index
    %c0_280 = arith.constant 0 : index
    %c16 = arith.constant 16 : index
    %c0_281 = arith.constant 0 : index
    %381 = vector.load %arg8[%c0_279, %c0_280, %c16, %c0_281] : memref<1x1x48x32xf32, #tpu.memory_space<vmem>>, vector<1x1x8x32xf32>
    %382 = vector.shape_cast %381 : vector<1x1x8x32xf32> to vector<8x32xf32>
    %383 = vector.shape_cast %380 : vector<8x32xf32> to vector<1x1x8x32xf32>
    tpu.vector_store %arg8[%c0_279, %c0_280, %c16, %c0_281], %383 {strides = array<i32>} : memref<1x1x48x32xf32, #tpu.memory_space<vmem>>, vector<1x1x8x32xf32>,
    %c0_i32_282 = arith.constant 0 : i32
    %384 = arith.addi %3, %c0_i32_282 : i32
    %c8_i32_283 = arith.constant 8 : i32
    %385 = arith.muli %384, %c8_i32_283 : i32
    %c3_i32 = arith.constant 3 : i32
    %386 = arith.addi %385, %c3_i32 : i32
    %c0_i32_284 = arith.constant 0 : i32
    %387 = arith.addi %386, %c0_i32_284 : i32
    %388 = arith.index_cast %387 : i32 to index
    %c0_285 = arith.constant 0 : index
    %c0_286 = arith.constant 0 : index
    %389 = vector.load %arg9[%388, %c0_285, %c0_286] : memref<48x10x32xbf16, #tpu.memory_space<vmem>>, vector<1x8x32xbf16>
    %390 = vector.shape_cast %389 : vector<1x8x32xbf16> to vector<8x32xbf16>
    %391 = arith.index_cast %387 : i32 to index
    %c1_287 = arith.constant 1 : index
    %c0_288 = arith.constant 0 : index
    %392 = vector.load %arg9[%391, %c1_287, %c0_288] : memref<48x10x32xbf16, #tpu.memory_space<vmem>>, vector<1x8x32xbf16>
    %393 = vector.shape_cast %392 : vector<1x8x32xbf16> to vector<8x32xbf16>
    %394 = arith.index_cast %387 : i32 to index
    %c2_289 = arith.constant 2 : index
    %c0_290 = arith.constant 0 : index
    %395 = vector.load %arg9[%394, %c2_289, %c0_290] : memref<48x10x32xbf16, #tpu.memory_space<vmem>>, vector<1x8x32xbf16>
    %396 = vector.shape_cast %395 : vector<1x8x32xbf16> to vector<8x32xbf16>
    %c0_i32_291 = arith.constant 0 : i32
    %397 = arith.addi %3, %c0_i32_291 : i32
    %c8_i32_292 = arith.constant 8 : i32
    %398 = arith.muli %397, %c8_i32_292 : i32
    %c3_i32_293 = arith.constant 3 : i32
    %399 = arith.addi %398, %c3_i32_293 : i32
    %c1_i32_294 = arith.constant 1 : i32
    %400 = arith.addi %399, %c1_i32_294 : i32
    %401 = arith.index_cast %400 : i32 to index
    %c0_295 = arith.constant 0 : index
    %c0_296 = arith.constant 0 : index
    %402 = vector.load %arg9[%401, %c0_295, %c0_296] : memref<48x10x32xbf16, #tpu.memory_space<vmem>>, vector<1x8x32xbf16>
    %403 = vector.shape_cast %402 : vector<1x8x32xbf16> to vector<8x32xbf16>
    %404 = arith.index_cast %400 : i32 to index
    %c1_297 = arith.constant 1 : index
    %c0_298 = arith.constant 0 : index
    %405 = vector.load %arg9[%404, %c1_297, %c0_298] : memref<48x10x32xbf16, #tpu.memory_space<vmem>>, vector<1x8x32xbf16>
    %406 = vector.shape_cast %405 : vector<1x8x32xbf16> to vector<8x32xbf16>
    %407 = arith.index_cast %400 : i32 to index
    %c2_299 = arith.constant 2 : index
    %c0_300 = arith.constant 0 : index
    %408 = vector.load %arg9[%407, %c2_299, %c0_300] : memref<48x10x32xbf16, #tpu.memory_space<vmem>>, vector<1x8x32xbf16>
    %409 = vector.shape_cast %408 : vector<1x8x32xbf16> to vector<8x32xbf16>
    %c0_i32_301 = arith.constant 0 : i32
    %410 = arith.addi %3, %c0_i32_301 : i32
    %c8_i32_302 = arith.constant 8 : i32
    %411 = arith.muli %410, %c8_i32_302 : i32
    %c3_i32_303 = arith.constant 3 : i32
    %412 = arith.addi %411, %c3_i32_303 : i32
    %c2_i32_304 = arith.constant 2 : i32
    %413 = arith.addi %412, %c2_i32_304 : i32
    %414 = arith.index_cast %413 : i32 to index
    %c0_305 = arith.constant 0 : index
    %c0_306 = arith.constant 0 : index
    %415 = vector.load %arg9[%414, %c0_305, %c0_306] : memref<48x10x32xbf16, #tpu.memory_space<vmem>>, vector<1x8x32xbf16>
    %416 = vector.shape_cast %415 : vector<1x8x32xbf16> to vector<8x32xbf16>
    %417 = arith.index_cast %413 : i32 to index
    %c1_307 = arith.constant 1 : index
    %c0_308 = arith.constant 0 : index
    %418 = vector.load %arg9[%417, %c1_307, %c0_308] : memref<48x10x32xbf16, #tpu.memory_space<vmem>>, vector<1x8x32xbf16>
    %419 = vector.shape_cast %418 : vector<1x8x32xbf16> to vector<8x32xbf16>
    %420 = arith.index_cast %413 : i32 to index
    %c2_309 = arith.constant 2 : index
    %c0_310 = arith.constant 0 : index
    %421 = vector.load %arg9[%420, %c2_309, %c0_310] : memref<48x10x32xbf16, #tpu.memory_space<vmem>>, vector<1x8x32xbf16>
    %422 = vector.shape_cast %421 : vector<1x8x32xbf16> to vector<8x32xbf16>
    %c1_i32_311 = arith.constant 1 : i32
    %423 = arith.addi %3, %c1_i32_311 : i32
    %c8_i32_312 = arith.constant 8 : i32
    %424 = arith.muli %423, %c8_i32_312 : i32
    %c3_i32_313 = arith.constant 3 : i32
    %425 = arith.addi %424, %c3_i32_313 : i32
    %c0_i32_314 = arith.constant 0 : i32
    %426 = arith.addi %425, %c0_i32_314 : i32
    %427 = arith.index_cast %426 : i32 to index
    %c0_315 = arith.constant 0 : index
    %c0_316 = arith.constant 0 : index
    %428 = vector.load %arg9[%427, %c0_315, %c0_316] : memref<48x10x32xbf16, #tpu.memory_space<vmem>>, vector<1x8x32xbf16>
    %429 = vector.shape_cast %428 : vector<1x8x32xbf16> to vector<8x32xbf16>
    %430 = arith.index_cast %426 : i32 to index
    %c1_317 = arith.constant 1 : index
    %c0_318 = arith.constant 0 : index
    %431 = vector.load %arg9[%430, %c1_317, %c0_318] : memref<48x10x32xbf16, #tpu.memory_space<vmem>>, vector<1x8x32xbf16>
    %432 = vector.shape_cast %431 : vector<1x8x32xbf16> to vector<8x32xbf16>
    %433 = arith.index_cast %426 : i32 to index
    %c2_319 = arith.constant 2 : index
    %c0_320 = arith.constant 0 : index
    %434 = vector.load %arg9[%433, %c2_319, %c0_320] : memref<48x10x32xbf16, #tpu.memory_space<vmem>>, vector<1x8x32xbf16>
    %435 = vector.shape_cast %434 : vector<1x8x32xbf16> to vector<8x32xbf16>
    %c1_i32_321 = arith.constant 1 : i32
    %436 = arith.addi %3, %c1_i32_321 : i32
    %c8_i32_322 = arith.constant 8 : i32
    %437 = arith.muli %436, %c8_i32_322 : i32
    %c3_i32_323 = arith.constant 3 : i32
    %438 = arith.addi %437, %c3_i32_323 : i32
    %c1_i32_324 = arith.constant 1 : i32
    %439 = arith.addi %438, %c1_i32_324 : i32
    %440 = arith.index_cast %439 : i32 to index
    %c0_325 = arith.constant 0 : index
    %c0_326 = arith.constant 0 : index
    %441 = vector.load %arg9[%440, %c0_325, %c0_326] : memref<48x10x32xbf16, #tpu.memory_space<vmem>>, vector<1x8x32xbf16>
    %442 = vector.shape_cast %441 : vector<1x8x32xbf16> to vector<8x32xbf16>
    %443 = arith.index_cast %439 : i32 to index
    %c1_327 = arith.constant 1 : index
    %c0_328 = arith.constant 0 : index
    %444 = vector.load %arg9[%443, %c1_327, %c0_328] : memref<48x10x32xbf16, #tpu.memory_space<vmem>>, vector<1x8x32xbf16>
    %445 = vector.shape_cast %444 : vector<1x8x32xbf16> to vector<8x32xbf16>
    %446 = arith.index_cast %439 : i32 to index
    %c2_329 = arith.constant 2 : index
    %c0_330 = arith.constant 0 : index
    %447 = vector.load %arg9[%446, %c2_329, %c0_330] : memref<48x10x32xbf16, #tpu.memory_space<vmem>>, vector<1x8x32xbf16>
    %448 = vector.shape_cast %447 : vector<1x8x32xbf16> to vector<8x32xbf16>
    %c1_i32_331 = arith.constant 1 : i32
    %449 = arith.addi %3, %c1_i32_331 : i32
    %c8_i32_332 = arith.constant 8 : i32
    %450 = arith.muli %449, %c8_i32_332 : i32
    %c3_i32_333 = arith.constant 3 : i32
    %451 = arith.addi %450, %c3_i32_333 : i32
    %c2_i32_334 = arith.constant 2 : i32
    %452 = arith.addi %451, %c2_i32_334 : i32
    %453 = arith.index_cast %452 : i32 to index
    %c0_335 = arith.constant 0 : index
    %c0_336 = arith.constant 0 : index
    %454 = vector.load %arg9[%453, %c0_335, %c0_336] : memref<48x10x32xbf16, #tpu.memory_space<vmem>>, vector<1x8x32xbf16>
    %455 = vector.shape_cast %454 : vector<1x8x32xbf16> to vector<8x32xbf16>
    %456 = arith.index_cast %452 : i32 to index
    %c1_337 = arith.constant 1 : index
    %c0_338 = arith.constant 0 : index
    %457 = vector.load %arg9[%456, %c1_337, %c0_338] : memref<48x10x32xbf16, #tpu.memory_space<vmem>>, vector<1x8x32xbf16>
    %458 = vector.shape_cast %457 : vector<1x8x32xbf16> to vector<8x32xbf16>
    %459 = arith.index_cast %452 : i32 to index
    %c2_339 = arith.constant 2 : index
    %c0_340 = arith.constant 0 : index
    %460 = vector.load %arg9[%459, %c2_339, %c0_340] : memref<48x10x32xbf16, #tpu.memory_space<vmem>>, vector<1x8x32xbf16>
    %461 = vector.shape_cast %460 : vector<1x8x32xbf16> to vector<8x32xbf16>
    %c2_i32_341 = arith.constant 2 : i32
    %462 = arith.addi %3, %c2_i32_341 : i32
    %c8_i32_342 = arith.constant 8 : i32
    %463 = arith.muli %462, %c8_i32_342 : i32
    %c3_i32_343 = arith.constant 3 : i32
    %464 = arith.addi %463, %c3_i32_343 : i32
    %c0_i32_344 = arith.constant 0 : i32
    %465 = arith.addi %464, %c0_i32_344 : i32
    %466 = arith.index_cast %465 : i32 to index
    %c0_345 = arith.constant 0 : index
    %c0_346 = arith.constant 0 : index
    %467 = vector.load %arg9[%466, %c0_345, %c0_346] : memref<48x10x32xbf16, #tpu.memory_space<vmem>>, vector<1x8x32xbf16>
    %468 = vector.shape_cast %467 : vector<1x8x32xbf16> to vector<8x32xbf16>
    %469 = arith.index_cast %465 : i32 to index
    %c1_347 = arith.constant 1 : index
    %c0_348 = arith.constant 0 : index
    %470 = vector.load %arg9[%469, %c1_347, %c0_348] : memref<48x10x32xbf16, #tpu.memory_space<vmem>>, vector<1x8x32xbf16>
    %471 = vector.shape_cast %470 : vector<1x8x32xbf16> to vector<8x32xbf16>
    %472 = arith.index_cast %465 : i32 to index
    %c2_349 = arith.constant 2 : index
    %c0_350 = arith.constant 0 : index
    %473 = vector.load %arg9[%472, %c2_349, %c0_350] : memref<48x10x32xbf16, #tpu.memory_space<vmem>>, vector<1x8x32xbf16>
    %474 = vector.shape_cast %473 : vector<1x8x32xbf16> to vector<8x32xbf16>
    %c2_i32_351 = arith.constant 2 : i32
    %475 = arith.addi %3, %c2_i32_351 : i32
    %c8_i32_352 = arith.constant 8 : i32
    %476 = arith.muli %475, %c8_i32_352 : i32
    %c3_i32_353 = arith.constant 3 : i32
    %477 = arith.addi %476, %c3_i32_353 : i32
    %c1_i32_354 = arith.constant 1 : i32
    %478 = arith.addi %477, %c1_i32_354 : i32
    %479 = arith.index_cast %478 : i32 to index
    %c0_355 = arith.constant 0 : index
    %c0_356 = arith.constant 0 : index
    %480 = vector.load %arg9[%479, %c0_355, %c0_356] : memref<48x10x32xbf16, #tpu.memory_space<vmem>>, vector<1x8x32xbf16>
    %481 = vector.shape_cast %480 : vector<1x8x32xbf16> to vector<8x32xbf16>
    %482 = arith.index_cast %478 : i32 to index
    %c1_357 = arith.constant 1 : index
    %c0_358 = arith.constant 0 : index
    %483 = vector.load %arg9[%482, %c1_357, %c0_358] : memref<48x10x32xbf16, #tpu.memory_space<vmem>>, vector<1x8x32xbf16>
    %484 = vector.shape_cast %483 : vector<1x8x32xbf16> to vector<8x32xbf16>
    %485 = arith.index_cast %478 : i32 to index
    %c2_359 = arith.constant 2 : index
    %c0_360 = arith.constant 0 : index
    %486 = vector.load %arg9[%485, %c2_359, %c0_360] : memref<48x10x32xbf16, #tpu.memory_space<vmem>>, vector<1x8x32xbf16>
    %487 = vector.shape_cast %486 : vector<1x8x32xbf16> to vector<8x32xbf16>
    %c2_i32_361 = arith.constant 2 : i32
    %488 = arith.addi %3, %c2_i32_361 : i32
    %c8_i32_362 = arith.constant 8 : i32
    %489 = arith.muli %488, %c8_i32_362 : i32
    %c3_i32_363 = arith.constant 3 : i32
    %490 = arith.addi %489, %c3_i32_363 : i32
    %c2_i32_364 = arith.constant 2 : i32
    %491 = arith.addi %490, %c2_i32_364 : i32
    %492 = arith.index_cast %491 : i32 to index
    %c0_365 = arith.constant 0 : index
    %c0_366 = arith.constant 0 : index
    %493 = vector.load %arg9[%492, %c0_365, %c0_366] : memref<48x10x32xbf16, #tpu.memory_space<vmem>>, vector<1x8x32xbf16>
    %494 = vector.shape_cast %493 : vector<1x8x32xbf16> to vector<8x32xbf16>
    %495 = arith.index_cast %491 : i32 to index
    %c1_367 = arith.constant 1 : index
    %c0_368 = arith.constant 0 : index
    %496 = vector.load %arg9[%495, %c1_367, %c0_368] : memref<48x10x32xbf16, #tpu.memory_space<vmem>>, vector<1x8x32xbf16>
    %497 = vector.shape_cast %496 : vector<1x8x32xbf16> to vector<8x32xbf16>
    %498 = arith.index_cast %491 : i32 to index
    %c2_369 = arith.constant 2 : index
    %c0_370 = arith.constant 0 : index
    %499 = vector.load %arg9[%498, %c2_369, %c0_370] : memref<48x10x32xbf16, #tpu.memory_space<vmem>>, vector<1x8x32xbf16>
    %500 = vector.shape_cast %499 : vector<1x8x32xbf16> to vector<8x32xbf16>
    %501 = tpu.concatenate %390, %393, %396, %403, %406, %409, %416, %419, %422, %429, %432, %435, %442, %445, %448, %455 in 1 : vector<8x32xbf16>, vector<8x32xbf16>, vector<8x32xbf16>, vector<8x32xbf16>, vector<8x32xbf16>, vector<8x32xbf16>, vector<8x32xbf16>, vector<8x32xbf16>, vector<8x32xbf16>, vector<8x32xbf16>, vector<8x32xbf16>, vector<8x32xbf16>, vector<8x32xbf16>, vector<8x32xbf16>, vector<8x32xbf16>, vector<8x32xbf16> -> vector<8x512xbf16>
    %502 = tpu.concatenate %458, %461, %468, %471, %474, %481, %484, %487, %494, %497, %500 in 1 : vector<8x32xbf16>, vector<8x32xbf16>, vector<8x32xbf16>, vector<8x32xbf16>, vector<8x32xbf16>, vector<8x32xbf16>, vector<8x32xbf16>, vector<8x32xbf16>, vector<8x32xbf16>, vector<8x32xbf16>, vector<8x32xbf16> -> vector<8x352xbf16>
    %503 = tpu.concatenate %501, %502 in 1 : vector<8x512xbf16>, vector<8x352xbf16> -> vector<8x864xbf16>
    %cst_371 = arith.constant dense<0.000000e+00> : vector<8x32xf32>
    %504 = tpu.matmul %503, %4, %cst_371 {dimension_numbers = #tpu.dot_dimension_numbers<[1], [0], [0], [1], [0, 0, 1, 1], [], []>} : vector<8x864xbf16>, vector<864x32xbf16>, vector<8x32xf32> -> vector<8x32xf32>
    %505 = vector.broadcast %5 : vector<1x32xf32> to vector<8x32xf32>
    %506 = arith.addf %504, %505 : vector<8x32xf32>
    %c0_372 = arith.constant 0 : index
    %c0_373 = arith.constant 0 : index
    %c24 = arith.constant 24 : index
    %c0_374 = arith.constant 0 : index
    %507 = vector.load %arg8[%c0_372, %c0_373, %c24, %c0_374] : memref<1x1x48x32xf32, #tpu.memory_space<vmem>>, vector<1x1x8x32xf32>
    %508 = vector.shape_cast %507 : vector<1x1x8x32xf32> to vector<8x32xf32>
    %509 = vector.shape_cast %506 : vector<8x32xf32> to vector<1x1x8x32xf32>
    tpu.vector_store %arg8[%c0_372, %c0_373, %c24, %c0_374], %509 {strides = array<i32>} : memref<1x1x48x32xf32, #tpu.memory_space<vmem>>, vector<1x1x8x32xf32>,
    %c0_i32_375 = arith.constant 0 : i32
    %510 = arith.addi %3, %c0_i32_375 : i32
    %c8_i32_376 = arith.constant 8 : i32
    %511 = arith.muli %510, %c8_i32_376 : i32
    %c4_i32 = arith.constant 4 : i32
    %512 = arith.addi %511, %c4_i32 : i32
    %c0_i32_377 = arith.constant 0 : i32
    %513 = arith.addi %512, %c0_i32_377 : i32
    %514 = arith.index_cast %513 : i32 to index
    %c0_378 = arith.constant 0 : index
    %c0_379 = arith.constant 0 : index
    %515 = vector.load %arg9[%514, %c0_378, %c0_379] : memref<48x10x32xbf16, #tpu.memory_space<vmem>>, vector<1x8x32xbf16>
    %516 = vector.shape_cast %515 : vector<1x8x32xbf16> to vector<8x32xbf16>
    %517 = arith.index_cast %513 : i32 to index
    %c1_380 = arith.constant 1 : index
    %c0_381 = arith.constant 0 : index
    %518 = vector.load %arg9[%517, %c1_380, %c0_381] : memref<48x10x32xbf16, #tpu.memory_space<vmem>>, vector<1x8x32xbf16>
    %519 = vector.shape_cast %518 : vector<1x8x32xbf16> to vector<8x32xbf16>
    %520 = arith.index_cast %513 : i32 to index
    %c2_382 = arith.constant 2 : index
    %c0_383 = arith.constant 0 : index
    %521 = vector.load %arg9[%520, %c2_382, %c0_383] : memref<48x10x32xbf16, #tpu.memory_space<vmem>>, vector<1x8x32xbf16>
    %522 = vector.shape_cast %521 : vector<1x8x32xbf16> to vector<8x32xbf16>
    %c0_i32_384 = arith.constant 0 : i32
    %523 = arith.addi %3, %c0_i32_384 : i32
    %c8_i32_385 = arith.constant 8 : i32
    %524 = arith.muli %523, %c8_i32_385 : i32
    %c4_i32_386 = arith.constant 4 : i32
    %525 = arith.addi %524, %c4_i32_386 : i32
    %c1_i32_387 = arith.constant 1 : i32
    %526 = arith.addi %525, %c1_i32_387 : i32
    %527 = arith.index_cast %526 : i32 to index
    %c0_388 = arith.constant 0 : index
    %c0_389 = arith.constant 0 : index
    %528 = vector.load %arg9[%527, %c0_388, %c0_389] : memref<48x10x32xbf16, #tpu.memory_space<vmem>>, vector<1x8x32xbf16>
    %529 = vector.shape_cast %528 : vector<1x8x32xbf16> to vector<8x32xbf16>
    %530 = arith.index_cast %526 : i32 to index
    %c1_390 = arith.constant 1 : index
    %c0_391 = arith.constant 0 : index
    %531 = vector.load %arg9[%530, %c1_390, %c0_391] : memref<48x10x32xbf16, #tpu.memory_space<vmem>>, vector<1x8x32xbf16>
    %532 = vector.shape_cast %531 : vector<1x8x32xbf16> to vector<8x32xbf16>
    %533 = arith.index_cast %526 : i32 to index
    %c2_392 = arith.constant 2 : index
    %c0_393 = arith.constant 0 : index
    %534 = vector.load %arg9[%533, %c2_392, %c0_393] : memref<48x10x32xbf16, #tpu.memory_space<vmem>>, vector<1x8x32xbf16>
    %535 = vector.shape_cast %534 : vector<1x8x32xbf16> to vector<8x32xbf16>
    %c0_i32_394 = arith.constant 0 : i32
    %536 = arith.addi %3, %c0_i32_394 : i32
    %c8_i32_395 = arith.constant 8 : i32
    %537 = arith.muli %536, %c8_i32_395 : i32
    %c4_i32_396 = arith.constant 4 : i32
    %538 = arith.addi %537, %c4_i32_396 : i32
    %c2_i32_397 = arith.constant 2 : i32
    %539 = arith.addi %538, %c2_i32_397 : i32
    %540 = arith.index_cast %539 : i32 to index
    %c0_398 = arith.constant 0 : index
    %c0_399 = arith.constant 0 : index
    %541 = vector.load %arg9[%540, %c0_398, %c0_399] : memref<48x10x32xbf16, #tpu.memory_space<vmem>>, vector<1x8x32xbf16>
    %542 = vector.shape_cast %541 : vector<1x8x32xbf16> to vector<8x32xbf16>
    %543 = arith.index_cast %539 : i32 to index
    %c1_400 = arith.constant 1 : index
    %c0_401 = arith.constant 0 : index
    %544 = vector.load %arg9[%543, %c1_400, %c0_401] : memref<48x10x32xbf16, #tpu.memory_space<vmem>>, vector<1x8x32xbf16>
    %545 = vector.shape_cast %544 : vector<1x8x32xbf16> to vector<8x32xbf16>
    %546 = arith.index_cast %539 : i32 to index
    %c2_402 = arith.constant 2 : index
    %c0_403 = arith.constant 0 : index
    %547 = vector.load %arg9[%546, %c2_402, %c0_403] : memref<48x10x32xbf16, #tpu.memory_space<vmem>>, vector<1x8x32xbf16>
    %548 = vector.shape_cast %547 : vector<1x8x32xbf16> to vector<8x32xbf16>
    %c1_i32_404 = arith.constant 1 : i32
    %549 = arith.addi %3, %c1_i32_404 : i32
    %c8_i32_405 = arith.constant 8 : i32
    %550 = arith.muli %549, %c8_i32_405 : i32
    %c4_i32_406 = arith.constant 4 : i32
    %551 = arith.addi %550, %c4_i32_406 : i32
    %c0_i32_407 = arith.constant 0 : i32
    %552 = arith.addi %551, %c0_i32_407 : i32
    %553 = arith.index_cast %552 : i32 to index
    %c0_408 = arith.constant 0 : index
    %c0_409 = arith.constant 0 : index
    %554 = vector.load %arg9[%553, %c0_408, %c0_409] : memref<48x10x32xbf16, #tpu.memory_space<vmem>>, vector<1x8x32xbf16>
    %555 = vector.shape_cast %554 : vector<1x8x32xbf16> to vector<8x32xbf16>
    %556 = arith.index_cast %552 : i32 to index
    %c1_410 = arith.constant 1 : index
    %c0_411 = arith.constant 0 : index
    %557 = vector.load %arg9[%556, %c1_410, %c0_411] : memref<48x10x32xbf16, #tpu.memory_space<vmem>>, vector<1x8x32xbf16>
    %558 = vector.shape_cast %557 : vector<1x8x32xbf16> to vector<8x32xbf16>
    %559 = arith.index_cast %552 : i32 to index
    %c2_412 = arith.constant 2 : index
    %c0_413 = arith.constant 0 : index
    %560 = vector.load %arg9[%559, %c2_412, %c0_413] : memref<48x10x32xbf16, #tpu.memory_space<vmem>>, vector<1x8x32xbf16>
    %561 = vector.shape_cast %560 : vector<1x8x32xbf16> to vector<8x32xbf16>
    %c1_i32_414 = arith.constant 1 : i32
    %562 = arith.addi %3, %c1_i32_414 : i32
    %c8_i32_415 = arith.constant 8 : i32
    %563 = arith.muli %562, %c8_i32_415 : i32
    %c4_i32_416 = arith.constant 4 : i32
    %564 = arith.addi %563, %c4_i32_416 : i32
    %c1_i32_417 = arith.constant 1 : i32
    %565 = arith.addi %564, %c1_i32_417 : i32
    %566 = arith.index_cast %565 : i32 to index
    %c0_418 = arith.constant 0 : index
    %c0_419 = arith.constant 0 : index
    %567 = vector.load %arg9[%566, %c0_418, %c0_419] : memref<48x10x32xbf16, #tpu.memory_space<vmem>>, vector<1x8x32xbf16>
    %568 = vector.shape_cast %567 : vector<1x8x32xbf16> to vector<8x32xbf16>
    %569 = arith.index_cast %565 : i32 to index
    %c1_420 = arith.constant 1 : index
    %c0_421 = arith.constant 0 : index
    %570 = vector.load %arg9[%569, %c1_420, %c0_421] : memref<48x10x32xbf16, #tpu.memory_space<vmem>>, vector<1x8x32xbf16>
    %571 = vector.shape_cast %570 : vector<1x8x32xbf16> to vector<8x32xbf16>
    %572 = arith.index_cast %565 : i32 to index
    %c2_422 = arith.constant 2 : index
    %c0_423 = arith.constant 0 : index
    %573 = vector.load %arg9[%572, %c2_422, %c0_423] : memref<48x10x32xbf16, #tpu.memory_space<vmem>>, vector<1x8x32xbf16>
    %574 = vector.shape_cast %573 : vector<1x8x32xbf16> to vector<8x32xbf16>
    %c1_i32_424 = arith.constant 1 : i32
    %575 = arith.addi %3, %c1_i32_424 : i32
    %c8_i32_425 = arith.constant 8 : i32
    %576 = arith.muli %575, %c8_i32_425 : i32
    %c4_i32_426 = arith.constant 4 : i32
    %577 = arith.addi %576, %c4_i32_426 : i32
    %c2_i32_427 = arith.constant 2 : i32
    %578 = arith.addi %577, %c2_i32_427 : i32
    %579 = arith.index_cast %578 : i32 to index
    %c0_428 = arith.constant 0 : index
    %c0_429 = arith.constant 0 : index
    %580 = vector.load %arg9[%579, %c0_428, %c0_429] : memref<48x10x32xbf16, #tpu.memory_space<vmem>>, vector<1x8x32xbf16>
    %581 = vector.shape_cast %580 : vector<1x8x32xbf16> to vector<8x32xbf16>
    %582 = arith.index_cast %578 : i32 to index
    %c1_430 = arith.constant 1 : index
    %c0_431 = arith.constant 0 : index
    %583 = vector.load %arg9[%582, %c1_430, %c0_431] : memref<48x10x32xbf16, #tpu.memory_space<vmem>>, vector<1x8x32xbf16>
    %584 = vector.shape_cast %583 : vector<1x8x32xbf16> to vector<8x32xbf16>
    %585 = arith.index_cast %578 : i32 to index
    %c2_432 = arith.constant 2 : index
    %c0_433 = arith.constant 0 : index
    %586 = vector.load %arg9[%585, %c2_432, %c0_433] : memref<48x10x32xbf16, #tpu.memory_space<vmem>>, vector<1x8x32xbf16>
    %587 = vector.shape_cast %586 : vector<1x8x32xbf16> to vector<8x32xbf16>
    %c2_i32_434 = arith.constant 2 : i32
    %588 = arith.addi %3, %c2_i32_434 : i32
    %c8_i32_435 = arith.constant 8 : i32
    %589 = arith.muli %588, %c8_i32_435 : i32
    %c4_i32_436 = arith.constant 4 : i32
    %590 = arith.addi %589, %c4_i32_436 : i32
    %c0_i32_437 = arith.constant 0 : i32
    %591 = arith.addi %590, %c0_i32_437 : i32
    %592 = arith.index_cast %591 : i32 to index
    %c0_438 = arith.constant 0 : index
    %c0_439 = arith.constant 0 : index
    %593 = vector.load %arg9[%592, %c0_438, %c0_439] : memref<48x10x32xbf16, #tpu.memory_space<vmem>>, vector<1x8x32xbf16>
    %594 = vector.shape_cast %593 : vector<1x8x32xbf16> to vector<8x32xbf16>
    %595 = arith.index_cast %591 : i32 to index
    %c1_440 = arith.constant 1 : index
    %c0_441 = arith.constant 0 : index
    %596 = vector.load %arg9[%595, %c1_440, %c0_441] : memref<48x10x32xbf16, #tpu.memory_space<vmem>>, vector<1x8x32xbf16>
    %597 = vector.shape_cast %596 : vector<1x8x32xbf16> to vector<8x32xbf16>
    %598 = arith.index_cast %591 : i32 to index
    %c2_442 = arith.constant 2 : index
    %c0_443 = arith.constant 0 : index
    %599 = vector.load %arg9[%598, %c2_442, %c0_443] : memref<48x10x32xbf16, #tpu.memory_space<vmem>>, vector<1x8x32xbf16>
    %600 = vector.shape_cast %599 : vector<1x8x32xbf16> to vector<8x32xbf16>
    %c2_i32_444 = arith.constant 2 : i32
    %601 = arith.addi %3, %c2_i32_444 : i32
    %c8_i32_445 = arith.constant 8 : i32
    %602 = arith.muli %601, %c8_i32_445 : i32
    %c4_i32_446 = arith.constant 4 : i32
    %603 = arith.addi %602, %c4_i32_446 : i32
    %c1_i32_447 = arith.constant 1 : i32
    %604 = arith.addi %603, %c1_i32_447 : i32
    %605 = arith.index_cast %604 : i32 to index
    %c0_448 = arith.constant 0 : index
    %c0_449 = arith.constant 0 : index
    %606 = vector.load %arg9[%605, %c0_448, %c0_449] : memref<48x10x32xbf16, #tpu.memory_space<vmem>>, vector<1x8x32xbf16>
    %607 = vector.shape_cast %606 : vector<1x8x32xbf16> to vector<8x32xbf16>
    %608 = arith.index_cast %604 : i32 to index
    %c1_450 = arith.constant 1 : index
    %c0_451 = arith.constant 0 : index
    %609 = vector.load %arg9[%608, %c1_450, %c0_451] : memref<48x10x32xbf16, #tpu.memory_space<vmem>>, vector<1x8x32xbf16>
    %610 = vector.shape_cast %609 : vector<1x8x32xbf16> to vector<8x32xbf16>
    %611 = arith.index_cast %604 : i32 to index
    %c2_452 = arith.constant 2 : index
    %c0_453 = arith.constant 0 : index
    %612 = vector.load %arg9[%611, %c2_452, %c0_453] : memref<48x10x32xbf16, #tpu.memory_space<vmem>>, vector<1x8x32xbf16>
    %613 = vector.shape_cast %612 : vector<1x8x32xbf16> to vector<8x32xbf16>
    %c2_i32_454 = arith.constant 2 : i32
    %614 = arith.addi %3, %c2_i32_454 : i32
    %c8_i32_455 = arith.constant 8 : i32
    %615 = arith.muli %614, %c8_i32_455 : i32
    %c4_i32_456 = arith.constant 4 : i32
    %616 = arith.addi %615, %c4_i32_456 : i32
    %c2_i32_457 = arith.constant 2 : i32
    %617 = arith.addi %616, %c2_i32_457 : i32
    %618 = arith.index_cast %617 : i32 to index
    %c0_458 = arith.constant 0 : index
    %c0_459 = arith.constant 0 : index
    %619 = vector.load %arg9[%618, %c0_458, %c0_459] : memref<48x10x32xbf16, #tpu.memory_space<vmem>>, vector<1x8x32xbf16>
    %620 = vector.shape_cast %619 : vector<1x8x32xbf16> to vector<8x32xbf16>
    %621 = arith.index_cast %617 : i32 to index
    %c1_460 = arith.constant 1 : index
    %c0_461 = arith.constant 0 : index
    %622 = vector.load %arg9[%621, %c1_460, %c0_461] : memref<48x10x32xbf16, #tpu.memory_space<vmem>>, vector<1x8x32xbf16>
    %623 = vector.shape_cast %622 : vector<1x8x32xbf16> to vector<8x32xbf16>
    %624 = arith.index_cast %617 : i32 to index
    %c2_462 = arith.constant 2 : index
    %c0_463 = arith.constant 0 : index
    %625 = vector.load %arg9[%624, %c2_462, %c0_463] : memref<48x10x32xbf16, #tpu.memory_space<vmem>>, vector<1x8x32xbf16>
    %626 = vector.shape_cast %625 : vector<1x8x32xbf16> to vector<8x32xbf16>
    %627 = tpu.concatenate %516, %519, %522, %529, %532, %535, %542, %545, %548, %555, %558, %561, %568, %571, %574, %581 in 1 : vector<8x32xbf16>, vector<8x32xbf16>, vector<8x32xbf16>, vector<8x32xbf16>, vector<8x32xbf16>, vector<8x32xbf16>, vector<8x32xbf16>, vector<8x32xbf16>, vector<8x32xbf16>, vector<8x32xbf16>, vector<8x32xbf16>, vector<8x32xbf16>, vector<8x32xbf16>, vector<8x32xbf16>, vector<8x32xbf16>, vector<8x32xbf16> -> vector<8x512xbf16>
    %628 = tpu.concatenate %584, %587, %594, %597, %600, %607, %610, %613, %620, %623, %626 in 1 : vector<8x32xbf16>, vector<8x32xbf16>, vector<8x32xbf16>, vector<8x32xbf16>, vector<8x32xbf16>, vector<8x32xbf16>, vector<8x32xbf16>, vector<8x32xbf16>, vector<8x32xbf16>, vector<8x32xbf16>, vector<8x32xbf16> -> vector<8x352xbf16>
    %629 = tpu.concatenate %627, %628 in 1 : vector<8x512xbf16>, vector<8x352xbf16> -> vector<8x864xbf16>
    %cst_464 = arith.constant dense<0.000000e+00> : vector<8x32xf32>
    %630 = tpu.matmul %629, %4, %cst_464 {dimension_numbers = #tpu.dot_dimension_numbers<[1], [0], [0], [1], [0, 0, 1, 1], [], []>} : vector<8x864xbf16>, vector<864x32xbf16>, vector<8x32xf32> -> vector<8x32xf32>
    %631 = vector.broadcast %5 : vector<1x32xf32> to vector<8x32xf32>
    %632 = arith.addf %630, %631 : vector<8x32xf32>
    %c0_465 = arith.constant 0 : index
    %c0_466 = arith.constant 0 : index
    %c32 = arith.constant 32 : index
    %c0_467 = arith.constant 0 : index
    %633 = vector.load %arg8[%c0_465, %c0_466, %c32, %c0_467] : memref<1x1x48x32xf32, #tpu.memory_space<vmem>>, vector<1x1x8x32xf32>
    %634 = vector.shape_cast %633 : vector<1x1x8x32xf32> to vector<8x32xf32>
    %635 = vector.shape_cast %632 : vector<8x32xf32> to vector<1x1x8x32xf32>
    tpu.vector_store %arg8[%c0_465, %c0_466, %c32, %c0_467], %635 {strides = array<i32>} : memref<1x1x48x32xf32, #tpu.memory_space<vmem>>, vector<1x1x8x32xf32>,
    %c0_i32_468 = arith.constant 0 : i32
    %636 = arith.addi %3, %c0_i32_468 : i32
    %c8_i32_469 = arith.constant 8 : i32
    %637 = arith.muli %636, %c8_i32_469 : i32
    %c5_i32 = arith.constant 5 : i32
    %638 = arith.addi %637, %c5_i32 : i32
    %c0_i32_470 = arith.constant 0 : i32
    %639 = arith.addi %638, %c0_i32_470 : i32
    %640 = arith.index_cast %639 : i32 to index
    %c0_471 = arith.constant 0 : index
    %c0_472 = arith.constant 0 : index
    %641 = vector.load %arg9[%640, %c0_471, %c0_472] : memref<48x10x32xbf16, #tpu.memory_space<vmem>>, vector<1x8x32xbf16>
    %642 = vector.shape_cast %641 : vector<1x8x32xbf16> to vector<8x32xbf16>
    %643 = arith.index_cast %639 : i32 to index
    %c1_473 = arith.constant 1 : index
    %c0_474 = arith.constant 0 : index
    %644 = vector.load %arg9[%643, %c1_473, %c0_474] : memref<48x10x32xbf16, #tpu.memory_space<vmem>>, vector<1x8x32xbf16>
    %645 = vector.shape_cast %644 : vector<1x8x32xbf16> to vector<8x32xbf16>
    %646 = arith.index_cast %639 : i32 to index
    %c2_475 = arith.constant 2 : index
    %c0_476 = arith.constant 0 : index
    %647 = vector.load %arg9[%646, %c2_475, %c0_476] : memref<48x10x32xbf16, #tpu.memory_space<vmem>>, vector<1x8x32xbf16>
    %648 = vector.shape_cast %647 : vector<1x8x32xbf16> to vector<8x32xbf16>
    %c0_i32_477 = arith.constant 0 : i32
    %649 = arith.addi %3, %c0_i32_477 : i32
    %c8_i32_478 = arith.constant 8 : i32
    %650 = arith.muli %649, %c8_i32_478 : i32
    %c5_i32_479 = arith.constant 5 : i32
    %651 = arith.addi %650, %c5_i32_479 : i32
    %c1_i32_480 = arith.constant 1 : i32
    %652 = arith.addi %651, %c1_i32_480 : i32
    %653 = arith.index_cast %652 : i32 to index
    %c0_481 = arith.constant 0 : index
    %c0_482 = arith.constant 0 : index
    %654 = vector.load %arg9[%653, %c0_481, %c0_482] : memref<48x10x32xbf16, #tpu.memory_space<vmem>>, vector<1x8x32xbf16>
    %655 = vector.shape_cast %654 : vector<1x8x32xbf16> to vector<8x32xbf16>
    %656 = arith.index_cast %652 : i32 to index
    %c1_483 = arith.constant 1 : index
    %c0_484 = arith.constant 0 : index
    %657 = vector.load %arg9[%656, %c1_483, %c0_484] : memref<48x10x32xbf16, #tpu.memory_space<vmem>>, vector<1x8x32xbf16>
    %658 = vector.shape_cast %657 : vector<1x8x32xbf16> to vector<8x32xbf16>
    %659 = arith.index_cast %652 : i32 to index
    %c2_485 = arith.constant 2 : index
    %c0_486 = arith.constant 0 : index
    %660 = vector.load %arg9[%659, %c2_485, %c0_486] : memref<48x10x32xbf16, #tpu.memory_space<vmem>>, vector<1x8x32xbf16>
    %661 = vector.shape_cast %660 : vector<1x8x32xbf16> to vector<8x32xbf16>
    %c0_i32_487 = arith.constant 0 : i32
    %662 = arith.addi %3, %c0_i32_487 : i32
    %c8_i32_488 = arith.constant 8 : i32
    %663 = arith.muli %662, %c8_i32_488 : i32
    %c5_i32_489 = arith.constant 5 : i32
    %664 = arith.addi %663, %c5_i32_489 : i32
    %c2_i32_490 = arith.constant 2 : i32
    %665 = arith.addi %664, %c2_i32_490 : i32
    %666 = arith.index_cast %665 : i32 to index
    %c0_491 = arith.constant 0 : index
    %c0_492 = arith.constant 0 : index
    %667 = vector.load %arg9[%666, %c0_491, %c0_492] : memref<48x10x32xbf16, #tpu.memory_space<vmem>>, vector<1x8x32xbf16>
    %668 = vector.shape_cast %667 : vector<1x8x32xbf16> to vector<8x32xbf16>
    %669 = arith.index_cast %665 : i32 to index
    %c1_493 = arith.constant 1 : index
    %c0_494 = arith.constant 0 : index
    %670 = vector.load %arg9[%669, %c1_493, %c0_494] : memref<48x10x32xbf16, #tpu.memory_space<vmem>>, vector<1x8x32xbf16>
    %671 = vector.shape_cast %670 : vector<1x8x32xbf16> to vector<8x32xbf16>
    %672 = arith.index_cast %665 : i32 to index
    %c2_495 = arith.constant 2 : index
    %c0_496 = arith.constant 0 : index
    %673 = vector.load %arg9[%672, %c2_495, %c0_496] : memref<48x10x32xbf16, #tpu.memory_space<vmem>>, vector<1x8x32xbf16>
    %674 = vector.shape_cast %673 : vector<1x8x32xbf16> to vector<8x32xbf16>
    %c1_i32_497 = arith.constant 1 : i32
    %675 = arith.addi %3, %c1_i32_497 : i32
    %c8_i32_498 = arith.constant 8 : i32
    %676 = arith.muli %675, %c8_i32_498 : i32
    %c5_i32_499 = arith.constant 5 : i32
    %677 = arith.addi %676, %c5_i32_499 : i32
    %c0_i32_500 = arith.constant 0 : i32
    %678 = arith.addi %677, %c0_i32_500 : i32
    %679 = arith.index_cast %678 : i32 to index
    %c0_501 = arith.constant 0 : index
    %c0_502 = arith.constant 0 : index
    %680 = vector.load %arg9[%679, %c0_501, %c0_502] : memref<48x10x32xbf16, #tpu.memory_space<vmem>>, vector<1x8x32xbf16>
    %681 = vector.shape_cast %680 : vector<1x8x32xbf16> to vector<8x32xbf16>
    %682 = arith.index_cast %678 : i32 to index
    %c1_503 = arith.constant 1 : index
    %c0_504 = arith.constant 0 : index
    %683 = vector.load %arg9[%682, %c1_503, %c0_504] : memref<48x10x32xbf16, #tpu.memory_space<vmem>>, vector<1x8x32xbf16>
    %684 = vector.shape_cast %683 : vector<1x8x32xbf16> to vector<8x32xbf16>
    %685 = arith.index_cast %678 : i32 to index
    %c2_505 = arith.constant 2 : index
    %c0_506 = arith.constant 0 : index
    %686 = vector.load %arg9[%685, %c2_505, %c0_506] : memref<48x10x32xbf16, #tpu.memory_space<vmem>>, vector<1x8x32xbf16>
    %687 = vector.shape_cast %686 : vector<1x8x32xbf16> to vector<8x32xbf16>
    %c1_i32_507 = arith.constant 1 : i32
    %688 = arith.addi %3, %c1_i32_507 : i32
    %c8_i32_508 = arith.constant 8 : i32
    %689 = arith.muli %688, %c8_i32_508 : i32
    %c5_i32_509 = arith.constant 5 : i32
    %690 = arith.addi %689, %c5_i32_509 : i32
    %c1_i32_510 = arith.constant 1 : i32
    %691 = arith.addi %690, %c1_i32_510 : i32
    %692 = arith.index_cast %691 : i32 to index
    %c0_511 = arith.constant 0 : index
    %c0_512 = arith.constant 0 : index
    %693 = vector.load %arg9[%692, %c0_511, %c0_512] : memref<48x10x32xbf16, #tpu.memory_space<vmem>>, vector<1x8x32xbf16>
    %694 = vector.shape_cast %693 : vector<1x8x32xbf16> to vector<8x32xbf16>
    %695 = arith.index_cast %691 : i32 to index
    %c1_513 = arith.constant 1 : index
    %c0_514 = arith.constant 0 : index
    %696 = vector.load %arg9[%695, %c1_513, %c0_514] : memref<48x10x32xbf16, #tpu.memory_space<vmem>>, vector<1x8x32xbf16>
    %697 = vector.shape_cast %696 : vector<1x8x32xbf16> to vector<8x32xbf16>
    %698 = arith.index_cast %691 : i32 to index
    %c2_515 = arith.constant 2 : index
    %c0_516 = arith.constant 0 : index
    %699 = vector.load %arg9[%698, %c2_515, %c0_516] : memref<48x10x32xbf16, #tpu.memory_space<vmem>>, vector<1x8x32xbf16>
    %700 = vector.shape_cast %699 : vector<1x8x32xbf16> to vector<8x32xbf16>
    %c1_i32_517 = arith.constant 1 : i32
    %701 = arith.addi %3, %c1_i32_517 : i32
    %c8_i32_518 = arith.constant 8 : i32
    %702 = arith.muli %701, %c8_i32_518 : i32
    %c5_i32_519 = arith.constant 5 : i32
    %703 = arith.addi %702, %c5_i32_519 : i32
    %c2_i32_520 = arith.constant 2 : i32
    %704 = arith.addi %703, %c2_i32_520 : i32
    %705 = arith.index_cast %704 : i32 to index
    %c0_521 = arith.constant 0 : index
    %c0_522 = arith.constant 0 : index
    %706 = vector.load %arg9[%705, %c0_521, %c0_522] : memref<48x10x32xbf16, #tpu.memory_space<vmem>>, vector<1x8x32xbf16>
    %707 = vector.shape_cast %706 : vector<1x8x32xbf16> to vector<8x32xbf16>
    %708 = arith.index_cast %704 : i32 to index
    %c1_523 = arith.constant 1 : index
    %c0_524 = arith.constant 0 : index
    %709 = vector.load %arg9[%708, %c1_523, %c0_524] : memref<48x10x32xbf16, #tpu.memory_space<vmem>>, vector<1x8x32xbf16>
    %710 = vector.shape_cast %709 : vector<1x8x32xbf16> to vector<8x32xbf16>
    %711 = arith.index_cast %704 : i32 to index
    %c2_525 = arith.constant 2 : index
    %c0_526 = arith.constant 0 : index
    %712 = vector.load %arg9[%711, %c2_525, %c0_526] : memref<48x10x32xbf16, #tpu.memory_space<vmem>>, vector<1x8x32xbf16>
    %713 = vector.shape_cast %712 : vector<1x8x32xbf16> to vector<8x32xbf16>
    %c2_i32_527 = arith.constant 2 : i32
    %714 = arith.addi %3, %c2_i32_527 : i32
    %c8_i32_528 = arith.constant 8 : i32
    %715 = arith.muli %714, %c8_i32_528 : i32
    %c5_i32_529 = arith.constant 5 : i32
    %716 = arith.addi %715, %c5_i32_529 : i32
    %c0_i32_530 = arith.constant 0 : i32
    %717 = arith.addi %716, %c0_i32_530 : i32
    %718 = arith.index_cast %717 : i32 to index
    %c0_531 = arith.constant 0 : index
    %c0_532 = arith.constant 0 : index
    %719 = vector.load %arg9[%718, %c0_531, %c0_532] : memref<48x10x32xbf16, #tpu.memory_space<vmem>>, vector<1x8x32xbf16>
    %720 = vector.shape_cast %719 : vector<1x8x32xbf16> to vector<8x32xbf16>
    %721 = arith.index_cast %717 : i32 to index
    %c1_533 = arith.constant 1 : index
    %c0_534 = arith.constant 0 : index
    %722 = vector.load %arg9[%721, %c1_533, %c0_534] : memref<48x10x32xbf16, #tpu.memory_space<vmem>>, vector<1x8x32xbf16>
    %723 = vector.shape_cast %722 : vector<1x8x32xbf16> to vector<8x32xbf16>
    %724 = arith.index_cast %717 : i32 to index
    %c2_535 = arith.constant 2 : index
    %c0_536 = arith.constant 0 : index
    %725 = vector.load %arg9[%724, %c2_535, %c0_536] : memref<48x10x32xbf16, #tpu.memory_space<vmem>>, vector<1x8x32xbf16>
    %726 = vector.shape_cast %725 : vector<1x8x32xbf16> to vector<8x32xbf16>
    %c2_i32_537 = arith.constant 2 : i32
    %727 = arith.addi %3, %c2_i32_537 : i32
    %c8_i32_538 = arith.constant 8 : i32
    %728 = arith.muli %727, %c8_i32_538 : i32
    %c5_i32_539 = arith.constant 5 : i32
    %729 = arith.addi %728, %c5_i32_539 : i32
    %c1_i32_540 = arith.constant 1 : i32
    %730 = arith.addi %729, %c1_i32_540 : i32
    %731 = arith.index_cast %730 : i32 to index
    %c0_541 = arith.constant 0 : index
    %c0_542 = arith.constant 0 : index
    %732 = vector.load %arg9[%731, %c0_541, %c0_542] : memref<48x10x32xbf16, #tpu.memory_space<vmem>>, vector<1x8x32xbf16>
    %733 = vector.shape_cast %732 : vector<1x8x32xbf16> to vector<8x32xbf16>
    %734 = arith.index_cast %730 : i32 to index
    %c1_543 = arith.constant 1 : index
    %c0_544 = arith.constant 0 : index
    %735 = vector.load %arg9[%734, %c1_543, %c0_544] : memref<48x10x32xbf16, #tpu.memory_space<vmem>>, vector<1x8x32xbf16>
    %736 = vector.shape_cast %735 : vector<1x8x32xbf16> to vector<8x32xbf16>
    %737 = arith.index_cast %730 : i32 to index
    %c2_545 = arith.constant 2 : index
    %c0_546 = arith.constant 0 : index
    %738 = vector.load %arg9[%737, %c2_545, %c0_546] : memref<48x10x32xbf16, #tpu.memory_space<vmem>>, vector<1x8x32xbf16>
    %739 = vector.shape_cast %738 : vector<1x8x32xbf16> to vector<8x32xbf16>
    %c2_i32_547 = arith.constant 2 : i32
    %740 = arith.addi %3, %c2_i32_547 : i32
    %c8_i32_548 = arith.constant 8 : i32
    %741 = arith.muli %740, %c8_i32_548 : i32
    %c5_i32_549 = arith.constant 5 : i32
    %742 = arith.addi %741, %c5_i32_549 : i32
    %c2_i32_550 = arith.constant 2 : i32
    %743 = arith.addi %742, %c2_i32_550 : i32
    %744 = arith.index_cast %743 : i32 to index
    %c0_551 = arith.constant 0 : index
    %c0_552 = arith.constant 0 : index
    %745 = vector.load %arg9[%744, %c0_551, %c0_552] : memref<48x10x32xbf16, #tpu.memory_space<vmem>>, vector<1x8x32xbf16>
    %746 = vector.shape_cast %745 : vector<1x8x32xbf16> to vector<8x32xbf16>
    %747 = arith.index_cast %743 : i32 to index
    %c1_553 = arith.constant 1 : index
    %c0_554 = arith.constant 0 : index
    %748 = vector.load %arg9[%747, %c1_553, %c0_554] : memref<48x10x32xbf16, #tpu.memory_space<vmem>>, vector<1x8x32xbf16>
    %749 = vector.shape_cast %748 : vector<1x8x32xbf16> to vector<8x32xbf16>
    %750 = arith.index_cast %743 : i32 to index
    %c2_555 = arith.constant 2 : index
    %c0_556 = arith.constant 0 : index
    %751 = vector.load %arg9[%750, %c2_555, %c0_556] : memref<48x10x32xbf16, #tpu.memory_space<vmem>>, vector<1x8x32xbf16>
    %752 = vector.shape_cast %751 : vector<1x8x32xbf16> to vector<8x32xbf16>
    %753 = tpu.concatenate %642, %645, %648, %655, %658, %661, %668, %671, %674, %681, %684, %687, %694, %697, %700, %707 in 1 : vector<8x32xbf16>, vector<8x32xbf16>, vector<8x32xbf16>, vector<8x32xbf16>, vector<8x32xbf16>, vector<8x32xbf16>, vector<8x32xbf16>, vector<8x32xbf16>, vector<8x32xbf16>, vector<8x32xbf16>, vector<8x32xbf16>, vector<8x32xbf16>, vector<8x32xbf16>, vector<8x32xbf16>, vector<8x32xbf16>, vector<8x32xbf16> -> vector<8x512xbf16>
    %754 = tpu.concatenate %710, %713, %720, %723, %726, %733, %736, %739, %746, %749, %752 in 1 : vector<8x32xbf16>, vector<8x32xbf16>, vector<8x32xbf16>, vector<8x32xbf16>, vector<8x32xbf16>, vector<8x32xbf16>, vector<8x32xbf16>, vector<8x32xbf16>, vector<8x32xbf16>, vector<8x32xbf16>, vector<8x32xbf16> -> vector<8x352xbf16>
    %755 = tpu.concatenate %753, %754 in 1 : vector<8x512xbf16>, vector<8x352xbf16> -> vector<8x864xbf16>
    %cst_557 = arith.constant dense<0.000000e+00> : vector<8x32xf32>
    %756 = tpu.matmul %755, %4, %cst_557 {dimension_numbers = #tpu.dot_dimension_numbers<[1], [0], [0], [1], [0, 0, 1, 1], [], []>} : vector<8x864xbf16>, vector<864x32xbf16>, vector<8x32xf32> -> vector<8x32xf32>
    %757 = vector.broadcast %5 : vector<1x32xf32> to vector<8x32xf32>
    %758 = arith.addf %756, %757 : vector<8x32xf32>
    %c0_558 = arith.constant 0 : index
    %c0_559 = arith.constant 0 : index
    %c40 = arith.constant 40 : index
    %c0_560 = arith.constant 0 : index
    %759 = vector.load %arg8[%c0_558, %c0_559, %c40, %c0_560] : memref<1x1x48x32xf32, #tpu.memory_space<vmem>>, vector<1x1x8x32xf32>
    %760 = vector.shape_cast %759 : vector<1x1x8x32xf32> to vector<8x32xf32>
    %761 = vector.shape_cast %758 : vector<8x32xf32> to vector<1x1x8x32xf32>
    tpu.vector_store %arg8[%c0_558, %c0_559, %c40, %c0_560], %761 {strides = array<i32>} : memref<1x1x48x32xf32, #tpu.memory_space<vmem>>, vector<1x1x8x32xf32>,
    return
  }
  func.func @transform_0(%arg0: i32, %arg1: i32) -> (i32, i32, i32, i32) {
    %c0_i32 = arith.constant 0 : i32
    %c0_i32_0 = arith.constant 0 : i32
    %c0_i32_1 = arith.constant 0 : i32
    %c0_i32_2 = arith.constant 0 : i32
    return %arg0, %c0_i32, %c0_i32_0, %c0_i32_1 : i32, i32, i32, i32
  }
  func.func @transform_1(%arg0: i32, %arg1: i32) -> (i32, i32) {
    %c0_i32 = arith.constant 0 : i32
    %c0_i32_0 = arith.constant 0 : i32
    %c0_i32_1 = arith.constant 0 : i32
    return %c0_i32, %c0_i32_0 : i32, i32
  }
  func.func @transform_2(%arg0: i32, %arg1: i32) -> (i32, i32) {
    %c0_i32 = arith.constant 0 : i32
    %c0_i32_0 = arith.constant 0 : i32
    %c0_i32_1 = arith.constant 0 : i32
    return %c0_i32, %c0_i32_0 : i32, i32
  }
  func.func @transform_3(%arg0: i32, %arg1: i32) -> (i32, i32) {
    %c0_i32 = arith.constant 0 : i32
    %c0_i32_0 = arith.constant 0 : i32
    %c0_i32_1 = arith.constant 0 : i32
    return %c0_i32, %c0_i32_0 : i32, i32
  }
  func.func @transform_4(%arg0: i32, %arg1: i32) -> (i32, i32) {
    %c0_i32 = arith.constant 0 : i32
    %c0_i32_0 = arith.constant 0 : i32
    %c0_i32_1 = arith.constant 0 : i32
    return %c0_i32, %c0_i32_0 : i32, i32
  }
  func.func @transform_5(%arg0: i32, %arg1: i32) -> (i32, i32) {
    %c0_i32 = arith.constant 0 : i32
    %c0_i32_0 = arith.constant 0 : i32
    %c0_i32_1 = arith.constant 0 : i32
    return %c0_i32, %c0_i32_0 : i32, i32
  }
  func.func @transform_6(%arg0: i32, %arg1: i32) -> (i32, i32, i32, i32) {
    %c0_i32 = arith.constant 0 : i32
    %c0_i32_0 = arith.constant 0 : i32
    %c0_i32_1 = arith.constant 0 : i32
    return %arg0, %arg1, %c0_i32, %c0_i32_0 : i32, i32, i32, i32
  }
}

</mosaic_0001>

<llo_original>
// kernel: tpu_custom_call.1
$region0: #{tpu_custom_call.1}
  #allocation0 [shape = 'u32[]', space=smem, size = 0x4, offset = 0x4, fixed_abs, tag = 'smem constant byte address 0x4 - core index']
  #allocation1 [shape = 'u32[144,128]{1,0:T(1,128)}', space=vmem, size = 0x12000, scoped, tag = 'internal scratch']
  #allocation2 [shape = 'bf16[48,10,32]{2,1,0:T(8,128)(2,1)}', space=vmem, size = 0x30000, scoped, tag = 'scratch operand']
  %s0 = inlined_call_operand.vmem [shape: bf16[2,24,8,32], index: 0, kind: input, shape index: {}]
  %s1 = inlined_call_operand.vmem [shape: bf16[864,32], index: 1, kind: input, shape index: {}]
  %s2 = inlined_call_operand.vmem [shape: f32[1,32], index: 2, kind: input, shape index: {}]
  %s3 = inlined_call_operand.vmem [shape: f32[1,32], index: 3, kind: input, shape index: {}]
  %s4 = inlined_call_operand.vmem [shape: f32[1,32], index: 4, kind: input, shape index: {}]
  %s5 = inlined_call_operand.vmem [shape: f32[32,32], index: 5, kind: input, shape index: {}]
  %s6 = inlined_call_operand.vmem [shape: f32[2,4,48,32], index: 6, kind: output, shape index: {}]
  %s7 = sld [smem:[#allocation0]]
  $region61: #{tpu_custom_call.1} parent=0
    _
  %s9 = ssub.s32 1, %s7
  %s10 = scalar_select 0, %s9, %s7
  loop: start=0, step=1, limit=10
  $region2: #{tpu_custom_call.1} parent=0 // loop_pre_header
    _
  $region3: #{tpu_custom_call.1} parent=0 // loop_header
    %s12 = sphi 0, %s16
    %p13 = scmp.ge.s32.totalorder %s12, 10
    %s19 = sphi 0, %s31
    %s20 = sphi 0, %s27
    %s21 = sphi 0, %s19
    %s22 = sphi 0, %s20
    %s23 = sphi 0, %s21
    %s24 = sphi 0, %s22
    %s34 = sphi 0, %s36
    %s37 = sphi 0, %s34
    %s38 = sphi 0, %s37
    %s54 = sphi 0, %s38
    %s58 = sphi 0, %s58
    %s60 = sphi 0, %s58
    %s61 = sphi 0, %s60
    %s75 = sphi 0, %s61
    %s79 = sphi 0, %s79
    %s81 = sphi 0, %s79
    %s82 = sphi 0, %s81
    %s96 = sphi 0, %s82
    %s100 = sphi 0, %s100
    %s102 = sphi 0, %s100
    %s103 = sphi 0, %s102
    %s117 = sphi 0, %s103
    %s121 = sphi 0, %s121
    %s123 = sphi 0, %s121
    %s124 = sphi 0, %s123
    %s138 = sphi 0, %s124
    %s142 = sphi 0, %s142
    %s144 = sphi 0, %s142
    %s145 = sphi 0, %s144
    %s159 = sphi 0, %s145
    %s167 = sphi 0, %s169
    %s170 = sphi 0, %s167
    %s171 = sphi 0, %s170
    %s187 = sphi 0, %s171
  $region4: #{tpu_custom_call.1} parent=0 // loop_header_branch
    %15 = sbr.rel (%p13) target = $region8
  $region5: #{tpu_custom_call.1} parent=0 // loop_body
    %s17 = ssub.s32 %s12, 1
    %s18 = ssub.s32 %s12, 2
    %s25 = sadd.s32 1, %s20
    %p26 = scmp.ge.s32.totalorder %s25, 4
    %s27 = scalar_select %p26, 0, %s25
    %s28 = sadd.s32 1, %s19
    %s29 = scalar_select %p26, %s28, %s19
    %p30 = scmp.ge.s32.totalorder %s29, 2
    %s31 = scalar_select %p30, 0, %s29
    %s32 = ssub.s32 %s19, %s31
    %p33 = scmp.eq.s32.totalorder %s32, 0
    %s35 = sadd.s32 %s34, 1
    %s36 = scalar_select %p33, %s34, %s35
    %p39 = pneg %p33
    %p40 = scmp.eq.s32.totalorder %s12, 7
    %p41 = por %p39, %p40
    %p42 = scmp.ne.s32.totalorder %s34, %s37
    %p43 = scmp.eq.s32.totalorder %s12, 0
    %p44 = por %p42, %p43
    %p45 = scmp.ne.s32.totalorder %s34, %s37
    %p46 = scmp.eq.s32.totalorder %s17, 7
    %p47 = por %p45, %p46
    %p48 = scmp.ne.s32.totalorder %s37, %s38
    %p49 = scmp.eq.s32.totalorder %s17, 0
    %p50 = por %p48, %p49
    %p51 = scmp.ne.s32.totalorder %s37, %s38
    %p52 = scmp.eq.s32.totalorder %s18, 7
    %p53 = por %p51, %p52
    %p55 = scmp.ne.s32.totalorder %s38, %s54
    %p56 = scmp.eq.s32.totalorder %s18, 0
    %p57 = por %p55, %p56
    %s59 = sadd.s32 %s58, 1
    %p62 = scmp.eq.s32.totalorder %s12, 7
    %p63 = scmp.ne.s32.totalorder %s58, %s60
    %p64 = scmp.eq.s32.totalorder %s12, 0
    %p65 = por %p63, %p64
    %p66 = scmp.ne.s32.totalorder %s58, %s60
    %p67 = scmp.eq.s32.totalorder %s17, 7
    %p68 = por %p66, %p67
    %p69 = scmp.ne.s32.totalorder %s60, %s61
    %p70 = scmp.eq.s32.totalorder %s17, 0
    %p71 = por %p69, %p70
    %p72 = scmp.ne.s32.totalorder %s60, %s61
    %p73 = scmp.eq.s32.totalorder %s18, 7
    %p74 = por %p72, %p73
    %p76 = scmp.ne.s32.totalorder %s61, %s75
    %p77 = scmp.eq.s32.totalorder %s18, 0
    %p78 = por %p76, %p77
    %s80 = sadd.s32 %s79, 1
    %p83 = scmp.eq.s32.totalorder %s12, 7
    %p84 = scmp.ne.s32.totalorder %s79, %s81
    %p85 = scmp.eq.s32.totalorder %s12, 0
    %p86 = por %p84, %p85
    %p87 = scmp.ne.s32.totalorder %s79, %s81
    %p88 = scmp.eq.s32.totalorder %s17, 7
    %p89 = por %p87, %p88
    %p90 = scmp.ne.s32.totalorder %s81, %s82
    %p91 = scmp.eq.s32.totalorder %s17, 0
    %p92 = por %p90, %p91
    %p93 = scmp.ne.s32.totalorder %s81, %s82
    %p94 = scmp.eq.s32.totalorder %s18, 7
    %p95 = por %p93, %p94
    %p97 = scmp.ne.s32.totalorder %s82, %s96
    %p98 = scmp.eq.s32.totalorder %s18, 0
    %p99 = por %p97, %p98
    %s101 = sadd.s32 %s100, 1
    %p104 = scmp.eq.s32.totalorder %s12, 7
    %p105 = scmp.ne.s32.totalorder %s100, %s102
    %p106 = scmp.eq.s32.totalorder %s12, 0
    %p107 = por %p105, %p106
    %p108 = scmp.ne.s32.totalorder %s100, %s102
    %p109 = scmp.eq.s32.totalorder %s17, 7
    %p110 = por %p108, %p109
    %p111 = scmp.ne.s32.totalorder %s102, %s103
    %p112 = scmp.eq.s32.totalorder %s17, 0
    %p113 = por %p111, %p112
    %p114 = scmp.ne.s32.totalorder %s102, %s103
    %p115 = scmp.eq.s32.totalorder %s18, 7
    %p116 = por %p114, %p115
    %p118 = scmp.ne.s32.totalorder %s103, %s117
    %p119 = scmp.eq.s32.totalorder %s18, 0
    %p120 = por %p118, %p119
    %s122 = sadd.s32 %s121, 1
    %p125 = scmp.eq.s32.totalorder %s12, 7
    %p126 = scmp.ne.s32.totalorder %s121, %s123
    %p127 = scmp.eq.s32.totalorder %s12, 0
    %p128 = por %p126, %p127
    %p129 = scmp.ne.s32.totalorder %s121, %s123
    %p130 = scmp.eq.s32.totalorder %s17, 7
    %p131 = por %p129, %p130
    %p132 = scmp.ne.s32.totalorder %s123, %s124
    %p133 = scmp.eq.s32.totalorder %s17, 0
    %p134 = por %p132, %p133
    %p135 = scmp.ne.s32.totalorder %s123, %s124
    %p136 = scmp.eq.s32.totalorder %s18, 7
    %p137 = por %p135, %p136
    %p139 = scmp.ne.s32.totalorder %s124, %s138
    %p140 = scmp.eq.s32.totalorder %s18, 0
    %p141 = por %p139, %p140
    %s143 = sadd.s32 %s142, 1
    %p146 = scmp.eq.s32.totalorder %s12, 7
    %p147 = scmp.ne.s32.totalorder %s142, %s144
    %p148 = scmp.eq.s32.totalorder %s12, 0
    %p149 = por %p147, %p148
    %p150 = scmp.ne.s32.totalorder %s142, %s144
    %p151 = scmp.eq.s32.totalorder %s17, 7
    %p152 = por %p150, %p151
    %p153 = scmp.ne.s32.totalorder %s144, %s145
    %p154 = scmp.eq.s32.totalorder %s17, 0
    %p155 = por %p153, %p154
    %p156 = scmp.ne.s32.totalorder %s144, %s145
    %p157 = scmp.eq.s32.totalorder %s18, 7
    %p158 = por %p156, %p157
    %p160 = scmp.ne.s32.totalorder %s145, %s159
    %p161 = scmp.eq.s32.totalorder %s18, 0
    %p162 = por %p160, %p161
    %s163 = ssub.s32 %s19, %s31
    %s164 = ssub.s32 %s20, %s27
    %s165 = sor.u32 %s163, %s164
    %p166 = scmp.eq.s32.totalorder %s165, 0
    %s168 = sadd.s32 %s167, 1
    %s169 = scalar_select %p166, %s167, %s168
    %p172 = pneg %p166
    %p173 = scmp.eq.s32.totalorder %s12, 7
    %p174 = por %p172, %p173
    %p175 = scmp.ne.s32.totalorder %s167, %s170
    %p176 = scmp.eq.s32.totalorder %s12, 0
    %p177 = por %p175, %p176
    %p178 = scmp.ne.s32.totalorder %s167, %s170
    %p179 = scmp.eq.s32.totalorder %s17, 7
    %p180 = por %p178, %p179
    %p181 = scmp.ne.s32.totalorder %s170, %s171
    %p182 = scmp.eq.s32.totalorder %s17, 0
    %p183 = por %p181, %p182
    %p184 = scmp.ne.s32.totalorder %s170, %s171
    %p185 = scmp.eq.s32.totalorder %s18, 7
    %p186 = por %p184, %p185
    %p188 = scmp.ne.s32.totalorder %s171, %s187
    %p189 = scmp.eq.s32.totalorder %s18, 0
    %p190 = por %p188, %p189
    %p191 = scmp.le.s32.totalorder 1, %s12
    %p192 = scmp.lt.s32.totalorder %s12, 9
    %p193 = pnand %p191, %p192
    %p194 = pneg %p193
    // Predicated region
    $region9: #{tpu_custom_call.1} parent=5 // pred_check
      _
    $region10: #{tpu_custom_call.1} parent=5 // pred_check_branch
      %196 = sbr.rel (%p193) target = $region12
    $region11: #{tpu_custom_call.1} parent=5 // pred_region
      %s197 = ssub.s32 %s12, 1
      // Predicated region
      $region13: #{tpu_custom_call.1} parent=11 // pred_check
        %p198 = pneg %p71
      $region14: #{tpu_custom_call.1} parent=11 // pred_check_branch
        %200 = sbr.rel (%p198) target = $region16
      $region15: #{tpu_custom_call.1} parent=11 // pred_region
        _
      $region16: #{tpu_custom_call.1} parent=11 // pred_fallthru
        _
      // Predicated region
      $region17: #{tpu_custom_call.1} parent=11 // pred_check
        %p201 = pneg %p92
      $region18: #{tpu_custom_call.1} parent=11 // pred_check_branch
        %203 = sbr.rel (%p201) target = $region20
      $region19: #{tpu_custom_call.1} parent=11 // pred_region
        _
      $region20: #{tpu_custom_call.1} parent=11 // pred_fallthru
        _
      // Predicated region
      $region21: #{tpu_custom_call.1} parent=11 // pred_check
        %p204 = pneg %p113
      $region22: #{tpu_custom_call.1} parent=11 // pred_check_branch
        %206 = sbr.rel (%p204) target = $region24
      $region23: #{tpu_custom_call.1} parent=11 // pred_region
        _
      $region24: #{tpu_custom_call.1} parent=11 // pred_fallthru
        _
      // Predicated region
      $region25: #{tpu_custom_call.1} parent=11 // pred_check
        %p207 = pneg %p134
      $region26: #{tpu_custom_call.1} parent=11 // pred_check_branch
        %209 = sbr.rel (%p207) target = $region28
      $region27: #{tpu_custom_call.1} parent=11 // pred_region
        _
      $region28: #{tpu_custom_call.1} parent=11 // pred_fallthru
        _
      // Predicated region
      $region29: #{tpu_custom_call.1} parent=11 // pred_check
        %p210 = pneg %p155
      $region30: #{tpu_custom_call.1} parent=11 // pred_check_branch
        %212 = sbr.rel (%p210) target = $region32
      $region31: #{tpu_custom_call.1} parent=11 // pred_region
        _
      $region32: #{tpu_custom_call.1} parent=11 // pred_fallthru
        _
    $region12: #{tpu_custom_call.1} parent=5 // pred_fallthru
      _
    %p213 = scmp.lt.s32.totalorder %s12, 8
    // Predicated region
    $region33: #{tpu_custom_call.1} parent=5 // pred_check
      %p214 = pneg %p213
    $region34: #{tpu_custom_call.1} parent=5 // pred_check_branch
      %216 = sbr.rel (%p214) target = $region36
    $region35: #{tpu_custom_call.1} parent=5 // pred_region
      // Predicated region
      $region37: #{tpu_custom_call.1} parent=35 // pred_check
        %p217 = pneg %p44
      $region38: #{tpu_custom_call.1} parent=35 // pred_check_branch
        %219 = sbr.rel (%p217) target = $region40
      $region39: #{tpu_custom_call.1} parent=35 // pred_region
        %p220 = scmp.lt.s32.totalorder %s19, 1
        %s221 = scalar_select %p220, %s19, 1
        %s222 = smul.addr %s221, 24
        %s223 = smul.addr %s222, 4
        %s224 = scalar_lea.vmem %s0, %s223
      $region40: #{tpu_custom_call.1} parent=35 // pred_fallthru
        _
    $region36: #{tpu_custom_call.1} parent=5 // pred_fallthru
      _
    %p225 = scmp.le.s32.totalorder 1, %s12
    %p226 = scmp.lt.s32.totalorder %s12, 9
    %p227 = pnand %p225, %p226
    %p228 = pneg %p227
    // Predicated region
    $region41: #{tpu_custom_call.1} parent=5 // pred_check
      _
    $region42: #{tpu_custom_call.1} parent=5 // pred_check_branch
      %230 = sbr.rel (%p227) target = $region44
    $region43: #{tpu_custom_call.1} parent=5 // pred_region
      %s231 = ssub.s32 %s12, 1
      %p232 = scmp.lt.s32.totalorder %s21, 1
      %s233 = scalar_select %p232, %s21, 1
      %s234 = smul.addr %s233, 24
      %s235 = smul.addr %s234, 4
      %s236 = scalar_lea.vmem %s0, %s235
      %p237 = pneg %p50
      %p238 = pneg %p47
      %p239 = pneg %p71
      %p240 = pneg %p68
      %p241 = pneg %p92
      %p242 = pneg %p89
      %p243 = pneg %p113
      %p244 = pneg %p110
      %p245 = pneg %p134
      %p246 = pneg %p131
      %p247 = pneg %p155
      %p248 = pneg %p152
      %p249 = pneg %p183
      %p250 = pneg %p180
      %p251 = scmp.lt.s32.totalorder %s21, 1
      %s252 = scalar_select %p251, %s21, 1
      %p253 = scmp.lt.s32.totalorder %s22, 3
      %s254 = scalar_select %p253, %s22, 3
      %s255 = smul.addr %s254, 6
      %s256 = smul.addr %s252, 24
      %s257 = sadd.s32 %s255, %s256
      %s258 = smul.addr %s257, 8
      %s259 = scalar_lea.vmem %s6, %s258
      %p260 = scmp.lt.s32.totalorder %s21, 1
      %s261 = scalar_select %p260, %s21, 1
      %s262 = smul.addr %s261, 24
      %s263 = smul.addr %s262, 4
      %s264 = scalar_lea.vmem %s0, %s263
      %p265 = scmp.lt.s32.totalorder %s21, 1
      %s266 = scalar_select %p265, %s21, 1
      %p267 = scmp.lt.s32.totalorder %s22, 3
      %s268 = scalar_select %p267, %s22, 3
      %s269 = smul.addr %s268, 6
      %s270 = smul.addr %s266, 24
      %s271 = sadd.s32 %s269, %s270
      %s272 = smul.addr %s271, 8
      %s273 = scalar_lea.vmem %s6, %s272
      %p275 = scmp.eq.s32.totalorder %s22, 0
      // Predicated region
      $region45: #{tpu_custom_call.1} parent=43 // pred_check
        %p276 = pneg %p275
      $region46: #{tpu_custom_call.1} parent=43 // pred_check_branch
        %278 = sbr.rel (%p276) target = $region48
      $region47: #{tpu_custom_call.1} parent=43 // pred_region
        %vm279 = vcmask 257024
        %280 = vst.msk [vmem:[#allocation2] sm:$0xf] %vm279, 0
        %vm281 = vcmask 253952
        %282 = vst.msk [vmem:[#allocation2 + $0x4] sm:$0x1] %vm281, 0
        %283 = vst.msk [vmem:[#allocation2 + $0x8] sm:$0xf] %vm279, 0
        %284 = vst.msk [vmem:[#allocation2 + $0xc] sm:$0x1] %vm281, 0
        %285 = vst.msk [vmem:[#allocation2 + $0x10] sm:$0xf] %vm279, 0
        %286 = vst.msk [vmem:[#allocation2 + $0x14] sm:$0x1] %vm281, 0
        %287 = vst.msk [vmem:[#allocation2 + $0x18] sm:$0xf] %vm279, 0
        %288 = vst.msk [vmem:[#allocation2 + $0x1c] sm:$0x1] %vm281, 0
        %289 = vst.msk [vmem:[#allocation2 + $0x20] sm:$0xf] %vm279, 0
        %290 = vst.msk [vmem:[#allocation2 + $0x24] sm:$0x1] %vm281, 0
        %291 = vst.msk [vmem:[#allocation2 + $0x28] sm:$0xf] %vm279, 0
        %292 = vst.msk [vmem:[#allocation2 + $0x2c] sm:$0x1] %vm281, 0
        %293 = vst.msk [vmem:[#allocation2 + $0x30] sm:$0xf] %vm279, 0
        %294 = vst.msk [vmem:[#allocation2 + $0x34] sm:$0x1] %vm281, 0
        %295 = vst.msk [vmem:[#allocation2 + $0x38] sm:$0xf] %vm279, 0
        %296 = vst.msk [vmem:[#allocation2 + $0x3c] sm:$0x1] %vm281, 0
        %297 = vst.msk [vmem:[#allocation2 + $0x40] sm:$0xf] %vm279, 0
        %298 = vst.msk [vmem:[#allocation2 + $0x44] sm:$0x1] %vm281, 0
        %299 = vst.msk [vmem:[#allocation2 + $0x48] sm:$0xf] %vm279, 0
        %300 = vst.msk [vmem:[#allocation2 + $0x4c] sm:$0x1] %vm281, 0
        %301 = vst.msk [vmem:[#allocation2 + $0x50] sm:$0xf] %vm279, 0
        %302 = vst.msk [vmem:[#allocation2 + $0x54] sm:$0x1] %vm281, 0
        %303 = vst.msk [vmem:[#allocation2 + $0x58] sm:$0xf] %vm279, 0
        %304 = vst.msk [vmem:[#allocation2 + $0x5c] sm:$0x1] %vm281, 0
        %305 = vst.msk [vmem:[#allocation2 + $0x60] sm:$0xf] %vm279, 0
        %306 = vst.msk [vmem:[#allocation2 + $0x64] sm:$0x1] %vm281, 0
        %307 = vst.msk [vmem:[#allocation2 + $0x68] sm:$0xf] %vm279, 0
        %308 = vst.msk [vmem:[#allocation2 + $0x6c] sm:$0x1] %vm281, 0
        %309 = vst.msk [vmem:[#allocation2 + $0x70] sm:$0xf] %vm279, 0
        %310 = vst.msk [vmem:[#allocation2 + $0x74] sm:$0x1] %vm281, 0
        %311 = vst.msk [vmem:[#allocation2 + $0x78] sm:$0xf] %vm279, 0
        %312 = vst.msk [vmem:[#allocation2 + $0x7c] sm:$0x1] %vm281, 0
        %313 = vst.msk [vmem:[#allocation2 + $0x80] sm:$0xf] %vm279, 0
        %314 = vst.msk [vmem:[#allocation2 + $0x84] sm:$0x1] %vm281, 0
        %315 = vst.msk [vmem:[#allocation2 + $0x88] sm:$0xf] %vm279, 0
        %316 = vst.msk [vmem:[#allocation2 + $0x8c] sm:$0x1] %vm281, 0
        %317 = vst.msk [vmem:[#allocation2 + $0x90] sm:$0xf] %vm279, 0
        %318 = vst.msk [vmem:[#allocation2 + $0x94] sm:$0x1] %vm281, 0
        %319 = vst.msk [vmem:[#allocation2 + $0x98] sm:$0xf] %vm279, 0
        %320 = vst.msk [vmem:[#allocation2 + $0x9c] sm:$0x1] %vm281, 0
        %321 = vst.msk [vmem:[#allocation2 + $0xa0] sm:$0xf] %vm279, 0
        %322 = vst.msk [vmem:[#allocation2 + $0xa4] sm:$0x1] %vm281, 0
        %323 = vst.msk [vmem:[#allocation2 + $0xa8] sm:$0xf] %vm279, 0
        %324 = vst.msk [vmem:[#allocation2 + $0xac] sm:$0x1] %vm281, 0
        %325 = vst.msk [vmem:[#allocation2 + $0xb0] sm:$0xf] %vm279, 0
        %326 = vst.msk [vmem:[#allocation2 + $0xb4] sm:$0x1] %vm281, 0
        %327 = vst.msk [vmem:[#allocation2 + $0xb8] sm:$0xf] %vm279, 0
        %328 = vst.msk [vmem:[#allocation2 + $0xbc] sm:$0x1] %vm281, 0
        %329 = vst.msk [vmem:[#allocation2 + $0xc0] sm:$0xf] %vm279, 0
        %330 = vst.msk [vmem:[#allocation2 + $0xc4] sm:$0x1] %vm281, 0
        %331 = vst.msk [vmem:[#allocation2 + $0xc8] sm:$0xf] %vm279, 0
        %332 = vst.msk [vmem:[#allocation2 + $0xcc] sm:$0x1] %vm281, 0
        %333 = vst.msk [vmem:[#allocation2 + $0xd0] sm:$0xf] %vm279, 0
        %334 = vst.msk [vmem:[#allocation2 + $0xd4] sm:$0x1] %vm281, 0
        %335 = vst.msk [vmem:[#allocation2 + $0xd8] sm:$0xf] %vm279, 0
        %336 = vst.msk [vmem:[#allocation2 + $0xdc] sm:$0x1] %vm281, 0
        %337 = vst.msk [vmem:[#allocation2 + $0xe0] sm:$0xf] %vm279, 0
        %338 = vst.msk [vmem:[#allocation2 + $0xe4] sm:$0x1] %vm281, 0
        %339 = vst.msk [vmem:[#allocation2 + $0xe8] sm:$0xf] %vm279, 0
        %340 = vst.msk [vmem:[#allocation2 + $0xec] sm:$0x1] %vm281, 0
        %341 = vst.msk [vmem:[#allocation2 + $0xf0] sm:$0xf] %vm279, 0
        %342 = vst.msk [vmem:[#allocation2 + $0xf4] sm:$0x1] %vm281, 0
        %343 = vst.msk [vmem:[#allocation2 + $0xf8] sm:$0xf] %vm279, 0
        %344 = vst.msk [vmem:[#allocation2 + $0xfc] sm:$0x1] %vm281, 0
        %345 = vst.msk [vmem:[#allocation2 + $0x100] sm:$0xf] %vm279, 0
        %346 = vst.msk [vmem:[#allocation2 + $0x104] sm:$0x1] %vm281, 0
        %347 = vst.msk [vmem:[#allocation2 + $0x108] sm:$0xf] %vm279, 0
        %348 = vst.msk [vmem:[#allocation2 + $0x10c] sm:$0x1] %vm281, 0
        %349 = vst.msk [vmem:[#allocation2 + $0x110] sm:$0xf] %vm279, 0
        %350 = vst.msk [vmem:[#allocation2 + $0x114] sm:$0x1] %vm281, 0
        %351 = vst.msk [vmem:[#allocation2 + $0x118] sm:$0xf] %vm279, 0
        %352 = vst.msk [vmem:[#allocation2 + $0x11c] sm:$0x1] %vm281, 0
        %353 = vst.msk [vmem:[#allocation2 + $0x120] sm:$0xf] %vm279, 0
        %354 = vst.msk [vmem:[#allocation2 + $0x124] sm:$0x1] %vm281, 0
        %355 = vst.msk [vmem:[#allocation2 + $0x128] sm:$0xf] %vm279, 0
        %356 = vst.msk [vmem:[#allocation2 + $0x12c] sm:$0x1] %vm281, 0
        %357 = vst.msk [vmem:[#allocation2 + $0x130] sm:$0xf] %vm279, 0
        %358 = vst.msk [vmem:[#allocation2 + $0x134] sm:$0x1] %vm281, 0
        %359 = vst.msk [vmem:[#allocation2 + $0x138] sm:$0xf] %vm279, 0
        %360 = vst.msk [vmem:[#allocation2 + $0x13c] sm:$0x1] %vm281, 0
        %361 = vst.msk [vmem:[#allocation2 + $0x140] sm:$0xf] %vm279, 0
        %362 = vst.msk [vmem:[#allocation2 + $0x144] sm:$0x1] %vm281, 0
        %363 = vst.msk [vmem:[#allocation2 + $0x148] sm:$0xf] %vm279, 0
        %364 = vst.msk [vmem:[#allocation2 + $0x14c] sm:$0x1] %vm281, 0
        %365 = vst.msk [vmem:[#allocation2 + $0x150] sm:$0xf] %vm279, 0
        %366 = vst.msk [vmem:[#allocation2 + $0x154] sm:$0x1] %vm281, 0
        %367 = vst.msk [vmem:[#allocation2 + $0x158] sm:$0xf] %vm279, 0
        %368 = vst.msk [vmem:[#allocation2 + $0x15c] sm:$0x1] %vm281, 0
        %369 = vst.msk [vmem:[#allocation2 + $0x160] sm:$0xf] %vm279, 0
        %370 = vst.msk [vmem:[#allocation2 + $0x164] sm:$0x1] %vm281, 0
        %371 = vst.msk [vmem:[#allocation2 + $0x168] sm:$0xf] %vm279, 0
        %372 = vst.msk [vmem:[#allocation2 + $0x16c] sm:$0x1] %vm281, 0
        %373 = vst.msk [vmem:[#allocation2 + $0x170] sm:$0xf] %vm279, 0
        %374 = vst.msk [vmem:[#allocation2 + $0x174] sm:$0x1] %vm281, 0
        %375 = vst.msk [vmem:[#allocation2 + $0x178] sm:$0xf] %vm279, 0
        %376 = vst.msk [vmem:[#allocation2 + $0x17c] sm:$0x1] %vm281, 0
        %v377 = vld [vmem:[%s264] sm:$0xf]
        %v378 = vld [vmem:[%s264 + $0x4] sm:$0xf]
        %v379 = vld [vmem:[%s264 + $0x8] sm:$0xf]
        %v380 = vld [vmem:[%s264 + $0xc] sm:$0xf]
        %v381 = vld [vmem:[%s264 + $0x10] sm:$0xf]
        %v382 = vld [vmem:[%s264 + $0x14] sm:$0xf]
        %v383 = vld [vmem:[%s264 + $0x18] sm:$0xf]
        %v384 = vld [vmem:[%s264 + $0x1c] sm:$0xf]
        %v385 = vld [vmem:[%s264 + $0x20] sm:$0xf]
        %v386 = vld [vmem:[%s264 + $0x24] sm:$0xf]
        %v387 = vld [vmem:[%s264 + $0x28] sm:$0xf]
        %v388 = vld [vmem:[%s264 + $0x2c] sm:$0xf]
        %v389 = vld [vmem:[%s264 + $0x30] sm:$0xf]
        %v390 = vld [vmem:[%s264 + $0x34] sm:$0xf]
        %v391 = vld [vmem:[%s264 + $0x38] sm:$0xf]
        %v392 = vld [vmem:[%s264 + $0x3c] sm:$0xf]
        %v393 = vld [vmem:[%s264 + $0x40] sm:$0xf]
        %v394 = vld [vmem:[%s264 + $0x44] sm:$0xf]
        %v395 = vld [vmem:[%s264 + $0x48] sm:$0xf]
        %v396 = vld [vmem:[%s264 + $0x4c] sm:$0xf]
        %v397 = vld [vmem:[%s264 + $0x50] sm:$0xf]
        %v398 = vld [vmem:[%s264 + $0x54] sm:$0xf]
        %v399 = vld [vmem:[%s264 + $0x58] sm:$0xf]
        %v400 = vld [vmem:[%s264 + $0x5c] sm:$0xf]
        %v401 = vunpack.c.l.bf16 %v377
        %v402 = vunpack.c.l.bf16 %v378
        %v403 = vunpack.c.l.bf16 %v379
        %v404 = vunpack.c.l.bf16 %v380
        %v405 = vunpack.c.l.bf16 %v381
        %v406 = vunpack.c.l.bf16 %v382
        %v407 = vunpack.c.l.bf16 %v383
        %v408 = vunpack.c.l.bf16 %v384
        %v409 = vunpack.c.l.bf16 %v385
        %v410 = vunpack.c.l.bf16 %v386
        %v411 = vunpack.c.l.bf16 %v387
        %v412 = vunpack.c.l.bf16 %v388
        %v413 = vunpack.c.l.bf16 %v389
        %v414 = vunpack.c.l.bf16 %v390
        %v415 = vunpack.c.l.bf16 %v391
        %v416 = vunpack.c.l.bf16 %v392
        %v417 = vunpack.c.l.bf16 %v393
        %v418 = vunpack.c.l.bf16 %v394
        %v419 = vunpack.c.l.bf16 %v395
        %v420 = vunpack.c.l.bf16 %v396
        %v421 = vunpack.c.l.bf16 %v397
        %v422 = vunpack.c.l.bf16 %v398
        %v423 = vunpack.c.l.bf16 %v399
        %v424 = vunpack.c.l.bf16 %v400
        %vm425 = vcmask 261120
        %v426 = vsel %vm425, %v401, 0.0
        %v427 = vsel %vm425, %v402, 0.0
        %v428 = vadd.f32 %v426, %v427
        %v429 = vsel %vm425, %v403, 0.0
        %v430 = vadd.f32 %v428, %v429
        %v431 = vsel %vm425, %v404, 0.0
        %v432 = vadd.f32 %v430, %v431
        %v433 = vsel %vm425, %v405, 0.0
        %v434 = vadd.f32 %v432, %v433
        %v435 = vsel %vm425, %v406, 0.0
        %v436 = vadd.f32 %v434, %v435
        %v437 = vsel %vm425, %v407, 0.0
        %v438 = vadd.f32 %v436, %v437
        %v439 = vsel %vm425, %v408, 0.0
        %v440 = vadd.f32 %v438, %v439
        %v441 = vsel %vm425, %v409, 0.0
        %v442 = vadd.f32 %v440, %v441
        %v443 = vsel %vm425, %v410, 0.0
        %v444 = vadd.f32 %v442, %v443
        %v445 = vsel %vm425, %v411, 0.0
        %v446 = vadd.f32 %v444, %v445
        %v447 = vsel %vm425, %v412, 0.0
        %v448 = vadd.f32 %v446, %v447
        %v449 = vsel %vm425, %v413, 0.0
        %v450 = vadd.f32 %v448, %v449
        %v451 = vsel %vm425, %v414, 0.0
        %v452 = vadd.f32 %v450, %v451
        %v453 = vsel %vm425, %v415, 0.0
        %v454 = vadd.f32 %v452, %v453
        %v455 = vsel %vm425, %v416, 0.0
        %v456 = vadd.f32 %v454, %v455
        %v457 = vsel %vm425, %v417, 0.0
        %v458 = vadd.f32 %v456, %v457
        %v459 = vsel %vm425, %v418, 0.0
        %v460 = vadd.f32 %v458, %v459
        %v461 = vsel %vm425, %v419, 0.0
        %v462 = vadd.f32 %v460, %v461
        %v463 = vsel %vm425, %v420, 0.0
        %v464 = vadd.f32 %v462, %v463
        %v465 = vsel %vm425, %v421, 0.0
        %v466 = vadd.f32 %v464, %v465
        %v467 = vsel %vm425, %v422, 0.0
        %v468 = vadd.f32 %v466, %v467
        %v469 = vsel %vm425, %v423, 0.0
        %v470 = vadd.f32 %v468, %v469
        %v471 = vsel %vm425, %v424, 0.0
        %v472 = vadd.f32 %v470, %v471
        %v473 = vrot.slane %v472, 4
        %v474 = vadd.f32 %v472, %v473
        %v475 = vrot.slane %v474, 2
        %v476 = vadd.f32 %v474, %v475
        %v477 = vrot.slane %v476, 1
        %v478 = vadd.f32 %v476, %v477
        %v479 = vmul.f32 %v478, 0.0052083335
        %v480 = vmul.f32 %v401, %v401
        %v481 = vmul.f32 %v402, %v402
        %v482 = vmul.f32 %v403, %v403
        %v483 = vmul.f32 %v404, %v404
        %v484 = vmul.f32 %v405, %v405
        %v485 = vmul.f32 %v406, %v406
        %v486 = vmul.f32 %v407, %v407
        %v487 = vmul.f32 %v408, %v408
        %v488 = vmul.f32 %v409, %v409
        %v489 = vmul.f32 %v410, %v410
        %v490 = vmul.f32 %v411, %v411
        %v491 = vmul.f32 %v412, %v412
        %v492 = vmul.f32 %v413, %v413
        %v493 = vmul.f32 %v414, %v414
        %v494 = vmul.f32 %v415, %v415
        %v495 = vmul.f32 %v416, %v416
        %v496 = vmul.f32 %v417, %v417
        %v497 = vmul.f32 %v418, %v418
        %v498 = vmul.f32 %v419, %v419
        %v499 = vmul.f32 %v420, %v420
        %v500 = vmul.f32 %v421, %v421
        %v501 = vmul.f32 %v422, %v422
        %v502 = vmul.f32 %v423, %v423
        %v503 = vmul.f32 %v424, %v424
        %v504 = vsel %vm425, %v480, 0.0
        %v505 = vsel %vm425, %v481, 0.0
        %v506 = vadd.f32 %v504, %v505
        %v507 = vsel %vm425, %v482, 0.0
        %v508 = vadd.f32 %v506, %v507
        %v509 = vsel %vm425, %v483, 0.0
        %v510 = vadd.f32 %v508, %v509
        %v511 = vsel %vm425, %v484, 0.0
        %v512 = vadd.f32 %v510, %v511
        %v513 = vsel %vm425, %v485, 0.0
        %v514 = vadd.f32 %v512, %v513
        %v515 = vsel %vm425, %v486, 0.0
        %v516 = vadd.f32 %v514, %v515
        %v517 = vsel %vm425, %v487, 0.0
        %v518 = vadd.f32 %v516, %v517
        %v519 = vsel %vm425, %v488, 0.0
        %v520 = vadd.f32 %v518, %v519
        %v521 = vsel %vm425, %v489, 0.0
        %v522 = vadd.f32 %v520, %v521
        %v523 = vsel %vm425, %v490, 0.0
        %v524 = vadd.f32 %v522, %v523
        %v525 = vsel %vm425, %v491, 0.0
        %v526 = vadd.f32 %v524, %v525
        %v527 = vsel %vm425, %v492, 0.0
        %v528 = vadd.f32 %v526, %v527
        %v529 = vsel %vm425, %v493, 0.0
        %v530 = vadd.f32 %v528, %v529
        %v531 = vsel %vm425, %v494, 0.0
        %v532 = vadd.f32 %v530, %v531
        %v533 = vsel %vm425, %v495, 0.0
        %v534 = vadd.f32 %v532, %v533
        %v535 = vsel %vm425, %v496, 0.0
        %v536 = vadd.f32 %v534, %v535
        %v537 = vsel %vm425, %v497, 0.0
        %v538 = vadd.f32 %v536, %v537
        %v539 = vsel %vm425, %v498, 0.0
        %v540 = vadd.f32 %v538, %v539
        %v541 = vsel %vm425, %v499, 0.0
        %v542 = vadd.f32 %v540, %v541
        %v543 = vsel %vm425, %v500, 0.0
        %v544 = vadd.f32 %v542, %v543
        %v545 = vsel %vm425, %v501, 0.0
        %v546 = vadd.f32 %v544, %v545
        %v547 = vsel %vm425, %v502, 0.0
        %v548 = vadd.f32 %v546, %v547
        %v549 = vsel %vm425, %v503, 0.0
        %v550 = vadd.f32 %v548, %v549
        %v551 = vrot.slane %v550, 4
        %v552 = vadd.f32 %v550, %v551
        %v553 = vrot.slane %v552, 2
        %v554 = vadd.f32 %v552, %v553
        %v555 = vrot.slane %v554, 1
        %v556 = vadd.f32 %v554, %v555
        %v557 = vmul.f32 %v556, 0.0052083335
        %vm558 = vcmask 1040384
        %v559 = vsel %vm558, %v479, %v557
        %v560 = vld [vmem:[%s5] sm:$0xff]
        %v561 = vld [vmem:[%s5 + $0x8] sm:$0xff]
        %v562 = vld [vmem:[%s5 + $0x10] sm:$0xff]
        %v563 = vld [vmem:[%s5 + $0x18] sm:$0xff]
        %v565 = vsel %vm425, %v559, 0
        %567 = vmatprep.subr.mxu0 0.0
        %568 = vmatpush1.msra.mxu0 %v560
        %569 = vmatprep.subr.mxu0 0.0
        %570 = vmatpush1.msra.mxu0 %v561
        %571 = vmatprep.subr.mxu0 0.0
        %572 = vmatpush1.msra.mxu0 %v562
        %573 = vmatprep.subr.mxu0 0.0
        %574 = vmatpush1.msra.mxu0 %v563
        %575 = vmatprep.subr.mxu0 0.0
        %576 = vmatpush1.msra.mxu0 0.0
        %577 = vmatprep.subr.mxu0 0.0
        %578 = vmatpush1.msra.mxu0 0.0
        %579 = vmatprep.subr.mxu0 0.0
        %580 = vmatpush1.msra.mxu0 0.0
        %581 = vmatprep.subr.mxu0 0.0
        %582 = vmatpush1.msra.mxu0 0.0
        %583 = vmatprep.subr.mxu0 0.0
        %584 = vmatpush1.msra.mxu0 0.0
        %585 = vmatprep.subr.mxu0 0.0
        %586 = vmatpush1.msra.mxu0 0.0
        %587 = vmatprep.subr.mxu0 0.0
        %588 = vmatpush1.msra.mxu0 0.0
        %589 = vmatprep.subr.mxu0 0.0
        %590 = vmatpush1.msra.mxu0 0.0
        %591 = vmatprep.subr.mxu0 0.0
        %592 = vmatpush1.msra.mxu0 0.0
        %593 = vmatprep.subr.mxu0 0.0
        %594 = vmatpush1.msra.mxu0 0.0
        %595 = vmatprep.subr.mxu0 0.0
        %596 = vmatpush1.msra.mxu0 0.0
        %597 = vmatprep.subr.mxu0 0.0
        %598 = vmatpush1.msra.mxu0 0.0
        %599 = vmatprep.subr.mxu0 0.0
        %600 = vmatpush1.msra.mxu0 0.0
        %601 = vmatprep.subr.mxu0 0.0
        %602 = vmatpush1.msra.mxu0 0.0
        %603 = vmatprep.subr.mxu0 0.0
        %604 = vmatpush1.msra.mxu0 0.0
        %605 = vmatprep.subr.mxu0 0.0
        %606 = vmatpush1.msra.mxu0 0.0
        %607 = vmatprep.subr.mxu0 0.0
        %608 = vmatpush1.msra.mxu0 0.0
        %609 = vmatprep.subr.mxu0 0.0
        %610 = vmatpush1.msra.mxu0 0.0
        %611 = vmatprep.subr.mxu0 0.0
        %612 = vmatpush1.msra.mxu0 0.0
        %613 = vmatprep.subr.mxu0 0.0
        %614 = vmatpush1.msra.mxu0 0.0
        %615 = vmatprep.subr.mxu0 0.0
        %616 = vmatpush1.msra.mxu0 0.0
        %617 = vmatprep.subr.mxu0 0.0
        %618 = vmatpush1.msra.mxu0 0.0
        %619 = vmatprep.subr.mxu0 0.0
        %620 = vmatpush1.msra.mxu0 0.0
        %621 = vmatprep.subr.mxu0 0.0
        %622 = vmatpush1.msra.mxu0 0.0
        %623 = vmatprep.subr.mxu0 0.0
        %624 = vmatpush1.msra.mxu0 0.0
        %625 = vmatprep.subr.mxu0 0.0
        %626 = vmatpush1.msra.mxu0 0.0
        %627 = vmatprep.subr.mxu0 0.0
        %628 = vmatpush1.msra.mxu0 0.0
        %629 = vmatprep.subr.mxu0 0.0
        %630 = vmatpush1.msra.mxu0 0.0
        %631 = vmatprep.mubr.f32.mxu0 0.0
        %632 = vmatmul.mubr.f32.gmra.mrb[0].mxu0 %v565
        %v633 = vpop.f32.mrb[0].mxu0
        %v634 = vadd.f32 0.0, %v633
        %v635 = vpop.f32.mrb[0].mxu0
        %636 = vdwg.mxu0
        %v637 = vmul.f32 %v634, %v634
        %v639 = vrot.slane %v637, 7
        %v641 = vsub.f32 %v634, %v639
        %v642 = vmax.f32 %v641, 0.0
        %v643 = vadd.f32 %v642, 1e-05
        %v644 = vrsqrt.pop %v643
        %v645 = vld [vmem:[%s3] sm:$0x1]
        %v647 = vlaneseq
        %v648 = vshrl.u32 %v647, 7
        %v649 = vsub.s32 0, %v648
        %v650 = vrot.slane %v645, %v649
        %v652 = vmul.f32 %v644, %v650
        %v653 = vld [vmem:[%s4] sm:$0x1]
        %v655 = vrot.slane %v652, 1
        %v657 = vmul.f32 %v634, %v655
        %v658 = vsub.f32 %v653, %v657
        %v659 = vld [vmem:[%s264] sm:$0xf]
        %v660 = vunpack.c.l.bf16 %v659
        %v661 = vlaneseq
        %v662 = vshrl.u32 %v661, 7
        %v663 = vsub.s32 1, %v662
        %v664 = vrot.slane %v652, %v663
        %v665 = vmul.f32 %v660, %v664
        %v667 = vlaneseq
        %v668 = vshrl.u32 %v667, 7
        %v669 = vsub.s32 0, %v668
        %v670 = vrot.slane %v658, %v669
        %v672 = vadd.f32 %v665, %v670
        %v673 = vxor.u32 %v672, 2147483648
        %v674 = vmul.f32 %v673, 1.442695
        %v675 = vpow.pop %v674
        %v676 = vadd.f32 %v675, 1.0
        %v677 = vrcp.pop %v676
        %v678 = vmul.f32 1.0, %v677
        %v679 = vmul.f32 %v672, %v678
        %v680 = vpack.c.bf16 %v679, %v679
        %v682 = vunpack.c.l.b16 %v680
        %v683 = vpack.c.b16 %v682, %v682
        %v685 = vshrl.u32 %v683, 16
        %v687 = vrot.slane %v685, 7
        %v688 = vshll.u32 %v683, 16
        %v690 = vor.u32 %v687, %v688
        %v691 = vrot.slane %v687, 4
        %s694 = scalar_lea.vmem [#allocation2], 72
        %vm695 = vcmask 257024
        %vm696 = vsmask.f32 7938
        %vm697 = vmand %vm695, %vm696
        %v698 = vld [vmem:[%s694] sm:$0xf]
        %v699 = vsel %vm697, %v690, %v698
        %700 = vst [vmem:[%s694] sm:$0xf] %v699
        %vm701 = vcmask 253952
        %vm702 = vsmask.f32 256
        %vm703 = vmand %vm701, %vm702
        %v704 = vld [vmem:[%s694 + $0x4] sm:$0x1]
        %v705 = vsel %vm703, %v691, %v704
        %706 = vst [vmem:[%s694 + $0x4] sm:$0x1] %v705
        %s707 = scalar_lea.vmem %s264, 4
        %v708 = vld [vmem:[%s707] sm:$0xf]
        %v709 = vunpack.c.l.bf16 %v708
        %v710 = vmul.f32 %v709, %v664
        %v711 = vadd.f32 %v710, %v670
        %v712 = vxor.u32 %v711, 2147483648
        %v713 = vmul.f32 %v712, 1.442695
        %v714 = vpow.pop %v713
        %v715 = vadd.f32 %v714, 1.0
        %v716 = vrcp.pop %v715
        %v717 = vmul.f32 1.0, %v716
        %v718 = vmul.f32 %v711, %v717
        %v719 = vpack.c.bf16 %v718, %v718
        %v721 = vunpack.c.l.b16 %v719
        %v722 = vpack.c.b16 %v721, %v721
        %v724 = vshrl.u32 %v722, 16
        %v726 = vrot.slane %v724, 7
        %v727 = vshll.u32 %v722, 16
        %v729 = vor.u32 %v726, %v727
        %v730 = vrot.slane %v726, 4
        %s733 = scalar_lea.vmem [#allocation2], 80
        %v734 = vld [vmem:[%s733] sm:$0xf]
        %v735 = vsel %vm697, %v729, %v734
        %736 = vst [vmem:[%s733] sm:$0xf] %v735
        %v737 = vld [vmem:[%s733 + $0x4] sm:$0x1]
        %v738 = vsel %vm703, %v730, %v737
        %739 = vst [vmem:[%s733 + $0x4] sm:$0x1] %v738
        %s740 = scalar_lea.vmem %s264, 8
        %v741 = vld [vmem:[%s740] sm:$0xf]
        %v742 = vunpack.c.l.bf16 %v741
        %v743 = vmul.f32 %v742, %v664
        %v744 = vadd.f32 %v743, %v670
        %v745 = vxor.u32 %v744, 2147483648
        %v746 = vmul.f32 %v745, 1.442695
        %v747 = vpow.pop %v746
        %v748 = vadd.f32 %v747, 1.0
        %v749 = vrcp.pop %v748
        %v750 = vmul.f32 1.0, %v749
        %v751 = vmul.f32 %v744, %v750
        %v752 = vpack.c.bf16 %v751, %v751
        %v754 = vunpack.c.l.b16 %v752
        %v755 = vpack.c.b16 %v754, %v754
        %v757 = vshrl.u32 %v755, 16
        %v759 = vrot.slane %v757, 7
        %v760 = vshll.u32 %v755, 16
        %v762 = vor.u32 %v759, %v760
        %v763 = vrot.slane %v759, 4
        %s766 = scalar_lea.vmem [#allocation2], 88
        %v767 = vld [vmem:[%s766] sm:$0xf]
        %v768 = vsel %vm697, %v762, %v767
        %769 = vst [vmem:[%s766] sm:$0xf] %v768
        %v770 = vld [vmem:[%s766 + $0x4] sm:$0x1]
        %v771 = vsel %vm703, %v763, %v770
        %772 = vst [vmem:[%s766 + $0x4] sm:$0x1] %v771
        %s773 = scalar_lea.vmem %s264, 12
        %v774 = vld [vmem:[%s773] sm:$0xf]
        %v775 = vunpack.c.l.bf16 %v774
        %v776 = vmul.f32 %v775, %v664
        %v777 = vadd.f32 %v776, %v670
        %v778 = vxor.u32 %v777, 2147483648
        %v779 = vmul.f32 %v778, 1.442695
        %v780 = vpow.pop %v779
        %v781 = vadd.f32 %v780, 1.0
        %v782 = vrcp.pop %v781
        %v783 = vmul.f32 1.0, %v782
        %v784 = vmul.f32 %v777, %v783
        %v785 = vpack.c.bf16 %v784, %v784
        %v787 = vunpack.c.l.b16 %v785
        %v788 = vpack.c.b16 %v787, %v787
        %v790 = vshrl.u32 %v788, 16
        %v792 = vrot.slane %v790, 7
        %v793 = vshll.u32 %v788, 16
        %v795 = vor.u32 %v792, %v793
        %v796 = vrot.slane %v792, 4
        %s799 = scalar_lea.vmem [#allocation2], 96
        %v800 = vld [vmem:[%s799] sm:$0xf]
        %v801 = vsel %vm697, %v795, %v800
        %802 = vst [vmem:[%s799] sm:$0xf] %v801
        %v803 = vld [vmem:[%s799 + $0x4] sm:$0x1]
        %v804 = vsel %vm703, %v796, %v803
        %805 = vst [vmem:[%s799 + $0x4] sm:$0x1] %v804
        %s806 = scalar_lea.vmem %s264, 16
        %v807 = vld [vmem:[%s806] sm:$0xf]
        %v808 = vunpack.c.l.bf16 %v807
        %v809 = vmul.f32 %v808, %v664
        %v810 = vadd.f32 %v809, %v670
        %v811 = vxor.u32 %v810, 2147483648
        %v812 = vmul.f32 %v811, 1.442695
        %v813 = vpow.pop %v812
        %v814 = vadd.f32 %v813, 1.0
        %v815 = vrcp.pop %v814
        %v816 = vmul.f32 1.0, %v815
        %v817 = vmul.f32 %v810, %v816
        %v818 = vpack.c.bf16 %v817, %v817
        %v820 = vunpack.c.l.b16 %v818
        %v821 = vpack.c.b16 %v820, %v820
        %v823 = vshrl.u32 %v821, 16
        %v825 = vrot.slane %v823, 7
        %v826 = vshll.u32 %v821, 16
        %v828 = vor.u32 %v825, %v826
        %v829 = vrot.slane %v825, 4
        %s832 = scalar_lea.vmem [#allocation2], 104
        %v833 = vld [vmem:[%s832] sm:$0xf]
        %v834 = vsel %vm697, %v828, %v833
        %835 = vst [vmem:[%s832] sm:$0xf] %v834
        %v836 = vld [vmem:[%s832 + $0x4] sm:$0x1]
        %v837 = vsel %vm703, %v829, %v836
        %838 = vst [vmem:[%s832 + $0x4] sm:$0x1] %v837
        %s839 = scalar_lea.vmem %s264, 20
        %v840 = vld [vmem:[%s839] sm:$0xf]
        %v841 = vunpack.c.l.bf16 %v840
        %v842 = vmul.f32 %v841, %v664
        %v843 = vadd.f32 %v842, %v670
        %v844 = vxor.u32 %v843, 2147483648
        %v845 = vmul.f32 %v844, 1.442695
        %v846 = vpow.pop %v845
        %v847 = vadd.f32 %v846, 1.0
        %v848 = vrcp.pop %v847
        %v849 = vmul.f32 1.0, %v848
        %v850 = vmul.f32 %v843, %v849
        %v851 = vpack.c.bf16 %v850, %v850
        %v853 = vunpack.c.l.b16 %v851
        %v854 = vpack.c.b16 %v853, %v853
        %v856 = vshrl.u32 %v854, 16
        %v858 = vrot.slane %v856, 7
        %v859 = vshll.u32 %v854, 16
        %v861 = vor.u32 %v858, %v859
        %v862 = vrot.slane %v858, 4
        %s865 = scalar_lea.vmem [#allocation2], 112
        %v866 = vld [vmem:[%s865] sm:$0xf]
        %v867 = vsel %vm697, %v861, %v866
        %868 = vst [vmem:[%s865] sm:$0xf] %v867
        %v869 = vld [vmem:[%s865 + $0x4] sm:$0x1]
        %v870 = vsel %vm703, %v862, %v869
        %871 = vst [vmem:[%s865 + $0x4] sm:$0x1] %v870
        %s872 = scalar_lea.vmem %s264, 24
        %v873 = vld [vmem:[%s872] sm:$0xf]
        %v874 = vunpack.c.l.bf16 %v873
        %v875 = vmul.f32 %v874, %v664
        %v876 = vadd.f32 %v875, %v670
        %v877 = vxor.u32 %v876, 2147483648
        %v878 = vmul.f32 %v877, 1.442695
        %v879 = vpow.pop %v878
        %v880 = vadd.f32 %v879, 1.0
        %v881 = vrcp.pop %v880
        %v882 = vmul.f32 1.0, %v881
        %v883 = vmul.f32 %v876, %v882
        %v884 = vpack.c.bf16 %v883, %v883
        %v886 = vunpack.c.l.b16 %v884
        %v887 = vpack.c.b16 %v886, %v886
        %v889 = vshrl.u32 %v887, 16
        %v891 = vrot.slane %v889, 7
        %v892 = vshll.u32 %v887, 16
        %v894 = vor.u32 %v891, %v892
        %v895 = vrot.slane %v891, 4
        %s898 = scalar_lea.vmem [#allocation2], 136
        %v899 = vld [vmem:[%s898] sm:$0xf]
        %v900 = vsel %vm697, %v894, %v899
        %901 = vst [vmem:[%s898] sm:$0xf] %v900
        %v902 = vld [vmem:[%s898 + $0x4] sm:$0x1]
        %v903 = vsel %vm703, %v895, %v902
        %904 = vst [vmem:[%s898 + $0x4] sm:$0x1] %v903
        %s905 = scalar_lea.vmem %s264, 28
        %v906 = vld [vmem:[%s905] sm:$0xf]
        %v907 = vunpack.c.l.bf16 %v906
        %v908 = vmul.f32 %v907, %v664
        %v909 = vadd.f32 %v908, %v670
        %v910 = vxor.u32 %v909, 2147483648
        %v911 = vmul.f32 %v910, 1.442695
        %v912 = vpow.pop %v911
        %v913 = vadd.f32 %v912, 1.0
        %v914 = vrcp.pop %v913
        %v915 = vmul.f32 1.0, %v914
        %v916 = vmul.f32 %v909, %v915
        %v917 = vpack.c.bf16 %v916, %v916
        %v919 = vunpack.c.l.b16 %v917
        %v920 = vpack.c.b16 %v919, %v919
        %v922 = vshrl.u32 %v920, 16
        %v924 = vrot.slane %v922, 7
        %v925 = vshll.u32 %v920, 16
        %v927 = vor.u32 %v924, %v925
        %v928 = vrot.slane %v924, 4
        %s931 = scalar_lea.vmem [#allocation2], 144
        %v932 = vld [vmem:[%s931] sm:$0xf]
        %v933 = vsel %vm697, %v927, %v932
        %934 = vst [vmem:[%s931] sm:$0xf] %v933
        %v935 = vld [vmem:[%s931 + $0x4] sm:$0x1]
        %v936 = vsel %vm703, %v928, %v935
        %937 = vst [vmem:[%s931 + $0x4] sm:$0x1] %v936
        %s938 = scalar_lea.vmem %s264, 32
        %v939 = vld [vmem:[%s938] sm:$0xf]
        %v940 = vunpack.c.l.bf16 %v939
        %v941 = vmul.f32 %v940, %v664
        %v942 = vadd.f32 %v941, %v670
        %v943 = vxor.u32 %v942, 2147483648
        %v944 = vmul.f32 %v943, 1.442695
        %v945 = vpow.pop %v944
        %v946 = vadd.f32 %v945, 1.0
        %v947 = vrcp.pop %v946
        %v948 = vmul.f32 1.0, %v947
        %v949 = vmul.f32 %v942, %v948
        %v950 = vpack.c.bf16 %v949, %v949
        %v952 = vunpack.c.l.b16 %v950
        %v953 = vpack.c.b16 %v952, %v952
        %v955 = vshrl.u32 %v953, 16
        %v957 = vrot.slane %v955, 7
        %v958 = vshll.u32 %v953, 16
        %v960 = vor.u32 %v957, %v958
        %v961 = vrot.slane %v957, 4
        %s964 = scalar_lea.vmem [#allocation2], 152
        %v965 = vld [vmem:[%s964] sm:$0xf]
        %v966 = vsel %vm697, %v960, %v965
        %967 = vst [vmem:[%s964] sm:$0xf] %v966
        %v968 = vld [vmem:[%s964 + $0x4] sm:$0x1]
        %v969 = vsel %vm703, %v961, %v968
        %970 = vst [vmem:[%s964 + $0x4] sm:$0x1] %v969
        %s971 = scalar_lea.vmem %s264, 36
        %v972 = vld [vmem:[%s971] sm:$0xf]
        %v973 = vunpack.c.l.bf16 %v972
        %v974 = vmul.f32 %v973, %v664
        %v975 = vadd.f32 %v974, %v670
        %v976 = vxor.u32 %v975, 2147483648
        %v977 = vmul.f32 %v976, 1.442695
        %v978 = vpow.pop %v977
        %v979 = vadd.f32 %v978, 1.0
        %v980 = vrcp.pop %v979
        %v981 = vmul.f32 1.0, %v980
        %v982 = vmul.f32 %v975, %v981
        %v983 = vpack.c.bf16 %v982, %v982
        %v985 = vunpack.c.l.b16 %v983
        %v986 = vpack.c.b16 %v985, %v985
        %v988 = vshrl.u32 %v986, 16
        %v990 = vrot.slane %v988, 7
        %v991 = vshll.u32 %v986, 16
        %v993 = vor.u32 %v990, %v991
        %v994 = vrot.slane %v990, 4
        %s997 = scalar_lea.vmem [#allocation2], 160
        %v998 = vld [vmem:[%s997] sm:$0xf]
        %v999 = vsel %vm697, %v993, %v998
        %1000 = vst [vmem:[%s997] sm:$0xf] %v999
        %v1001 = vld [vmem:[%s997 + $0x4] sm:$0x1]
        %v1002 = vsel %vm703, %v994, %v1001
        %1003 = vst [vmem:[%s997 + $0x4] sm:$0x1] %v1002
        %s1004 = scalar_lea.vmem %s264, 40
        %v1005 = vld [vmem:[%s1004] sm:$0xf]
        %v1006 = vunpack.c.l.bf16 %v1005
        %v1007 = vmul.f32 %v1006, %v664
        %v1008 = vadd.f32 %v1007, %v670
        %v1009 = vxor.u32 %v1008, 2147483648
        %v1010 = vmul.f32 %v1009, 1.442695
        %v1011 = vpow.pop %v1010
        %v1012 = vadd.f32 %v1011, 1.0
        %v1013 = vrcp.pop %v1012
        %v1014 = vmul.f32 1.0, %v1013
        %v1015 = vmul.f32 %v1008, %v1014
        %v1016 = vpack.c.bf16 %v1015, %v1015
        %v1018 = vunpack.c.l.b16 %v1016
        %v1019 = vpack.c.b16 %v1018, %v1018
        %v1021 = vshrl.u32 %v1019, 16
        %v1023 = vrot.slane %v1021, 7
        %v1024 = vshll.u32 %v1019, 16
        %v1026 = vor.u32 %v1023, %v1024
        %v1027 = vrot.slane %v1023, 4
        %s1030 = scalar_lea.vmem [#allocation2], 168
        %v1031 = vld [vmem:[%s1030] sm:$0xf]
        %v1032 = vsel %vm697, %v1026, %v1031
        %1033 = vst [vmem:[%s1030] sm:$0xf] %v1032
        %v1034 = vld [vmem:[%s1030 + $0x4] sm:$0x1]
        %v1035 = vsel %vm703, %v1027, %v1034
        %1036 = vst [vmem:[%s1030 + $0x4] sm:$0x1] %v1035
        %s1037 = scalar_lea.vmem %s264, 44
        %v1038 = vld [vmem:[%s1037] sm:$0xf]
        %v1039 = vunpack.c.l.bf16 %v1038
        %v1040 = vmul.f32 %v1039, %v664
        %v1041 = vadd.f32 %v1040, %v670
        %v1042 = vxor.u32 %v1041, 2147483648
        %v1043 = vmul.f32 %v1042, 1.442695
        %v1044 = vpow.pop %v1043
        %v1045 = vadd.f32 %v1044, 1.0
        %v1046 = vrcp.pop %v1045
        %v1047 = vmul.f32 1.0, %v1046
        %v1048 = vmul.f32 %v1041, %v1047
        %v1049 = vpack.c.bf16 %v1048, %v1048
        %v1051 = vunpack.c.l.b16 %v1049
        %v1052 = vpack.c.b16 %v1051, %v1051
        %v1054 = vshrl.u32 %v1052, 16
        %v1056 = vrot.slane %v1054, 7
        %v1057 = vshll.u32 %v1052, 16
        %v1059 = vor.u32 %v1056, %v1057
        %v1060 = vrot.slane %v1056, 4
        %s1063 = scalar_lea.vmem [#allocation2], 176
        %v1064 = vld [vmem:[%s1063] sm:$0xf]
        %v1065 = vsel %vm697, %v1059, %v1064
        %1066 = vst [vmem:[%s1063] sm:$0xf] %v1065
        %v1067 = vld [vmem:[%s1063 + $0x4] sm:$0x1]
        %v1068 = vsel %vm703, %v1060, %v1067
        %1069 = vst [vmem:[%s1063 + $0x4] sm:$0x1] %v1068
        %s1070 = scalar_lea.vmem %s264, 48
        %v1071 = vld [vmem:[%s1070] sm:$0xf]
        %v1072 = vunpack.c.l.bf16 %v1071
        %v1073 = vmul.f32 %v1072, %v664
        %v1074 = vadd.f32 %v1073, %v670
        %v1075 = vxor.u32 %v1074, 2147483648
        %v1076 = vmul.f32 %v1075, 1.442695
        %v1077 = vpow.pop %v1076
        %v1078 = vadd.f32 %v1077, 1.0
        %v1079 = vrcp.pop %v1078
        %v1080 = vmul.f32 1.0, %v1079
        %v1081 = vmul.f32 %v1074, %v1080
        %v1082 = vpack.c.bf16 %v1081, %v1081
        %v1084 = vunpack.c.l.b16 %v1082
        %v1085 = vpack.c.b16 %v1084, %v1084
        %v1087 = vshrl.u32 %v1085, 16
        %v1089 = vrot.slane %v1087, 7
        %v1090 = vshll.u32 %v1085, 16
        %v1092 = vor.u32 %v1089, %v1090
        %v1093 = vrot.slane %v1089, 4
        %s1096 = scalar_lea.vmem [#allocation2], 200
        %v1097 = vld [vmem:[%s1096] sm:$0xf]
        %v1098 = vsel %vm697, %v1092, %v1097
        %1099 = vst [vmem:[%s1096] sm:$0xf] %v1098
        %v1100 = vld [vmem:[%s1096 + $0x4] sm:$0x1]
        %v1101 = vsel %vm703, %v1093, %v1100
        %1102 = vst [vmem:[%s1096 + $0x4] sm:$0x1] %v1101
        %s1103 = scalar_lea.vmem %s264, 52
        %v1104 = vld [vmem:[%s1103] sm:$0xf]
        %v1105 = vunpack.c.l.bf16 %v1104
        %v1106 = vmul.f32 %v1105, %v664
        %v1107 = vadd.f32 %v1106, %v670
        %v1108 = vxor.u32 %v1107, 2147483648
        %v1109 = vmul.f32 %v1108, 1.442695
        %v1110 = vpow.pop %v1109
        %v1111 = vadd.f32 %v1110, 1.0
        %v1112 = vrcp.pop %v1111
        %v1113 = vmul.f32 1.0, %v1112
        %v1114 = vmul.f32 %v1107, %v1113
        %v1115 = vpack.c.bf16 %v1114, %v1114
        %v1117 = vunpack.c.l.b16 %v1115
        %v1118 = vpack.c.b16 %v1117, %v1117
        %v1120 = vshrl.u32 %v1118, 16
        %v1122 = vrot.slane %v1120, 7
        %v1123 = vshll.u32 %v1118, 16
        %v1125 = vor.u32 %v1122, %v1123
        %v1126 = vrot.slane %v1122, 4
        %s1129 = scalar_lea.vmem [#allocation2], 208
        %v1130 = vld [vmem:[%s1129] sm:$0xf]
        %v1131 = vsel %vm697, %v1125, %v1130
        %1132 = vst [vmem:[%s1129] sm:$0xf] %v1131
        %v1133 = vld [vmem:[%s1129 + $0x4] sm:$0x1]
        %v1134 = vsel %vm703, %v1126, %v1133
        %1135 = vst [vmem:[%s1129 + $0x4] sm:$0x1] %v1134
        %s1136 = scalar_lea.vmem %s264, 56
        %v1137 = vld [vmem:[%s1136] sm:$0xf]
        %v1138 = vunpack.c.l.bf16 %v1137
        %v1139 = vmul.f32 %v1138, %v664
        %v1140 = vadd.f32 %v1139, %v670
        %v1141 = vxor.u32 %v1140, 2147483648
        %v1142 = vmul.f32 %v1141, 1.442695
        %v1143 = vpow.pop %v1142
        %v1144 = vadd.f32 %v1143, 1.0
        %v1145 = vrcp.pop %v1144
        %v1146 = vmul.f32 1.0, %v1145
        %v1147 = vmul.f32 %v1140, %v1146
        %v1148 = vpack.c.bf16 %v1147, %v1147
        %v1150 = vunpack.c.l.b16 %v1148
        %v1151 = vpack.c.b16 %v1150, %v1150
        %v1153 = vshrl.u32 %v1151, 16
        %v1155 = vrot.slane %v1153, 7
        %v1156 = vshll.u32 %v1151, 16
        %v1158 = vor.u32 %v1155, %v1156
        %v1159 = vrot.slane %v1155, 4
        %s1162 = scalar_lea.vmem [#allocation2], 216
        %v1163 = vld [vmem:[%s1162] sm:$0xf]
        %v1164 = vsel %vm697, %v1158, %v1163
        %1165 = vst [vmem:[%s1162] sm:$0xf] %v1164
        %v1166 = vld [vmem:[%s1162 + $0x4] sm:$0x1]
        %v1167 = vsel %vm703, %v1159, %v1166
        %1168 = vst [vmem:[%s1162 + $0x4] sm:$0x1] %v1167
        %s1169 = scalar_lea.vmem %s264, 60
        %v1170 = vld [vmem:[%s1169] sm:$0xf]
        %v1171 = vunpack.c.l.bf16 %v1170
        %v1172 = vmul.f32 %v1171, %v664
        %v1173 = vadd.f32 %v1172, %v670
        %v1174 = vxor.u32 %v1173, 2147483648
        %v1175 = vmul.f32 %v1174, 1.442695
        %v1176 = vpow.pop %v1175
        %v1177 = vadd.f32 %v1176, 1.0
        %v1178 = vrcp.pop %v1177
        %v1179 = vmul.f32 1.0, %v1178
        %v1180 = vmul.f32 %v1173, %v1179
        %v1181 = vpack.c.bf16 %v1180, %v1180
        %v1183 = vunpack.c.l.b16 %v1181
        %v1184 = vpack.c.b16 %v1183, %v1183
        %v1186 = vshrl.u32 %v1184, 16
        %v1188 = vrot.slane %v1186, 7
        %v1189 = vshll.u32 %v1184, 16
        %v1191 = vor.u32 %v1188, %v1189
        %v1192 = vrot.slane %v1188, 4
        %s1195 = scalar_lea.vmem [#allocation2], 224
        %v1196 = vld [vmem:[%s1195] sm:$0xf]
        %v1197 = vsel %vm697, %v1191, %v1196
        %1198 = vst [vmem:[%s1195] sm:$0xf] %v1197
        %v1199 = vld [vmem:[%s1195 + $0x4] sm:$0x1]
        %v1200 = vsel %vm703, %v1192, %v1199
        %1201 = vst [vmem:[%s1195 + $0x4] sm:$0x1] %v1200
        %s1202 = scalar_lea.vmem %s264, 64
        %v1203 = vld [vmem:[%s1202] sm:$0xf]
        %v1204 = vunpack.c.l.bf16 %v1203
        %v1205 = vmul.f32 %v1204, %v664
        %v1206 = vadd.f32 %v1205, %v670
        %v1207 = vxor.u32 %v1206, 2147483648
        %v1208 = vmul.f32 %v1207, 1.442695
        %v1209 = vpow.pop %v1208
        %v1210 = vadd.f32 %v1209, 1.0
        %v1211 = vrcp.pop %v1210
        %v1212 = vmul.f32 1.0, %v1211
        %v1213 = vmul.f32 %v1206, %v1212
        %v1214 = vpack.c.bf16 %v1213, %v1213
        %v1216 = vunpack.c.l.b16 %v1214
        %v1217 = vpack.c.b16 %v1216, %v1216
        %v1219 = vshrl.u32 %v1217, 16
        %v1221 = vrot.slane %v1219, 7
        %v1222 = vshll.u32 %v1217, 16
        %v1224 = vor.u32 %v1221, %v1222
        %v1225 = vrot.slane %v1221, 4
        %s1228 = scalar_lea.vmem [#allocation2], 232
        %v1229 = vld [vmem:[%s1228] sm:$0xf]
        %v1230 = vsel %vm697, %v1224, %v1229
        %1231 = vst [vmem:[%s1228] sm:$0xf] %v1230
        %v1232 = vld [vmem:[%s1228 + $0x4] sm:$0x1]
        %v1233 = vsel %vm703, %v1225, %v1232
        %1234 = vst [vmem:[%s1228 + $0x4] sm:$0x1] %v1233
        %s1235 = scalar_lea.vmem %s264, 68
        %v1236 = vld [vmem:[%s1235] sm:$0xf]
        %v1237 = vunpack.c.l.bf16 %v1236
        %v1238 = vmul.f32 %v1237, %v664
        %v1239 = vadd.f32 %v1238, %v670
        %v1240 = vxor.u32 %v1239, 2147483648
        %v1241 = vmul.f32 %v1240, 1.442695
        %v1242 = vpow.pop %v1241
        %v1243 = vadd.f32 %v1242, 1.0
        %v1244 = vrcp.pop %v1243
        %v1245 = vmul.f32 1.0, %v1244
        %v1246 = vmul.f32 %v1239, %v1245
        %v1247 = vpack.c.bf16 %v1246, %v1246
        %v1249 = vunpack.c.l.b16 %v1247
        %v1250 = vpack.c.b16 %v1249, %v1249
        %v1252 = vshrl.u32 %v1250, 16
        %v1254 = vrot.slane %v1252, 7
        %v1255 = vshll.u32 %v1250, 16
        %v1257 = vor.u32 %v1254, %v1255
        %v1258 = vrot.slane %v1254, 4
        %s1261 = scalar_lea.vmem [#allocation2], 240
        %v1262 = vld [vmem:[%s1261] sm:$0xf]
        %v1263 = vsel %vm697, %v1257, %v1262
        %1264 = vst [vmem:[%s1261] sm:$0xf] %v1263
        %v1265 = vld [vmem:[%s1261 + $0x4] sm:$0x1]
        %v1266 = vsel %vm703, %v1258, %v1265
        %1267 = vst [vmem:[%s1261 + $0x4] sm:$0x1] %v1266
        %s1268 = scalar_lea.vmem %s264, 72
        %v1269 = vld [vmem:[%s1268] sm:$0xf]
        %v1270 = vunpack.c.l.bf16 %v1269
        %v1271 = vmul.f32 %v1270, %v664
        %v1272 = vadd.f32 %v1271, %v670
        %v1273 = vxor.u32 %v1272, 2147483648
        %v1274 = vmul.f32 %v1273, 1.442695
        %v1275 = vpow.pop %v1274
        %v1276 = vadd.f32 %v1275, 1.0
        %v1277 = vrcp.pop %v1276
        %v1278 = vmul.f32 1.0, %v1277
        %v1279 = vmul.f32 %v1272, %v1278
        %v1280 = vpack.c.bf16 %v1279, %v1279
        %v1282 = vunpack.c.l.b16 %v1280
        %v1283 = vpack.c.b16 %v1282, %v1282
        %v1285 = vshrl.u32 %v1283, 16
        %v1287 = vrot.slane %v1285, 7
        %v1288 = vshll.u32 %v1283, 16
        %v1290 = vor.u32 %v1287, %v1288
        %v1291 = vrot.slane %v1287, 4
        %s1294 = scalar_lea.vmem [#allocation2], 264
        %v1295 = vld [vmem:[%s1294] sm:$0xf]
        %v1296 = vsel %vm697, %v1290, %v1295
        %1297 = vst [vmem:[%s1294] sm:$0xf] %v1296
        %v1298 = vld [vmem:[%s1294 + $0x4] sm:$0x1]
        %v1299 = vsel %vm703, %v1291, %v1298
        %1300 = vst [vmem:[%s1294 + $0x4] sm:$0x1] %v1299
        %s1301 = scalar_lea.vmem %s264, 76
        %v1302 = vld [vmem:[%s1301] sm:$0xf]
        %v1303 = vunpack.c.l.bf16 %v1302
        %v1304 = vmul.f32 %v1303, %v664
        %v1305 = vadd.f32 %v1304, %v670
        %v1306 = vxor.u32 %v1305, 2147483648
        %v1307 = vmul.f32 %v1306, 1.442695
        %v1308 = vpow.pop %v1307
        %v1309 = vadd.f32 %v1308, 1.0
        %v1310 = vrcp.pop %v1309
        %v1311 = vmul.f32 1.0, %v1310
        %v1312 = vmul.f32 %v1305, %v1311
        %v1313 = vpack.c.bf16 %v1312, %v1312
        %v1315 = vunpack.c.l.b16 %v1313
        %v1316 = vpack.c.b16 %v1315, %v1315
        %v1318 = vshrl.u32 %v1316, 16
        %v1320 = vrot.slane %v1318, 7
        %v1321 = vshll.u32 %v1316, 16
        %v1323 = vor.u32 %v1320, %v1321
        %v1324 = vrot.slane %v1320, 4
        %s1327 = scalar_lea.vmem [#allocation2], 272
        %v1328 = vld [vmem:[%s1327] sm:$0xf]
        %v1329 = vsel %vm697, %v1323, %v1328
        %1330 = vst [vmem:[%s1327] sm:$0xf] %v1329
        %v1331 = vld [vmem:[%s1327 + $0x4] sm:$0x1]
        %v1332 = vsel %vm703, %v1324, %v1331
        %1333 = vst [vmem:[%s1327 + $0x4] sm:$0x1] %v1332
        %s1334 = scalar_lea.vmem %s264, 80
        %v1335 = vld [vmem:[%s1334] sm:$0xf]
        %v1336 = vunpack.c.l.bf16 %v1335
        %v1337 = vmul.f32 %v1336, %v664
        %v1338 = vadd.f32 %v1337, %v670
        %v1339 = vxor.u32 %v1338, 2147483648
        %v1340 = vmul.f32 %v1339, 1.442695
        %v1341 = vpow.pop %v1340
        %v1342 = vadd.f32 %v1341, 1.0
        %v1343 = vrcp.pop %v1342
        %v1344 = vmul.f32 1.0, %v1343
        %v1345 = vmul.f32 %v1338, %v1344
        %v1346 = vpack.c.bf16 %v1345, %v1345
        %v1348 = vunpack.c.l.b16 %v1346
        %v1349 = vpack.c.b16 %v1348, %v1348
        %v1351 = vshrl.u32 %v1349, 16
        %v1353 = vrot.slane %v1351, 7
        %v1354 = vshll.u32 %v1349, 16
        %v1356 = vor.u32 %v1353, %v1354
        %v1357 = vrot.slane %v1353, 4
        %s1360 = scalar_lea.vmem [#allocation2], 280
        %v1361 = vld [vmem:[%s1360] sm:$0xf]
        %v1362 = vsel %vm697, %v1356, %v1361
        %1363 = vst [vmem:[%s1360] sm:$0xf] %v1362
        %v1364 = vld [vmem:[%s1360 + $0x4] sm:$0x1]
        %v1365 = vsel %vm703, %v1357, %v1364
        %1366 = vst [vmem:[%s1360 + $0x4] sm:$0x1] %v1365
        %s1367 = scalar_lea.vmem %s264, 84
        %v1368 = vld [vmem:[%s1367] sm:$0xf]
        %v1369 = vunpack.c.l.bf16 %v1368
        %v1370 = vmul.f32 %v1369, %v664
        %v1371 = vadd.f32 %v1370, %v670
        %v1372 = vxor.u32 %v1371, 2147483648
        %v1373 = vmul.f32 %v1372, 1.442695
        %v1374 = vpow.pop %v1373
        %v1375 = vadd.f32 %v1374, 1.0
        %v1376 = vrcp.pop %v1375
        %v1377 = vmul.f32 1.0, %v1376
        %v1378 = vmul.f32 %v1371, %v1377
        %v1379 = vpack.c.bf16 %v1378, %v1378
        %v1381 = vunpack.c.l.b16 %v1379
        %v1382 = vpack.c.b16 %v1381, %v1381
        %v1384 = vshrl.u32 %v1382, 16
        %v1386 = vrot.slane %v1384, 7
        %v1387 = vshll.u32 %v1382, 16
        %v1389 = vor.u32 %v1386, %v1387
        %v1390 = vrot.slane %v1386, 4
        %s1393 = scalar_lea.vmem [#allocation2], 288
        %v1394 = vld [vmem:[%s1393] sm:$0xf]
        %v1395 = vsel %vm697, %v1389, %v1394
        %1396 = vst [vmem:[%s1393] sm:$0xf] %v1395
        %v1397 = vld [vmem:[%s1393 + $0x4] sm:$0x1]
        %v1398 = vsel %vm703, %v1390, %v1397
        %1399 = vst [vmem:[%s1393 + $0x4] sm:$0x1] %v1398
        %s1400 = scalar_lea.vmem %s264, 88
        %v1401 = vld [vmem:[%s1400] sm:$0xf]
        %v1402 = vunpack.c.l.bf16 %v1401
        %v1403 = vmul.f32 %v1402, %v664
        %v1404 = vadd.f32 %v1403, %v670
        %v1405 = vxor.u32 %v1404, 2147483648
        %v1406 = vmul.f32 %v1405, 1.442695
        %v1407 = vpow.pop %v1406
        %v1408 = vadd.f32 %v1407, 1.0
        %v1409 = vrcp.pop %v1408
        %v1410 = vmul.f32 1.0, %v1409
        %v1411 = vmul.f32 %v1404, %v1410
        %v1412 = vpack.c.bf16 %v1411, %v1411
        %v1414 = vunpack.c.l.b16 %v1412
        %v1415 = vpack.c.b16 %v1414, %v1414
        %v1417 = vshrl.u32 %v1415, 16
        %v1419 = vrot.slane %v1417, 7
        %v1420 = vshll.u32 %v1415, 16
        %v1422 = vor.u32 %v1419, %v1420
        %v1423 = vrot.slane %v1419, 4
        %s1426 = scalar_lea.vmem [#allocation2], 296
        %v1427 = vld [vmem:[%s1426] sm:$0xf]
        %v1428 = vsel %vm697, %v1422, %v1427
        %1429 = vst [vmem:[%s1426] sm:$0xf] %v1428
        %v1430 = vld [vmem:[%s1426 + $0x4] sm:$0x1]
        %v1431 = vsel %vm703, %v1423, %v1430
        %1432 = vst [vmem:[%s1426 + $0x4] sm:$0x1] %v1431
        %s1433 = scalar_lea.vmem %s264, 92
        %v1434 = vld [vmem:[%s1433] sm:$0xf]
        %v1435 = vunpack.c.l.bf16 %v1434
        %v1436 = vmul.f32 %v1435, %v664
        %v1437 = vadd.f32 %v1436, %v670
        %v1438 = vxor.u32 %v1437, 2147483648
        %v1439 = vmul.f32 %v1438, 1.442695
        %v1440 = vpow.pop %v1439
        %v1441 = vadd.f32 %v1440, 1.0
        %v1442 = vrcp.pop %v1441
        %v1443 = vmul.f32 1.0, %v1442
        %v1444 = vmul.f32 %v1437, %v1443
        %v1445 = vpack.c.bf16 %v1444, %v1444
        %v1447 = vunpack.c.l.b16 %v1445
        %v1448 = vpack.c.b16 %v1447, %v1447
        %v1450 = vshrl.u32 %v1448, 16
        %v1452 = vrot.slane %v1450, 7
        %v1453 = vshll.u32 %v1448, 16
        %v1455 = vor.u32 %v1452, %v1453
        %v1456 = vrot.slane %v1452, 4
        %s1459 = scalar_lea.vmem [#allocation2], 304
        %v1460 = vld [vmem:[%s1459] sm:$0xf]
        %v1461 = vsel %vm697, %v1455, %v1460
        %1462 = vst [vmem:[%s1459] sm:$0xf] %v1461
        %v1463 = vld [vmem:[%s1459 + $0x4] sm:$0x1]
        %v1464 = vsel %vm703, %v1456, %v1463
        %1465 = vst [vmem:[%s1459 + $0x4] sm:$0x1] %v1464
      $region48: #{tpu_custom_call.1} parent=43 // pred_fallthru
        _
      %v1466 = vld [vmem:[%s1] sm:$0xf]
      %v1467 = vld [vmem:[%s1 + $0x4] sm:$0xf]
      %v1468 = vld [vmem:[%s1 + $0x8] sm:$0xf]
      %v1469 = vld [vmem:[%s1 + $0xc] sm:$0xf]
      %v1470 = vld [vmem:[%s1 + $0x10] sm:$0xf]
      %v1471 = vld [vmem:[%s1 + $0x14] sm:$0xf]
      %v1472 = vld [vmem:[%s1 + $0x18] sm:$0xf]
      %v1473 = vld [vmem:[%s1 + $0x1c] sm:$0xf]
      %v1474 = vld [vmem:[%s1 + $0x20] sm:$0xf]
      %v1475 = vld [vmem:[%s1 + $0x24] sm:$0xf]
      %v1476 = vld [vmem:[%s1 + $0x28] sm:$0xf]
      %v1477 = vld [vmem:[%s1 + $0x2c] sm:$0xf]
      %v1478 = vld [vmem:[%s1 + $0x30] sm:$0xf]
      %v1479 = vld [vmem:[%s1 + $0x34] sm:$0xf]
      %v1480 = vld [vmem:[%s1 + $0x38] sm:$0xf]
      %v1481 = vld [vmem:[%s1 + $0x3c] sm:$0xf]
      %v1482 = vld [vmem:[%s1 + $0x40] sm:$0xf]
      %v1483 = vld [vmem:[%s1 + $0x44] sm:$0xf]
      %v1484 = vld [vmem:[%s1 + $0x48] sm:$0xf]
      %v1485 = vld [vmem:[%s1 + $0x4c] sm:$0xf]
      %v1486 = vld [vmem:[%s1 + $0x50] sm:$0xf]
      %v1487 = vld [vmem:[%s1 + $0x54] sm:$0xf]
      %v1488 = vld [vmem:[%s1 + $0x58] sm:$0xf]
      %v1489 = vld [vmem:[%s1 + $0x5c] sm:$0xf]
      %v1490 = vld [vmem:[%s1 + $0x60] sm:$0xf]
      %v1491 = vld [vmem:[%s1 + $0x64] sm:$0xf]
      %v1492 = vld [vmem:[%s1 + $0x68] sm:$0xf]
      %v1493 = vld [vmem:[%s1 + $0x6c] sm:$0xf]
      %v1494 = vld [vmem:[%s1 + $0x70] sm:$0xf]
      %v1495 = vld [vmem:[%s1 + $0x74] sm:$0xf]
      %v1496 = vld [vmem:[%s1 + $0x78] sm:$0xf]
      %v1497 = vld [vmem:[%s1 + $0x7c] sm:$0xf]
      %v1498 = vld [vmem:[%s1 + $0x80] sm:$0xf]
      %v1499 = vld [vmem:[%s1 + $0x84] sm:$0xf]
      %v1500 = vld [vmem:[%s1 + $0x88] sm:$0xf]
      %v1501 = vld [vmem:[%s1 + $0x8c] sm:$0xf]
      %v1502 = vld [vmem:[%s1 + $0x90] sm:$0xf]
      %v1503 = vld [vmem:[%s1 + $0x94] sm:$0xf]
      %v1504 = vld [vmem:[%s1 + $0x98] sm:$0xf]
      %v1505 = vld [vmem:[%s1 + $0x9c] sm:$0xf]
      %v1506 = vld [vmem:[%s1 + $0xa0] sm:$0xf]
      %v1507 = vld [vmem:[%s1 + $0xa4] sm:$0xf]
      %v1508 = vld [vmem:[%s1 + $0xa8] sm:$0xf]
      %v1509 = vld [vmem:[%s1 + $0xac] sm:$0xf]
      %v1510 = vld [vmem:[%s1 + $0xb0] sm:$0xf]
      %v1511 = vld [vmem:[%s1 + $0xb4] sm:$0xf]
      %v1512 = vld [vmem:[%s1 + $0xb8] sm:$0xf]
      %v1513 = vld [vmem:[%s1 + $0xbc] sm:$0xf]
      %v1514 = vld [vmem:[%s1 + $0xc0] sm:$0xf]
      %v1515 = vld [vmem:[%s1 + $0xc4] sm:$0xf]
      %v1516 = vld [vmem:[%s1 + $0xc8] sm:$0xf]
      %v1517 = vld [vmem:[%s1 + $0xcc] sm:$0xf]
      %v1518 = vld [vmem:[%s1 + $0xd0] sm:$0xf]
      %v1519 = vld [vmem:[%s1 + $0xd4] sm:$0xf]
      %v1520 = vld [vmem:[%s1 + $0xd8] sm:$0xf]
      %v1521 = vld [vmem:[%s1 + $0xdc] sm:$0xf]
      %v1522 = vld [vmem:[%s1 + $0xe0] sm:$0xf]
      %v1523 = vld [vmem:[%s1 + $0xe4] sm:$0xf]
      %v1524 = vld [vmem:[%s1 + $0xe8] sm:$0xf]
      %v1525 = vld [vmem:[%s1 + $0xec] sm:$0xf]
      %v1526 = vld [vmem:[%s1 + $0xf0] sm:$0xf]
      %v1527 = vld [vmem:[%s1 + $0xf4] sm:$0xf]
      %v1528 = vld [vmem:[%s1 + $0xf8] sm:$0xf]
      %v1529 = vld [vmem:[%s1 + $0xfc] sm:$0xf]
      %v1530 = vld [vmem:[%s1 + $0x100] sm:$0xf]
      %v1531 = vld [vmem:[%s1 + $0x104] sm:$0xf]
      %v1532 = vld [vmem:[%s1 + $0x108] sm:$0xf]
      %v1533 = vld [vmem:[%s1 + $0x10c] sm:$0xf]
      %v1534 = vld [vmem:[%s1 + $0x110] sm:$0xf]
      %v1535 = vld [vmem:[%s1 + $0x114] sm:$0xf]
      %v1536 = vld [vmem:[%s1 + $0x118] sm:$0xf]
      %v1537 = vld [vmem:[%s1 + $0x11c] sm:$0xf]
      %v1538 = vld [vmem:[%s1 + $0x120] sm:$0xf]
      %v1539 = vld [vmem:[%s1 + $0x124] sm:$0xf]
      %v1540 = vld [vmem:[%s1 + $0x128] sm:$0xf]
      %v1541 = vld [vmem:[%s1 + $0x12c] sm:$0xf]
      %v1542 = vld [vmem:[%s1 + $0x130] sm:$0xf]
      %v1543 = vld [vmem:[%s1 + $0x134] sm:$0xf]
      %v1544 = vld [vmem:[%s1 + $0x138] sm:$0xf]
      %v1545 = vld [vmem:[%s1 + $0x13c] sm:$0xf]
      %v1546 = vld [vmem:[%s1 + $0x140] sm:$0xf]
      %v1547 = vld [vmem:[%s1 + $0x144] sm:$0xf]
      %v1548 = vld [vmem:[%s1 + $0x148] sm:$0xf]
      %v1549 = vld [vmem:[%s1 + $0x14c] sm:$0xf]
      %v1550 = vld [vmem:[%s1 + $0x150] sm:$0xf]
      %v1551 = vld [vmem:[%s1 + $0x154] sm:$0xf]
      %v1552 = vld [vmem:[%s1 + $0x158] sm:$0xf]
      %v1553 = vld [vmem:[%s1 + $0x15c] sm:$0xf]
      %v1554 = vld [vmem:[%s1 + $0x160] sm:$0xf]
      %v1555 = vld [vmem:[%s1 + $0x164] sm:$0xf]
      %v1556 = vld [vmem:[%s1 + $0x168] sm:$0xf]
      %v1557 = vld [vmem:[%s1 + $0x16c] sm:$0xf]
      %v1558 = vld [vmem:[%s1 + $0x170] sm:$0xf]
      %v1559 = vld [vmem:[%s1 + $0x174] sm:$0xf]
      %v1560 = vld [vmem:[%s1 + $0x178] sm:$0xf]
      %v1561 = vld [vmem:[%s1 + $0x17c] sm:$0xf]
      %v1562 = vld [vmem:[%s1 + $0x180] sm:$0xf]
      %v1563 = vld [vmem:[%s1 + $0x184] sm:$0xf]
      %v1564 = vld [vmem:[%s1 + $0x188] sm:$0xf]
      %v1565 = vld [vmem:[%s1 + $0x18c] sm:$0xf]
      %v1566 = vld [vmem:[%s1 + $0x190] sm:$0xf]
      %v1567 = vld [vmem:[%s1 + $0x194] sm:$0xf]
      %v1568 = vld [vmem:[%s1 + $0x198] sm:$0xf]
      %v1569 = vld [vmem:[%s1 + $0x19c] sm:$0xf]
      %v1570 = vld [vmem:[%s1 + $0x1a0] sm:$0xf]
      %v1571 = vld [vmem:[%s1 + $0x1a4] sm:$0xf]
      %v1572 = vld [vmem:[%s1 + $0x1a8] sm:$0xf]
      %v1573 = vld [vmem:[%s1 + $0x1ac] sm:$0xf]
      %v1574 = vld [vmem:[%s2] sm:$0x1]
      %s1575 = smul.u32 %s22, 8
      %s1576 = smul.u32 %s1575, 2
      %s1577 = smul.addr %s1576, 4
      %s1578 = scalar_lea.vmem [#allocation2], %s1577
      %v1579 = vld [vmem:[%s1578] sm:$0xf]
      %v1580 = vld [vmem:[%s1578 + $0x4] sm:$0x1]
      %v1581 = vld [vmem:[%s1578] sm:$0xe]
      %s1582 = sadd.s32 %s1575, 1
      %s1583 = smul.u32 %s1582, 2
      %s1584 = smul.addr %s1583, 4
      %s1585 = scalar_lea.vmem [#allocation2], %s1584
      %v1586 = vld [vmem:[%s1585] sm:$0xf]
      %v1587 = vld [vmem:[%s1585 + $0x4] sm:$0x1]
      %v1588 = vld [vmem:[%s1585] sm:$0xe]
      %s1589 = sadd.s32 %s1575, 2
      %s1590 = smul.u32 %s1589, 2
      %s1591 = smul.addr %s1590, 4
      %s1592 = scalar_lea.vmem [#allocation2], %s1591
      %v1593 = vld [vmem:[%s1592] sm:$0xf]
      %v1594 = vld [vmem:[%s1592 + $0x4] sm:$0x1]
      %v1595 = vld [vmem:[%s1592] sm:$0xe]
      %s1596 = sadd.s32 %s22, 1
      %s1597 = smul.u32 %s1596, 8
      %s1598 = smul.u32 %s1597, 2
      %s1599 = smul.addr %s1598, 4
      %s1600 = scalar_lea.vmem [#allocation2], %s1599
      %v1601 = vld [vmem:[%s1600] sm:$0xf]
      %v1602 = vld [vmem:[%s1600 + $0x4] sm:$0x1]
      %v1603 = vld [vmem:[%s1600] sm:$0xe]
      %s1604 = sadd.s32 %s1597, 1
      %s1605 = smul.u32 %s1604, 2
      %s1606 = smul.addr %s1605, 4
      %s1607 = scalar_lea.vmem [#allocation2], %s1606
      %v1608 = vld [vmem:[%s1607] sm:$0xf]
      %v1609 = vld [vmem:[%s1607 + $0x4] sm:$0x1]
      %v1610 = vld [vmem:[%s1607] sm:$0xe]
      %s1611 = sadd.s32 %s1597, 2
      %s1612 = smul.u32 %s1611, 2
      %s1613 = smul.addr %s1612, 4
      %s1614 = scalar_lea.vmem [#allocation2], %s1613
      %v1615 = vld [vmem:[%s1614] sm:$0xf]
      %v1616 = vld [vmem:[%s1614 + $0x4] sm:$0x1]
      %v1617 = vld [vmem:[%s1614] sm:$0xe]
      %s1618 = sadd.s32 %s22, 2
      %s1619 = smul.u32 %s1618, 8
      %s1620 = smul.u32 %s1619, 2
      %s1621 = smul.addr %s1620, 4
      %s1622 = scalar_lea.vmem [#allocation2], %s1621
      %v1623 = vld [vmem:[%s1622] sm:$0xf]
      %v1624 = vld [vmem:[%s1622 + $0x4] sm:$0x1]
      %v1625 = vld [vmem:[%s1622] sm:$0xe]
      %s1626 = sadd.s32 %s1619, 1
      %s1627 = smul.u32 %s1626, 2
      %s1628 = smul.addr %s1627, 4
      %s1629 = scalar_lea.vmem [#allocation2], %s1628
      %v1630 = vld [vmem:[%s1629] sm:$0xf]
      %v1631 = vld [vmem:[%s1629 + $0x4] sm:$0x1]
      %v1632 = vld [vmem:[%s1629] sm:$0xe]
      %s1633 = sadd.s32 %s1619, 2
      %s1634 = smul.u32 %s1633, 2
      %s1635 = smul.addr %s1634, 4
      %s1636 = scalar_lea.vmem [#allocation2], %s1635
      %v1637 = vld [vmem:[%s1636] sm:$0xf]
      %v1638 = vld [vmem:[%s1636 + $0x4] sm:$0x1]
      %v1639 = vld [vmem:[%s1636] sm:$0xe]
      %v1642 = vunpack.c.l.b16 %v1579
      %v1643 = vunpack.c.l.b16 %v1580
      %v1644 = vpack.c.b16 %v1643, %v1642
      %v1646 = vshrl.u32 %v1644, 16
      %v1648 = vshll.u32 %v1644, 16
      %v1650 = vrot.slane %v1648, 1
      %v1651 = vor.u32 %v1646, %v1650
      %1652 = vrot.lane.b32.xlu0 %v1651, 32
      %v1653 = vpop.permute.xlu0 %1652
      %v1655 = vunpack.c.l.b16 %v1581
      %v1656 = vpack.c.b16 %v1643, %v1655
      %v1657 = vrot.slane %v1656, 1
      %1658 = vrot.lane.b32.xlu0 %v1657, 64
      %v1659 = vpop.permute.xlu0 %1658
      %v1661 = vunpack.c.l.b16 %v1586
      %v1662 = vpack.c.b16 %v1661, %v1661
      %1663 = vrot.lane.b32.xlu0 %v1662, 96
      %v1664 = vpop.permute.xlu0 %1663
      %v1666 = vunpack.c.l.b16 %v1587
      %v1667 = vpack.c.b16 %v1666, %v1661
      %v1669 = vshrl.u32 %v1667, 16
      %v1671 = vshll.u32 %v1667, 16
      %v1673 = vrot.slane %v1671, 1
      %v1674 = vor.u32 %v1669, %v1673
      %v1676 = vunpack.c.l.b16 %v1588
      %v1677 = vpack.c.b16 %v1666, %v1676
      %v1678 = vrot.slane %v1677, 1
      %1679 = vrot.lane.b32.xlu0 %v1678, 32
      %v1680 = vpop.permute.xlu0 %1679
      %v1682 = vunpack.c.l.b16 %v1593
      %v1683 = vpack.c.b16 %v1682, %v1682
      %1684 = vrot.lane.b32.xlu0 %v1683, 64
      %v1685 = vpop.permute.xlu0 %1684
      %v1687 = vunpack.c.l.b16 %v1594
      %v1688 = vpack.c.b16 %v1687, %v1682
      %v1690 = vshrl.u32 %v1688, 16
      %v1692 = vshll.u32 %v1688, 16
      %v1694 = vrot.slane %v1692, 1
      %v1695 = vor.u32 %v1690, %v1694
      %1696 = vrot.lane.b32.xlu0 %v1695, 96
      %v1697 = vpop.permute.xlu0 %1696
      %v1699 = vunpack.c.l.b16 %v1595
      %v1700 = vpack.c.b16 %v1687, %v1699
      %v1701 = vrot.slane %v1700, 1
      %v1703 = vunpack.c.l.b16 %v1601
      %v1704 = vpack.c.b16 %v1703, %v1703
      %1705 = vrot.lane.b32.xlu0 %v1704, 32
      %v1706 = vpop.permute.xlu0 %1705
      %v1708 = vunpack.c.l.b16 %v1602
      %v1709 = vpack.c.b16 %v1708, %v1703
      %v1711 = vshrl.u32 %v1709, 16
      %v1713 = vshll.u32 %v1709, 16
      %v1715 = vrot.slane %v1713, 1
      %v1716 = vor.u32 %v1711, %v1715
      %1717 = vrot.lane.b32.xlu0 %v1716, 64
      %v1718 = vpop.permute.xlu0 %1717
      %v1720 = vunpack.c.l.b16 %v1603
      %v1721 = vpack.c.b16 %v1708, %v1720
      %v1722 = vrot.slane %v1721, 1
      %1723 = vrot.lane.b32.xlu0 %v1722, 96
      %v1724 = vpop.permute.xlu0 %1723
      %v1727 = vunpack.c.l.b16 %v1608
      %v1728 = vunpack.c.l.b16 %v1609
      %v1729 = vpack.c.b16 %v1728, %v1727
      %v1731 = vshrl.u32 %v1729, 16
      %v1733 = vshll.u32 %v1729, 16
      %v1735 = vrot.slane %v1733, 1
      %v1736 = vor.u32 %v1731, %v1735
      %1737 = vrot.lane.b32.xlu0 %v1736, 32
      %v1738 = vpop.permute.xlu0 %1737
      %v1740 = vunpack.c.l.b16 %v1610
      %v1741 = vpack.c.b16 %v1728, %v1740
      %v1742 = vrot.slane %v1741, 1
      %1743 = vrot.lane.b32.xlu0 %v1742, 64
      %v1744 = vpop.permute.xlu0 %1743
      %v1746 = vunpack.c.l.b16 %v1615
      %v1747 = vpack.c.b16 %v1746, %v1746
      %1748 = vrot.lane.b32.xlu0 %v1747, 96
      %v1749 = vpop.permute.xlu0 %1748
      %vm1750 = vcmask 261120
      %v1753 = vsel %vm1750, %v1579, %v1653
      %vm1754 = vcmask 523264
      %v1756 = vsel %vm1754, %v1753, %v1659
      %vm1757 = vcmask 785408
      %v1759 = vsel %vm1757, %v1756, %v1664
      %v1763 = vsel %vm1750, %v1674, %v1680
      %v1765 = vsel %vm1754, %v1763, %v1685
      %v1767 = vsel %vm1757, %v1765, %v1697
      %v1771 = vsel %vm1750, %v1701, %v1706
      %v1773 = vsel %vm1754, %v1771, %v1718
      %v1775 = vsel %vm1757, %v1773, %v1724
      %v1779 = vsel %vm1750, %v1608, %v1738
      %v1781 = vsel %vm1754, %v1779, %v1744
      %v1783 = vsel %vm1757, %v1781, %v1749
      %v1786 = vunpack.c.l.b16 %v1616
      %v1787 = vpack.c.b16 %v1786, %v1746
      %v1789 = vunpack.c.l.b16 %v1617
      %v1790 = vpack.c.b16 %v1786, %v1789
      %v1792 = vshrl.u32 %v1790, 16
      %v1794 = vshll.u32 %v1790, 16
      %v1796 = vrot.slane %v1794, 1
      %v1797 = vor.u32 %v1792, %v1796
      %1798 = vrot.lane.b32.xlu0 %v1797, 32
      %v1799 = vpop.permute.xlu0 %1798
      %v1801 = vunpack.c.l.b16 %v1623
      %v1802 = vpack.c.b16 %v1801, %v1801
      %v1804 = vshrl.u32 %v1802, 16
      %v1806 = vrot.slane %v1804, 7
      %v1807 = vshll.u32 %v1802, 16
      %v1809 = vor.u32 %v1806, %v1807
      %1810 = vrot.lane.b32.xlu0 %v1809, 64
      %v1811 = vpop.permute.xlu0 %1810
      %v1813 = vunpack.c.l.b16 %v1624
      %v1814 = vpack.c.b16 %v1813, %v1801
      %1815 = vrot.lane.b32.xlu0 %v1814, 96
      %v1816 = vpop.permute.xlu0 %1815
      %v1818 = vunpack.c.l.b16 %v1625
      %v1819 = vpack.c.b16 %v1813, %v1818
      %v1821 = vshrl.u32 %v1819, 16
      %v1823 = vshll.u32 %v1819, 16
      %v1825 = vrot.slane %v1823, 1
      %v1826 = vor.u32 %v1821, %v1825
      %v1828 = vunpack.c.l.b16 %v1630
      %v1829 = vpack.c.b16 %v1828, %v1828
      %v1831 = vshrl.u32 %v1829, 16
      %v1833 = vrot.slane %v1831, 7
      %v1834 = vshll.u32 %v1829, 16
      %v1836 = vor.u32 %v1833, %v1834
      %1837 = vrot.lane.b32.xlu0 %v1836, 32
      %v1838 = vpop.permute.xlu0 %1837
      %v1840 = vunpack.c.l.b16 %v1631
      %v1841 = vpack.c.b16 %v1840, %v1828
      %1842 = vrot.lane.b32.xlu0 %v1841, 64
      %v1843 = vpop.permute.xlu0 %1842
      %v1845 = vunpack.c.l.b16 %v1632
      %v1846 = vpack.c.b16 %v1840, %v1845
      %v1848 = vshrl.u32 %v1846, 16
      %v1850 = vshll.u32 %v1846, 16
      %v1852 = vrot.slane %v1850, 1
      %v1853 = vor.u32 %v1848, %v1852
      %1854 = vrot.lane.b32.xlu0 %v1853, 96
      %v1855 = vpop.permute.xlu0 %1854
      %v1857 = vunpack.c.l.b16 %v1637
      %v1858 = vpack.c.b16 %v1857, %v1857
      %v1860 = vshrl.u32 %v1858, 16
      %v1862 = vrot.slane %v1860, 7
      %v1863 = vshll.u32 %v1858, 16
      %v1865 = vor.u32 %v1862, %v1863
      %v1867 = vunpack.c.l.b16 %v1638
      %v1868 = vpack.c.b16 %v1867, %v1857
      %1869 = vrot.lane.b32.xlu0 %v1868, 32
      %v1870 = vpop.permute.xlu0 %1869
      %v1872 = vunpack.c.l.b16 %v1639
      %v1873 = vpack.c.b16 %v1867, %v1872
      %v1875 = vshrl.u32 %v1873, 16
      %v1877 = vshll.u32 %v1873, 16
      %v1879 = vrot.slane %v1877, 1
      %v1880 = vor.u32 %v1875, %v1879
      %1881 = vrot.lane.b32.xlu0 %v1880, 64
      %v1882 = vpop.permute.xlu0 %1881
      %v1885 = vsel %vm1750, %v1787, %v1799
      %v1887 = vsel %vm1754, %v1885, %v1811
      %v1889 = vsel %vm1757, %v1887, %v1816
      %v1892 = vsel %vm1750, %v1826, %v1838
      %v1894 = vsel %vm1754, %v1892, %v1843
      %v1896 = vsel %vm1757, %v1894, %v1855
      %v1899 = vsel %vm1750, %v1865, %v1870
      %v1901 = vsel %vm1754, %v1899, %v1882
      %v1902 = vshrl.u32 %v1889, 16
      %v1904 = vshll.u32 %v1889, 16
      %v1906 = vrot.slane %v1904, 1
      %v1907 = vor.u32 %v1902, %v1906
      %v1908 = vshrl.u32 %v1896, 16
      %v1910 = vshll.u32 %v1896, 16
      %v1912 = vrot.slane %v1910, 1
      %v1913 = vor.u32 %v1908, %v1912
      %v1914 = vshrl.u32 %v1901, 16
      %v1916 = vshll.u32 %v1901, 16
      %v1918 = vrot.slane %v1916, 1
      %v1919 = vor.u32 %v1914, %v1918
      %v1923 = vlaneseq
      %v1924 = vshrl.u32 %v1923, 7
      %v1925 = vsub.s32 0, %v1924
      %v1926 = vrot.slane %v1574, %v1925
      %v2036 = vunpack.c.l.b16 %v1466
      %v2037 = vunpack.c.l.b16 %v1467
      %v2038 = vunpack.c.l.b16 %v1468
      %v2039 = vunpack.c.l.b16 %v1469
      %v2040 = vunpack.c.l.b16 %v1470
      %v2041 = vunpack.c.l.b16 %v1471
      %v2042 = vunpack.c.l.b16 %v1472
      %v2043 = vunpack.c.l.b16 %v1473
      %v2044 = vunpack.c.l.b16 %v1474
      %v2045 = vunpack.c.l.b16 %v1475
      %v2046 = vunpack.c.l.b16 %v1476
      %v2047 = vunpack.c.l.b16 %v1477
      %v2048 = vunpack.c.l.b16 %v1478
      %v2049 = vunpack.c.l.b16 %v1479
      %v2050 = vunpack.c.l.b16 %v1480
      %v2051 = vunpack.c.l.b16 %v1481
      %v2052 = vunpack.c.l.b16 %v1482
      %v2053 = vunpack.c.l.b16 %v1483
      %v2054 = vunpack.c.l.b16 %v1484
      %v2055 = vunpack.c.l.b16 %v1485
      %v2056 = vunpack.c.l.b16 %v1486
      %v2057 = vunpack.c.l.b16 %v1487
      %v2058 = vunpack.c.l.b16 %v1488
      %v2059 = vunpack.c.l.b16 %v1489
      %v2060 = vunpack.c.l.b16 %v1490
      %v2061 = vunpack.c.l.b16 %v1491
      %v2062 = vunpack.c.l.b16 %v1492
      %v2063 = vunpack.c.l.b16 %v1493
      %v2064 = vunpack.c.l.b16 %v1494
      %v2065 = vunpack.c.l.b16 %v1495
      %v2066 = vunpack.c.l.b16 %v1496
      %v2067 = vunpack.c.l.b16 %v1497
      %v2068 = vunpack.c.l.b16 %v1498
      %v2069 = vunpack.c.l.b16 %v1499
      %v2070 = vunpack.c.l.b16 %v1500
      %v2071 = vunpack.c.l.b16 %v1501
      %v2072 = vunpack.c.l.b16 %v1502
      %v2073 = vunpack.c.l.b16 %v1503
      %v2074 = vunpack.c.l.b16 %v1504
      %v2075 = vunpack.c.l.b16 %v1505
      %v2076 = vunpack.c.l.b16 %v1506
      %v2077 = vunpack.c.l.b16 %v1507
      %v2078 = vunpack.c.l.b16 %v1508
      %v2079 = vunpack.c.l.b16 %v1509
      %v2080 = vunpack.c.l.b16 %v1510
      %v2081 = vunpack.c.l.b16 %v1511
      %v2082 = vunpack.c.l.b16 %v1512
      %v2083 = vunpack.c.l.b16 %v1513
      %v2084 = vunpack.c.l.b16 %v1514
      %v2085 = vunpack.c.l.b16 %v1515
      %v2086 = vunpack.c.l.b16 %v1516
      %v2087 = vunpack.c.l.b16 %v1517
      %v2088 = vunpack.c.l.b16 %v1518
      %v2089 = vunpack.c.l.b16 %v1519
      %v2090 = vunpack.c.l.b16 %v1520
      %v2091 = vunpack.c.l.b16 %v1521
      %v2092 = vunpack.c.l.b16 %v1522
      %v2093 = vunpack.c.l.b16 %v1523
      %v2094 = vunpack.c.l.b16 %v1524
      %v2095 = vunpack.c.l.b16 %v1525
      %v2096 = vunpack.c.l.b16 %v1526
      %v2097 = vunpack.c.l.b16 %v1527
      %v2098 = vunpack.c.l.b16 %v1528
      %v2099 = vunpack.c.l.b16 %v1529
      %v2100 = vunpack.c.l.b16 %v1530
      %v2101 = vunpack.c.l.b16 %v1531
      %v2102 = vunpack.c.l.b16 %v1532
      %v2103 = vunpack.c.l.b16 %v1533
      %v2104 = vunpack.c.l.b16 %v1534
      %v2105 = vunpack.c.l.b16 %v1535
      %v2106 = vunpack.c.l.b16 %v1536
      %v2107 = vunpack.c.l.b16 %v1537
      %v2108 = vunpack.c.l.b16 %v1538
      %v2109 = vunpack.c.l.b16 %v1539
      %v2110 = vunpack.c.l.b16 %v1540
      %v2111 = vunpack.c.l.b16 %v1541
      %v2112 = vunpack.c.l.b16 %v1542
      %v2113 = vunpack.c.l.b16 %v1543
      %v2114 = vunpack.c.l.b16 %v1544
      %v2115 = vunpack.c.l.b16 %v1545
      %v2116 = vunpack.c.l.b16 %v1546
      %v2117 = vunpack.c.l.b16 %v1547
      %v2118 = vunpack.c.l.b16 %v1548
      %v2119 = vunpack.c.l.b16 %v1549
      %v2120 = vunpack.c.l.b16 %v1550
      %v2121 = vunpack.c.l.b16 %v1551
      %v2122 = vunpack.c.l.b16 %v1552
      %v2123 = vunpack.c.l.b16 %v1553
      %v2124 = vunpack.c.l.b16 %v1554
      %v2125 = vunpack.c.l.b16 %v1555
      %v2126 = vunpack.c.l.b16 %v1556
      %v2127 = vunpack.c.l.b16 %v1557
      %v2128 = vunpack.c.l.b16 %v1558
      %v2129 = vunpack.c.l.b16 %v1559
      %v2130 = vunpack.c.l.b16 %v1560
      %v2131 = vunpack.c.l.b16 %v1561
      %v2132 = vunpack.c.l.b16 %v1562
      %v2133 = vunpack.c.l.b16 %v1563
      %v2134 = vunpack.c.l.b16 %v1564
      %v2135 = vunpack.c.l.b16 %v1565
      %v2136 = vunpack.c.l.b16 %v1566
      %v2137 = vunpack.c.l.b16 %v1567
      %v2138 = vunpack.c.l.b16 %v1568
      %v2139 = vunpack.c.l.b16 %v1569
      %v2140 = vunpack.c.l.b16 %v1570
      %v2141 = vunpack.c.l.b16 %v1571
      %v2142 = vunpack.c.l.b16 %v1572
      %v2143 = vunpack.c.l.b16 %v1573
      %v2144 = vpack.c.b16 %v2037, %v2036
      %v2145 = vpack.c.b16 %v2039, %v2038
      %v2146 = vpack.c.b16 %v2041, %v2040
      %v2147 = vpack.c.b16 %v2043, %v2042
      %v2148 = vpack.c.b16 %v2045, %v2044
      %v2149 = vpack.c.b16 %v2047, %v2046
      %v2150 = vpack.c.b16 %v2049, %v2048
      %v2151 = vpack.c.b16 %v2051, %v2050
      %v2152 = vpack.c.b16 %v2053, %v2052
      %v2153 = vpack.c.b16 %v2055, %v2054
      %v2154 = vpack.c.b16 %v2057, %v2056
      %v2155 = vpack.c.b16 %v2059, %v2058
      %v2156 = vpack.c.b16 %v2061, %v2060
      %v2157 = vpack.c.b16 %v2063, %v2062
      %v2158 = vpack.c.b16 %v2065, %v2064
      %v2159 = vpack.c.b16 %v2067, %v2066
      %v2160 = vpack.c.b16 %v2069, %v2068
      %v2161 = vpack.c.b16 %v2071, %v2070
      %v2162 = vpack.c.b16 %v2073, %v2072
      %v2163 = vpack.c.b16 %v2075, %v2074
      %v2164 = vpack.c.b16 %v2077, %v2076
      %v2165 = vpack.c.b16 %v2079, %v2078
      %v2166 = vpack.c.b16 %v2081, %v2080
      %v2167 = vpack.c.b16 %v2083, %v2082
      %v2168 = vpack.c.b16 %v2085, %v2084
      %v2169 = vpack.c.b16 %v2087, %v2086
      %v2170 = vpack.c.b16 %v2089, %v2088
      %v2171 = vpack.c.b16 %v2091, %v2090
      %v2172 = vpack.c.b16 %v2093, %v2092
      %v2173 = vpack.c.b16 %v2095, %v2094
      %v2174 = vpack.c.b16 %v2097, %v2096
      %v2175 = vpack.c.b16 %v2099, %v2098
      %v2176 = vpack.c.b16 %v2101, %v2100
      %v2177 = vpack.c.b16 %v2103, %v2102
      %v2178 = vpack.c.b16 %v2105, %v2104
      %v2179 = vpack.c.b16 %v2107, %v2106
      %v2180 = vpack.c.b16 %v2109, %v2108
      %v2181 = vpack.c.b16 %v2111, %v2110
      %v2182 = vpack.c.b16 %v2113, %v2112
      %v2183 = vpack.c.b16 %v2115, %v2114
      %v2184 = vpack.c.b16 %v2117, %v2116
      %v2185 = vpack.c.b16 %v2119, %v2118
      %v2186 = vpack.c.b16 %v2121, %v2120
      %v2187 = vpack.c.b16 %v2123, %v2122
      %v2188 = vpack.c.b16 %v2125, %v2124
      %v2189 = vpack.c.b16 %v2127, %v2126
      %v2190 = vpack.c.b16 %v2129, %v2128
      %v2191 = vpack.c.b16 %v2131, %v2130
      %v2192 = vpack.c.b16 %v2133, %v2132
      %v2193 = vpack.c.b16 %v2135, %v2134
      %v2194 = vpack.c.b16 %v2137, %v2136
      %v2195 = vpack.c.b16 %v2139, %v2138
      %v2196 = vpack.c.b16 %v2141, %v2140
      %v2197 = vpack.c.b16 %v2143, %v2142
      %v2253 = vsel %vm1757, %v1919, 0
      %2255 = vmatprep.subr.bf16.mxu0 0
      %2256 = vmatpush1.bf16.msra.mxu0 %v2144
      %2257 = vmatprep.subr.bf16.mxu0 0
      %2258 = vmatpush1.bf16.msra.mxu0 %v2145
      %2259 = vmatprep.subr.bf16.mxu0 0
      %2260 = vmatpush1.bf16.msra.mxu0 %v2146
      %2261 = vmatprep.subr.bf16.mxu0 0
      %2262 = vmatpush1.bf16.msra.mxu0 %v2147
      %2263 = vmatprep.subr.bf16.mxu0 0
      %2264 = vmatpush1.bf16.msra.mxu0 %v2148
      %2265 = vmatprep.subr.bf16.mxu0 0
      %2266 = vmatpush1.bf16.msra.mxu0 %v2149
      %2267 = vmatprep.subr.bf16.mxu0 0
      %2268 = vmatpush1.bf16.msra.mxu0 %v2150
      %2269 = vmatprep.subr.bf16.mxu0 0
      %2270 = vmatpush1.bf16.msra.mxu0 %v2151
      %2271 = vmatprep.subr.bf16.mxu0 0
      %2272 = vmatpush1.bf16.msra.mxu0 %v2152
      %2273 = vmatprep.subr.bf16.mxu0 0
      %2274 = vmatpush1.bf16.msra.mxu0 %v2153
      %2275 = vmatprep.subr.bf16.mxu0 0
      %2276 = vmatpush1.bf16.msra.mxu0 %v2154
      %2277 = vmatprep.subr.bf16.mxu0 0
      %2278 = vmatpush1.bf16.msra.mxu0 %v2155
      %2279 = vmatprep.subr.bf16.mxu0 0
      %2280 = vmatpush1.bf16.msra.mxu0 %v2156
      %2281 = vmatprep.subr.bf16.mxu0 0
      %2282 = vmatpush1.bf16.msra.mxu0 %v2157
      %2283 = vmatprep.subr.bf16.mxu0 0
      %2284 = vmatpush1.bf16.msra.mxu0 %v2158
      %2285 = vmatprep.subr.bf16.mxu0 0
      %2286 = vmatpush1.bf16.msra.mxu0 %v2159
      %2287 = vmatprep.mubr.bf16.mxu0 %v1767
      %2288 = vmatmul.mubr.bf16.gmra.mrb[0].mxu0 %v1759
      %v2289 = vpop.f32.mrb[0].mxu0
      %v2290 = vadd.f32 %v1926, %v2289
      %v2291 = vpop.f32.mrb[0].mxu0
      %v2292 = vpop.f32.mrb[0].mxu0
      %v2293 = vpop.f32.mrb[0].mxu0
      %2294 = vdwg.mxu0
      %2295 = vmatprep.subr.bf16.mxu0 0
      %2296 = vmatpush1.bf16.msra.mxu0 %v2160
      %2297 = vmatprep.subr.bf16.mxu0 0
      %2298 = vmatpush1.bf16.msra.mxu0 %v2161
      %2299 = vmatprep.subr.bf16.mxu0 0
      %2300 = vmatpush1.bf16.msra.mxu0 %v2162
      %2301 = vmatprep.subr.bf16.mxu0 0
      %2302 = vmatpush1.bf16.msra.mxu0 %v2163
      %2303 = vmatprep.subr.bf16.mxu0 0
      %2304 = vmatpush1.bf16.msra.mxu0 %v2164
      %2305 = vmatprep.subr.bf16.mxu0 0
      %2306 = vmatpush1.bf16.msra.mxu0 %v2165
      %2307 = vmatprep.subr.bf16.mxu0 0
      %2308 = vmatpush1.bf16.msra.mxu0 %v2166
      %2309 = vmatprep.subr.bf16.mxu0 0
      %2310 = vmatpush1.bf16.msra.mxu0 %v2167
      %2311 = vmatprep.subr.bf16.mxu0 0
      %2312 = vmatpush1.bf16.msra.mxu0 %v2168
      %2313 = vmatprep.subr.bf16.mxu0 0
      %2314 = vmatpush1.bf16.msra.mxu0 %v2169
      %2315 = vmatprep.subr.bf16.mxu0 0
      %2316 = vmatpush1.bf16.msra.mxu0 %v2170
      %2317 = vmatprep.subr.bf16.mxu0 0
      %2318 = vmatpush1.bf16.msra.mxu0 %v2171
      %2319 = vmatprep.subr.bf16.mxu0 0
      %2320 = vmatpush1.bf16.msra.mxu0 %v2172
      %2321 = vmatprep.subr.bf16.mxu0 0
      %2322 = vmatpush1.bf16.msra.mxu0 %v2173
      %2323 = vmatprep.subr.bf16.mxu0 0
      %2324 = vmatpush1.bf16.msra.mxu0 %v2174
      %2325 = vmatprep.subr.bf16.mxu0 0
      %2326 = vmatpush1.bf16.msra.mxu0 %v2175
      %2327 = vmatprep.mubr.bf16.mxu0 %v1783
      %2328 = vmatmul.mubr.bf16.gmra.mrb[0].mxu0 %v1775
      %v2329 = vpop.f32.mrb[0].mxu0
      %v2330 = vadd.f32 %v2290, %v2329
      %v2331 = vpop.f32.mrb[0].mxu0
      %v2332 = vpop.f32.mrb[0].mxu0
      %v2333 = vpop.f32.mrb[0].mxu0
      %2334 = vdwg.mxu0
      %2335 = vmatprep.subr.bf16.mxu0 0
      %2336 = vmatpush1.bf16.msra.mxu0 %v2176
      %2337 = vmatprep.subr.bf16.mxu0 0
      %2338 = vmatpush1.bf16.msra.mxu0 %v2177
      %2339 = vmatprep.subr.bf16.mxu0 0
      %2340 = vmatpush1.bf16.msra.mxu0 %v2178
      %2341 = vmatprep.subr.bf16.mxu0 0
      %2342 = vmatpush1.bf16.msra.mxu0 %v2179
      %2343 = vmatprep.subr.bf16.mxu0 0
      %2344 = vmatpush1.bf16.msra.mxu0 %v2180
      %2345 = vmatprep.subr.bf16.mxu0 0
      %2346 = vmatpush1.bf16.msra.mxu0 %v2181
      %2347 = vmatprep.subr.bf16.mxu0 0
      %2348 = vmatpush1.bf16.msra.mxu0 %v2182
      %2349 = vmatprep.subr.bf16.mxu0 0
      %2350 = vmatpush1.bf16.msra.mxu0 %v2183
      %2351 = vmatprep.subr.bf16.mxu0 0
      %2352 = vmatpush1.bf16.msra.mxu0 %v2184
      %2353 = vmatprep.subr.bf16.mxu0 0
      %2354 = vmatpush1.bf16.msra.mxu0 %v2185
      %2355 = vmatprep.subr.bf16.mxu0 0
      %2356 = vmatpush1.bf16.msra.mxu0 %v2186
      %2357 = vmatprep.subr.bf16.mxu0 0
      %2358 = vmatpush1.bf16.msra.mxu0 %v2187
      %2359 = vmatprep.subr.bf16.mxu0 0
      %2360 = vmatpush1.bf16.msra.mxu0 %v2188
      %2361 = vmatprep.subr.bf16.mxu0 0
      %2362 = vmatpush1.bf16.msra.mxu0 %v2189
      %2363 = vmatprep.subr.bf16.mxu0 0
      %2364 = vmatpush1.bf16.msra.mxu0 %v2190
      %2365 = vmatprep.subr.bf16.mxu0 0
      %2366 = vmatpush1.bf16.msra.mxu0 %v2191
      %2367 = vmatprep.mubr.bf16.mxu0 %v1913
      %2368 = vmatmul.mubr.bf16.gmra.mrb[0].mxu0 %v1907
      %v2369 = vpop.f32.mrb[0].mxu0
      %v2370 = vadd.f32 %v2330, %v2369
      %v2371 = vpop.f32.mrb[0].mxu0
      %v2372 = vpop.f32.mrb[0].mxu0
      %v2373 = vpop.f32.mrb[0].mxu0
      %2374 = vdwg.mxu0
      %2375 = vmatprep.subr.bf16.mxu0 0
      %2376 = vmatpush1.bf16.msra.mxu0 %v2192
      %2377 = vmatprep.subr.bf16.mxu0 0
      %2378 = vmatpush1.bf16.msra.mxu0 %v2193
      %2379 = vmatprep.subr.bf16.mxu0 0
      %2380 = vmatpush1.bf16.msra.mxu0 %v2194
      %2381 = vmatprep.subr.bf16.mxu0 0
      %2382 = vmatpush1.bf16.msra.mxu0 %v2195
      %2383 = vmatprep.subr.bf16.mxu0 0
      %2384 = vmatpush1.bf16.msra.mxu0 %v2196
      %2385 = vmatprep.subr.bf16.mxu0 0
      %2386 = vmatpush1.bf16.msra.mxu0 %v2197
      %2387 = vmatprep.subr.bf16.mxu0 0
      %2388 = vmatpush1.bf16.msra.mxu0 0
      %2389 = vmatprep.subr.bf16.mxu0 0
      %2390 = vmatpush1.bf16.msra.mxu0 0
      %2391 = vmatprep.subr.bf16.mxu0 0
      %2392 = vmatpush1.bf16.msra.mxu0 0
      %2393 = vmatprep.subr.bf16.mxu0 0
      %2394 = vmatpush1.bf16.msra.mxu0 0
      %2395 = vmatprep.subr.bf16.mxu0 0
      %2396 = vmatpush1.bf16.msra.mxu0 0
      %2397 = vmatprep.subr.bf16.mxu0 0
      %2398 = vmatpush1.bf16.msra.mxu0 0
      %2399 = vmatprep.subr.bf16.mxu0 0
      %2400 = vmatpush1.bf16.msra.mxu0 0
      %2401 = vmatprep.subr.bf16.mxu0 0
      %2402 = vmatpush1.bf16.msra.mxu0 0
      %2403 = vmatprep.subr.bf16.mxu0 0
      %2404 = vmatpush1.bf16.msra.mxu0 0
      %2405 = vmatprep.subr.bf16.mxu0 0
      %2406 = vmatpush1.bf16.msra.mxu0 0
      %2407 = vmatprep.mubr.bf16.mxu0 0
      %2408 = vmatmul.mubr.bf16.gmra.mrb[0].mxu0 %v2253
      %v2409 = vpop.f32.mrb[0].mxu0
      %v2410 = vadd.f32 %v2370, %v2409
      %v2411 = vpop.f32.mrb[0].mxu0
      %v2412 = vpop.f32.mrb[0].mxu0
      %v2413 = vpop.f32.mrb[0].mxu0
      %2414 = vdwg.mxu0
      %2415 = vst.msk [vmem:[%s273] sm:$0xff] %vm1750, %v2410
      %v2416 = vld [vmem:[%s1585] sm:$0xf]
      %v2417 = vld [vmem:[%s1585 + $0x4] sm:$0x1]
      %v2418 = vld [vmem:[%s1585] sm:$0xe]
      %v2419 = vld [vmem:[%s1592] sm:$0xf]
      %v2420 = vld [vmem:[%s1592 + $0x4] sm:$0x1]
      %v2421 = vld [vmem:[%s1592] sm:$0xe]
      %s2422 = sadd.s32 %s1575, 3
      %s2423 = smul.u32 %s2422, 2
      %s2424 = smul.addr %s2423, 4
      %s2425 = scalar_lea.vmem [#allocation2], %s2424
      %v2426 = vld [vmem:[%s2425] sm:$0xf]
      %v2427 = vld [vmem:[%s2425 + $0x4] sm:$0x1]
      %v2428 = vld [vmem:[%s2425] sm:$0xe]
      %v2429 = vld [vmem:[%s1607] sm:$0xf]
      %v2430 = vld [vmem:[%s1607 + $0x4] sm:$0x1]
      %v2431 = vld [vmem:[%s1607] sm:$0xe]
      %v2432 = vld [vmem:[%s1614] sm:$0xf]
      %v2433 = vld [vmem:[%s1614 + $0x4] sm:$0x1]
      %v2434 = vld [vmem:[%s1614] sm:$0xe]
      %s2435 = sadd.s32 %s1597, 3
      %s2436 = smul.u32 %s2435, 2
      %s2437 = smul.addr %s2436, 4
      %s2438 = scalar_lea.vmem [#allocation2], %s2437
      %v2439 = vld [vmem:[%s2438] sm:$0xf]
      %v2440 = vld [vmem:[%s2438 + $0x4] sm:$0x1]
      %v2441 = vld [vmem:[%s2438] sm:$0xe]
      %v2442 = vld [vmem:[%s1629] sm:$0xf]
      %v2443 = vld [vmem:[%s1629 + $0x4] sm:$0x1]
      %v2444 = vld [vmem:[%s1629] sm:$0xe]
      %v2445 = vld [vmem:[%s1636] sm:$0xf]
      %v2446 = vld [vmem:[%s1636 + $0x4] sm:$0x1]
      %v2447 = vld [vmem:[%s1636] sm:$0xe]
      %s2448 = sadd.s32 %s1619, 3
      %s2449 = smul.u32 %s2448, 2
      %s2450 = smul.addr %s2449, 4
      %s2451 = scalar_lea.vmem [#allocation2], %s2450
      %v2452 = vld [vmem:[%s2451] sm:$0xf]
      %v2453 = vld [vmem:[%s2451 + $0x4] sm:$0x1]
      %v2454 = vld [vmem:[%s2451] sm:$0xe]
      %v2457 = vunpack.c.l.b16 %v2416
      %v2458 = vunpack.c.l.b16 %v2417
      %v2459 = vpack.c.b16 %v2458, %v2457
      %v2461 = vshrl.u32 %v2459, 16
      %v2463 = vshll.u32 %v2459, 16
      %v2465 = vrot.slane %v2463, 1
      %v2466 = vor.u32 %v2461, %v2465
      %2467 = vrot.lane.b32.xlu0 %v2466, 32
      %v2468 = vpop.permute.xlu0 %2467
      %v2470 = vunpack.c.l.b16 %v2418
      %v2471 = vpack.c.b16 %v2458, %v2470
      %v2472 = vrot.slane %v2471, 1
      %2473 = vrot.lane.b32.xlu0 %v2472, 64
      %v2474 = vpop.permute.xlu0 %2473
      %v2476 = vunpack.c.l.b16 %v2419
      %v2477 = vpack.c.b16 %v2476, %v2476
      %2478 = vrot.lane.b32.xlu0 %v2477, 96
      %v2479 = vpop.permute.xlu0 %2478
      %v2481 = vunpack.c.l.b16 %v2420
      %v2482 = vpack.c.b16 %v2481, %v2476
      %v2484 = vshrl.u32 %v2482, 16
      %v2486 = vshll.u32 %v2482, 16
      %v2488 = vrot.slane %v2486, 1
      %v2489 = vor.u32 %v2484, %v2488
      %v2491 = vunpack.c.l.b16 %v2421
      %v2492 = vpack.c.b16 %v2481, %v2491
      %v2493 = vrot.slane %v2492, 1
      %2494 = vrot.lane.b32.xlu0 %v2493, 32
      %v2495 = vpop.permute.xlu0 %2494
      %v2497 = vunpack.c.l.b16 %v2426
      %v2498 = vpack.c.b16 %v2497, %v2497
      %2499 = vrot.lane.b32.xlu0 %v2498, 64
      %v2500 = vpop.permute.xlu0 %2499
      %v2502 = vunpack.c.l.b16 %v2427
      %v2503 = vpack.c.b16 %v2502, %v2497
      %v2505 = vshrl.u32 %v2503, 16
      %v2507 = vshll.u32 %v2503, 16
      %v2509 = vrot.slane %v2507, 1
      %v2510 = vor.u32 %v2505, %v2509
      %2511 = vrot.lane.b32.xlu0 %v2510, 96
      %v2512 = vpop.permute.xlu0 %2511
      %v2514 = vunpack.c.l.b16 %v2428
      %v2515 = vpack.c.b16 %v2502, %v2514
      %v2516 = vrot.slane %v2515, 1
      %v2518 = vunpack.c.l.b16 %v2429
      %v2519 = vpack.c.b16 %v2518, %v2518
      %2520 = vrot.lane.b32.xlu0 %v2519, 32
      %v2521 = vpop.permute.xlu0 %2520
      %v2523 = vunpack.c.l.b16 %v2430
      %v2524 = vpack.c.b16 %v2523, %v2518
      %v2526 = vshrl.u32 %v2524, 16
      %v2528 = vshll.u32 %v2524, 16
      %v2530 = vrot.slane %v2528, 1
      %v2531 = vor.u32 %v2526, %v2530
      %2532 = vrot.lane.b32.xlu0 %v2531, 64
      %v2533 = vpop.permute.xlu0 %2532
      %v2535 = vunpack.c.l.b16 %v2431
      %v2536 = vpack.c.b16 %v2523, %v2535
      %v2537 = vrot.slane %v2536, 1
      %2538 = vrot.lane.b32.xlu0 %v2537, 96
      %v2539 = vpop.permute.xlu0 %2538
      %v2542 = vunpack.c.l.b16 %v2432
      %v2543 = vunpack.c.l.b16 %v2433
      %v2544 = vpack.c.b16 %v2543, %v2542
      %v2546 = vshrl.u32 %v2544, 16
      %v2548 = vshll.u32 %v2544, 16
      %v2550 = vrot.slane %v2548, 1
      %v2551 = vor.u32 %v2546, %v2550
      %2552 = vrot.lane.b32.xlu0 %v2551, 32
      %v2553 = vpop.permute.xlu0 %2552
      %v2555 = vunpack.c.l.b16 %v2434
      %v2556 = vpack.c.b16 %v2543, %v2555
      %v2557 = vrot.slane %v2556, 1
      %2558 = vrot.lane.b32.xlu0 %v2557, 64
      %v2559 = vpop.permute.xlu0 %2558
      %v2561 = vunpack.c.l.b16 %v2439
      %v2562 = vpack.c.b16 %v2561, %v2561
      %2563 = vrot.lane.b32.xlu0 %v2562, 96
      %v2564 = vpop.permute.xlu0 %2563
      %v2567 = vsel %vm1750, %v2416, %v2468
      %v2569 = vsel %vm1754, %v2567, %v2474
      %v2571 = vsel %vm1757, %v2569, %v2479
      %v2575 = vsel %vm1750, %v2489, %v2495
      %v2577 = vsel %vm1754, %v2575, %v2500
      %v2579 = vsel %vm1757, %v2577, %v2512
      %v2583 = vsel %vm1750, %v2516, %v2521
      %v2585 = vsel %vm1754, %v2583, %v2533
      %v2587 = vsel %vm1757, %v2585, %v2539
      %v2591 = vsel %vm1750, %v2432, %v2553
      %v2593 = vsel %vm1754, %v2591, %v2559
      %v2595 = vsel %vm1757, %v2593, %v2564
      %v2598 = vunpack.c.l.b16 %v2440
      %v2599 = vpack.c.b16 %v2598, %v2561
      %v2601 = vunpack.c.l.b16 %v2441
      %v2602 = vpack.c.b16 %v2598, %v2601
      %v2604 = vshrl.u32 %v2602, 16
      %v2606 = vshll.u32 %v2602, 16
      %v2608 = vrot.slane %v2606, 1
      %v2609 = vor.u32 %v2604, %v2608
      %2610 = vrot.lane.b32.xlu0 %v2609, 32
      %v2611 = vpop.permute.xlu0 %2610
      %v2613 = vunpack.c.l.b16 %v2442
      %v2614 = vpack.c.b16 %v2613, %v2613
      %v2616 = vshrl.u32 %v2614, 16
      %v2618 = vrot.slane %v2616, 7
      %v2619 = vshll.u32 %v2614, 16
      %v2621 = vor.u32 %v2618, %v2619
      %2622 = vrot.lane.b32.xlu0 %v2621, 64
      %v2623 = vpop.permute.xlu0 %2622
      %v2625 = vunpack.c.l.b16 %v2443
      %v2626 = vpack.c.b16 %v2625, %v2613
      %2627 = vrot.lane.b32.xlu0 %v2626, 96
      %v2628 = vpop.permute.xlu0 %2627
      %v2630 = vunpack.c.l.b16 %v2444
      %v2631 = vpack.c.b16 %v2625, %v2630
      %v2633 = vshrl.u32 %v2631, 16
      %v2635 = vshll.u32 %v2631, 16
      %v2637 = vrot.slane %v2635, 1
      %v2638 = vor.u32 %v2633, %v2637
      %v2640 = vunpack.c.l.b16 %v2445
      %v2641 = vpack.c.b16 %v2640, %v2640
      %v2643 = vshrl.u32 %v2641, 16
      %v2645 = vrot.slane %v2643, 7
      %v2646 = vshll.u32 %v2641, 16
      %v2648 = vor.u32 %v2645, %v2646
      %2649 = vrot.lane.b32.xlu0 %v2648, 32
      %v2650 = vpop.permute.xlu0 %2649
      %v2652 = vunpack.c.l.b16 %v2446
      %v2653 = vpack.c.b16 %v2652, %v2640
      %2654 = vrot.lane.b32.xlu0 %v2653, 64
      %v2655 = vpop.permute.xlu0 %2654
      %v2657 = vunpack.c.l.b16 %v2447
      %v2658 = vpack.c.b16 %v2652, %v2657
      %v2660 = vshrl.u32 %v2658, 16
      %v2662 = vshll.u32 %v2658, 16
      %v2664 = vrot.slane %v2662, 1
      %v2665 = vor.u32 %v2660, %v2664
      %2666 = vrot.lane.b32.xlu0 %v2665, 96
      %v2667 = vpop.permute.xlu0 %2666
      %v2669 = vunpack.c.l.b16 %v2452
      %v2670 = vpack.c.b16 %v2669, %v2669
      %v2672 = vshrl.u32 %v2670, 16
      %v2674 = vrot.slane %v2672, 7
      %v2675 = vshll.u32 %v2670, 16
      %v2677 = vor.u32 %v2674, %v2675
      %v2679 = vunpack.c.l.b16 %v2453
      %v2680 = vpack.c.b16 %v2679, %v2669
      %2681 = vrot.lane.b32.xlu0 %v2680, 32
      %v2682 = vpop.permute.xlu0 %2681
      %v2684 = vunpack.c.l.b16 %v2454
      %v2685 = vpack.c.b16 %v2679, %v2684
      %v2687 = vshrl.u32 %v2685, 16
      %v2689 = vshll.u32 %v2685, 16
      %v2691 = vrot.slane %v2689, 1
      %v2692 = vor.u32 %v2687, %v2691
      %2693 = vrot.lane.b32.xlu0 %v2692, 64
      %v2694 = vpop.permute.xlu0 %2693
      %v2697 = vsel %vm1750, %v2599, %v2611
      %v2699 = vsel %vm1754, %v2697, %v2623
      %v2701 = vsel %vm1757, %v2699, %v2628
      %v2704 = vsel %vm1750, %v2638, %v2650
      %v2706 = vsel %vm1754, %v2704, %v2655
      %v2708 = vsel %vm1757, %v2706, %v2667
      %v2711 = vsel %vm1750, %v2677, %v2682
      %v2713 = vsel %vm1754, %v2711, %v2694
      %v2714 = vshrl.u32 %v2701, 16
      %v2716 = vshll.u32 %v2701, 16
      %v2718 = vrot.slane %v2716, 1
      %v2719 = vor.u32 %v2714, %v2718
      %v2720 = vshrl.u32 %v2708, 16
      %v2722 = vshll.u32 %v2708, 16
      %v2724 = vrot.slane %v2722, 1
      %v2725 = vor.u32 %v2720, %v2724
      %v2726 = vshrl.u32 %v2713, 16
      %v2728 = vshll.u32 %v2713, 16
      %v2730 = vrot.slane %v2728, 1
      %v2731 = vor.u32 %v2726, %v2730
      %v2735 = vsel %vm1757, %v2731, 0
      %2737 = vmatprep.subr.bf16.mxu0 0
      %2738 = vmatpush1.bf16.msra.mxu0 %v2144
      %2739 = vmatprep.subr.bf16.mxu0 0
      %2740 = vmatpush1.bf16.msra.mxu0 %v2145
      %2741 = vmatprep.subr.bf16.mxu0 0
      %2742 = vmatpush1.bf16.msra.mxu0 %v2146
      %2743 = vmatprep.subr.bf16.mxu0 0
      %2744 = vmatpush1.bf16.msra.mxu0 %v2147
      %2745 = vmatprep.subr.bf16.mxu0 0
      %2746 = vmatpush1.bf16.msra.mxu0 %v2148
      %2747 = vmatprep.subr.bf16.mxu0 0
      %2748 = vmatpush1.bf16.msra.mxu0 %v2149
      %2749 = vmatprep.subr.bf16.mxu0 0
      %2750 = vmatpush1.bf16.msra.mxu0 %v2150
      %2751 = vmatprep.subr.bf16.mxu0 0
      %2752 = vmatpush1.bf16.msra.mxu0 %v2151
      %2753 = vmatprep.subr.bf16.mxu0 0
      %2754 = vmatpush1.bf16.msra.mxu0 %v2152
      %2755 = vmatprep.subr.bf16.mxu0 0
      %2756 = vmatpush1.bf16.msra.mxu0 %v2153
      %2757 = vmatprep.subr.bf16.mxu0 0
      %2758 = vmatpush1.bf16.msra.mxu0 %v2154
      %2759 = vmatprep.subr.bf16.mxu0 0
      %2760 = vmatpush1.bf16.msra.mxu0 %v2155
      %2761 = vmatprep.subr.bf16.mxu0 0
      %2762 = vmatpush1.bf16.msra.mxu0 %v2156
      %2763 = vmatprep.subr.bf16.mxu0 0
      %2764 = vmatpush1.bf16.msra.mxu0 %v2157
      %2765 = vmatprep.subr.bf16.mxu0 0
      %2766 = vmatpush1.bf16.msra.mxu0 %v2158
      %2767 = vmatprep.subr.bf16.mxu0 0
      %2768 = vmatpush1.bf16.msra.mxu0 %v2159
      %2769 = vmatprep.mubr.bf16.mxu0 %v2579
      %2770 = vmatmul.mubr.bf16.gmra.mrb[0].mxu0 %v2571
      %v2771 = vpop.f32.mrb[0].mxu0
      %v2772 = vadd.f32 %v1926, %v2771
      %v2773 = vpop.f32.mrb[0].mxu0
      %v2774 = vpop.f32.mrb[0].mxu0
      %v2775 = vpop.f32.mrb[0].mxu0
      %2776 = vdwg.mxu0
      %2777 = vmatprep.subr.bf16.mxu0 0
      %2778 = vmatpush1.bf16.msra.mxu0 %v2160
      %2779 = vmatprep.subr.bf16.mxu0 0
      %2780 = vmatpush1.bf16.msra.mxu0 %v2161
      %2781 = vmatprep.subr.bf16.mxu0 0
      %2782 = vmatpush1.bf16.msra.mxu0 %v2162
      %2783 = vmatprep.subr.bf16.mxu0 0
      %2784 = vmatpush1.bf16.msra.mxu0 %v2163
      %2785 = vmatprep.subr.bf16.mxu0 0
      %2786 = vmatpush1.bf16.msra.mxu0 %v2164
      %2787 = vmatprep.subr.bf16.mxu0 0
      %2788 = vmatpush1.bf16.msra.mxu0 %v2165
      %2789 = vmatprep.subr.bf16.mxu0 0
      %2790 = vmatpush1.bf16.msra.mxu0 %v2166
      %2791 = vmatprep.subr.bf16.mxu0 0
      %2792 = vmatpush1.bf16.msra.mxu0 %v2167
      %2793 = vmatprep.subr.bf16.mxu0 0
      %2794 = vmatpush1.bf16.msra.mxu0 %v2168
      %2795 = vmatprep.subr.bf16.mxu0 0
      %2796 = vmatpush1.bf16.msra.mxu0 %v2169
      %2797 = vmatprep.subr.bf16.mxu0 0
      %2798 = vmatpush1.bf16.msra.mxu0 %v2170
      %2799 = vmatprep.subr.bf16.mxu0 0
      %2800 = vmatpush1.bf16.msra.mxu0 %v2171
      %2801 = vmatprep.subr.bf16.mxu0 0
      %2802 = vmatpush1.bf16.msra.mxu0 %v2172
      %2803 = vmatprep.subr.bf16.mxu0 0
      %2804 = vmatpush1.bf16.msra.mxu0 %v2173
      %2805 = vmatprep.subr.bf16.mxu0 0
      %2806 = vmatpush1.bf16.msra.mxu0 %v2174
      %2807 = vmatprep.subr.bf16.mxu0 0
      %2808 = vmatpush1.bf16.msra.mxu0 %v2175
      %2809 = vmatprep.mubr.bf16.mxu0 %v2595
      %2810 = vmatmul.mubr.bf16.gmra.mrb[0].mxu0 %v2587
      %v2811 = vpop.f32.mrb[0].mxu0
      %v2812 = vadd.f32 %v2772, %v2811
      %v2813 = vpop.f32.mrb[0].mxu0
      %v2814 = vpop.f32.mrb[0].mxu0
      %v2815 = vpop.f32.mrb[0].mxu0
      %2816 = vdwg.mxu0
      %2817 = vmatprep.subr.bf16.mxu0 0
      %2818 = vmatpush1.bf16.msra.mxu0 %v2176
      %2819 = vmatprep.subr.bf16.mxu0 0
      %2820 = vmatpush1.bf16.msra.mxu0 %v2177
      %2821 = vmatprep.subr.bf16.mxu0 0
      %2822 = vmatpush1.bf16.msra.mxu0 %v2178
      %2823 = vmatprep.subr.bf16.mxu0 0
      %2824 = vmatpush1.bf16.msra.mxu0 %v2179
      %2825 = vmatprep.subr.bf16.mxu0 0
      %2826 = vmatpush1.bf16.msra.mxu0 %v2180
      %2827 = vmatprep.subr.bf16.mxu0 0
      %2828 = vmatpush1.bf16.msra.mxu0 %v2181
      %2829 = vmatprep.subr.bf16.mxu0 0
      %2830 = vmatpush1.bf16.msra.mxu0 %v2182
      %2831 = vmatprep.subr.bf16.mxu0 0
      %2832 = vmatpush1.bf16.msra.mxu0 %v2183
      %2833 = vmatprep.subr.bf16.mxu0 0
      %2834 = vmatpush1.bf16.msra.mxu0 %v2184
      %2835 = vmatprep.subr.bf16.mxu0 0
      %2836 = vmatpush1.bf16.msra.mxu0 %v2185
      %2837 = vmatprep.subr.bf16.mxu0 0
      %2838 = vmatpush1.bf16.msra.mxu0 %v2186
      %2839 = vmatprep.subr.bf16.mxu0 0
      %2840 = vmatpush1.bf16.msra.mxu0 %v2187
      %2841 = vmatprep.subr.bf16.mxu0 0
      %2842 = vmatpush1.bf16.msra.mxu0 %v2188
      %2843 = vmatprep.subr.bf16.mxu0 0
      %2844 = vmatpush1.bf16.msra.mxu0 %v2189
      %2845 = vmatprep.subr.bf16.mxu0 0
      %2846 = vmatpush1.bf16.msra.mxu0 %v2190
      %2847 = vmatprep.subr.bf16.mxu0 0
      %2848 = vmatpush1.bf16.msra.mxu0 %v2191
      %2849 = vmatprep.mubr.bf16.mxu0 %v2725
      %2850 = vmatmul.mubr.bf16.gmra.mrb[0].mxu0 %v2719
      %v2851 = vpop.f32.mrb[0].mxu0
      %v2852 = vadd.f32 %v2812, %v2851
      %v2853 = vpop.f32.mrb[0].mxu0
      %v2854 = vpop.f32.mrb[0].mxu0
      %v2855 = vpop.f32.mrb[0].mxu0
      %2856 = vdwg.mxu0
      %2857 = vmatprep.subr.bf16.mxu0 0
      %2858 = vmatpush1.bf16.msra.mxu0 %v2192
      %2859 = vmatprep.subr.bf16.mxu0 0
      %2860 = vmatpush1.bf16.msra.mxu0 %v2193
      %2861 = vmatprep.subr.bf16.mxu0 0
      %2862 = vmatpush1.bf16.msra.mxu0 %v2194
      %2863 = vmatprep.subr.bf16.mxu0 0
      %2864 = vmatpush1.bf16.msra.mxu0 %v2195
      %2865 = vmatprep.subr.bf16.mxu0 0
      %2866 = vmatpush1.bf16.msra.mxu0 %v2196
      %2867 = vmatprep.subr.bf16.mxu0 0
      %2868 = vmatpush1.bf16.msra.mxu0 %v2197
      %2869 = vmatprep.subr.bf16.mxu0 0
      %2870 = vmatpush1.bf16.msra.mxu0 0
      %2871 = vmatprep.subr.bf16.mxu0 0
      %2872 = vmatpush1.bf16.msra.mxu0 0
      %2873 = vmatprep.subr.bf16.mxu0 0
      %2874 = vmatpush1.bf16.msra.mxu0 0
      %2875 = vmatprep.subr.bf16.mxu0 0
      %2876 = vmatpush1.bf16.msra.mxu0 0
      %2877 = vmatprep.subr.bf16.mxu0 0
      %2878 = vmatpush1.bf16.msra.mxu0 0
      %2879 = vmatprep.subr.bf16.mxu0 0
      %2880 = vmatpush1.bf16.msra.mxu0 0
      %2881 = vmatprep.subr.bf16.mxu0 0
      %2882 = vmatpush1.bf16.msra.mxu0 0
      %2883 = vmatprep.subr.bf16.mxu0 0
      %2884 = vmatpush1.bf16.msra.mxu0 0
      %2885 = vmatprep.subr.bf16.mxu0 0
      %2886 = vmatpush1.bf16.msra.mxu0 0
      %2887 = vmatprep.subr.bf16.mxu0 0
      %2888 = vmatpush1.bf16.msra.mxu0 0
      %2889 = vmatprep.mubr.bf16.mxu0 0
      %2890 = vmatmul.mubr.bf16.gmra.mrb[0].mxu0 %v2735
      %v2891 = vpop.f32.mrb[0].mxu0
      %v2892 = vadd.f32 %v2852, %v2891
      %v2893 = vpop.f32.mrb[0].mxu0
      %v2894 = vpop.f32.mrb[0].mxu0
      %v2895 = vpop.f32.mrb[0].mxu0
      %2896 = vdwg.mxu0
      %2897 = vst.msk [vmem:[%s273 + $0x8] sm:$0xff] %vm1750, %v2892
      %v2898 = vld [vmem:[%s1592] sm:$0xf]
      %v2899 = vld [vmem:[%s1592 + $0x4] sm:$0x1]
      %v2900 = vld [vmem:[%s1592] sm:$0xe]
      %v2901 = vld [vmem:[%s2425] sm:$0xf]
      %v2902 = vld [vmem:[%s2425 + $0x4] sm:$0x1]
      %v2903 = vld [vmem:[%s2425] sm:$0xe]
      %s2904 = sadd.s32 %s1575, 4
      %s2905 = smul.u32 %s2904, 2
      %s2906 = smul.addr %s2905, 4
      %s2907 = scalar_lea.vmem [#allocation2], %s2906
      %v2908 = vld [vmem:[%s2907] sm:$0xf]
      %v2909 = vld [vmem:[%s2907 + $0x4] sm:$0x1]
      %v2910 = vld [vmem:[%s2907] sm:$0xe]
      %v2911 = vld [vmem:[%s1614] sm:$0xf]
      %v2912 = vld [vmem:[%s1614 + $0x4] sm:$0x1]
      %v2913 = vld [vmem:[%s1614] sm:$0xe]
      %v2914 = vld [vmem:[%s2438] sm:$0xf]
      %v2915 = vld [vmem:[%s2438 + $0x4] sm:$0x1]
      %v2916 = vld [vmem:[%s2438] sm:$0xe]
      %s2917 = sadd.s32 %s1597, 4
      %s2918 = smul.u32 %s2917, 2
      %s2919 = smul.addr %s2918, 4
      %s2920 = scalar_lea.vmem [#allocation2], %s2919
      %v2921 = vld [vmem:[%s2920] sm:$0xf]
      %v2922 = vld [vmem:[%s2920 + $0x4] sm:$0x1]
      %v2923 = vld [vmem:[%s2920] sm:$0xe]
      %v2924 = vld [vmem:[%s1636] sm:$0xf]
      %v2925 = vld [vmem:[%s1636 + $0x4] sm:$0x1]
      %v2926 = vld [vmem:[%s1636] sm:$0xe]
      %v2927 = vld [vmem:[%s2451] sm:$0xf]
      %v2928 = vld [vmem:[%s2451 + $0x4] sm:$0x1]
      %v2929 = vld [vmem:[%s2451] sm:$0xe]
      %s2930 = sadd.s32 %s1619, 4
      %s2931 = smul.u32 %s2930, 2
      %s2932 = smul.addr %s2931, 4
      %s2933 = scalar_lea.vmem [#allocation2], %s2932
      %v2934 = vld [vmem:[%s2933] sm:$0xf]
      %v2935 = vld [vmem:[%s2933 + $0x4] sm:$0x1]
      %v2936 = vld [vmem:[%s2933] sm:$0xe]
      %v2939 = vunpack.c.l.b16 %v2898
      %v2940 = vunpack.c.l.b16 %v2899
      %v2941 = vpack.c.b16 %v2940, %v2939
      %v2943 = vshrl.u32 %v2941, 16
      %v2945 = vshll.u32 %v2941, 16
      %v2947 = vrot.slane %v2945, 1
      %v2948 = vor.u32 %v2943, %v2947
      %2949 = vrot.lane.b32.xlu0 %v2948, 32
      %v2950 = vpop.permute.xlu0 %2949
      %v2952 = vunpack.c.l.b16 %v2900
      %v2953 = vpack.c.b16 %v2940, %v2952
      %v2954 = vrot.slane %v2953, 1
      %2955 = vrot.lane.b32.xlu0 %v2954, 64
      %v2956 = vpop.permute.xlu0 %2955
      %v2958 = vunpack.c.l.b16 %v2901
      %v2959 = vpack.c.b16 %v2958, %v2958
      %2960 = vrot.lane.b32.xlu0 %v2959, 96
      %v2961 = vpop.permute.xlu0 %2960
      %v2963 = vunpack.c.l.b16 %v2902
      %v2964 = vpack.c.b16 %v2963, %v2958
      %v2966 = vshrl.u32 %v2964, 16
      %v2968 = vshll.u32 %v2964, 16
      %v2970 = vrot.slane %v2968, 1
      %v2971 = vor.u32 %v2966, %v2970
      %v2973 = vunpack.c.l.b16 %v2903
      %v2974 = vpack.c.b16 %v2963, %v2973
      %v2975 = vrot.slane %v2974, 1
      %2976 = vrot.lane.b32.xlu0 %v2975, 32
      %v2977 = vpop.permute.xlu0 %2976
      %v2979 = vunpack.c.l.b16 %v2908
      %v2980 = vpack.c.b16 %v2979, %v2979
      %2981 = vrot.lane.b32.xlu0 %v2980, 64
      %v2982 = vpop.permute.xlu0 %2981
      %v2984 = vunpack.c.l.b16 %v2909
      %v2985 = vpack.c.b16 %v2984, %v2979
      %v2987 = vshrl.u32 %v2985, 16
      %v2989 = vshll.u32 %v2985, 16
      %v2991 = vrot.slane %v2989, 1
      %v2992 = vor.u32 %v2987, %v2991
      %2993 = vrot.lane.b32.xlu0 %v2992, 96
      %v2994 = vpop.permute.xlu0 %2993
      %v2996 = vunpack.c.l.b16 %v2910
      %v2997 = vpack.c.b16 %v2984, %v2996
      %v2998 = vrot.slane %v2997, 1
      %v3000 = vunpack.c.l.b16 %v2911
      %v3001 = vpack.c.b16 %v3000, %v3000
      %3002 = vrot.lane.b32.xlu0 %v3001, 32
      %v3003 = vpop.permute.xlu0 %3002
      %v3005 = vunpack.c.l.b16 %v2912
      %v3006 = vpack.c.b16 %v3005, %v3000
      %v3008 = vshrl.u32 %v3006, 16
      %v3010 = vshll.u32 %v3006, 16
      %v3012 = vrot.slane %v3010, 1
      %v3013 = vor.u32 %v3008, %v3012
      %3014 = vrot.lane.b32.xlu0 %v3013, 64
      %v3015 = vpop.permute.xlu0 %3014
      %v3017 = vunpack.c.l.b16 %v2913
      %v3018 = vpack.c.b16 %v3005, %v3017
      %v3019 = vrot.slane %v3018, 1
      %3020 = vrot.lane.b32.xlu0 %v3019, 96
      %v3021 = vpop.permute.xlu0 %3020
      %v3024 = vunpack.c.l.b16 %v2914
      %v3025 = vunpack.c.l.b16 %v2915
      %v3026 = vpack.c.b16 %v3025, %v3024
      %v3028 = vshrl.u32 %v3026, 16
      %v3030 = vshll.u32 %v3026, 16
      %v3032 = vrot.slane %v3030, 1
      %v3033 = vor.u32 %v3028, %v3032
      %3034 = vrot.lane.b32.xlu0 %v3033, 32
      %v3035 = vpop.permute.xlu0 %3034
      %v3037 = vunpack.c.l.b16 %v2916
      %v3038 = vpack.c.b16 %v3025, %v3037
      %v3039 = vrot.slane %v3038, 1
      %3040 = vrot.lane.b32.xlu0 %v3039, 64
      %v3041 = vpop.permute.xlu0 %3040
      %v3043 = vunpack.c.l.b16 %v2921
      %v3044 = vpack.c.b16 %v3043, %v3043
      %3045 = vrot.lane.b32.xlu0 %v3044, 96
      %v3046 = vpop.permute.xlu0 %3045
      %v3049 = vsel %vm1750, %v2898, %v2950
      %v3051 = vsel %vm1754, %v3049, %v2956
      %v3053 = vsel %vm1757, %v3051, %v2961
      %v3057 = vsel %vm1750, %v2971, %v2977
      %v3059 = vsel %vm1754, %v3057, %v2982
      %v3061 = vsel %vm1757, %v3059, %v2994
      %v3065 = vsel %vm1750, %v2998, %v3003
      %v3067 = vsel %vm1754, %v3065, %v3015
      %v3069 = vsel %vm1757, %v3067, %v3021
      %v3073 = vsel %vm1750, %v2914, %v3035
      %v3075 = vsel %vm1754, %v3073, %v3041
      %v3077 = vsel %vm1757, %v3075, %v3046
      %v3080 = vunpack.c.l.b16 %v2922
      %v3081 = vpack.c.b16 %v3080, %v3043
      %v3083 = vunpack.c.l.b16 %v2923
      %v3084 = vpack.c.b16 %v3080, %v3083
      %v3086 = vshrl.u32 %v3084, 16
      %v3088 = vshll.u32 %v3084, 16
      %v3090 = vrot.slane %v3088, 1
      %v3091 = vor.u32 %v3086, %v3090
      %3092 = vrot.lane.b32.xlu0 %v3091, 32
      %v3093 = vpop.permute.xlu0 %3092
      %v3095 = vunpack.c.l.b16 %v2924
      %v3096 = vpack.c.b16 %v3095, %v3095
      %v3098 = vshrl.u32 %v3096, 16
      %v3100 = vrot.slane %v3098, 7
      %v3101 = vshll.u32 %v3096, 16
      %v3103 = vor.u32 %v3100, %v3101
      %3104 = vrot.lane.b32.xlu0 %v3103, 64
      %v3105 = vpop.permute.xlu0 %3104
      %v3107 = vunpack.c.l.b16 %v2925
      %v3108 = vpack.c.b16 %v3107, %v3095
      %3109 = vrot.lane.b32.xlu0 %v3108, 96
      %v3110 = vpop.permute.xlu0 %3109
      %v3112 = vunpack.c.l.b16 %v2926
      %v3113 = vpack.c.b16 %v3107, %v3112
      %v3115 = vshrl.u32 %v3113, 16
      %v3117 = vshll.u32 %v3113, 16
      %v3119 = vrot.slane %v3117, 1
      %v3120 = vor.u32 %v3115, %v3119
      %v3122 = vunpack.c.l.b16 %v2927
      %v3123 = vpack.c.b16 %v3122, %v3122
      %v3125 = vshrl.u32 %v3123, 16
      %v3127 = vrot.slane %v3125, 7
      %v3128 = vshll.u32 %v3123, 16
      %v3130 = vor.u32 %v3127, %v3128
      %3131 = vrot.lane.b32.xlu0 %v3130, 32
      %v3132 = vpop.permute.xlu0 %3131
      %v3134 = vunpack.c.l.b16 %v2928
      %v3135 = vpack.c.b16 %v3134, %v3122
      %3136 = vrot.lane.b32.xlu0 %v3135, 64
      %v3137 = vpop.permute.xlu0 %3136
      %v3139 = vunpack.c.l.b16 %v2929
      %v3140 = vpack.c.b16 %v3134, %v3139
      %v3142 = vshrl.u32 %v3140, 16
      %v3144 = vshll.u32 %v3140, 16
      %v3146 = vrot.slane %v3144, 1
      %v3147 = vor.u32 %v3142, %v3146
      %3148 = vrot.lane.b32.xlu0 %v3147, 96
      %v3149 = vpop.permute.xlu0 %3148
      %v3151 = vunpack.c.l.b16 %v2934
      %v3152 = vpack.c.b16 %v3151, %v3151
      %v3154 = vshrl.u32 %v3152, 16
      %v3156 = vrot.slane %v3154, 7
      %v3157 = vshll.u32 %v3152, 16
      %v3159 = vor.u32 %v3156, %v3157
      %v3161 = vunpack.c.l.b16 %v2935
      %v3162 = vpack.c.b16 %v3161, %v3151
      %3163 = vrot.lane.b32.xlu0 %v3162, 32
      %v3164 = vpop.permute.xlu0 %3163
      %v3166 = vunpack.c.l.b16 %v2936
      %v3167 = vpack.c.b16 %v3161, %v3166
      %v3169 = vshrl.u32 %v3167, 16
      %v3171 = vshll.u32 %v3167, 16
      %v3173 = vrot.slane %v3171, 1
      %v3174 = vor.u32 %v3169, %v3173
      %3175 = vrot.lane.b32.xlu0 %v3174, 64
      %v3176 = vpop.permute.xlu0 %3175
      %v3179 = vsel %vm1750, %v3081, %v3093
      %v3181 = vsel %vm1754, %v3179, %v3105
      %v3183 = vsel %vm1757, %v3181, %v3110
      %v3186 = vsel %vm1750, %v3120, %v3132
      %v3188 = vsel %vm1754, %v3186, %v3137
      %v3190 = vsel %vm1757, %v3188, %v3149
      %v3193 = vsel %vm1750, %v3159, %v3164
      %v3195 = vsel %vm1754, %v3193, %v3176
      %v3196 = vshrl.u32 %v3183, 16
      %v3198 = vshll.u32 %v3183, 16
      %v3200 = vrot.slane %v3198, 1
      %v3201 = vor.u32 %v3196, %v3200
      %v3202 = vshrl.u32 %v3190, 16
      %v3204 = vshll.u32 %v3190, 16
      %v3206 = vrot.slane %v3204, 1
      %v3207 = vor.u32 %v3202, %v3206
      %v3208 = vshrl.u32 %v3195, 16
      %v3210 = vshll.u32 %v3195, 16
      %v3212 = vrot.slane %v3210, 1
      %v3213 = vor.u32 %v3208, %v3212
      %v3217 = vsel %vm1757, %v3213, 0
      %3219 = vmatprep.subr.bf16.mxu0 0
      %3220 = vmatpush1.bf16.msra.mxu0 %v2144
      %3221 = vmatprep.subr.bf16.mxu0 0
      %3222 = vmatpush1.bf16.msra.mxu0 %v2145
      %3223 = vmatprep.subr.bf16.mxu0 0
      %3224 = vmatpush1.bf16.msra.mxu0 %v2146
      %3225 = vmatprep.subr.bf16.mxu0 0
      %3226 = vmatpush1.bf16.msra.mxu0 %v2147
      %3227 = vmatprep.subr.bf16.mxu0 0
      %3228 = vmatpush1.bf16.msra.mxu0 %v2148
      %3229 = vmatprep.subr.bf16.mxu0 0
      %3230 = vmatpush1.bf16.msra.mxu0 %v2149
      %3231 = vmatprep.subr.bf16.mxu0 0
      %3232 = vmatpush1.bf16.msra.mxu0 %v2150
      %3233 = vmatprep.subr.bf16.mxu0 0
      %3234 = vmatpush1.bf16.msra.mxu0 %v2151
      %3235 = vmatprep.subr.bf16.mxu0 0
      %3236 = vmatpush1.bf16.msra.mxu0 %v2152
      %3237 = vmatprep.subr.bf16.mxu0 0
      %3238 = vmatpush1.bf16.msra.mxu0 %v2153
      %3239 = vmatprep.subr.bf16.mxu0 0
      %3240 = vmatpush1.bf16.msra.mxu0 %v2154
      %3241 = vmatprep.subr.bf16.mxu0 0
      %3242 = vmatpush1.bf16.msra.mxu0 %v2155
      %3243 = vmatprep.subr.bf16.mxu0 0
      %3244 = vmatpush1.bf16.msra.mxu0 %v2156
      %3245 = vmatprep.subr.bf16.mxu0 0
      %3246 = vmatpush1.bf16.msra.mxu0 %v2157
      %3247 = vmatprep.subr.bf16.mxu0 0
      %3248 = vmatpush1.bf16.msra.mxu0 %v2158
      %3249 = vmatprep.subr.bf16.mxu0 0
      %3250 = vmatpush1.bf16.msra.mxu0 %v2159
      %3251 = vmatprep.mubr.bf16.mxu0 %v3061
      %3252 = vmatmul.mubr.bf16.gmra.mrb[0].mxu0 %v3053
      %v3253 = vpop.f32.mrb[0].mxu0
      %v3254 = vadd.f32 %v1926, %v3253
      %v3255 = vpop.f32.mrb[0].mxu0
      %v3256 = vpop.f32.mrb[0].mxu0
      %v3257 = vpop.f32.mrb[0].mxu0
      %3258 = vdwg.mxu0
      %3259 = vmatprep.subr.bf16.mxu0 0
      %3260 = vmatpush1.bf16.msra.mxu0 %v2160
      %3261 = vmatprep.subr.bf16.mxu0 0
      %3262 = vmatpush1.bf16.msra.mxu0 %v2161
      %3263 = vmatprep.subr.bf16.mxu0 0
      %3264 = vmatpush1.bf16.msra.mxu0 %v2162
      %3265 = vmatprep.subr.bf16.mxu0 0
      %3266 = vmatpush1.bf16.msra.mxu0 %v2163
      %3267 = vmatprep.subr.bf16.mxu0 0
      %3268 = vmatpush1.bf16.msra.mxu0 %v2164
      %3269 = vmatprep.subr.bf16.mxu0 0
      %3270 = vmatpush1.bf16.msra.mxu0 %v2165
      %3271 = vmatprep.subr.bf16.mxu0 0
      %3272 = vmatpush1.bf16.msra.mxu0 %v2166
      %3273 = vmatprep.subr.bf16.mxu0 0
      %3274 = vmatpush1.bf16.msra.mxu0 %v2167
      %3275 = vmatprep.subr.bf16.mxu0 0
      %3276 = vmatpush1.bf16.msra.mxu0 %v2168
      %3277 = vmatprep.subr.bf16.mxu0 0
      %3278 = vmatpush1.bf16.msra.mxu0 %v2169
      %3279 = vmatprep.subr.bf16.mxu0 0
      %3280 = vmatpush1.bf16.msra.mxu0 %v2170
      %3281 = vmatprep.subr.bf16.mxu0 0
      %3282 = vmatpush1.bf16.msra.mxu0 %v2171
      %3283 = vmatprep.subr.bf16.mxu0 0
      %3284 = vmatpush1.bf16.msra.mxu0 %v2172
      %3285 = vmatprep.subr.bf16.mxu0 0
      %3286 = vmatpush1.bf16.msra.mxu0 %v2173
      %3287 = vmatprep.subr.bf16.mxu0 0
      %3288 = vmatpush1.bf16.msra.mxu0 %v2174
      %3289 = vmatprep.subr.bf16.mxu0 0
      %3290 = vmatpush1.bf16.msra.mxu0 %v2175
      %3291 = vmatprep.mubr.bf16.mxu0 %v3077
      %3292 = vmatmul.mubr.bf16.gmra.mrb[0].mxu0 %v3069
      %v3293 = vpop.f32.mrb[0].mxu0
      %v3294 = vadd.f32 %v3254, %v3293
      %v3295 = vpop.f32.mrb[0].mxu0
      %v3296 = vpop.f32.mrb[0].mxu0
      %v3297 = vpop.f32.mrb[0].mxu0
      %3298 = vdwg.mxu0
      %3299 = vmatprep.subr.bf16.mxu0 0
      %3300 = vmatpush1.bf16.msra.mxu0 %v2176
      %3301 = vmatprep.subr.bf16.mxu0 0
      %3302 = vmatpush1.bf16.msra.mxu0 %v2177
      %3303 = vmatprep.subr.bf16.mxu0 0
      %3304 = vmatpush1.bf16.msra.mxu0 %v2178
      %3305 = vmatprep.subr.bf16.mxu0 0
      %3306 = vmatpush1.bf16.msra.mxu0 %v2179
      %3307 = vmatprep.subr.bf16.mxu0 0
      %3308 = vmatpush1.bf16.msra.mxu0 %v2180
      %3309 = vmatprep.subr.bf16.mxu0 0
      %3310 = vmatpush1.bf16.msra.mxu0 %v2181
      %3311 = vmatprep.subr.bf16.mxu0 0
      %3312 = vmatpush1.bf16.msra.mxu0 %v2182
      %3313 = vmatprep.subr.bf16.mxu0 0
      %3314 = vmatpush1.bf16.msra.mxu0 %v2183
      %3315 = vmatprep.subr.bf16.mxu0 0
      %3316 = vmatpush1.bf16.msra.mxu0 %v2184
      %3317 = vmatprep.subr.bf16.mxu0 0
      %3318 = vmatpush1.bf16.msra.mxu0 %v2185
      %3319 = vmatprep.subr.bf16.mxu0 0
      %3320 = vmatpush1.bf16.msra.mxu0 %v2186
      %3321 = vmatprep.subr.bf16.mxu0 0
      %3322 = vmatpush1.bf16.msra.mxu0 %v2187
      %3323 = vmatprep.subr.bf16.mxu0 0
      %3324 = vmatpush1.bf16.msra.mxu0 %v2188
      %3325 = vmatprep.subr.bf16.mxu0 0
      %3326 = vmatpush1.bf16.msra.mxu0 %v2189
      %3327 = vmatprep.subr.bf16.mxu0 0
      %3328 = vmatpush1.bf16.msra.mxu0 %v2190
      %3329 = vmatprep.subr.bf16.mxu0 0
      %3330 = vmatpush1.bf16.msra.mxu0 %v2191
      %3331 = vmatprep.mubr.bf16.mxu0 %v3207
      %3332 = vmatmul.mubr.bf16.gmra.mrb[0].mxu0 %v3201
      %v3333 = vpop.f32.mrb[0].mxu0
      %v3334 = vadd.f32 %v3294, %v3333
      %v3335 = vpop.f32.mrb[0].mxu0
      %v3336 = vpop.f32.mrb[0].mxu0
      %v3337 = vpop.f32.mrb[0].mxu0
      %3338 = vdwg.mxu0
      %3339 = vmatprep.subr.bf16.mxu0 0
      %3340 = vmatpush1.bf16.msra.mxu0 %v2192
      %3341 = vmatprep.subr.bf16.mxu0 0
      %3342 = vmatpush1.bf16.msra.mxu0 %v2193
      %3343 = vmatprep.subr.bf16.mxu0 0
      %3344 = vmatpush1.bf16.msra.mxu0 %v2194
      %3345 = vmatprep.subr.bf16.mxu0 0
      %3346 = vmatpush1.bf16.msra.mxu0 %v2195
      %3347 = vmatprep.subr.bf16.mxu0 0
      %3348 = vmatpush1.bf16.msra.mxu0 %v2196
      %3349 = vmatprep.subr.bf16.mxu0 0
      %3350 = vmatpush1.bf16.msra.mxu0 %v2197
      %3351 = vmatprep.subr.bf16.mxu0 0
      %3352 = vmatpush1.bf16.msra.mxu0 0
      %3353 = vmatprep.subr.bf16.mxu0 0
      %3354 = vmatpush1.bf16.msra.mxu0 0
      %3355 = vmatprep.subr.bf16.mxu0 0
      %3356 = vmatpush1.bf16.msra.mxu0 0
      %3357 = vmatprep.subr.bf16.mxu0 0
      %3358 = vmatpush1.bf16.msra.mxu0 0
      %3359 = vmatprep.subr.bf16.mxu0 0
      %3360 = vmatpush1.bf16.msra.mxu0 0
      %3361 = vmatprep.subr.bf16.mxu0 0
      %3362 = vmatpush1.bf16.msra.mxu0 0
      %3363 = vmatprep.subr.bf16.mxu0 0
      %3364 = vmatpush1.bf16.msra.mxu0 0
      %3365 = vmatprep.subr.bf16.mxu0 0
      %3366 = vmatpush1.bf16.msra.mxu0 0
      %3367 = vmatprep.subr.bf16.mxu0 0
      %3368 = vmatpush1.bf16.msra.mxu0 0
      %3369 = vmatprep.subr.bf16.mxu0 0
      %3370 = vmatpush1.bf16.msra.mxu0 0
      %3371 = vmatprep.mubr.bf16.mxu0 0
      %3372 = vmatmul.mubr.bf16.gmra.mrb[0].mxu0 %v3217
      %v3373 = vpop.f32.mrb[0].mxu0
      %v3374 = vadd.f32 %v3334, %v3373
      %v3375 = vpop.f32.mrb[0].mxu0
      %v3376 = vpop.f32.mrb[0].mxu0
      %v3377 = vpop.f32.mrb[0].mxu0
      %3378 = vdwg.mxu0
      %3379 = vst.msk [vmem:[%s273 + $0x10] sm:$0xff] %vm1750, %v3374
      %v3380 = vld [vmem:[%s2425] sm:$0xf]
      %v3381 = vld [vmem:[%s2425 + $0x4] sm:$0x1]
      %v3382 = vld [vmem:[%s2425] sm:$0xe]
      %v3383 = vld [vmem:[%s2907] sm:$0xf]
      %v3384 = vld [vmem:[%s2907 + $0x4] sm:$0x1]
      %v3385 = vld [vmem:[%s2907] sm:$0xe]
      %s3386 = sadd.s32 %s1575, 5
      %s3387 = smul.u32 %s3386, 2
      %s3388 = smul.addr %s3387, 4
      %s3389 = scalar_lea.vmem [#allocation2], %s3388
      %v3390 = vld [vmem:[%s3389] sm:$0xf]
      %v3391 = vld [vmem:[%s3389 + $0x4] sm:$0x1]
      %v3392 = vld [vmem:[%s3389] sm:$0xe]
      %v3393 = vld [vmem:[%s2438] sm:$0xf]
      %v3394 = vld [vmem:[%s2438 + $0x4] sm:$0x1]
      %v3395 = vld [vmem:[%s2438] sm:$0xe]
      %v3396 = vld [vmem:[%s2920] sm:$0xf]
      %v3397 = vld [vmem:[%s2920 + $0x4] sm:$0x1]
      %v3398 = vld [vmem:[%s2920] sm:$0xe]
      %s3399 = sadd.s32 %s1597, 5
      %s3400 = smul.u32 %s3399, 2
      %s3401 = smul.addr %s3400, 4
      %s3402 = scalar_lea.vmem [#allocation2], %s3401
      %v3403 = vld [vmem:[%s3402] sm:$0xf]
      %v3404 = vld [vmem:[%s3402 + $0x4] sm:$0x1]
      %v3405 = vld [vmem:[%s3402] sm:$0xe]
      %v3406 = vld [vmem:[%s2451] sm:$0xf]
      %v3407 = vld [vmem:[%s2451 + $0x4] sm:$0x1]
      %v3408 = vld [vmem:[%s2451] sm:$0xe]
      %v3409 = vld [vmem:[%s2933] sm:$0xf]
      %v3410 = vld [vmem:[%s2933 + $0x4] sm:$0x1]
      %v3411 = vld [vmem:[%s2933] sm:$0xe]
      %s3412 = sadd.s32 %s1619, 5
      %s3413 = smul.u32 %s3412, 2
      %s3414 = smul.addr %s3413, 4
      %s3415 = scalar_lea.vmem [#allocation2], %s3414
      %v3416 = vld [vmem:[%s3415] sm:$0xf]
      %v3417 = vld [vmem:[%s3415 + $0x4] sm:$0x1]
      %v3418 = vld [vmem:[%s3415] sm:$0xe]
      %v3421 = vunpack.c.l.b16 %v3380
      %v3422 = vunpack.c.l.b16 %v3381
      %v3423 = vpack.c.b16 %v3422, %v3421
      %v3425 = vshrl.u32 %v3423, 16
      %v3427 = vshll.u32 %v3423, 16
      %v3429 = vrot.slane %v3427, 1
      %v3430 = vor.u32 %v3425, %v3429
      %3431 = vrot.lane.b32.xlu0 %v3430, 32
      %v3432 = vpop.permute.xlu0 %3431
      %v3434 = vunpack.c.l.b16 %v3382
      %v3435 = vpack.c.b16 %v3422, %v3434
      %v3436 = vrot.slane %v3435, 1
      %3437 = vrot.lane.b32.xlu0 %v3436, 64
      %v3438 = vpop.permute.xlu0 %3437
      %v3440 = vunpack.c.l.b16 %v3383
      %v3441 = vpack.c.b16 %v3440, %v3440
      %3442 = vrot.lane.b32.xlu0 %v3441, 96
      %v3443 = vpop.permute.xlu0 %3442
      %v3445 = vunpack.c.l.b16 %v3384
      %v3446 = vpack.c.b16 %v3445, %v3440
      %v3448 = vshrl.u32 %v3446, 16
      %v3450 = vshll.u32 %v3446, 16
      %v3452 = vrot.slane %v3450, 1
      %v3453 = vor.u32 %v3448, %v3452
      %v3455 = vunpack.c.l.b16 %v3385
      %v3456 = vpack.c.b16 %v3445, %v3455
      %v3457 = vrot.slane %v3456, 1
      %3458 = vrot.lane.b32.xlu0 %v3457, 32
      %v3459 = vpop.permute.xlu0 %3458
      %v3461 = vunpack.c.l.b16 %v3390
      %v3462 = vpack.c.b16 %v3461, %v3461
      %3463 = vrot.lane.b32.xlu0 %v3462, 64
      %v3464 = vpop.permute.xlu0 %3463
      %v3466 = vunpack.c.l.b16 %v3391
      %v3467 = vpack.c.b16 %v3466, %v3461
      %v3469 = vshrl.u32 %v3467, 16
      %v3471 = vshll.u32 %v3467, 16
      %v3473 = vrot.slane %v3471, 1
      %v3474 = vor.u32 %v3469, %v3473
      %3475 = vrot.lane.b32.xlu0 %v3474, 96
      %v3476 = vpop.permute.xlu0 %3475
      %v3478 = vunpack.c.l.b16 %v3392
      %v3479 = vpack.c.b16 %v3466, %v3478
      %v3480 = vrot.slane %v3479, 1
      %v3482 = vunpack.c.l.b16 %v3393
      %v3483 = vpack.c.b16 %v3482, %v3482
      %3484 = vrot.lane.b32.xlu0 %v3483, 32
      %v3485 = vpop.permute.xlu0 %3484
      %v3487 = vunpack.c.l.b16 %v3394
      %v3488 = vpack.c.b16 %v3487, %v3482
      %v3490 = vshrl.u32 %v3488, 16
      %v3492 = vshll.u32 %v3488, 16
      %v3494 = vrot.slane %v3492, 1
      %v3495 = vor.u32 %v3490, %v3494
      %3496 = vrot.lane.b32.xlu0 %v3495, 64
      %v3497 = vpop.permute.xlu0 %3496
      %v3499 = vunpack.c.l.b16 %v3395
      %v3500 = vpack.c.b16 %v3487, %v3499
      %v3501 = vrot.slane %v3500, 1
      %3502 = vrot.lane.b32.xlu0 %v3501, 96
      %v3503 = vpop.permute.xlu0 %3502
      %v3506 = vunpack.c.l.b16 %v3396
      %v3507 = vunpack.c.l.b16 %v3397
      %v3508 = vpack.c.b16 %v3507, %v3506
      %v3510 = vshrl.u32 %v3508, 16
      %v3512 = vshll.u32 %v3508, 16
      %v3514 = vrot.slane %v3512, 1
      %v3515 = vor.u32 %v3510, %v3514
      %3516 = vrot.lane.b32.xlu0 %v3515, 32
      %v3517 = vpop.permute.xlu0 %3516
      %v3519 = vunpack.c.l.b16 %v3398
      %v3520 = vpack.c.b16 %v3507, %v3519
      %v3521 = vrot.slane %v3520, 1
      %3522 = vrot.lane.b32.xlu0 %v3521, 64
      %v3523 = vpop.permute.xlu0 %3522
      %v3525 = vunpack.c.l.b16 %v3403
      %v3526 = vpack.c.b16 %v3525, %v3525
      %3527 = vrot.lane.b32.xlu0 %v3526, 96
      %v3528 = vpop.permute.xlu0 %3527
      %v3531 = vsel %vm1750, %v3380, %v3432
      %v3533 = vsel %vm1754, %v3531, %v3438
      %v3535 = vsel %vm1757, %v3533, %v3443
      %v3539 = vsel %vm1750, %v3453, %v3459
      %v3541 = vsel %vm1754, %v3539, %v3464
      %v3543 = vsel %vm1757, %v3541, %v3476
      %v3547 = vsel %vm1750, %v3480, %v3485
      %v3549 = vsel %vm1754, %v3547, %v3497
      %v3551 = vsel %vm1757, %v3549, %v3503
      %v3555 = vsel %vm1750, %v3396, %v3517
      %v3557 = vsel %vm1754, %v3555, %v3523
      %v3559 = vsel %vm1757, %v3557, %v3528
      %v3562 = vunpack.c.l.b16 %v3404
      %v3563 = vpack.c.b16 %v3562, %v3525
      %v3565 = vunpack.c.l.b16 %v3405
      %v3566 = vpack.c.b16 %v3562, %v3565
      %v3568 = vshrl.u32 %v3566, 16
      %v3570 = vshll.u32 %v3566, 16
      %v3572 = vrot.slane %v3570, 1
      %v3573 = vor.u32 %v3568, %v3572
      %3574 = vrot.lane.b32.xlu0 %v3573, 32
      %v3575 = vpop.permute.xlu0 %3574
      %v3577 = vunpack.c.l.b16 %v3406
      %v3578 = vpack.c.b16 %v3577, %v3577
      %v3580 = vshrl.u32 %v3578, 16
      %v3582 = vrot.slane %v3580, 7
      %v3583 = vshll.u32 %v3578, 16
      %v3585 = vor.u32 %v3582, %v3583
      %3586 = vrot.lane.b32.xlu0 %v3585, 64
      %v3587 = vpop.permute.xlu0 %3586
      %v3589 = vunpack.c.l.b16 %v3407
      %v3590 = vpack.c.b16 %v3589, %v3577
      %3591 = vrot.lane.b32.xlu0 %v3590, 96
      %v3592 = vpop.permute.xlu0 %3591
      %v3594 = vunpack.c.l.b16 %v3408
      %v3595 = vpack.c.b16 %v3589, %v3594
      %v3597 = vshrl.u32 %v3595, 16
      %v3599 = vshll.u32 %v3595, 16
      %v3601 = vrot.slane %v3599, 1
      %v3602 = vor.u32 %v3597, %v3601
      %v3604 = vunpack.c.l.b16 %v3409
      %v3605 = vpack.c.b16 %v3604, %v3604
      %v3607 = vshrl.u32 %v3605, 16
      %v3609 = vrot.slane %v3607, 7
      %v3610 = vshll.u32 %v3605, 16
      %v3612 = vor.u32 %v3609, %v3610
      %3613 = vrot.lane.b32.xlu0 %v3612, 32
      %v3614 = vpop.permute.xlu0 %3613
      %v3616 = vunpack.c.l.b16 %v3410
      %v3617 = vpack.c.b16 %v3616, %v3604
      %3618 = vrot.lane.b32.xlu0 %v3617, 64
      %v3619 = vpop.permute.xlu0 %3618
      %v3621 = vunpack.c.l.b16 %v3411
      %v3622 = vpack.c.b16 %v3616, %v3621
      %v3624 = vshrl.u32 %v3622, 16
      %v3626 = vshll.u32 %v3622, 16
      %v3628 = vrot.slane %v3626, 1
      %v3629 = vor.u32 %v3624, %v3628
      %3630 = vrot.lane.b32.xlu0 %v3629, 96
      %v3631 = vpop.permute.xlu0 %3630
      %v3633 = vunpack.c.l.b16 %v3416
      %v3634 = vpack.c.b16 %v3633, %v3633
      %v3636 = vshrl.u32 %v3634, 16
      %v3638 = vrot.slane %v3636, 7
      %v3639 = vshll.u32 %v3634, 16
      %v3641 = vor.u32 %v3638, %v3639
      %v3643 = vunpack.c.l.b16 %v3417
      %v3644 = vpack.c.b16 %v3643, %v3633
      %3645 = vrot.lane.b32.xlu0 %v3644, 32
      %v3646 = vpop.permute.xlu0 %3645
      %v3648 = vunpack.c.l.b16 %v3418
      %v3649 = vpack.c.b16 %v3643, %v3648
      %v3651 = vshrl.u32 %v3649, 16
      %v3653 = vshll.u32 %v3649, 16
      %v3655 = vrot.slane %v3653, 1
      %v3656 = vor.u32 %v3651, %v3655
      %3657 = vrot.lane.b32.xlu0 %v3656, 64
      %v3658 = vpop.permute.xlu0 %3657
      %v3661 = vsel %vm1750, %v3563, %v3575
      %v3663 = vsel %vm1754, %v3661, %v3587
      %v3665 = vsel %vm1757, %v3663, %v3592
      %v3668 = vsel %vm1750, %v3602, %v3614
      %v3670 = vsel %vm1754, %v3668, %v3619
      %v3672 = vsel %vm1757, %v3670, %v3631
      %v3675 = vsel %vm1750, %v3641, %v3646
      %v3677 = vsel %vm1754, %v3675, %v3658
      %v3678 = vshrl.u32 %v3665, 16
      %v3680 = vshll.u32 %v3665, 16
      %v3682 = vrot.slane %v3680, 1
      %v3683 = vor.u32 %v3678, %v3682
      %v3684 = vshrl.u32 %v3672, 16
      %v3686 = vshll.u32 %v3672, 16
      %v3688 = vrot.slane %v3686, 1
      %v3689 = vor.u32 %v3684, %v3688
      %v3690 = vshrl.u32 %v3677, 16
      %v3692 = vshll.u32 %v3677, 16
      %v3694 = vrot.slane %v3692, 1
      %v3695 = vor.u32 %v3690, %v3694
      %v3699 = vsel %vm1757, %v3695, 0
      %3701 = vmatprep.subr.bf16.mxu0 0
      %3702 = vmatpush1.bf16.msra.mxu0 %v2144
      %3703 = vmatprep.subr.bf16.mxu0 0
      %3704 = vmatpush1.bf16.msra.mxu0 %v2145
      %3705 = vmatprep.subr.bf16.mxu0 0
      %3706 = vmatpush1.bf16.msra.mxu0 %v2146
      %3707 = vmatprep.subr.bf16.mxu0 0
      %3708 = vmatpush1.bf16.msra.mxu0 %v2147
      %3709 = vmatprep.subr.bf16.mxu0 0
      %3710 = vmatpush1.bf16.msra.mxu0 %v2148
      %3711 = vmatprep.subr.bf16.mxu0 0
      %3712 = vmatpush1.bf16.msra.mxu0 %v2149
      %3713 = vmatprep.subr.bf16.mxu0 0
      %3714 = vmatpush1.bf16.msra.mxu0 %v2150
      %3715 = vmatprep.subr.bf16.mxu0 0
      %3716 = vmatpush1.bf16.msra.mxu0 %v2151
      %3717 = vmatprep.subr.bf16.mxu0 0
      %3718 = vmatpush1.bf16.msra.mxu0 %v2152
      %3719 = vmatprep.subr.bf16.mxu0 0
      %3720 = vmatpush1.bf16.msra.mxu0 %v2153
      %3721 = vmatprep.subr.bf16.mxu0 0
      %3722 = vmatpush1.bf16.msra.mxu0 %v2154
      %3723 = vmatprep.subr.bf16.mxu0 0
      %3724 = vmatpush1.bf16.msra.mxu0 %v2155
      %3725 = vmatprep.subr.bf16.mxu0 0
      %3726 = vmatpush1.bf16.msra.mxu0 %v2156
      %3727 = vmatprep.subr.bf16.mxu0 0
      %3728 = vmatpush1.bf16.msra.mxu0 %v2157
      %3729 = vmatprep.subr.bf16.mxu0 0
      %3730 = vmatpush1.bf16.msra.mxu0 %v2158
      %3731 = vmatprep.subr.bf16.mxu0 0
      %3732 = vmatpush1.bf16.msra.mxu0 %v2159
      %3733 = vmatprep.mubr.bf16.mxu0 %v3543
      %3734 = vmatmul.mubr.bf16.gmra.mrb[0].mxu0 %v3535
      %v3735 = vpop.f32.mrb[0].mxu0
      %v3736 = vadd.f32 %v1926, %v3735
      %v3737 = vpop.f32.mrb[0].mxu0
      %v3738 = vpop.f32.mrb[0].mxu0
      %v3739 = vpop.f32.mrb[0].mxu0
      %3740 = vdwg.mxu0
      %3741 = vmatprep.subr.bf16.mxu0 0
      %3742 = vmatpush1.bf16.msra.mxu0 %v2160
      %3743 = vmatprep.subr.bf16.mxu0 0
      %3744 = vmatpush1.bf16.msra.mxu0 %v2161
      %3745 = vmatprep.subr.bf16.mxu0 0
      %3746 = vmatpush1.bf16.msra.mxu0 %v2162
      %3747 = vmatprep.subr.bf16.mxu0 0
      %3748 = vmatpush1.bf16.msra.mxu0 %v2163
      %3749 = vmatprep.subr.bf16.mxu0 0
      %3750 = vmatpush1.bf16.msra.mxu0 %v2164
      %3751 = vmatprep.subr.bf16.mxu0 0
      %3752 = vmatpush1.bf16.msra.mxu0 %v2165
      %3753 = vmatprep.subr.bf16.mxu0 0
      %3754 = vmatpush1.bf16.msra.mxu0 %v2166
      %3755 = vmatprep.subr.bf16.mxu0 0
      %3756 = vmatpush1.bf16.msra.mxu0 %v2167
      %3757 = vmatprep.subr.bf16.mxu0 0
      %3758 = vmatpush1.bf16.msra.mxu0 %v2168
      %3759 = vmatprep.subr.bf16.mxu0 0
      %3760 = vmatpush1.bf16.msra.mxu0 %v2169
      %3761 = vmatprep.subr.bf16.mxu0 0
      %3762 = vmatpush1.bf16.msra.mxu0 %v2170
      %3763 = vmatprep.subr.bf16.mxu0 0
      %3764 = vmatpush1.bf16.msra.mxu0 %v2171
      %3765 = vmatprep.subr.bf16.mxu0 0
      %3766 = vmatpush1.bf16.msra.mxu0 %v2172
      %3767 = vmatprep.subr.bf16.mxu0 0
      %3768 = vmatpush1.bf16.msra.mxu0 %v2173
      %3769 = vmatprep.subr.bf16.mxu0 0
      %3770 = vmatpush1.bf16.msra.mxu0 %v2174
      %3771 = vmatprep.subr.bf16.mxu0 0
      %3772 = vmatpush1.bf16.msra.mxu0 %v2175
      %3773 = vmatprep.mubr.bf16.mxu0 %v3559
      %3774 = vmatmul.mubr.bf16.gmra.mrb[0].mxu0 %v3551
      %v3775 = vpop.f32.mrb[0].mxu0
      %v3776 = vadd.f32 %v3736, %v3775
      %v3777 = vpop.f32.mrb[0].mxu0
      %v3778 = vpop.f32.mrb[0].mxu0
      %v3779 = vpop.f32.mrb[0].mxu0
      %3780 = vdwg.mxu0
      %3781 = vmatprep.subr.bf16.mxu0 0
      %3782 = vmatpush1.bf16.msra.mxu0 %v2176
      %3783 = vmatprep.subr.bf16.mxu0 0
      %3784 = vmatpush1.bf16.msra.mxu0 %v2177
      %3785 = vmatprep.subr.bf16.mxu0 0
      %3786 = vmatpush1.bf16.msra.mxu0 %v2178
      %3787 = vmatprep.subr.bf16.mxu0 0
      %3788 = vmatpush1.bf16.msra.mxu0 %v2179
      %3789 = vmatprep.subr.bf16.mxu0 0
      %3790 = vmatpush1.bf16.msra.mxu0 %v2180
      %3791 = vmatprep.subr.bf16.mxu0 0
      %3792 = vmatpush1.bf16.msra.mxu0 %v2181
      %3793 = vmatprep.subr.bf16.mxu0 0
      %3794 = vmatpush1.bf16.msra.mxu0 %v2182
      %3795 = vmatprep.subr.bf16.mxu0 0
      %3796 = vmatpush1.bf16.msra.mxu0 %v2183
      %3797 = vmatprep.subr.bf16.mxu0 0
      %3798 = vmatpush1.bf16.msra.mxu0 %v2184
      %3799 = vmatprep.subr.bf16.mxu0 0
      %3800 = vmatpush1.bf16.msra.mxu0 %v2185
      %3801 = vmatprep.subr.bf16.mxu0 0
      %3802 = vmatpush1.bf16.msra.mxu0 %v2186
      %3803 = vmatprep.subr.bf16.mxu0 0
      %3804 = vmatpush1.bf16.msra.mxu0 %v2187
      %3805 = vmatprep.subr.bf16.mxu0 0
      %3806 = vmatpush1.bf16.msra.mxu0 %v2188
      %3807 = vmatprep.subr.bf16.mxu0 0
      %3808 = vmatpush1.bf16.msra.mxu0 %v2189
      %3809 = vmatprep.subr.bf16.mxu0 0
      %3810 = vmatpush1.bf16.msra.mxu0 %v2190
      %3811 = vmatprep.subr.bf16.mxu0 0
      %3812 = vmatpush1.bf16.msra.mxu0 %v2191
      %3813 = vmatprep.mubr.bf16.mxu0 %v3689
      %3814 = vmatmul.mubr.bf16.gmra.mrb[0].mxu0 %v3683
      %v3815 = vpop.f32.mrb[0].mxu0
      %v3816 = vadd.f32 %v3776, %v3815
      %v3817 = vpop.f32.mrb[0].mxu0
      %v3818 = vpop.f32.mrb[0].mxu0
      %v3819 = vpop.f32.mrb[0].mxu0
      %3820 = vdwg.mxu0
      %3821 = vmatprep.subr.bf16.mxu0 0
      %3822 = vmatpush1.bf16.msra.mxu0 %v2192
      %3823 = vmatprep.subr.bf16.mxu0 0
      %3824 = vmatpush1.bf16.msra.mxu0 %v2193
      %3825 = vmatprep.subr.bf16.mxu0 0
      %3826 = vmatpush1.bf16.msra.mxu0 %v2194
      %3827 = vmatprep.subr.bf16.mxu0 0
      %3828 = vmatpush1.bf16.msra.mxu0 %v2195
      %3829 = vmatprep.subr.bf16.mxu0 0
      %3830 = vmatpush1.bf16.msra.mxu0 %v2196
      %3831 = vmatprep.subr.bf16.mxu0 0
      %3832 = vmatpush1.bf16.msra.mxu0 %v2197
      %3833 = vmatprep.subr.bf16.mxu0 0
      %3834 = vmatpush1.bf16.msra.mxu0 0
      %3835 = vmatprep.subr.bf16.mxu0 0
      %3836 = vmatpush1.bf16.msra.mxu0 0
      %3837 = vmatprep.subr.bf16.mxu0 0
      %3838 = vmatpush1.bf16.msra.mxu0 0
      %3839 = vmatprep.subr.bf16.mxu0 0
      %3840 = vmatpush1.bf16.msra.mxu0 0
      %3841 = vmatprep.subr.bf16.mxu0 0
      %3842 = vmatpush1.bf16.msra.mxu0 0
      %3843 = vmatprep.subr.bf16.mxu0 0
      %3844 = vmatpush1.bf16.msra.mxu0 0
      %3845 = vmatprep.subr.bf16.mxu0 0
      %3846 = vmatpush1.bf16.msra.mxu0 0
      %3847 = vmatprep.subr.bf16.mxu0 0
      %3848 = vmatpush1.bf16.msra.mxu0 0
      %3849 = vmatprep.subr.bf16.mxu0 0
      %3850 = vmatpush1.bf16.msra.mxu0 0
      %3851 = vmatprep.subr.bf16.mxu0 0
      %3852 = vmatpush1.bf16.msra.mxu0 0
      %3853 = vmatprep.mubr.bf16.mxu0 0
      %3854 = vmatmul.mubr.bf16.gmra.mrb[0].mxu0 %v3699
      %v3855 = vpop.f32.mrb[0].mxu0
      %v3856 = vadd.f32 %v3816, %v3855
      %v3857 = vpop.f32.mrb[0].mxu0
      %v3858 = vpop.f32.mrb[0].mxu0
      %v3859 = vpop.f32.mrb[0].mxu0
      %3860 = vdwg.mxu0
      %3861 = vst.msk [vmem:[%s273 + $0x18] sm:$0xff] %vm1750, %v3856
      %v3862 = vld [vmem:[%s2907] sm:$0xf]
      %v3863 = vld [vmem:[%s2907 + $0x4] sm:$0x1]
      %v3864 = vld [vmem:[%s2907] sm:$0xe]
      %v3865 = vld [vmem:[%s3389] sm:$0xf]
      %v3866 = vld [vmem:[%s3389 + $0x4] sm:$0x1]
      %v3867 = vld [vmem:[%s3389] sm:$0xe]
      %s3868 = sadd.s32 %s1575, 6
      %s3869 = smul.u32 %s3868, 2
      %s3870 = smul.addr %s3869, 4
      %s3871 = scalar_lea.vmem [#allocation2], %s3870
      %v3872 = vld [vmem:[%s3871] sm:$0xf]
      %v3873 = vld [vmem:[%s3871 + $0x4] sm:$0x1]
      %v3874 = vld [vmem:[%s3871] sm:$0xe]
      %v3875 = vld [vmem:[%s2920] sm:$0xf]
      %v3876 = vld [vmem:[%s2920 + $0x4] sm:$0x1]
      %v3877 = vld [vmem:[%s2920] sm:$0xe]
      %v3878 = vld [vmem:[%s3402] sm:$0xf]
      %v3879 = vld [vmem:[%s3402 + $0x4] sm:$0x1]
      %v3880 = vld [vmem:[%s3402] sm:$0xe]
      %s3881 = sadd.s32 %s1597, 6
      %s3882 = smul.u32 %s3881, 2
      %s3883 = smul.addr %s3882, 4
      %s3884 = scalar_lea.vmem [#allocation2], %s3883
      %v3885 = vld [vmem:[%s3884] sm:$0xf]
      %v3886 = vld [vmem:[%s3884 + $0x4] sm:$0x1]
      %v3887 = vld [vmem:[%s3884] sm:$0xe]
      %v3888 = vld [vmem:[%s2933] sm:$0xf]
      %v3889 = vld [vmem:[%s2933 + $0x4] sm:$0x1]
      %v3890 = vld [vmem:[%s2933] sm:$0xe]
      %v3891 = vld [vmem:[%s3415] sm:$0xf]
      %v3892 = vld [vmem:[%s3415 + $0x4] sm:$0x1]
      %v3893 = vld [vmem:[%s3415] sm:$0xe]
      %s3894 = sadd.s32 %s1619, 6
      %s3895 = smul.u32 %s3894, 2
      %s3896 = smul.addr %s3895, 4
      %s3897 = scalar_lea.vmem [#allocation2], %s3896
      %v3898 = vld [vmem:[%s3897] sm:$0xf]
      %v3899 = vld [vmem:[%s3897 + $0x4] sm:$0x1]
      %v3900 = vld [vmem:[%s3897] sm:$0xe]
      %v3903 = vunpack.c.l.b16 %v3862
      %v3904 = vunpack.c.l.b16 %v3863
      %v3905 = vpack.c.b16 %v3904, %v3903
      %v3907 = vshrl.u32 %v3905, 16
      %v3909 = vshll.u32 %v3905, 16
      %v3911 = vrot.slane %v3909, 1
      %v3912 = vor.u32 %v3907, %v3911
      %3913 = vrot.lane.b32.xlu0 %v3912, 32
      %v3914 = vpop.permute.xlu0 %3913
      %v3916 = vunpack.c.l.b16 %v3864
      %v3917 = vpack.c.b16 %v3904, %v3916
      %v3918 = vrot.slane %v3917, 1
      %3919 = vrot.lane.b32.xlu0 %v3918, 64
      %v3920 = vpop.permute.xlu0 %3919
      %v3922 = vunpack.c.l.b16 %v3865
      %v3923 = vpack.c.b16 %v3922, %v3922
      %3924 = vrot.lane.b32.xlu0 %v3923, 96
      %v3925 = vpop.permute.xlu0 %3924
      %v3927 = vunpack.c.l.b16 %v3866
      %v3928 = vpack.c.b16 %v3927, %v3922
      %v3930 = vshrl.u32 %v3928, 16
      %v3932 = vshll.u32 %v3928, 16
      %v3934 = vrot.slane %v3932, 1
      %v3935 = vor.u32 %v3930, %v3934
      %v3937 = vunpack.c.l.b16 %v3867
      %v3938 = vpack.c.b16 %v3927, %v3937
      %v3939 = vrot.slane %v3938, 1
      %3940 = vrot.lane.b32.xlu0 %v3939, 32
      %v3941 = vpop.permute.xlu0 %3940
      %v3943 = vunpack.c.l.b16 %v3872
      %v3944 = vpack.c.b16 %v3943, %v3943
      %3945 = vrot.lane.b32.xlu0 %v3944, 64
      %v3946 = vpop.permute.xlu0 %3945
      %v3948 = vunpack.c.l.b16 %v3873
      %v3949 = vpack.c.b16 %v3948, %v3943
      %v3951 = vshrl.u32 %v3949, 16
      %v3953 = vshll.u32 %v3949, 16
      %v3955 = vrot.slane %v3953, 1
      %v3956 = vor.u32 %v3951, %v3955
      %3957 = vrot.lane.b32.xlu0 %v3956, 96
      %v3958 = vpop.permute.xlu0 %3957
      %v3960 = vunpack.c.l.b16 %v3874
      %v3961 = vpack.c.b16 %v3948, %v3960
      %v3962 = vrot.slane %v3961, 1
      %v3964 = vunpack.c.l.b16 %v3875
      %v3965 = vpack.c.b16 %v3964, %v3964
      %3966 = vrot.lane.b32.xlu0 %v3965, 32
      %v3967 = vpop.permute.xlu0 %3966
      %v3969 = vunpack.c.l.b16 %v3876
      %v3970 = vpack.c.b16 %v3969, %v3964
      %v3972 = vshrl.u32 %v3970, 16
      %v3974 = vshll.u32 %v3970, 16
      %v3976 = vrot.slane %v3974, 1
      %v3977 = vor.u32 %v3972, %v3976
      %3978 = vrot.lane.b32.xlu0 %v3977, 64
      %v3979 = vpop.permute.xlu0 %3978
      %v3981 = vunpack.c.l.b16 %v3877
      %v3982 = vpack.c.b16 %v3969, %v3981
      %v3983 = vrot.slane %v3982, 1
      %3984 = vrot.lane.b32.xlu0 %v3983, 96
      %v3985 = vpop.permute.xlu0 %3984
      %v3988 = vunpack.c.l.b16 %v3878
      %v3989 = vunpack.c.l.b16 %v3879
      %v3990 = vpack.c.b16 %v3989, %v3988
      %v3992 = vshrl.u32 %v3990, 16
      %v3994 = vshll.u32 %v3990, 16
      %v3996 = vrot.slane %v3994, 1
      %v3997 = vor.u32 %v3992, %v3996
      %3998 = vrot.lane.b32.xlu0 %v3997, 32
      %v3999 = vpop.permute.xlu0 %3998
      %v4001 = vunpack.c.l.b16 %v3880
      %v4002 = vpack.c.b16 %v3989, %v4001
      %v4003 = vrot.slane %v4002, 1
      %4004 = vrot.lane.b32.xlu0 %v4003, 64
      %v4005 = vpop.permute.xlu0 %4004
      %v4007 = vunpack.c.l.b16 %v3885
      %v4008 = vpack.c.b16 %v4007, %v4007
      %4009 = vrot.lane.b32.xlu0 %v4008, 96
      %v4010 = vpop.permute.xlu0 %4009
      %v4013 = vsel %vm1750, %v3862, %v3914
      %v4015 = vsel %vm1754, %v4013, %v3920
      %v4017 = vsel %vm1757, %v4015, %v3925
      %v4021 = vsel %vm1750, %v3935, %v3941
      %v4023 = vsel %vm1754, %v4021, %v3946
      %v4025 = vsel %vm1757, %v4023, %v3958
      %v4029 = vsel %vm1750, %v3962, %v3967
      %v4031 = vsel %vm1754, %v4029, %v3979
      %v4033 = vsel %vm1757, %v4031, %v3985
      %v4037 = vsel %vm1750, %v3878, %v3999
      %v4039 = vsel %vm1754, %v4037, %v4005
      %v4041 = vsel %vm1757, %v4039, %v4010
      %v4044 = vunpack.c.l.b16 %v3886
      %v4045 = vpack.c.b16 %v4044, %v4007
      %v4047 = vunpack.c.l.b16 %v3887
      %v4048 = vpack.c.b16 %v4044, %v4047
      %v4050 = vshrl.u32 %v4048, 16
      %v4052 = vshll.u32 %v4048, 16
      %v4054 = vrot.slane %v4052, 1
      %v4055 = vor.u32 %v4050, %v4054
      %4056 = vrot.lane.b32.xlu0 %v4055, 32
      %v4057 = vpop.permute.xlu0 %4056
      %v4059 = vunpack.c.l.b16 %v3888
      %v4060 = vpack.c.b16 %v4059, %v4059
      %v4062 = vshrl.u32 %v4060, 16
      %v4064 = vrot.slane %v4062, 7
      %v4065 = vshll.u32 %v4060, 16
      %v4067 = vor.u32 %v4064, %v4065
      %4068 = vrot.lane.b32.xlu0 %v4067, 64
      %v4069 = vpop.permute.xlu0 %4068
      %v4071 = vunpack.c.l.b16 %v3889
      %v4072 = vpack.c.b16 %v4071, %v4059
      %4073 = vrot.lane.b32.xlu0 %v4072, 96
      %v4074 = vpop.permute.xlu0 %4073
      %v4076 = vunpack.c.l.b16 %v3890
      %v4077 = vpack.c.b16 %v4071, %v4076
      %v4079 = vshrl.u32 %v4077, 16
      %v4081 = vshll.u32 %v4077, 16
      %v4083 = vrot.slane %v4081, 1
      %v4084 = vor.u32 %v4079, %v4083
      %v4086 = vunpack.c.l.b16 %v3891
      %v4087 = vpack.c.b16 %v4086, %v4086
      %v4089 = vshrl.u32 %v4087, 16
      %v4091 = vrot.slane %v4089, 7
      %v4092 = vshll.u32 %v4087, 16
      %v4094 = vor.u32 %v4091, %v4092
      %4095 = vrot.lane.b32.xlu0 %v4094, 32
      %v4096 = vpop.permute.xlu0 %4095
      %v4098 = vunpack.c.l.b16 %v3892
      %v4099 = vpack.c.b16 %v4098, %v4086
      %4100 = vrot.lane.b32.xlu0 %v4099, 64
      %v4101 = vpop.permute.xlu0 %4100
      %v4103 = vunpack.c.l.b16 %v3893
      %v4104 = vpack.c.b16 %v4098, %v4103
      %v4106 = vshrl.u32 %v4104, 16
      %v4108 = vshll.u32 %v4104, 16
      %v4110 = vrot.slane %v4108, 1
      %v4111 = vor.u32 %v4106, %v4110
      %4112 = vrot.lane.b32.xlu0 %v4111, 96
      %v4113 = vpop.permute.xlu0 %4112
      %v4115 = vunpack.c.l.b16 %v3898
      %v4116 = vpack.c.b16 %v4115, %v4115
      %v4118 = vshrl.u32 %v4116, 16
      %v4120 = vrot.slane %v4118, 7
      %v4121 = vshll.u32 %v4116, 16
      %v4123 = vor.u32 %v4120, %v4121
      %v4125 = vunpack.c.l.b16 %v3899
      %v4126 = vpack.c.b16 %v4125, %v4115
      %4127 = vrot.lane.b32.xlu0 %v4126, 32
      %v4128 = vpop.permute.xlu0 %4127
      %v4130 = vunpack.c.l.b16 %v3900
      %v4131 = vpack.c.b16 %v4125, %v4130
      %v4133 = vshrl.u32 %v4131, 16
      %v4135 = vshll.u32 %v4131, 16
      %v4137 = vrot.slane %v4135, 1
      %v4138 = vor.u32 %v4133, %v4137
      %4139 = vrot.lane.b32.xlu0 %v4138, 64
      %v4140 = vpop.permute.xlu0 %4139
      %v4143 = vsel %vm1750, %v4045, %v4057
      %v4145 = vsel %vm1754, %v4143, %v4069
      %v4147 = vsel %vm1757, %v4145, %v4074
      %v4150 = vsel %vm1750, %v4084, %v4096
      %v4152 = vsel %vm1754, %v4150, %v4101
      %v4154 = vsel %vm1757, %v4152, %v4113
      %v4157 = vsel %vm1750, %v4123, %v4128
      %v4159 = vsel %vm1754, %v4157, %v4140
      %v4160 = vshrl.u32 %v4147, 16
      %v4162 = vshll.u32 %v4147, 16
      %v4164 = vrot.slane %v4162, 1
      %v4165 = vor.u32 %v4160, %v4164
      %v4166 = vshrl.u32 %v4154, 16
      %v4168 = vshll.u32 %v4154, 16
      %v4170 = vrot.slane %v4168, 1
      %v4171 = vor.u32 %v4166, %v4170
      %v4172 = vshrl.u32 %v4159, 16
      %v4174 = vshll.u32 %v4159, 16
      %v4176 = vrot.slane %v4174, 1
      %v4177 = vor.u32 %v4172, %v4176
      %v4181 = vsel %vm1757, %v4177, 0
      %4183 = vmatprep.subr.bf16.mxu0 0
      %4184 = vmatpush1.bf16.msra.mxu0 %v2144
      %4185 = vmatprep.subr.bf16.mxu0 0
      %4186 = vmatpush1.bf16.msra.mxu0 %v2145
      %4187 = vmatprep.subr.bf16.mxu0 0
      %4188 = vmatpush1.bf16.msra.mxu0 %v2146
      %4189 = vmatprep.subr.bf16.mxu0 0
      %4190 = vmatpush1.bf16.msra.mxu0 %v2147
      %4191 = vmatprep.subr.bf16.mxu0 0
      %4192 = vmatpush1.bf16.msra.mxu0 %v2148
      %4193 = vmatprep.subr.bf16.mxu0 0
      %4194 = vmatpush1.bf16.msra.mxu0 %v2149
      %4195 = vmatprep.subr.bf16.mxu0 0
      %4196 = vmatpush1.bf16.msra.mxu0 %v2150
      %4197 = vmatprep.subr.bf16.mxu0 0
      %4198 = vmatpush1.bf16.msra.mxu0 %v2151
      %4199 = vmatprep.subr.bf16.mxu0 0
      %4200 = vmatpush1.bf16.msra.mxu0 %v2152
      %4201 = vmatprep.subr.bf16.mxu0 0
      %4202 = vmatpush1.bf16.msra.mxu0 %v2153
      %4203 = vmatprep.subr.bf16.mxu0 0
      %4204 = vmatpush1.bf16.msra.mxu0 %v2154
      %4205 = vmatprep.subr.bf16.mxu0 0
      %4206 = vmatpush1.bf16.msra.mxu0 %v2155
      %4207 = vmatprep.subr.bf16.mxu0 0
      %4208 = vmatpush1.bf16.msra.mxu0 %v2156
      %4209 = vmatprep.subr.bf16.mxu0 0
      %4210 = vmatpush1.bf16.msra.mxu0 %v2157
      %4211 = vmatprep.subr.bf16.mxu0 0
      %4212 = vmatpush1.bf16.msra.mxu0 %v2158
      %4213 = vmatprep.subr.bf16.mxu0 0
      %4214 = vmatpush1.bf16.msra.mxu0 %v2159
      %4215 = vmatprep.mubr.bf16.mxu0 %v4025
      %4216 = vmatmul.mubr.bf16.gmra.mrb[0].mxu0 %v4017
      %v4217 = vpop.f32.mrb[0].mxu0
      %v4218 = vadd.f32 %v1926, %v4217
      %v4219 = vpop.f32.mrb[0].mxu0
      %v4220 = vpop.f32.mrb[0].mxu0
      %v4221 = vpop.f32.mrb[0].mxu0
      %4222 = vdwg.mxu0
      %4223 = vmatprep.subr.bf16.mxu0 0
      %4224 = vmatpush1.bf16.msra.mxu0 %v2160
      %4225 = vmatprep.subr.bf16.mxu0 0
      %4226 = vmatpush1.bf16.msra.mxu0 %v2161
      %4227 = vmatprep.subr.bf16.mxu0 0
      %4228 = vmatpush1.bf16.msra.mxu0 %v2162
      %4229 = vmatprep.subr.bf16.mxu0 0
      %4230 = vmatpush1.bf16.msra.mxu0 %v2163
      %4231 = vmatprep.subr.bf16.mxu0 0
      %4232 = vmatpush1.bf16.msra.mxu0 %v2164
      %4233 = vmatprep.subr.bf16.mxu0 0
      %4234 = vmatpush1.bf16.msra.mxu0 %v2165
      %4235 = vmatprep.subr.bf16.mxu0 0
      %4236 = vmatpush1.bf16.msra.mxu0 %v2166
      %4237 = vmatprep.subr.bf16.mxu0 0
      %4238 = vmatpush1.bf16.msra.mxu0 %v2167
      %4239 = vmatprep.subr.bf16.mxu0 0
      %4240 = vmatpush1.bf16.msra.mxu0 %v2168
      %4241 = vmatprep.subr.bf16.mxu0 0
      %4242 = vmatpush1.bf16.msra.mxu0 %v2169
      %4243 = vmatprep.subr.bf16.mxu0 0
      %4244 = vmatpush1.bf16.msra.mxu0 %v2170
      %4245 = vmatprep.subr.bf16.mxu0 0
      %4246 = vmatpush1.bf16.msra.mxu0 %v2171
      %4247 = vmatprep.subr.bf16.mxu0 0
      %4248 = vmatpush1.bf16.msra.mxu0 %v2172
      %4249 = vmatprep.subr.bf16.mxu0 0
      %4250 = vmatpush1.bf16.msra.mxu0 %v2173
      %4251 = vmatprep.subr.bf16.mxu0 0
      %4252 = vmatpush1.bf16.msra.mxu0 %v2174
      %4253 = vmatprep.subr.bf16.mxu0 0
      %4254 = vmatpush1.bf16.msra.mxu0 %v2175
      %4255 = vmatprep.mubr.bf16.mxu0 %v4041
      %4256 = vmatmul.mubr.bf16.gmra.mrb[0].mxu0 %v4033
      %v4257 = vpop.f32.mrb[0].mxu0
      %v4258 = vadd.f32 %v4218, %v4257
      %v4259 = vpop.f32.mrb[0].mxu0
      %v4260 = vpop.f32.mrb[0].mxu0
      %v4261 = vpop.f32.mrb[0].mxu0
      %4262 = vdwg.mxu0
      %4263 = vmatprep.subr.bf16.mxu0 0
      %4264 = vmatpush1.bf16.msra.mxu0 %v2176
      %4265 = vmatprep.subr.bf16.mxu0 0
      %4266 = vmatpush1.bf16.msra.mxu0 %v2177
      %4267 = vmatprep.subr.bf16.mxu0 0
      %4268 = vmatpush1.bf16.msra.mxu0 %v2178
      %4269 = vmatprep.subr.bf16.mxu0 0
      %4270 = vmatpush1.bf16.msra.mxu0 %v2179
      %4271 = vmatprep.subr.bf16.mxu0 0
      %4272 = vmatpush1.bf16.msra.mxu0 %v2180
      %4273 = vmatprep.subr.bf16.mxu0 0
      %4274 = vmatpush1.bf16.msra.mxu0 %v2181
      %4275 = vmatprep.subr.bf16.mxu0 0
      %4276 = vmatpush1.bf16.msra.mxu0 %v2182
      %4277 = vmatprep.subr.bf16.mxu0 0
      %4278 = vmatpush1.bf16.msra.mxu0 %v2183
      %4279 = vmatprep.subr.bf16.mxu0 0
      %4280 = vmatpush1.bf16.msra.mxu0 %v2184
      %4281 = vmatprep.subr.bf16.mxu0 0
      %4282 = vmatpush1.bf16.msra.mxu0 %v2185
      %4283 = vmatprep.subr.bf16.mxu0 0
      %4284 = vmatpush1.bf16.msra.mxu0 %v2186
      %4285 = vmatprep.subr.bf16.mxu0 0
      %4286 = vmatpush1.bf16.msra.mxu0 %v2187
      %4287 = vmatprep.subr.bf16.mxu0 0
      %4288 = vmatpush1.bf16.msra.mxu0 %v2188
      %4289 = vmatprep.subr.bf16.mxu0 0
      %4290 = vmatpush1.bf16.msra.mxu0 %v2189
      %4291 = vmatprep.subr.bf16.mxu0 0
      %4292 = vmatpush1.bf16.msra.mxu0 %v2190
      %4293 = vmatprep.subr.bf16.mxu0 0
      %4294 = vmatpush1.bf16.msra.mxu0 %v2191
      %4295 = vmatprep.mubr.bf16.mxu0 %v4171
      %4296 = vmatmul.mubr.bf16.gmra.mrb[0].mxu0 %v4165
      %v4297 = vpop.f32.mrb[0].mxu0
      %v4298 = vadd.f32 %v4258, %v4297
      %v4299 = vpop.f32.mrb[0].mxu0
      %v4300 = vpop.f32.mrb[0].mxu0
      %v4301 = vpop.f32.mrb[0].mxu0
      %4302 = vdwg.mxu0
      %4303 = vmatprep.subr.bf16.mxu0 0
      %4304 = vmatpush1.bf16.msra.mxu0 %v2192
      %4305 = vmatprep.subr.bf16.mxu0 0
      %4306 = vmatpush1.bf16.msra.mxu0 %v2193
      %4307 = vmatprep.subr.bf16.mxu0 0
      %4308 = vmatpush1.bf16.msra.mxu0 %v2194
      %4309 = vmatprep.subr.bf16.mxu0 0
      %4310 = vmatpush1.bf16.msra.mxu0 %v2195
      %4311 = vmatprep.subr.bf16.mxu0 0
      %4312 = vmatpush1.bf16.msra.mxu0 %v2196
      %4313 = vmatprep.subr.bf16.mxu0 0
      %4314 = vmatpush1.bf16.msra.mxu0 %v2197
      %4315 = vmatprep.subr.bf16.mxu0 0
      %4316 = vmatpush1.bf16.msra.mxu0 0
      %4317 = vmatprep.subr.bf16.mxu0 0
      %4318 = vmatpush1.bf16.msra.mxu0 0
      %4319 = vmatprep.subr.bf16.mxu0 0
      %4320 = vmatpush1.bf16.msra.mxu0 0
      %4321 = vmatprep.subr.bf16.mxu0 0
      %4322 = vmatpush1.bf16.msra.mxu0 0
      %4323 = vmatprep.subr.bf16.mxu0 0
      %4324 = vmatpush1.bf16.msra.mxu0 0
      %4325 = vmatprep.subr.bf16.mxu0 0
      %4326 = vmatpush1.bf16.msra.mxu0 0
      %4327 = vmatprep.subr.bf16.mxu0 0
      %4328 = vmatpush1.bf16.msra.mxu0 0
      %4329 = vmatprep.subr.bf16.mxu0 0
      %4330 = vmatpush1.bf16.msra.mxu0 0
      %4331 = vmatprep.subr.bf16.mxu0 0
      %4332 = vmatpush1.bf16.msra.mxu0 0
      %4333 = vmatprep.subr.bf16.mxu0 0
      %4334 = vmatpush1.bf16.msra.mxu0 0
      %4335 = vmatprep.mubr.bf16.mxu0 0
      %4336 = vmatmul.mubr.bf16.gmra.mrb[0].mxu0 %v4181
      %v4337 = vpop.f32.mrb[0].mxu0
      %v4338 = vadd.f32 %v4298, %v4337
      %v4339 = vpop.f32.mrb[0].mxu0
      %v4340 = vpop.f32.mrb[0].mxu0
      %v4341 = vpop.f32.mrb[0].mxu0
      %4342 = vdwg.mxu0
      %4343 = vst.msk [vmem:[%s273 + $0x20] sm:$0xff] %vm1750, %v4338
      %v4344 = vld [vmem:[%s3389] sm:$0xf]
      %v4345 = vld [vmem:[%s3389 + $0x4] sm:$0x1]
      %v4346 = vld [vmem:[%s3389] sm:$0xe]
      %v4347 = vld [vmem:[%s3871] sm:$0xf]
      %v4348 = vld [vmem:[%s3871 + $0x4] sm:$0x1]
      %v4349 = vld [vmem:[%s3871] sm:$0xe]
      %s4350 = sadd.s32 %s1575, 7
      %s4351 = smul.u32 %s4350, 2
      %s4352 = smul.addr %s4351, 4
      %s4353 = scalar_lea.vmem [#allocation2], %s4352
      %v4354 = vld [vmem:[%s4353] sm:$0xf]
      %v4355 = vld [vmem:[%s4353 + $0x4] sm:$0x1]
      %v4356 = vld [vmem:[%s4353] sm:$0xe]
      %v4357 = vld [vmem:[%s3402] sm:$0xf]
      %v4358 = vld [vmem:[%s3402 + $0x4] sm:$0x1]
      %v4359 = vld [vmem:[%s3402] sm:$0xe]
      %v4360 = vld [vmem:[%s3884] sm:$0xf]
      %v4361 = vld [vmem:[%s3884 + $0x4] sm:$0x1]
      %v4362 = vld [vmem:[%s3884] sm:$0xe]
      %s4363 = sadd.s32 %s1597, 7
      %s4364 = smul.u32 %s4363, 2
      %s4365 = smul.addr %s4364, 4
      %s4366 = scalar_lea.vmem [#allocation2], %s4365
      %v4367 = vld [vmem:[%s4366] sm:$0xf]
      %v4368 = vld [vmem:[%s4366 + $0x4] sm:$0x1]
      %v4369 = vld [vmem:[%s4366] sm:$0xe]
      %v4370 = vld [vmem:[%s3415] sm:$0xf]
      %v4371 = vld [vmem:[%s3415 + $0x4] sm:$0x1]
      %v4372 = vld [vmem:[%s3415] sm:$0xe]
      %v4373 = vld [vmem:[%s3897] sm:$0xf]
      %v4374 = vld [vmem:[%s3897 + $0x4] sm:$0x1]
      %v4375 = vld [vmem:[%s3897] sm:$0xe]
      %s4376 = sadd.s32 %s1619, 7
      %s4377 = smul.u32 %s4376, 2
      %s4378 = smul.addr %s4377, 4
      %s4379 = scalar_lea.vmem [#allocation2], %s4378
      %v4380 = vld [vmem:[%s4379] sm:$0xf]
      %v4381 = vld [vmem:[%s4379 + $0x4] sm:$0x1]
      %v4382 = vld [vmem:[%s4379] sm:$0xe]
      %v4385 = vunpack.c.l.b16 %v4344
      %v4386 = vunpack.c.l.b16 %v4345
      %v4387 = vpack.c.b16 %v4386, %v4385
      %v4389 = vshrl.u32 %v4387, 16
      %v4391 = vshll.u32 %v4387, 16
      %v4393 = vrot.slane %v4391, 1
      %v4394 = vor.u32 %v4389, %v4393
      %4395 = vrot.lane.b32.xlu0 %v4394, 32
      %v4396 = vpop.permute.xlu0 %4395
      %v4398 = vunpack.c.l.b16 %v4346
      %v4399 = vpack.c.b16 %v4386, %v4398
      %v4400 = vrot.slane %v4399, 1
      %4401 = vrot.lane.b32.xlu0 %v4400, 64
      %v4402 = vpop.permute.xlu0 %4401
      %v4404 = vunpack.c.l.b16 %v4347
      %v4405 = vpack.c.b16 %v4404, %v4404
      %4406 = vrot.lane.b32.xlu0 %v4405, 96
      %v4407 = vpop.permute.xlu0 %4406
      %v4409 = vunpack.c.l.b16 %v4348
      %v4410 = vpack.c.b16 %v4409, %v4404
      %v4412 = vshrl.u32 %v4410, 16
      %v4414 = vshll.u32 %v4410, 16
      %v4416 = vrot.slane %v4414, 1
      %v4417 = vor.u32 %v4412, %v4416
      %v4419 = vunpack.c.l.b16 %v4349
      %v4420 = vpack.c.b16 %v4409, %v4419
      %v4421 = vrot.slane %v4420, 1
      %4422 = vrot.lane.b32.xlu0 %v4421, 32
      %v4423 = vpop.permute.xlu0 %4422
      %v4425 = vunpack.c.l.b16 %v4354
      %v4426 = vpack.c.b16 %v4425, %v4425
      %4427 = vrot.lane.b32.xlu0 %v4426, 64
      %v4428 = vpop.permute.xlu0 %4427
      %v4430 = vunpack.c.l.b16 %v4355
      %v4431 = vpack.c.b16 %v4430, %v4425
      %v4433 = vshrl.u32 %v4431, 16
      %v4435 = vshll.u32 %v4431, 16
      %v4437 = vrot.slane %v4435, 1
      %v4438 = vor.u32 %v4433, %v4437
      %4439 = vrot.lane.b32.xlu0 %v4438, 96
      %v4440 = vpop.permute.xlu0 %4439
      %v4442 = vunpack.c.l.b16 %v4356
      %v4443 = vpack.c.b16 %v4430, %v4442
      %v4444 = vrot.slane %v4443, 1
      %v4446 = vunpack.c.l.b16 %v4357
      %v4447 = vpack.c.b16 %v4446, %v4446
      %4448 = vrot.lane.b32.xlu0 %v4447, 32
      %v4449 = vpop.permute.xlu0 %4448
      %v4451 = vunpack.c.l.b16 %v4358
      %v4452 = vpack.c.b16 %v4451, %v4446
      %v4454 = vshrl.u32 %v4452, 16
      %v4456 = vshll.u32 %v4452, 16
      %v4458 = vrot.slane %v4456, 1
      %v4459 = vor.u32 %v4454, %v4458
      %4460 = vrot.lane.b32.xlu0 %v4459, 64
      %v4461 = vpop.permute.xlu0 %4460
      %v4463 = vunpack.c.l.b16 %v4359
      %v4464 = vpack.c.b16 %v4451, %v4463
      %v4465 = vrot.slane %v4464, 1
      %4466 = vrot.lane.b32.xlu0 %v4465, 96
      %v4467 = vpop.permute.xlu0 %4466
      %v4470 = vunpack.c.l.b16 %v4360
      %v4471 = vunpack.c.l.b16 %v4361
      %v4472 = vpack.c.b16 %v4471, %v4470
      %v4474 = vshrl.u32 %v4472, 16
      %v4476 = vshll.u32 %v4472, 16
      %v4478 = vrot.slane %v4476, 1
      %v4479 = vor.u32 %v4474, %v4478
      %4480 = vrot.lane.b32.xlu0 %v4479, 32
      %v4481 = vpop.permute.xlu0 %4480
      %v4483 = vunpack.c.l.b16 %v4362
      %v4484 = vpack.c.b16 %v4471, %v4483
      %v4485 = vrot.slane %v4484, 1
      %4486 = vrot.lane.b32.xlu0 %v4485, 64
      %v4487 = vpop.permute.xlu0 %4486
      %v4489 = vunpack.c.l.b16 %v4367
      %v4490 = vpack.c.b16 %v4489, %v4489
      %4491 = vrot.lane.b32.xlu0 %v4490, 96
      %v4492 = vpop.permute.xlu0 %4491
      %v4495 = vsel %vm1750, %v4344, %v4396
      %v4497 = vsel %vm1754, %v4495, %v4402
      %v4499 = vsel %vm1757, %v4497, %v4407
      %v4503 = vsel %vm1750, %v4417, %v4423
      %v4505 = vsel %vm1754, %v4503, %v4428
      %v4507 = vsel %vm1757, %v4505, %v4440
      %v4511 = vsel %vm1750, %v4444, %v4449
      %v4513 = vsel %vm1754, %v4511, %v4461
      %v4515 = vsel %vm1757, %v4513, %v4467
      %v4519 = vsel %vm1750, %v4360, %v4481
      %v4521 = vsel %vm1754, %v4519, %v4487
      %v4523 = vsel %vm1757, %v4521, %v4492
      %v4526 = vunpack.c.l.b16 %v4368
      %v4527 = vpack.c.b16 %v4526, %v4489
      %v4529 = vunpack.c.l.b16 %v4369
      %v4530 = vpack.c.b16 %v4526, %v4529
      %v4532 = vshrl.u32 %v4530, 16
      %v4534 = vshll.u32 %v4530, 16
      %v4536 = vrot.slane %v4534, 1
      %v4537 = vor.u32 %v4532, %v4536
      %4538 = vrot.lane.b32.xlu0 %v4537, 32
      %v4539 = vpop.permute.xlu0 %4538
      %v4541 = vunpack.c.l.b16 %v4370
      %v4542 = vpack.c.b16 %v4541, %v4541
      %v4544 = vshrl.u32 %v4542, 16
      %v4546 = vrot.slane %v4544, 7
      %v4547 = vshll.u32 %v4542, 16
      %v4549 = vor.u32 %v4546, %v4547
      %4550 = vrot.lane.b32.xlu0 %v4549, 64
      %v4551 = vpop.permute.xlu0 %4550
      %v4553 = vunpack.c.l.b16 %v4371
      %v4554 = vpack.c.b16 %v4553, %v4541
      %4555 = vrot.lane.b32.xlu0 %v4554, 96
      %v4556 = vpop.permute.xlu0 %4555
      %v4558 = vunpack.c.l.b16 %v4372
      %v4559 = vpack.c.b16 %v4553, %v4558
      %v4561 = vshrl.u32 %v4559, 16
      %v4563 = vshll.u32 %v4559, 16
      %v4565 = vrot.slane %v4563, 1
      %v4566 = vor.u32 %v4561, %v4565
      %v4568 = vunpack.c.l.b16 %v4373
      %v4569 = vpack.c.b16 %v4568, %v4568
      %v4571 = vshrl.u32 %v4569, 16
      %v4573 = vrot.slane %v4571, 7
      %v4574 = vshll.u32 %v4569, 16
      %v4576 = vor.u32 %v4573, %v4574
      %4577 = vrot.lane.b32.xlu0 %v4576, 32
      %v4578 = vpop.permute.xlu0 %4577
      %v4580 = vunpack.c.l.b16 %v4374
      %v4581 = vpack.c.b16 %v4580, %v4568
      %4582 = vrot.lane.b32.xlu0 %v4581, 64
      %v4583 = vpop.permute.xlu0 %4582
      %v4585 = vunpack.c.l.b16 %v4375
      %v4586 = vpack.c.b16 %v4580, %v4585
      %v4588 = vshrl.u32 %v4586, 16
      %v4590 = vshll.u32 %v4586, 16
      %v4592 = vrot.slane %v4590, 1
      %v4593 = vor.u32 %v4588, %v4592
      %4594 = vrot.lane.b32.xlu0 %v4593, 96
      %v4595 = vpop.permute.xlu0 %4594
      %v4597 = vunpack.c.l.b16 %v4380
      %v4598 = vpack.c.b16 %v4597, %v4597
      %v4600 = vshrl.u32 %v4598, 16
      %v4602 = vrot.slane %v4600, 7
      %v4603 = vshll.u32 %v4598, 16
      %v4605 = vor.u32 %v4602, %v4603
      %v4607 = vunpack.c.l.b16 %v4381
      %v4608 = vpack.c.b16 %v4607, %v4597
      %4609 = vrot.lane.b32.xlu0 %v4608, 32
      %v4610 = vpop.permute.xlu0 %4609
      %v4612 = vunpack.c.l.b16 %v4382
      %v4613 = vpack.c.b16 %v4607, %v4612
      %v4615 = vshrl.u32 %v4613, 16
      %v4617 = vshll.u32 %v4613, 16
      %v4619 = vrot.slane %v4617, 1
      %v4620 = vor.u32 %v4615, %v4619
      %4621 = vrot.lane.b32.xlu0 %v4620, 64
      %v4622 = vpop.permute.xlu0 %4621
      %v4625 = vsel %vm1750, %v4527, %v4539
      %v4627 = vsel %vm1754, %v4625, %v4551
      %v4629 = vsel %vm1757, %v4627, %v4556
      %v4632 = vsel %vm1750, %v4566, %v4578
      %v4634 = vsel %vm1754, %v4632, %v4583
      %v4636 = vsel %vm1757, %v4634, %v4595
      %v4639 = vsel %vm1750, %v4605, %v4610
      %v4641 = vsel %vm1754, %v4639, %v4622
      %v4642 = vshrl.u32 %v4629, 16
      %v4644 = vshll.u32 %v4629, 16
      %v4646 = vrot.slane %v4644, 1
      %v4647 = vor.u32 %v4642, %v4646
      %v4648 = vshrl.u32 %v4636, 16
      %v4650 = vshll.u32 %v4636, 16
      %v4652 = vrot.slane %v4650, 1
      %v4653 = vor.u32 %v4648, %v4652
      %v4654 = vshrl.u32 %v4641, 16
      %v4656 = vshll.u32 %v4641, 16
      %v4658 = vrot.slane %v4656, 1
      %v4659 = vor.u32 %v4654, %v4658
      %v4663 = vsel %vm1757, %v4659, 0
      %4665 = vmatprep.subr.bf16.mxu0 0
      %4666 = vmatpush1.bf16.msra.mxu0 %v2144
      %4667 = vmatprep.subr.bf16.mxu0 0
      %4668 = vmatpush1.bf16.msra.mxu0 %v2145
      %4669 = vmatprep.subr.bf16.mxu0 0
      %4670 = vmatpush1.bf16.msra.mxu0 %v2146
      %4671 = vmatprep.subr.bf16.mxu0 0
      %4672 = vmatpush1.bf16.msra.mxu0 %v2147
      %4673 = vmatprep.subr.bf16.mxu0 0
      %4674 = vmatpush1.bf16.msra.mxu0 %v2148
      %4675 = vmatprep.subr.bf16.mxu0 0
      %4676 = vmatpush1.bf16.msra.mxu0 %v2149
      %4677 = vmatprep.subr.bf16.mxu0 0
      %4678 = vmatpush1.bf16.msra.mxu0 %v2150
      %4679 = vmatprep.subr.bf16.mxu0 0
      %4680 = vmatpush1.bf16.msra.mxu0 %v2151
      %4681 = vmatprep.subr.bf16.mxu0 0
      %4682 = vmatpush1.bf16.msra.mxu0 %v2152
      %4683 = vmatprep.subr.bf16.mxu0 0
      %4684 = vmatpush1.bf16.msra.mxu0 %v2153
      %4685 = vmatprep.subr.bf16.mxu0 0
      %4686 = vmatpush1.bf16.msra.mxu0 %v2154
      %4687 = vmatprep.subr.bf16.mxu0 0
      %4688 = vmatpush1.bf16.msra.mxu0 %v2155
      %4689 = vmatprep.subr.bf16.mxu0 0
      %4690 = vmatpush1.bf16.msra.mxu0 %v2156
      %4691 = vmatprep.subr.bf16.mxu0 0
      %4692 = vmatpush1.bf16.msra.mxu0 %v2157
      %4693 = vmatprep.subr.bf16.mxu0 0
      %4694 = vmatpush1.bf16.msra.mxu0 %v2158
      %4695 = vmatprep.subr.bf16.mxu0 0
      %4696 = vmatpush1.bf16.msra.mxu0 %v2159
      %4697 = vmatprep.mubr.bf16.mxu0 %v4507
      %4698 = vmatmul.mubr.bf16.gmra.mrb[0].mxu0 %v4499
      %v4699 = vpop.f32.mrb[0].mxu0
      %v4700 = vadd.f32 %v1926, %v4699
      %v4701 = vpop.f32.mrb[0].mxu0
      %v4702 = vpop.f32.mrb[0].mxu0
      %v4703 = vpop.f32.mrb[0].mxu0
      %4704 = vdwg.mxu0
      %4705 = vmatprep.subr.bf16.mxu0 0
      %4706 = vmatpush1.bf16.msra.mxu0 %v2160
      %4707 = vmatprep.subr.bf16.mxu0 0
      %4708 = vmatpush1.bf16.msra.mxu0 %v2161
      %4709 = vmatprep.subr.bf16.mxu0 0
      %4710 = vmatpush1.bf16.msra.mxu0 %v2162
      %4711 = vmatprep.subr.bf16.mxu0 0
      %4712 = vmatpush1.bf16.msra.mxu0 %v2163
      %4713 = vmatprep.subr.bf16.mxu0 0
      %4714 = vmatpush1.bf16.msra.mxu0 %v2164
      %4715 = vmatprep.subr.bf16.mxu0 0
      %4716 = vmatpush1.bf16.msra.mxu0 %v2165
      %4717 = vmatprep.subr.bf16.mxu0 0
      %4718 = vmatpush1.bf16.msra.mxu0 %v2166
      %4719 = vmatprep.subr.bf16.mxu0 0
      %4720 = vmatpush1.bf16.msra.mxu0 %v2167
      %4721 = vmatprep.subr.bf16.mxu0 0
      %4722 = vmatpush1.bf16.msra.mxu0 %v2168
      %4723 = vmatprep.subr.bf16.mxu0 0
      %4724 = vmatpush1.bf16.msra.mxu0 %v2169
      %4725 = vmatprep.subr.bf16.mxu0 0
      %4726 = vmatpush1.bf16.msra.mxu0 %v2170
      %4727 = vmatprep.subr.bf16.mxu0 0
      %4728 = vmatpush1.bf16.msra.mxu0 %v2171
      %4729 = vmatprep.subr.bf16.mxu0 0
      %4730 = vmatpush1.bf16.msra.mxu0 %v2172
      %4731 = vmatprep.subr.bf16.mxu0 0
      %4732 = vmatpush1.bf16.msra.mxu0 %v2173
      %4733 = vmatprep.subr.bf16.mxu0 0
      %4734 = vmatpush1.bf16.msra.mxu0 %v2174
      %4735 = vmatprep.subr.bf16.mxu0 0
      %4736 = vmatpush1.bf16.msra.mxu0 %v2175
      %4737 = vmatprep.mubr.bf16.mxu0 %v4523
      %4738 = vmatmul.mubr.bf16.gmra.mrb[0].mxu0 %v4515
      %v4739 = vpop.f32.mrb[0].mxu0
      %v4740 = vadd.f32 %v4700, %v4739
      %v4741 = vpop.f32.mrb[0].mxu0
      %v4742 = vpop.f32.mrb[0].mxu0
      %v4743 = vpop.f32.mrb[0].mxu0
      %4744 = vdwg.mxu0
      %4745 = vmatprep.subr.bf16.mxu0 0
      %4746 = vmatpush1.bf16.msra.mxu0 %v2176
      %4747 = vmatprep.subr.bf16.mxu0 0
      %4748 = vmatpush1.bf16.msra.mxu0 %v2177
      %4749 = vmatprep.subr.bf16.mxu0 0
      %4750 = vmatpush1.bf16.msra.mxu0 %v2178
      %4751 = vmatprep.subr.bf16.mxu0 0
      %4752 = vmatpush1.bf16.msra.mxu0 %v2179
      %4753 = vmatprep.subr.bf16.mxu0 0
      %4754 = vmatpush1.bf16.msra.mxu0 %v2180
      %4755 = vmatprep.subr.bf16.mxu0 0
      %4756 = vmatpush1.bf16.msra.mxu0 %v2181
      %4757 = vmatprep.subr.bf16.mxu0 0
      %4758 = vmatpush1.bf16.msra.mxu0 %v2182
      %4759 = vmatprep.subr.bf16.mxu0 0
      %4760 = vmatpush1.bf16.msra.mxu0 %v2183
      %4761 = vmatprep.subr.bf16.mxu0 0
      %4762 = vmatpush1.bf16.msra.mxu0 %v2184
      %4763 = vmatprep.subr.bf16.mxu0 0
      %4764 = vmatpush1.bf16.msra.mxu0 %v2185
      %4765 = vmatprep.subr.bf16.mxu0 0
      %4766 = vmatpush1.bf16.msra.mxu0 %v2186
      %4767 = vmatprep.subr.bf16.mxu0 0
      %4768 = vmatpush1.bf16.msra.mxu0 %v2187
      %4769 = vmatprep.subr.bf16.mxu0 0
      %4770 = vmatpush1.bf16.msra.mxu0 %v2188
      %4771 = vmatprep.subr.bf16.mxu0 0
      %4772 = vmatpush1.bf16.msra.mxu0 %v2189
      %4773 = vmatprep.subr.bf16.mxu0 0
      %4774 = vmatpush1.bf16.msra.mxu0 %v2190
      %4775 = vmatprep.subr.bf16.mxu0 0
      %4776 = vmatpush1.bf16.msra.mxu0 %v2191
      %4777 = vmatprep.mubr.bf16.mxu0 %v4653
      %4778 = vmatmul.mubr.bf16.gmra.mrb[0].mxu0 %v4647
      %v4779 = vpop.f32.mrb[0].mxu0
      %v4780 = vadd.f32 %v4740, %v4779
      %v4781 = vpop.f32.mrb[0].mxu0
      %v4782 = vpop.f32.mrb[0].mxu0
      %v4783 = vpop.f32.mrb[0].mxu0
      %4784 = vdwg.mxu0
      %4785 = vmatprep.subr.bf16.mxu0 0
      %4786 = vmatpush1.bf16.msra.mxu0 %v2192
      %4787 = vmatprep.subr.bf16.mxu0 0
      %4788 = vmatpush1.bf16.msra.mxu0 %v2193
      %4789 = vmatprep.subr.bf16.mxu0 0
      %4790 = vmatpush1.bf16.msra.mxu0 %v2194
      %4791 = vmatprep.subr.bf16.mxu0 0
      %4792 = vmatpush1.bf16.msra.mxu0 %v2195
      %4793 = vmatprep.subr.bf16.mxu0 0
      %4794 = vmatpush1.bf16.msra.mxu0 %v2196
      %4795 = vmatprep.subr.bf16.mxu0 0
      %4796 = vmatpush1.bf16.msra.mxu0 %v2197
      %4797 = vmatprep.subr.bf16.mxu0 0
      %4798 = vmatpush1.bf16.msra.mxu0 0
      %4799 = vmatprep.subr.bf16.mxu0 0
      %4800 = vmatpush1.bf16.msra.mxu0 0
      %4801 = vmatprep.subr.bf16.mxu0 0
      %4802 = vmatpush1.bf16.msra.mxu0 0
      %4803 = vmatprep.subr.bf16.mxu0 0
      %4804 = vmatpush1.bf16.msra.mxu0 0
      %4805 = vmatprep.subr.bf16.mxu0 0
      %4806 = vmatpush1.bf16.msra.mxu0 0
      %4807 = vmatprep.subr.bf16.mxu0 0
      %4808 = vmatpush1.bf16.msra.mxu0 0
      %4809 = vmatprep.subr.bf16.mxu0 0
      %4810 = vmatpush1.bf16.msra.mxu0 0
      %4811 = vmatprep.subr.bf16.mxu0 0
      %4812 = vmatpush1.bf16.msra.mxu0 0
      %4813 = vmatprep.subr.bf16.mxu0 0
      %4814 = vmatpush1.bf16.msra.mxu0 0
      %4815 = vmatprep.subr.bf16.mxu0 0
      %4816 = vmatpush1.bf16.msra.mxu0 0
      %4817 = vmatprep.mubr.bf16.mxu0 0
      %4818 = vmatmul.mubr.bf16.gmra.mrb[0].mxu0 %v4663
      %v4819 = vpop.f32.mrb[0].mxu0
      %v4820 = vadd.f32 %v4780, %v4819
      %v4821 = vpop.f32.mrb[0].mxu0
      %v4822 = vpop.f32.mrb[0].mxu0
      %v4823 = vpop.f32.mrb[0].mxu0
      %4824 = vdwg.mxu0
      %4825 = vst.msk [vmem:[%s273 + $0x28] sm:$0xff] %vm1750, %v4820
      %p4826 = scmp.lt.s32.totalorder %s21, 1
      %s4827 = scalar_select %p4826, %s21, 1
      %p4828 = scmp.lt.s32.totalorder %s22, 3
      %s4829 = scalar_select %p4828, %s22, 3
      %s4830 = smul.addr %s4829, 6
      %s4831 = smul.addr %s4827, 24
      %s4832 = sadd.s32 %s4830, %s4831
      %s4833 = smul.addr %s4832, 8
      %s4834 = scalar_lea.vmem %s6, %s4833
      // Predicated region
      $region49: #{tpu_custom_call.1} parent=43 // pred_check
        %p4835 = pneg %p180
      $region50: #{tpu_custom_call.1} parent=43 // pred_check_branch
        %4837 = sbr.rel (%p4835) target = $region52
      $region51: #{tpu_custom_call.1} parent=43 // pred_region
        _
      $region52: #{tpu_custom_call.1} parent=43 // pred_fallthru
        _
    $region44: #{tpu_custom_call.1} parent=5 // pred_fallthru
      _
    %p4838 = scmp.le.s32.totalorder 2, %s12
    // Predicated region
    $region53: #{tpu_custom_call.1} parent=5 // pred_check
      %p4839 = pneg %p4838
    $region54: #{tpu_custom_call.1} parent=5 // pred_check_branch
      %4841 = sbr.rel (%p4839) target = $region56
    $region55: #{tpu_custom_call.1} parent=5 // pred_region
      %s4842 = ssub.s32 %s12, 2
      // Predicated region
      $region57: #{tpu_custom_call.1} parent=55 // pred_check
        %p4843 = pneg %p186
      $region58: #{tpu_custom_call.1} parent=55 // pred_check_branch
        %4845 = sbr.rel (%p4843) target = $region60
      $region59: #{tpu_custom_call.1} parent=55 // pred_region
        %p4846 = scmp.lt.s32.totalorder %s23, 1
        %s4847 = scalar_select %p4846, %s23, 1
        %p4848 = scmp.lt.s32.totalorder %s24, 3
        %s4849 = scalar_select %p4848, %s24, 3
        %s4850 = smul.addr %s4849, 6
        %s4851 = smul.addr %s4847, 24
        %s4852 = sadd.s32 %s4850, %s4851
        %s4853 = smul.addr %s4852, 8
        %s4854 = scalar_lea.vmem %s6, %s4853
      $region60: #{tpu_custom_call.1} parent=55 // pred_fallthru
        _
    $region56: #{tpu_custom_call.1} parent=5 // pred_fallthru
      _
  $region6: #{tpu_custom_call.1} parent=0 // loop_footer
    %s16 = sadd.s32 1, %s12
  $region7: #{tpu_custom_call.1} parent=0 // loop_footer_branch
    %11 = sbr.rel target = $region3
  $region8: #{tpu_custom_call.1} parent=0 // loop_exit
    _

</llo_original>
